<compile_context>
chip_gen: v7x
topology: tpu7x:2x2x1
jax: 0.10.0
libtpu: 0.0.40
codegen_flags: <defaults>
</compile_context>

<pallas_src>
import functools

import jax
import jax.numpy as jnp
import numpy as np
from jax import lax
from jax.experimental import pallas as pl
from jax.experimental.pallas import tpu as pltpu

NPAD = 8   # padded output channels for conv2 (real channel is column 0)


def _make_kernel(H, W, Cin, Ch, Cmid, mm_dtype):
    HW = H * W
    L = HW + 2 * W   # row-padded flat length: W zero rows on top and bottom

    def kernel(xp_ref, mL_ref, mR_ref, wx_ref, wh_ref, b_ref,
               w1_ref, b1_ref, w2_ref, b2_ref,
               out_ref, hpad_ref, c_ref):
        t = pl.program_id(1)

        @pl.when(t == 0)
        def _init():
            hpad_ref[...] = jnp.zeros_like(hpad_ref)   # pad rows stay zero
            c_ref[...] = jnp.zeros_like(c_ref)

        mL = mL_ref[...]   # (HW, 1) f32, 0 where x == 0     (left border)
        mR = mR_ref[...]   # (HW, 1) f32, 0 where x == W - 1 (right border)

        def im2col(pad_val):
            """(L, C) row-padded flat buffer -> (HW, 9*C) f32 patch.

            Tap (dy, dx) of the 3x3 SAME conv at output row r = y*W + x is
            pad_val[(r + dy*W + dx - 1) mod L]; vertical out-of-bounds lands in
            the zero pad rows, horizontal out-of-bounds is zeroed by mL / mR.
            Rolls go to the XLU; all loads/stores stay full-width and aligned.
            """
            cols = []
            for dy in range(3):
                for dx in range(3):
                    off = dy * W + dx - 1
                    if off == 0:
                        v = pad_val[:HW]
                    else:
                        v = pltpu.roll(pad_val, shift=(-off) % L, axis=0)[:HW]
                    if dx == 0:
                        v = v * mL
                    elif dx == 2:
                        v = v * mR
                    cols.append(v)
            return jnp.concatenate(cols, axis=-1)

        # ---- ConvLSTM cell: z = x_patch @ Wx + h_patch @ Wh + b ------------
        h_patch = im2col(hpad_ref[...].astype(jnp.float32))
        z = (jnp.dot(xp_ref[0], wx_ref[...], preferred_element_type=jnp.float32)
             + jnp.dot(h_patch.astype(mm_dtype), wh_ref[...],
                       preferred_element_type=jnp.float32)
             + b_ref[...])

        # gate columns pre-ordered in the wrapper as [i | f | o | g]
        s = jax.nn.sigmoid(z[:, :3 * Ch])
        g = jnp.tanh(z[:, 3 * Ch:])
        i_g = s[:, :Ch]
        f_g = s[:, Ch:2 * Ch]
        o_g = s[:, 2 * Ch:]

        c_new = f_g * c_ref[...] + i_g * g
        h_new = o_g * jnp.tanh(c_new)

        c_ref[...] = c_new
        # aligned, full-width writeback of the interior rows [W, W + HW)
        hpad_ref[W:W + HW, :] = h_new.astype(hpad_ref.dtype)

        # ---- head on the final hidden state: conv1 -> relu -> conv2 --------
        @pl.when(t == pl.num_programs(1) - 1)
        def _head():
            hp = im2col(hpad_ref[...].astype(jnp.float32))
            y1 = jnp.dot(hp.astype(mm_dtype), w1_ref[...],
                         preferred_element_type=jnp.float32) + b1_ref[...]
            y1 = jnp.maximum(y1, 0.0)                      # (HW, Cmid) f32

            zpad = jnp.zeros((W, Cmid), jnp.float32)
            y1p = jnp.concatenate([zpad, y1, zpad], axis=0)   # (L, Cmid)
            yp = im2col(y1p)
            y2 = jnp.dot(yp.astype(mm_dtype), w2_ref[...],
                         preferred_element_type=jnp.float32) + b2_ref[...]
            out_ref[0] = y2                                # (HW, NPAD)

    return kernel


def _prepare_params(params, Cin, mm_dtype):
    """PyTorch-layout (OIHW) params -> kernel matmul layout."""
    w, b, w1, b1, w2, b2 = (params[k] for k in ("w", "b", "w1", "b1", "w2", "b2"))
    Ch4 = w.shape[0]
    Ch = Ch4 // 4
    Cmid = w1.shape[0]

    def hwio(wt):  # OIHW -> HWIO
        return jnp.transpose(wt, (2, 3, 1, 0))

    w_hwio = hwio(w)                                        # (3,3,Cin+Ch,4Ch)
    wx = w_hwio[:, :, :Cin, :].reshape(9 * Cin, Ch4)        # x-side weight
    wh = w_hwio[:, :, Cin:, :].reshape(9 * Ch, Ch4)         # h-side weight
    # reorder gate output columns from PyTorch (i, f, g, o) to (i, f, o, g)
    perm = jnp.concatenate([jnp.arange(0, 2 * Ch),
                            jnp.arange(3 * Ch, 4 * Ch),
                            jnp.arange(2 * Ch, 3 * Ch)])
    wx = wx[:, perm]
    wh = wh[:, perm]
    bk = b[perm].reshape(1, Ch4).astype(jnp.float32)

    w1k = hwio(w1).reshape(9 * Ch, Cmid)
    b1k = b1.reshape(1, Cmid).astype(jnp.float32)
    w2k = jnp.pad(hwio(w2).reshape(9 * Cmid, 1), ((0, 0), (0, NPAD - 1)))
    b2k = b2.reshape(1, 1).astype(jnp.float32)

    cast = lambda a: a.astype(mm_dtype)
    return (cast(wx), cast(wh), bk, cast(w1k), b1k, cast(w2k), b2k), Ch, Cmid


@functools.partial(jax.jit, static_argnames=("matmul_dtype",))
def sea_ice_convlstm(x, params, matmul_dtype=jnp.float32):
    """x: (B, T, Cin, H, W) float32 (PyTorch batch_first). Returns (B, 1, H, W)."""
    B, T, Cin, H, W = x.shape
    (wx, wh, bk, w1k, b1k, w2k, b2k), Ch, Cmid = _prepare_params(
        params, Cin, matmul_dtype)
    HW = H * W
    L = HW + 2 * W

    # ---- x-side im2col in the wrapper (recurrence-independent, pipelined) ----
    xt = jnp.transpose(x, (0, 1, 3, 4, 2))                      # (B,T,H,W,Cin)
    xt = jnp.pad(xt, ((0, 0), (0, 0), (1, 1), (1, 1), (0, 0)))
    taps = [xt[:, :, dy:dy + H, dx:dx + W, :]
            for dy in range(3) for dx in range(3)]
    xpatch = jnp.concatenate(taps, axis=-1)                     # (B,T,H,W,9Cin)
    xpatch = xpatch.reshape(B * T, HW, 9 * Cin).astype(matmul_dtype)

    # horizontal border masks (zero the wrapped columns of the flat taps)
    col = jnp.arange(HW, dtype=jnp.int32) % W
    mL = (col != 0).astype(jnp.float32).reshape(HW, 1)
    mR = (col != W - 1).astype(jnp.float32).reshape(HW, 1)

    kernel = _make_kernel(H, W, Cin, Ch, Cmid, matmul_dtype)

    def full(shape):
        return pl.BlockSpec(shape, lambda b, t, n=len(shape): (0,) * n)

    out = pl.pallas_call(
        kernel,
        out_shape=jax.ShapeDtypeStruct((B, HW, NPAD), jnp.float32),
        grid_spec=pltpu.PrefetchScalarGridSpec(
            num_scalar_prefetch=0,
            grid=(B, T),                     # batch parallel, time sequential
            in_specs=[
                pl.BlockSpec((1, HW, 9 * Cin), lambda b, t: (b * T + t, 0, 0)),
                full(mL.shape), full(mR.shape),
                full(wx.shape), full(wh.shape), full(bk.shape),
                full(w1k.shape), full(b1k.shape),
                full(w2k.shape), full(b2k.shape),
            ],
            out_specs=pl.BlockSpec((1, HW, NPAD), lambda b, t: (b, 0, 0)),
            scratch_shapes=[
                pltpu.VMEM((L, Ch), matmul_dtype),   # row-padded flat h carry
                pltpu.VMEM((HW, Ch), jnp.float32),   # cell state (f32)
            ],
        ),
        compiler_params=pltpu.CompilerParams(
            dimension_semantics=("parallel", "arbitrary")),
    )(xpatch, mL, mR, wx, wh, bk, w1k, b1k, w2k, b2k)

    # column 0 holds the real conv2 output channel -> (B, 1, H, W) NCHW
    return out[:, :, 0].reshape(B, 1, H, W)


# ---------------- pure-JAX reference (PyTorch semantics, NCHW) ----------------
def ref_forward(x, params):
    w, b, w1, b1, w2, b2 = (params[k] for k in ("w", "b", "w1", "b1", "w2", "b2"))
    Ch = w.shape[0] // 4
    B, T, Cin, H, W = x.shape
    dn = ("NCHW", "OIHW", "NCHW")
    conv = lambda v, k: lax.conv_general_dilated(
        v, k, (1, 1), "SAME", dimension_numbers=dn)
    h = jnp.zeros((B, Ch, H, W), jnp.float32)
    c = jnp.zeros((B, Ch, H, W), jnp.float32)
    for t in range(T):
        z = conv(jnp.concatenate([x[:, t], h], axis=1), w) + b[None, :, None, None]
        i = jax.nn.sigmoid(z[:, 0 * Ch:1 * Ch])
        f = jax.nn.sigmoid(z[:, 1 * Ch:2 * Ch])
        g = jnp.tanh(z[:, 2 * Ch:3 * Ch])
        o = jax.nn.sigmoid(z[:, 3 * Ch:4 * Ch])
        c = f * c + i * g
        h = o * jnp.tanh(c)
    y1 = jnp.maximum(conv(h, w1) + b1[None, :, None, None], 0.0)
    return conv(y1, w2) + b2[None, :, None, None]


if __name__ == "__main__":
    # SeaIceConvLSTM(input_channels=Cin, hidden_channels=Ch, kernel_size=(3,3),
    # lstm_layers=1) at small shapes.
    B, T, Cin, H, W = 2, 8, 4, 16, 16
    Ch, Cmid = 32, 32

    key = jax.random.PRNGKey(0)
    ks = jax.random.split(key, 7)
    init = lambda k, s: 0.1 * jax.random.normal(k, s, jnp.float32)

    # PyTorch-layout parameters (OIHW conv weights, 1-D biases).
    params = dict(
        w=init(ks[0], (4 * Ch, Cin + Ch, 3, 3)),   # ConvLSTM cell conv
        b=init(ks[1], (4 * Ch,)),
        w1=init(ks[2], (Cmid, Ch, 3, 3)),          # conv1
        b1=init(ks[3], (Cmid,)),
        w2=init(ks[4], (1, Cmid, 3, 3)),           # conv2
        b2=init(ks[5], (1,)),
    )
    x = jax.random.normal(ks[6], (B, T, Cin, H, W), jnp.float32)

    ref = jax.block_until_ready(ref_forward(x, params))

    # f32 MXU path: must match the f32 reference tightly.
    out_f32 = jax.block_until_ready(
        sea_ice_convlstm(x, params, matmul_dtype=jnp.float32))
    np.testing.assert_allclose(np.asarray(out_f32), np.asarray(ref),
                               rtol=1e-3, atol=1e-3)

    # bf16 MXU path (v6e/v7x fast path): f32 accumulation / cell state / gates,
    # so only operand rounding differs -> loose tolerance.
    out_bf16 = jax.block_until_ready(
        sea_ice_convlstm(x, params, matmul_dtype=jnp.bfloat16))
    np.testing.assert_allclose(np.asarray(out_bf16), np.asarray(ref),
                               rtol=5e-2, atol=5e-2)

    print("KERNEL_OK")
</pallas_src>

<mosaic_0001>
module attributes {stable_mosaic.version = 11 : i64} {
  func.func @kernel(%arg0: i32, %arg1: i32, %arg2: memref<1x256x36xf32, #tpu.memory_space<vmem>>, %arg3: memref<256x1xf32, #tpu.memory_space<vmem>>, %arg4: memref<256x1xf32, #tpu.memory_space<vmem>>, %arg5: memref<36x128xf32, #tpu.memory_space<vmem>>, %arg6: memref<288x128xf32, #tpu.memory_space<vmem>>, %arg7: memref<1x128xf32, #tpu.memory_space<vmem>>, %arg8: memref<288x32xf32, #tpu.memory_space<vmem>>, %arg9: memref<1x32xf32, #tpu.memory_space<vmem>>, %arg10: memref<288x8xf32, #tpu.memory_space<vmem>>, %arg11: memref<1x1xf32, #tpu.memory_space<vmem>>, %arg12: memref<1x256x8xf32, #tpu.memory_space<vmem>>, %arg13: memref<288x32xf32, #tpu.memory_space<vmem>>, %arg14: memref<256x32xf32, #tpu.memory_space<vmem>>) attributes {dimension_semantics = [#tpu.dimension_semantics<parallel>, #tpu.dimension_semantics<arbitrary>], iteration_bounds = array<i64: 2, 8>, scalar_prefetch = 0 : i64, scratch_operands = 2 : i64, tpu.core_type = #tpu.core_type<tc>, window_params = [{transform_indices = @transform_0, window_bounds = array<i64: 1, 256, 36>}, {pipeline_mode = #tpu.pipeline_mode<synchronous>, transform_indices = @transform_1, window_bounds = array<i64: 256, 1>}, {pipeline_mode = #tpu.pipeline_mode<synchronous>, transform_indices = @transform_2, window_bounds = array<i64: 256, 1>}, {pipeline_mode = #tpu.pipeline_mode<synchronous>, transform_indices = @transform_3, window_bounds = array<i64: 36, 128>}, {pipeline_mode = #tpu.pipeline_mode<synchronous>, transform_indices = @transform_4, window_bounds = array<i64: 288, 128>}, {pipeline_mode = #tpu.pipeline_mode<synchronous>, transform_indices = @transform_5, window_bounds = array<i64: 1, 128>}, {pipeline_mode = #tpu.pipeline_mode<synchronous>, transform_indices = @transform_6, window_bounds = array<i64: 288, 32>}, {pipeline_mode = #tpu.pipeline_mode<synchronous>, transform_indices = @transform_7, window_bounds = array<i64: 1, 32>}, {pipeline_mode = #tpu.pipeline_mode<synchronous>, transform_indices = @transform_8, window_bounds = array<i64: 288, 8>}, {pipeline_mode = #tpu.pipeline_mode<synchronous>, transform_indices = @transform_9, window_bounds = array<i64: 1, 1>}, {transform_indices = @transform_10, window_bounds = array<i64: 1, 256, 8>}]} {
    %c0_i32 = arith.constant 0 : i32
    %0 = arith.cmpi eq, %arg1, %c0_i32 : i32
    %1 = arith.extui %0 : i1 to i32
    %c0_i32_0 = arith.constant 0 : i32
    %2 = arith.cmpi ne, %1, %c0_i32_0 : i32
    scf.if %2 {
      %cst_23 = arith.constant 0.000000e+00 : f32
      %68 = vector.broadcast %cst_23 : f32 to vector<288x32xf32>
      %c0_24 = arith.constant 0 : index
      %c0_25 = arith.constant 0 : index
      %69 = vector.load %arg13[%c0_24, %c0_25] : memref<288x32xf32, #tpu.memory_space<vmem>>, vector<288x32xf32>
      tpu.vector_store %arg13[%c0_24, %c0_25], %68 {strides = array<i32>} : memref<288x32xf32, #tpu.memory_space<vmem>>, vector<288x32xf32>,
      %cst_26 = arith.constant 0.000000e+00 : f32
      %70 = vector.broadcast %cst_26 : f32 to vector<256x32xf32>
      %c0_27 = arith.constant 0 : index
      %c0_28 = arith.constant 0 : index
      %71 = vector.load %arg14[%c0_27, %c0_28] : memref<256x32xf32, #tpu.memory_space<vmem>>, vector<256x32xf32>
      tpu.vector_store %arg14[%c0_27, %c0_28], %70 {strides = array<i32>} : memref<256x32xf32, #tpu.memory_space<vmem>>, vector<256x32xf32>,
    } else {
    }
    %c0 = arith.constant 0 : index
    %c0_1 = arith.constant 0 : index
    %3 = vector.load %arg3[%c0, %c0_1] : memref<256x1xf32, #tpu.memory_space<vmem>>, vector<256x1xf32>
    %c0_2 = arith.constant 0 : index
    %c0_3 = arith.constant 0 : index
    %4 = vector.load %arg4[%c0_2, %c0_3] : memref<256x1xf32, #tpu.memory_space<vmem>>, vector<256x1xf32>
    %c0_4 = arith.constant 0 : index
    %c0_5 = arith.constant 0 : index
    %5 = vector.load %arg13[%c0_4, %c0_5] : memref<288x32xf32, #tpu.memory_space<vmem>>, vector<288x32xf32>
    %c1_i32 = arith.constant 1 : i32
    %6 = tpu.dynamic_rotate %5 by %c1_i32 dim 0 : vector<288x32xf32>, i32 -> vector<288x32xf32>
    %7 = vector.extract_strided_slice %6 {offsets = [0, 0], sizes = [256, 32], strides = [1, 1]} : vector<288x32xf32> to vector<256x32xf32>
    %8 = vector.broadcast %3 : vector<256x1xf32> to vector<256x32xf32>
    %9 = arith.mulf %7, %8 : vector<256x32xf32>
    %10 = vector.extract_strided_slice %5 {offsets = [0, 0], sizes = [256, 32], strides = [1, 1]} : vector<288x32xf32> to vector<256x32xf32>
    %c287_i32 = arith.constant 287 : i32
    %11 = tpu.dynamic_rotate %5 by %c287_i32 dim 0 : vector<288x32xf32>, i32 -> vector<288x32xf32>
    %12 = vector.extract_strided_slice %11 {offsets = [0, 0], sizes = [256, 32], strides = [1, 1]} : vector<288x32xf32> to vector<256x32xf32>
    %13 = vector.broadcast %4 : vector<256x1xf32> to vector<256x32xf32>
    %14 = arith.mulf %12, %13 : vector<256x32xf32>
    %c273_i32 = arith.constant 273 : i32
    %15 = tpu.dynamic_rotate %5 by %c273_i32 dim 0 : vector<288x32xf32>, i32 -> vector<288x32xf32>
    %16 = vector.extract_strided_slice %15 {offsets = [0, 0], sizes = [256, 32], strides = [1, 1]} : vector<288x32xf32> to vector<256x32xf32>
    %17 = vector.broadcast %3 : vector<256x1xf32> to vector<256x32xf32>
    %18 = arith.mulf %16, %17 : vector<256x32xf32>
    %c272_i32 = arith.constant 272 : i32
    %19 = tpu.dynamic_rotate %5 by %c272_i32 dim 0 : vector<288x32xf32>, i32 -> vector<288x32xf32>
    %20 = vector.extract_strided_slice %19 {offsets = [0, 0], sizes = [256, 32], strides = [1, 1]} : vector<288x32xf32> to vector<256x32xf32>
    %c271_i32 = arith.constant 271 : i32
    %21 = tpu.dynamic_rotate %5 by %c271_i32 dim 0 : vector<288x32xf32>, i32 -> vector<288x32xf32>
    %22 = vector.extract_strided_slice %21 {offsets = [0, 0], sizes = [256, 32], strides = [1, 1]} : vector<288x32xf32> to vector<256x32xf32>
    %23 = vector.broadcast %4 : vector<256x1xf32> to vector<256x32xf32>
    %24 = arith.mulf %22, %23 : vector<256x32xf32>
    %c257_i32 = arith.constant 257 : i32
    %25 = tpu.dynamic_rotate %5 by %c257_i32 dim 0 : vector<288x32xf32>, i32 -> vector<288x32xf32>
    %26 = vector.extract_strided_slice %25 {offsets = [0, 0], sizes = [256, 32], strides = [1, 1]} : vector<288x32xf32> to vector<256x32xf32>
    %27 = vector.broadcast %3 : vector<256x1xf32> to vector<256x32xf32>
    %28 = arith.mulf %26, %27 : vector<256x32xf32>
    %c256_i32 = arith.constant 256 : i32
    %29 = tpu.dynamic_rotate %5 by %c256_i32 dim 0 : vector<288x32xf32>, i32 -> vector<288x32xf32>
    %30 = vector.extract_strided_slice %29 {offsets = [0, 0], sizes = [256, 32], strides = [1, 1]} : vector<288x32xf32> to vector<256x32xf32>
    %c255_i32 = arith.constant 255 : i32
    %31 = tpu.dynamic_rotate %5 by %c255_i32 dim 0 : vector<288x32xf32>, i32 -> vector<288x32xf32>
    %32 = vector.extract_strided_slice %31 {offsets = [0, 0], sizes = [256, 32], strides = [1, 1]} : vector<288x32xf32> to vector<256x32xf32>
    %33 = vector.broadcast %4 : vector<256x1xf32> to vector<256x32xf32>
    %34 = arith.mulf %32, %33 : vector<256x32xf32>
    %35 = tpu.concatenate %9, %10, %14, %18, %20, %24, %28, %30, %34 in 1 : vector<256x32xf32>, vector<256x32xf32>, vector<256x32xf32>, vector<256x32xf32>, vector<256x32xf32>, vector<256x32xf32>, vector<256x32xf32>, vector<256x32xf32>, vector<256x32xf32> -> vector<256x288xf32>
    %c0_6 = arith.constant 0 : index
    %c0_7 = arith.constant 0 : index
    %c0_8 = arith.constant 0 : index
    %36 = vector.load %arg2[%c0_6, %c0_7, %c0_8] : memref<1x256x36xf32, #tpu.memory_space<vmem>>, vector<1x256x36xf32>
    %37 = vector.shape_cast %36 : vector<1x256x36xf32> to vector<256x36xf32>
    %c0_9 = arith.constant 0 : index
    %c0_10 = arith.constant 0 : index
    %38 = vector.load %arg5[%c0_9, %c0_10] : memref<36x128xf32, #tpu.memory_space<vmem>>, vector<36x128xf32>
    %cst = arith.constant dense<0.000000e+00> : vector<256x128xf32>
    %39 = tpu.matmul %37, %38, %cst {dimension_numbers = #tpu.dot_dimension_numbers<[1], [0], [0], [1], [0, 0, 1, 1], [], []>} : vector<256x36xf32>, vector<36x128xf32>, vector<256x128xf32> -> vector<256x128xf32>
    %c0_11 = arith.constant 0 : index
    %c0_12 = arith.constant 0 : index
    %40 = vector.load %arg6[%c0_11, %c0_12] : memref<288x128xf32, #tpu.memory_space<vmem>>, vector<288x128xf32>
    %cst_13 = arith.constant dense<0.000000e+00> : vector<256x128xf32>
    %41 = tpu.matmul %35, %40, %cst_13 {dimension_numbers = #tpu.dot_dimension_numbers<[1], [0], [0], [1], [0, 0, 1, 1], [], []>} : vector<256x288xf32>, vector<288x128xf32>, vector<256x128xf32> -> vector<256x128xf32>
    %42 = arith.addf %39, %41 : vector<256x128xf32>
    %c0_14 = arith.constant 0 : index
    %c0_15 = arith.constant 0 : index
    %43 = vector.load %arg7[%c0_14, %c0_15] : memref<1x128xf32, #tpu.memory_space<vmem>>, vector<1x128xf32>
    %44 = vector.broadcast %43 : vector<1x128xf32> to vector<256x128xf32>
    %45 = arith.addf %42, %44 : vector<256x128xf32>
    %46 = vector.extract_strided_slice %45 {offsets = [0, 0], sizes = [256, 96], strides = [1, 1]} : vector<256x128xf32> to vector<256x96xf32>
    %47 = arith.negf %46 : vector<256x96xf32>
    %48 = math.exp %47 : vector<256x96xf32>
    %cst_16 = arith.constant 1.000000e+00 : f32
    %49 = vector.broadcast %cst_16 : f32 to vector<256x96xf32>
    %50 = arith.addf %49, %48 : vector<256x96xf32>
    %51 = arith.divf %49, %50 : vector<256x96xf32>
    %52 = vector.extract_strided_slice %45 {offsets = [0, 96], sizes = [256, 32], strides = [1, 1]} : vector<256x128xf32> to vector<256x32xf32>
    %53 = math.tanh %52 : vector<256x32xf32>
    %54 = vector.extract_strided_slice %51 {offsets = [0, 0], sizes = [256, 32], strides = [1, 1]} : vector<256x96xf32> to vector<256x32xf32>
    %55 = vector.extract_strided_slice %51 {offsets = [0, 32], sizes = [256, 32], strides = [1, 1]} : vector<256x96xf32> to vector<256x32xf32>
    %56 = vector.extract_strided_slice %51 {offsets = [0, 64], sizes = [256, 32], strides = [1, 1]} : vector<256x96xf32> to vector<256x32xf32>
    %c0_17 = arith.constant 0 : index
    %c0_18 = arith.constant 0 : index
    %57 = vector.load %arg14[%c0_17, %c0_18] : memref<256x32xf32, #tpu.memory_space<vmem>>, vector<256x32xf32>
    %58 = arith.mulf %55, %57 : vector<256x32xf32>
    %59 = arith.mulf %54, %53 : vector<256x32xf32>
    %60 = arith.addf %58, %59 : vector<256x32xf32>
    %61 = math.tanh %60 : vector<256x32xf32>
    %62 = arith.mulf %56, %61 : vector<256x32xf32>
    %c0_19 = arith.constant 0 : index
    %c0_20 = arith.constant 0 : index
    %63 = vector.load %arg14[%c0_19, %c0_20] : memref<256x32xf32, #tpu.memory_space<vmem>>, vector<256x32xf32>
    tpu.vector_store %arg14[%c0_19, %c0_20], %60 {strides = array<i32>} : memref<256x32xf32, #tpu.memory_space<vmem>>, vector<256x32xf32>,
    %c16 = arith.constant 16 : index
    %c0_21 = arith.constant 0 : index
    %64 = vector.load %arg13[%c16, %c0_21] : memref<288x32xf32, #tpu.memory_space<vmem>>, vector<256x32xf32>
    tpu.vector_store %arg13[%c16, %c0_21], %62 {strides = array<i32>} : memref<288x32xf32, #tpu.memory_space<vmem>>, vector<256x32xf32>,
    %c7_i32 = arith.constant 7 : i32
    %65 = arith.cmpi eq, %arg1, %c7_i32 : i32
    %66 = arith.extui %65 : i1 to i32
    %c0_i32_22 = arith.constant 0 : i32
    %67 = arith.cmpi ne, %66, %c0_i32_22 : i32
    scf.if %67 {
      %c0_23 = arith.constant 0 : index
      %c0_24 = arith.constant 0 : index
      %68 = vector.load %arg13[%c0_23, %c0_24] : memref<288x32xf32, #tpu.memory_space<vmem>>, vector<288x32xf32>
      %c1_i32_25 = arith.constant 1 : i32
      %69 = tpu.dynamic_rotate %68 by %c1_i32_25 dim 0 : vector<288x32xf32>, i32 -> vector<288x32xf32>
      %70 = vector.extract_strided_slice %69 {offsets = [0, 0], sizes = [256, 32], strides = [1, 1]} : vector<288x32xf32> to vector<256x32xf32>
      %71 = vector.broadcast %3 : vector<256x1xf32> to vector<256x32xf32>
      %72 = arith.mulf %70, %71 : vector<256x32xf32>
      %73 = vector.extract_strided_slice %68 {offsets = [0, 0], sizes = [256, 32], strides = [1, 1]} : vector<288x32xf32> to vector<256x32xf32>
      %c287_i32_26 = arith.constant 287 : i32
      %74 = tpu.dynamic_rotate %68 by %c287_i32_26 dim 0 : vector<288x32xf32>, i32 -> vector<288x32xf32>
      %75 = vector.extract_strided_slice %74 {offsets = [0, 0], sizes = [256, 32], strides = [1, 1]} : vector<288x32xf32> to vector<256x32xf32>
      %76 = vector.broadcast %4 : vector<256x1xf32> to vector<256x32xf32>
      %77 = arith.mulf %75, %76 : vector<256x32xf32>
      %c273_i32_27 = arith.constant 273 : i32
      %78 = tpu.dynamic_rotate %68 by %c273_i32_27 dim 0 : vector<288x32xf32>, i32 -> vector<288x32xf32>
      %79 = vector.extract_strided_slice %78 {offsets = [0, 0], sizes = [256, 32], strides = [1, 1]} : vector<288x32xf32> to vector<256x32xf32>
      %80 = vector.broadcast %3 : vector<256x1xf32> to vector<256x32xf32>
      %81 = arith.mulf %79, %80 : vector<256x32xf32>
      %c272_i32_28 = arith.constant 272 : i32
      %82 = tpu.dynamic_rotate %68 by %c272_i32_28 dim 0 : vector<288x32xf32>, i32 -> vector<288x32xf32>
      %83 = vector.extract_strided_slice %82 {offsets = [0, 0], sizes = [256, 32], strides = [1, 1]} : vector<288x32xf32> to vector<256x32xf32>
      %c271_i32_29 = arith.constant 271 : i32
      %84 = tpu.dynamic_rotate %68 by %c271_i32_29 dim 0 : vector<288x32xf32>, i32 -> vector<288x32xf32>
      %85 = vector.extract_strided_slice %84 {offsets = [0, 0], sizes = [256, 32], strides = [1, 1]} : vector<288x32xf32> to vector<256x32xf32>
      %86 = vector.broadcast %4 : vector<256x1xf32> to vector<256x32xf32>
      %87 = arith.mulf %85, %86 : vector<256x32xf32>
      %c257_i32_30 = arith.constant 257 : i32
      %88 = tpu.dynamic_rotate %68 by %c257_i32_30 dim 0 : vector<288x32xf32>, i32 -> vector<288x32xf32>
      %89 = vector.extract_strided_slice %88 {offsets = [0, 0], sizes = [256, 32], strides = [1, 1]} : vector<288x32xf32> to vector<256x32xf32>
      %90 = vector.broadcast %3 : vector<256x1xf32> to vector<256x32xf32>
      %91 = arith.mulf %89, %90 : vector<256x32xf32>
      %c256_i32_31 = arith.constant 256 : i32
      %92 = tpu.dynamic_rotate %68 by %c256_i32_31 dim 0 : vector<288x32xf32>, i32 -> vector<288x32xf32>
      %93 = vector.extract_strided_slice %92 {offsets = [0, 0], sizes = [256, 32], strides = [1, 1]} : vector<288x32xf32> to vector<256x32xf32>
      %c255_i32_32 = arith.constant 255 : i32
      %94 = tpu.dynamic_rotate %68 by %c255_i32_32 dim 0 : vector<288x32xf32>, i32 -> vector<288x32xf32>
      %95 = vector.extract_strided_slice %94 {offsets = [0, 0], sizes = [256, 32], strides = [1, 1]} : vector<288x32xf32> to vector<256x32xf32>
      %96 = vector.broadcast %4 : vector<256x1xf32> to vector<256x32xf32>
      %97 = arith.mulf %95, %96 : vector<256x32xf32>
      %98 = tpu.concatenate %72, %73, %77, %81, %83, %87, %91, %93, %97 in 1 : vector<256x32xf32>, vector<256x32xf32>, vector<256x32xf32>, vector<256x32xf32>, vector<256x32xf32>, vector<256x32xf32>, vector<256x32xf32>, vector<256x32xf32>, vector<256x32xf32> -> vector<256x288xf32>
      %c0_33 = arith.constant 0 : index
      %c0_34 = arith.constant 0 : index
      %99 = vector.load %arg8[%c0_33, %c0_34] : memref<288x32xf32, #tpu.memory_space<vmem>>, vector<288x32xf32>
      %cst_35 = arith.constant dense<0.000000e+00> : vector<256x32xf32>
      %100 = tpu.matmul %98, %99, %cst_35 {dimension_numbers = #tpu.dot_dimension_numbers<[1], [0], [0], [1], [0, 0, 1, 1], [], []>} : vector<256x288xf32>, vector<288x32xf32>, vector<256x32xf32> -> vector<256x32xf32>
      %c0_36 = arith.constant 0 : index
      %c0_37 = arith.constant 0 : index
      %101 = vector.load %arg9[%c0_36, %c0_37] : memref<1x32xf32, #tpu.memory_space<vmem>>, vector<1x32xf32>
      %102 = vector.broadcast %101 : vector<1x32xf32> to vector<256x32xf32>
      %103 = arith.addf %100, %102 : vector<256x32xf32>
      %cst_38 = arith.constant 0.000000e+00 : f32
      %104 = vector.broadcast %cst_38 : f32 to vector<256x32xf32>
      %105 = arith.maximumf %103, %104 : vector<256x32xf32>
      %cst_39 = arith.constant 0.000000e+00 : f32
      %106 = vector.broadcast %cst_39 : f32 to vector<16x32xf32>
      %107 = tpu.concatenate %106, %105, %106 in 0 : vector<16x32xf32>, vector<256x32xf32>, vector<16x32xf32> -> vector<288x32xf32>
      %c1_i32_40 = arith.constant 1 : i32
      %108 = tpu.dynamic_rotate %107 by %c1_i32_40 dim 0 : vector<288x32xf32>, i32 -> vector<288x32xf32>
      %109 = vector.extract_strided_slice %108 {offsets = [0, 0], sizes = [256, 32], strides = [1, 1]} : vector<288x32xf32> to vector<256x32xf32>
      %110 = vector.broadcast %3 : vector<256x1xf32> to vector<256x32xf32>
      %111 = arith.mulf %109, %110 : vector<256x32xf32>
      %112 = vector.extract_strided_slice %107 {offsets = [0, 0], sizes = [256, 32], strides = [1, 1]} : vector<288x32xf32> to vector<256x32xf32>
      %c287_i32_41 = arith.constant 287 : i32
      %113 = tpu.dynamic_rotate %107 by %c287_i32_41 dim 0 : vector<288x32xf32>, i32 -> vector<288x32xf32>
      %114 = vector.extract_strided_slice %113 {offsets = [0, 0], sizes = [256, 32], strides = [1, 1]} : vector<288x32xf32> to vector<256x32xf32>
      %115 = vector.broadcast %4 : vector<256x1xf32> to vector<256x32xf32>
      %116 = arith.mulf %114, %115 : vector<256x32xf32>
      %c273_i32_42 = arith.constant 273 : i32
      %117 = tpu.dynamic_rotate %107 by %c273_i32_42 dim 0 : vector<288x32xf32>, i32 -> vector<288x32xf32>
      %118 = vector.extract_strided_slice %117 {offsets = [0, 0], sizes = [256, 32], strides = [1, 1]} : vector<288x32xf32> to vector<256x32xf32>
      %119 = vector.broadcast %3 : vector<256x1xf32> to vector<256x32xf32>
      %120 = arith.mulf %118, %119 : vector<256x32xf32>
      %c272_i32_43 = arith.constant 272 : i32
      %121 = tpu.dynamic_rotate %107 by %c272_i32_43 dim 0 : vector<288x32xf32>, i32 -> vector<288x32xf32>
      %122 = vector.extract_strided_slice %121 {offsets = [0, 0], sizes = [256, 32], strides = [1, 1]} : vector<288x32xf32> to vector<256x32xf32>
      %c271_i32_44 = arith.constant 271 : i32
      %123 = tpu.dynamic_rotate %107 by %c271_i32_44 dim 0 : vector<288x32xf32>, i32 -> vector<288x32xf32>
      %124 = vector.extract_strided_slice %123 {offsets = [0, 0], sizes = [256, 32], strides = [1, 1]} : vector<288x32xf32> to vector<256x32xf32>
      %125 = vector.broadcast %4 : vector<256x1xf32> to vector<256x32xf32>
      %126 = arith.mulf %124, %125 : vector<256x32xf32>
      %c257_i32_45 = arith.constant 257 : i32
      %127 = tpu.dynamic_rotate %107 by %c257_i32_45 dim 0 : vector<288x32xf32>, i32 -> vector<288x32xf32>
      %128 = vector.extract_strided_slice %127 {offsets = [0, 0], sizes = [256, 32], strides = [1, 1]} : vector<288x32xf32> to vector<256x32xf32>
      %129 = vector.broadcast %3 : vector<256x1xf32> to vector<256x32xf32>
      %130 = arith.mulf %128, %129 : vector<256x32xf32>
      %c256_i32_46 = arith.constant 256 : i32
      %131 = tpu.dynamic_rotate %107 by %c256_i32_46 dim 0 : vector<288x32xf32>, i32 -> vector<288x32xf32>
      %132 = vector.extract_strided_slice %131 {offsets = [0, 0], sizes = [256, 32], strides = [1, 1]} : vector<288x32xf32> to vector<256x32xf32>
      %c255_i32_47 = arith.constant 255 : i32
      %133 = tpu.dynamic_rotate %107 by %c255_i32_47 dim 0 : vector<288x32xf32>, i32 -> vector<288x32xf32>
      %134 = vector.extract_strided_slice %133 {offsets = [0, 0], sizes = [256, 32], strides = [1, 1]} : vector<288x32xf32> to vector<256x32xf32>
      %135 = vector.broadcast %4 : vector<256x1xf32> to vector<256x32xf32>
      %136 = arith.mulf %134, %135 : vector<256x32xf32>
      %137 = tpu.concatenate %111, %112, %116, %120, %122, %126, %130, %132, %136 in 1 : vector<256x32xf32>, vector<256x32xf32>, vector<256x32xf32>, vector<256x32xf32>, vector<256x32xf32>, vector<256x32xf32>, vector<256x32xf32>, vector<256x32xf32>, vector<256x32xf32> -> vector<256x288xf32>
      %c0_48 = arith.constant 0 : index
      %c0_49 = arith.constant 0 : index
      %138 = vector.load %arg10[%c0_48, %c0_49] : memref<288x8xf32, #tpu.memory_space<vmem>>, vector<288x8xf32>
      %cst_50 = arith.constant dense<0.000000e+00> : vector<256x8xf32>
      %139 = tpu.matmul %137, %138, %cst_50 {dimension_numbers = #tpu.dot_dimension_numbers<[1], [0], [0], [1], [0, 0, 1, 1], [], []>} : vector<256x288xf32>, vector<288x8xf32>, vector<256x8xf32> -> vector<256x8xf32>
      %c0_51 = arith.constant 0 : index
      %c0_52 = arith.constant 0 : index
      %140 = vector.load %arg11[%c0_51, %c0_52] : memref<1x1xf32, #tpu.memory_space<vmem>>, vector<1x1xf32>
      %141 = vector.broadcast %140 : vector<1x1xf32> to vector<256x8xf32>
      %142 = arith.addf %139, %141 : vector<256x8xf32>
      %c0_53 = arith.constant 0 : index
      %c0_54 = arith.constant 0 : index
      %c0_55 = arith.constant 0 : index
      %143 = vector.load %arg12[%c0_53, %c0_54, %c0_55] : memref<1x256x8xf32, #tpu.memory_space<vmem>>, vector<1x256x8xf32>
      %144 = vector.shape_cast %143 : vector<1x256x8xf32> to vector<256x8xf32>
      %145 = vector.shape_cast %142 : vector<256x8xf32> to vector<1x256x8xf32>
      tpu.vector_store %arg12[%c0_53, %c0_54, %c0_55], %145 {strides = array<i32>} : memref<1x256x8xf32, #tpu.memory_space<vmem>>, vector<1x256x8xf32>,
    } else {
    }
    return
  }
  func.func @transform_0(%arg0: i32, %arg1: i32) -> (i32, i32, i32) {
    %c8_i32 = arith.constant 8 : i32
    %0 = arith.muli %arg0, %c8_i32 : i32
    %1 = arith.addi %0, %arg1 : i32
    %c0_i32 = arith.constant 0 : i32
    %c0_i32_0 = arith.constant 0 : i32
    %c0_i32_1 = arith.constant 0 : i32
    return %1, %c0_i32, %c0_i32_0 : i32, i32, i32
  }
  func.func @transform_1(%arg0: i32, %arg1: i32) -> (i32, i32) {
    %c0_i32 = arith.constant 0 : i32
    %c0_i32_0 = arith.constant 0 : i32
    %c0_i32_1 = arith.constant 0 : i32
    return %c0_i32, %c0_i32_0 : i32, i32
  }
  func.func @transform_2(%arg0: i32, %arg1: i32) -> (i32, i32) {
    %c0_i32 = arith.constant 0 : i32
    %c0_i32_0 = arith.constant 0 : i32
    %c0_i32_1 = arith.constant 0 : i32
    return %c0_i32, %c0_i32_0 : i32, i32
  }
  func.func @transform_3(%arg0: i32, %arg1: i32) -> (i32, i32) {
    %c0_i32 = arith.constant 0 : i32
    %c0_i32_0 = arith.constant 0 : i32
    %c0_i32_1 = arith.constant 0 : i32
    return %c0_i32, %c0_i32_0 : i32, i32
  }
  func.func @transform_4(%arg0: i32, %arg1: i32) -> (i32, i32) {
    %c0_i32 = arith.constant 0 : i32
    %c0_i32_0 = arith.constant 0 : i32
    %c0_i32_1 = arith.constant 0 : i32
    return %c0_i32, %c0_i32_0 : i32, i32
  }
  func.func @transform_5(%arg0: i32, %arg1: i32) -> (i32, i32) {
    %c0_i32 = arith.constant 0 : i32
    %c0_i32_0 = arith.constant 0 : i32
    %c0_i32_1 = arith.constant 0 : i32
    return %c0_i32, %c0_i32_0 : i32, i32
  }
  func.func @transform_6(%arg0: i32, %arg1: i32) -> (i32, i32) {
    %c0_i32 = arith.constant 0 : i32
    %c0_i32_0 = arith.constant 0 : i32
    %c0_i32_1 = arith.constant 0 : i32
    return %c0_i32, %c0_i32_0 : i32, i32
  }
  func.func @transform_7(%arg0: i32, %arg1: i32) -> (i32, i32) {
    %c0_i32 = arith.constant 0 : i32
    %c0_i32_0 = arith.constant 0 : i32
    %c0_i32_1 = arith.constant 0 : i32
    return %c0_i32, %c0_i32_0 : i32, i32
  }
  func.func @transform_8(%arg0: i32, %arg1: i32) -> (i32, i32) {
    %c0_i32 = arith.constant 0 : i32
    %c0_i32_0 = arith.constant 0 : i32
    %c0_i32_1 = arith.constant 0 : i32
    return %c0_i32, %c0_i32_0 : i32, i32
  }
  func.func @transform_9(%arg0: i32, %arg1: i32) -> (i32, i32) {
    %c0_i32 = arith.constant 0 : i32
    %c0_i32_0 = arith.constant 0 : i32
    %c0_i32_1 = arith.constant 0 : i32
    return %c0_i32, %c0_i32_0 : i32, i32
  }
  func.func @transform_10(%arg0: i32, %arg1: i32) -> (i32, i32, i32) {
    %c0_i32 = arith.constant 0 : i32
    %c0_i32_0 = arith.constant 0 : i32
    %c0_i32_1 = arith.constant 0 : i32
    return %arg0, %c0_i32, %c0_i32_0 : i32, i32, i32
  }
}

</mosaic_0001>

<llo_original>
// kernel: squeeze.1
$region0: #{squeeze.1}
  %s0 = inlined_call_operand.vmem [shape: f32[2,256], index: 0, kind: input, shape index: {}]
  %s1 = inlined_call_operand.hbm [shape: f32[2,1,16,16], index: 1, kind: output, shape index: {}]
  $region1: #{squeeze.1} parent=0
    #allocation0 [shape = 'u8[16384]{0}', space=vmem, size = 0x4000, scoped, tag = 'operand span for operand 1']
    #allocation1 [shape = 's32[1]{0}', space=sflag, size = 0x4, scoped, tag = 'scoped memory for squeeze.1']
    #allocation2 [shape = 'u8[8192]{0}', space=vmem, size = 0x2000, scoped, tag = 'scoped mem for input reshape']
    %2 = vsyncpa [#allocation1], 0
    %s4 = sshllo.u32 0, 2
    %s5 = scalar_lea.vmem %s0, 2
    %v6 = vld [vmem:[%s5] sm:%s4]
    %s7 = scalar_lea.vmem [#allocation2], 8
    %8 = vst [vmem:[%s7] sm:%s4] %v6
    %v9 = vld [vmem:[%s0] sm:%s4]
    %10 = vst [vmem:[#allocation2] sm:%s4] %v9
    %v11 = vld [vmem:[#allocation2] sm:$0x3]
    %vm12 = vcmask 130048
    %13 = vst.msk [vmem:[#allocation0] ss:$16 sm:$0x3] %vm12, %v11
    %s14 = scalar_lea.vmem [#allocation2], 8
    %v15 = vld [vmem:[%s14] sm:$0x3]
    %vm16 = vcmask 130048
    %s17 = scalar_lea.vmem [#allocation0], 8
    %18 = vst.msk [vmem:[%s17] ss:$16 sm:$0x3] %vm16, %v15
    %v19 = vld.sshfl [vmem:[#allocation2] sm:$0xff pattern:$0x99999180]
    %20 = vrot.lane.b32.xlu0 %v19, 112
    %v21 = vpop.permute.xlu0 %20
    %vm22 = vcmask 130048
    %s23 = scalar_lea.vmem [#allocation0], 1
    %24 = vst.msk [vmem:[%s23] ss:$8 sm:$0xf] %vm22, %v21
    %v25 = vld.sshfl [vmem:[#allocation2] sm:$0xff pattern:$0x99999180]
    %26 = vrot.lane.b32.xlu0 %v25, 96
    %v27 = vpop.permute.xlu0 %26
    %vm28 = vcmask 130048
    %s29 = scalar_lea.vmem [#allocation0], 2
    %30 = vst.msk [vmem:[%s29] ss:$8 sm:$0xf] %vm28, %v27
    %v31 = vld.sshfl [vmem:[#allocation2] sm:$0xff pattern:$0x99999180]
    %32 = vrot.lane.b32.xlu0 %v31, 80
    %v33 = vpop.permute.xlu0 %32
    %vm34 = vcmask 130048
    %s35 = scalar_lea.vmem [#allocation0], 3
    %36 = vst.msk [vmem:[%s35] ss:$8 sm:$0xf] %vm34, %v33
    %v37 = vld.sshfl [vmem:[#allocation2] sm:$0xff pattern:$0x99999180]
    %38 = vrot.lane.b32.xlu0 %v37, 64
    %v39 = vpop.permute.xlu0 %38
    %vm40 = vcmask 130048
    %s41 = scalar_lea.vmem [#allocation0], 4
    %42 = vst.msk [vmem:[%s41] ss:$8 sm:$0xf] %vm40, %v39
    %v43 = vld.sshfl [vmem:[#allocation2] sm:$0xff pattern:$0x99999180]
    %44 = vrot.lane.b32.xlu0 %v43, 48
    %v45 = vpop.permute.xlu0 %44
    %vm46 = vcmask 130048
    %s47 = scalar_lea.vmem [#allocation0], 5
    %48 = vst.msk [vmem:[%s47] ss:$8 sm:$0xf] %vm46, %v45
    %v49 = vld.sshfl [vmem:[#allocation2] sm:$0xff pattern:$0x99999180]
    %50 = vrot.lane.b32.xlu0 %v49, 32
    %v51 = vpop.permute.xlu0 %50
    %vm52 = vcmask 130048
    %s53 = scalar_lea.vmem [#allocation0], 6
    %54 = vst.msk [vmem:[%s53] ss:$8 sm:$0xf] %vm52, %v51
    %v55 = vld.sshfl [vmem:[#allocation2] sm:$0xff pattern:$0x99999180]
    %56 = vrot.lane.b32.xlu0 %v55, 16
    %v57 = vpop.permute.xlu0 %56
    %vm58 = vcmask 130048
    %s59 = scalar_lea.vmem [#allocation0], 7
    %60 = vst.msk [vmem:[%s59] ss:$8 sm:$0xf] %vm58, %v57
    %s62 = ssub.s32 512, 512
    %63 = vsyncadd [#allocation1], %s62
    %s65 = sshll.u32 [#allocation0], 4
    %s66 = int_to_ptr.vmem [resolvable:$true] %s65
    %68 = dma.vmem_to_hbm [thread:$0]  %s66, 512, %s1, [#allocation1]
    %69 = dma.done [#allocation1], 512
    %70 = vsyncpa [#allocation1], 1

// kernel: sea_ice_convlstm.1
$region0: #{sea_ice_convlstm.1}
  #allocation0 [shape = 'u32[]', space=smem, size = 0x4, offset = 0x4, fixed_abs, tag = 'smem constant byte address 0x4 - core index']
  #allocation1 [shape = 'u32[144,128]{1,0:T(1,128)}', space=vmem, size = 0x12000, scoped, tag = 'internal scratch']
  #allocation2 [shape = 'f32[288,32]{1,0:T(8,128)}', space=vmem, size = 0x24000, scoped, tag = 'scratch operand']
  #allocation3 [shape = 'f32[256,32]{1,0:T(8,128)}', space=vmem, size = 0x20000, scoped, tag = 'scratch operand']
  #allocation4 [shape = 'f32[1,1]{1,0:T(1,128)S(1)}', space=vmem, size = 0x200, scoped, tag = 'scoped memory for sea_ice_convlstm.1']
  %s0 = inlined_call_operand.vmem [shape: f32[16,256,36], index: 0, kind: input, shape index: {}]
  %s1 = inlined_call_operand.vmem [shape: f32[256,1], index: 1, kind: input, shape index: {}]
  %s2 = inlined_call_operand.vmem [shape: f32[256,1], index: 2, kind: input, shape index: {}]
  %s3 = inlined_call_operand.vmem [shape: f32[36,128], index: 3, kind: input, shape index: {}]
  %s4 = inlined_call_operand.vmem [shape: f32[288,128], index: 4, kind: input, shape index: {}]
  %s5 = inlined_call_operand.vmem [shape: f32[1,128], index: 5, kind: input, shape index: {}]
  %s6 = inlined_call_operand.vmem [shape: f32[288,32], index: 6, kind: input, shape index: {}]
  %s7 = inlined_call_operand.vmem [shape: f32[1,32], index: 7, kind: input, shape index: {}]
  %s8 = inlined_call_operand.vmem [shape: f32[288,8], index: 8, kind: input, shape index: {}]
  %s9 = inlined_call_operand.<no memory space> [shape: f32[1,1], index: 9, kind: input, shape index: {}]
  %s10 = inlined_call_operand.vmem [shape: f32[2,256,8], index: 10, kind: output, shape index: {}]
  %s11 = sld [smem:[#allocation0]]
  $region81: #{sea_ice_convlstm.1} parent=0
    _
  %s13 = ssub.s32 1, %s11
  %s14 = scalar_select 0, %s13, %s11
  %v15 = vstv %s9
  %16 = vst [vmem:[#allocation4] sm:$0x1] %v15
  loop: start=0, step=1, limit=18
  $region2: #{sea_ice_convlstm.1} parent=0 // loop_pre_header
    _
  $region3: #{sea_ice_convlstm.1} parent=0 // loop_header
    %s18 = sphi 0, %s22
    %p19 = scmp.ge.s32.totalorder %s18, 18
    %s25 = sphi 0, %s37
    %s26 = sphi 0, %s33
    %s27 = sphi 0, %s25
    %s28 = sphi 0, %s26
    %s29 = sphi 0, %s27
    %s30 = sphi 0, %s28
    %s44 = sphi 0, %s46
    %s47 = sphi 0, %s44
    %s48 = sphi 0, %s47
    %s64 = sphi 0, %s48
    %s68 = sphi 0, %s68
    %s70 = sphi 0, %s68
    %s71 = sphi 0, %s70
    %s85 = sphi 0, %s71
    %s89 = sphi 0, %s89
    %s91 = sphi 0, %s89
    %s92 = sphi 0, %s91
    %s106 = sphi 0, %s92
    %s110 = sphi 0, %s110
    %s112 = sphi 0, %s110
    %s113 = sphi 0, %s112
    %s127 = sphi 0, %s113
    %s131 = sphi 0, %s131
    %s133 = sphi 0, %s131
    %s134 = sphi 0, %s133
    %s148 = sphi 0, %s134
    %s152 = sphi 0, %s152
    %s154 = sphi 0, %s152
    %s155 = sphi 0, %s154
    %s169 = sphi 0, %s155
    %s173 = sphi 0, %s173
    %s175 = sphi 0, %s173
    %s176 = sphi 0, %s175
    %s190 = sphi 0, %s176
    %s194 = sphi 0, %s194
    %s196 = sphi 0, %s194
    %s197 = sphi 0, %s196
    %s211 = sphi 0, %s197
    %s215 = sphi 0, %s215
    %s217 = sphi 0, %s215
    %s218 = sphi 0, %s217
    %s232 = sphi 0, %s218
    %s236 = sphi 0, %s236
    %s238 = sphi 0, %s236
    %s239 = sphi 0, %s238
    %s253 = sphi 0, %s239
    %s259 = sphi 0, %s261
    %s262 = sphi 0, %s259
    %s263 = sphi 0, %s262
    %s279 = sphi 0, %s263
  $region4: #{sea_ice_convlstm.1} parent=0 // loop_header_branch
    %21 = sbr.rel (%p19) target = $region8
  $region5: #{sea_ice_convlstm.1} parent=0 // loop_body
    %s23 = ssub.s32 %s18, 1
    %s24 = ssub.s32 %s18, 2
    %s31 = sadd.s32 1, %s26
    %p32 = scmp.ge.s32.totalorder %s31, 8
    %s33 = scalar_select %p32, 0, %s31
    %s34 = sadd.s32 1, %s25
    %s35 = scalar_select %p32, %s34, %s25
    %p36 = scmp.ge.s32.totalorder %s35, 2
    %s37 = scalar_select %p36, 0, %s35
    %s38 = smul.u32 %s25, 8
    %s39 = sadd.s32 %s38, %s26
    %s40 = smul.u32 %s37, 8
    %s41 = sadd.s32 %s40, %s33
    %s42 = ssub.s32 %s39, %s41
    %p43 = scmp.eq.s32.totalorder %s42, 0
    %s45 = sadd.s32 %s44, 1
    %s46 = scalar_select %p43, %s44, %s45
    %p49 = pneg %p43
    %p50 = scmp.eq.s32.totalorder %s18, 15
    %p51 = por %p49, %p50
    %p52 = scmp.ne.s32.totalorder %s44, %s47
    %p53 = scmp.eq.s32.totalorder %s18, 0
    %p54 = por %p52, %p53
    %p55 = scmp.ne.s32.totalorder %s44, %s47
    %p56 = scmp.eq.s32.totalorder %s23, 15
    %p57 = por %p55, %p56
    %p58 = scmp.ne.s32.totalorder %s47, %s48
    %p59 = scmp.eq.s32.totalorder %s23, 0
    %p60 = por %p58, %p59
    %p61 = scmp.ne.s32.totalorder %s47, %s48
    %p62 = scmp.eq.s32.totalorder %s24, 15
    %p63 = por %p61, %p62
    %p65 = scmp.ne.s32.totalorder %s48, %s64
    %p66 = scmp.eq.s32.totalorder %s24, 0
    %p67 = por %p65, %p66
    %s69 = sadd.s32 %s68, 1
    %p72 = scmp.eq.s32.totalorder %s18, 15
    %p73 = scmp.ne.s32.totalorder %s68, %s70
    %p74 = scmp.eq.s32.totalorder %s18, 0
    %p75 = por %p73, %p74
    %p76 = scmp.ne.s32.totalorder %s68, %s70
    %p77 = scmp.eq.s32.totalorder %s23, 15
    %p78 = por %p76, %p77
    %p79 = scmp.ne.s32.totalorder %s70, %s71
    %p80 = scmp.eq.s32.totalorder %s23, 0
    %p81 = por %p79, %p80
    %p82 = scmp.ne.s32.totalorder %s70, %s71
    %p83 = scmp.eq.s32.totalorder %s24, 15
    %p84 = por %p82, %p83
    %p86 = scmp.ne.s32.totalorder %s71, %s85
    %p87 = scmp.eq.s32.totalorder %s24, 0
    %p88 = por %p86, %p87
    %s90 = sadd.s32 %s89, 1
    %p93 = scmp.eq.s32.totalorder %s18, 15
    %p94 = scmp.ne.s32.totalorder %s89, %s91
    %p95 = scmp.eq.s32.totalorder %s18, 0
    %p96 = por %p94, %p95
    %p97 = scmp.ne.s32.totalorder %s89, %s91
    %p98 = scmp.eq.s32.totalorder %s23, 15
    %p99 = por %p97, %p98
    %p100 = scmp.ne.s32.totalorder %s91, %s92
    %p101 = scmp.eq.s32.totalorder %s23, 0
    %p102 = por %p100, %p101
    %p103 = scmp.ne.s32.totalorder %s91, %s92
    %p104 = scmp.eq.s32.totalorder %s24, 15
    %p105 = por %p103, %p104
    %p107 = scmp.ne.s32.totalorder %s92, %s106
    %p108 = scmp.eq.s32.totalorder %s24, 0
    %p109 = por %p107, %p108
    %s111 = sadd.s32 %s110, 1
    %p114 = scmp.eq.s32.totalorder %s18, 15
    %p115 = scmp.ne.s32.totalorder %s110, %s112
    %p116 = scmp.eq.s32.totalorder %s18, 0
    %p117 = por %p115, %p116
    %p118 = scmp.ne.s32.totalorder %s110, %s112
    %p119 = scmp.eq.s32.totalorder %s23, 15
    %p120 = por %p118, %p119
    %p121 = scmp.ne.s32.totalorder %s112, %s113
    %p122 = scmp.eq.s32.totalorder %s23, 0
    %p123 = por %p121, %p122
    %p124 = scmp.ne.s32.totalorder %s112, %s113
    %p125 = scmp.eq.s32.totalorder %s24, 15
    %p126 = por %p124, %p125
    %p128 = scmp.ne.s32.totalorder %s113, %s127
    %p129 = scmp.eq.s32.totalorder %s24, 0
    %p130 = por %p128, %p129
    %s132 = sadd.s32 %s131, 1
    %p135 = scmp.eq.s32.totalorder %s18, 15
    %p136 = scmp.ne.s32.totalorder %s131, %s133
    %p137 = scmp.eq.s32.totalorder %s18, 0
    %p138 = por %p136, %p137
    %p139 = scmp.ne.s32.totalorder %s131, %s133
    %p140 = scmp.eq.s32.totalorder %s23, 15
    %p141 = por %p139, %p140
    %p142 = scmp.ne.s32.totalorder %s133, %s134
    %p143 = scmp.eq.s32.totalorder %s23, 0
    %p144 = por %p142, %p143
    %p145 = scmp.ne.s32.totalorder %s133, %s134
    %p146 = scmp.eq.s32.totalorder %s24, 15
    %p147 = por %p145, %p146
    %p149 = scmp.ne.s32.totalorder %s134, %s148
    %p150 = scmp.eq.s32.totalorder %s24, 0
    %p151 = por %p149, %p150
    %s153 = sadd.s32 %s152, 1
    %p156 = scmp.eq.s32.totalorder %s18, 15
    %p157 = scmp.ne.s32.totalorder %s152, %s154
    %p158 = scmp.eq.s32.totalorder %s18, 0
    %p159 = por %p157, %p158
    %p160 = scmp.ne.s32.totalorder %s152, %s154
    %p161 = scmp.eq.s32.totalorder %s23, 15
    %p162 = por %p160, %p161
    %p163 = scmp.ne.s32.totalorder %s154, %s155
    %p164 = scmp.eq.s32.totalorder %s23, 0
    %p165 = por %p163, %p164
    %p166 = scmp.ne.s32.totalorder %s154, %s155
    %p167 = scmp.eq.s32.totalorder %s24, 15
    %p168 = por %p166, %p167
    %p170 = scmp.ne.s32.totalorder %s155, %s169
    %p171 = scmp.eq.s32.totalorder %s24, 0
    %p172 = por %p170, %p171
    %s174 = sadd.s32 %s173, 1
    %p177 = scmp.eq.s32.totalorder %s18, 15
    %p178 = scmp.ne.s32.totalorder %s173, %s175
    %p179 = scmp.eq.s32.totalorder %s18, 0
    %p180 = por %p178, %p179
    %p181 = scmp.ne.s32.totalorder %s173, %s175
    %p182 = scmp.eq.s32.totalorder %s23, 15
    %p183 = por %p181, %p182
    %p184 = scmp.ne.s32.totalorder %s175, %s176
    %p185 = scmp.eq.s32.totalorder %s23, 0
    %p186 = por %p184, %p185
    %p187 = scmp.ne.s32.totalorder %s175, %s176
    %p188 = scmp.eq.s32.totalorder %s24, 15
    %p189 = por %p187, %p188
    %p191 = scmp.ne.s32.totalorder %s176, %s190
    %p192 = scmp.eq.s32.totalorder %s24, 0
    %p193 = por %p191, %p192
    %s195 = sadd.s32 %s194, 1
    %p198 = scmp.eq.s32.totalorder %s18, 15
    %p199 = scmp.ne.s32.totalorder %s194, %s196
    %p200 = scmp.eq.s32.totalorder %s18, 0
    %p201 = por %p199, %p200
    %p202 = scmp.ne.s32.totalorder %s194, %s196
    %p203 = scmp.eq.s32.totalorder %s23, 15
    %p204 = por %p202, %p203
    %p205 = scmp.ne.s32.totalorder %s196, %s197
    %p206 = scmp.eq.s32.totalorder %s23, 0
    %p207 = por %p205, %p206
    %p208 = scmp.ne.s32.totalorder %s196, %s197
    %p209 = scmp.eq.s32.totalorder %s24, 15
    %p210 = por %p208, %p209
    %p212 = scmp.ne.s32.totalorder %s197, %s211
    %p213 = scmp.eq.s32.totalorder %s24, 0
    %p214 = por %p212, %p213
    %s216 = sadd.s32 %s215, 1
    %p219 = scmp.eq.s32.totalorder %s18, 15
    %p220 = scmp.ne.s32.totalorder %s215, %s217
    %p221 = scmp.eq.s32.totalorder %s18, 0
    %p222 = por %p220, %p221
    %p223 = scmp.ne.s32.totalorder %s215, %s217
    %p224 = scmp.eq.s32.totalorder %s23, 15
    %p225 = por %p223, %p224
    %p226 = scmp.ne.s32.totalorder %s217, %s218
    %p227 = scmp.eq.s32.totalorder %s23, 0
    %p228 = por %p226, %p227
    %p229 = scmp.ne.s32.totalorder %s217, %s218
    %p230 = scmp.eq.s32.totalorder %s24, 15
    %p231 = por %p229, %p230
    %p233 = scmp.ne.s32.totalorder %s218, %s232
    %p234 = scmp.eq.s32.totalorder %s24, 0
    %p235 = por %p233, %p234
    %s237 = sadd.s32 %s236, 1
    %p240 = scmp.eq.s32.totalorder %s18, 15
    %p241 = scmp.ne.s32.totalorder %s236, %s238
    %p242 = scmp.eq.s32.totalorder %s18, 0
    %p243 = por %p241, %p242
    %p244 = scmp.ne.s32.totalorder %s236, %s238
    %p245 = scmp.eq.s32.totalorder %s23, 15
    %p246 = por %p244, %p245
    %p247 = scmp.ne.s32.totalorder %s238, %s239
    %p248 = scmp.eq.s32.totalorder %s23, 0
    %p249 = por %p247, %p248
    %p250 = scmp.ne.s32.totalorder %s238, %s239
    %p251 = scmp.eq.s32.totalorder %s24, 15
    %p252 = por %p250, %p251
    %p254 = scmp.ne.s32.totalorder %s239, %s253
    %p255 = scmp.eq.s32.totalorder %s24, 0
    %p256 = por %p254, %p255
    %s257 = ssub.s32 %s25, %s37
    %p258 = scmp.eq.s32.totalorder %s257, 0
    %s260 = sadd.s32 %s259, 1
    %s261 = scalar_select %p258, %s259, %s260
    %p264 = pneg %p258
    %p265 = scmp.eq.s32.totalorder %s18, 15
    %p266 = por %p264, %p265
    %p267 = scmp.ne.s32.totalorder %s259, %s262
    %p268 = scmp.eq.s32.totalorder %s18, 0
    %p269 = por %p267, %p268
    %p270 = scmp.ne.s32.totalorder %s259, %s262
    %p271 = scmp.eq.s32.totalorder %s23, 15
    %p272 = por %p270, %p271
    %p273 = scmp.ne.s32.totalorder %s262, %s263
    %p274 = scmp.eq.s32.totalorder %s23, 0
    %p275 = por %p273, %p274
    %p276 = scmp.ne.s32.totalorder %s262, %s263
    %p277 = scmp.eq.s32.totalorder %s24, 15
    %p278 = por %p276, %p277
    %p280 = scmp.ne.s32.totalorder %s263, %s279
    %p281 = scmp.eq.s32.totalorder %s24, 0
    %p282 = por %p280, %p281
    %p283 = scmp.le.s32.totalorder 1, %s18
    %p284 = scmp.lt.s32.totalorder %s18, 17
    %p285 = pnand %p283, %p284
    %p286 = pneg %p285
    // Predicated region
    $region9: #{sea_ice_convlstm.1} parent=5 // pred_check
      _
    $region10: #{sea_ice_convlstm.1} parent=5 // pred_check_branch
      %288 = sbr.rel (%p285) target = $region12
    $region11: #{sea_ice_convlstm.1} parent=5 // pred_region
      %s289 = ssub.s32 %s18, 1
      // Predicated region
      $region13: #{sea_ice_convlstm.1} parent=11 // pred_check
        %p290 = pneg %p81
      $region14: #{sea_ice_convlstm.1} parent=11 // pred_check_branch
        %292 = sbr.rel (%p290) target = $region16
      $region15: #{sea_ice_convlstm.1} parent=11 // pred_region
        _
      $region16: #{sea_ice_convlstm.1} parent=11 // pred_fallthru
        _
      // Predicated region
      $region17: #{sea_ice_convlstm.1} parent=11 // pred_check
        %p293 = pneg %p102
      $region18: #{sea_ice_convlstm.1} parent=11 // pred_check_branch
        %295 = sbr.rel (%p293) target = $region20
      $region19: #{sea_ice_convlstm.1} parent=11 // pred_region
        _
      $region20: #{sea_ice_convlstm.1} parent=11 // pred_fallthru
        _
      // Predicated region
      $region21: #{sea_ice_convlstm.1} parent=11 // pred_check
        %p296 = pneg %p123
      $region22: #{sea_ice_convlstm.1} parent=11 // pred_check_branch
        %298 = sbr.rel (%p296) target = $region24
      $region23: #{sea_ice_convlstm.1} parent=11 // pred_region
        _
      $region24: #{sea_ice_convlstm.1} parent=11 // pred_fallthru
        _
      // Predicated region
      $region25: #{sea_ice_convlstm.1} parent=11 // pred_check
        %p299 = pneg %p144
      $region26: #{sea_ice_convlstm.1} parent=11 // pred_check_branch
        %301 = sbr.rel (%p299) target = $region28
      $region27: #{sea_ice_convlstm.1} parent=11 // pred_region
        _
      $region28: #{sea_ice_convlstm.1} parent=11 // pred_fallthru
        _
      // Predicated region
      $region29: #{sea_ice_convlstm.1} parent=11 // pred_check
        %p302 = pneg %p165
      $region30: #{sea_ice_convlstm.1} parent=11 // pred_check_branch
        %304 = sbr.rel (%p302) target = $region32
      $region31: #{sea_ice_convlstm.1} parent=11 // pred_region
        _
      $region32: #{sea_ice_convlstm.1} parent=11 // pred_fallthru
        _
      // Predicated region
      $region33: #{sea_ice_convlstm.1} parent=11 // pred_check
        %p305 = pneg %p186
      $region34: #{sea_ice_convlstm.1} parent=11 // pred_check_branch
        %307 = sbr.rel (%p305) target = $region36
      $region35: #{sea_ice_convlstm.1} parent=11 // pred_region
        _
      $region36: #{sea_ice_convlstm.1} parent=11 // pred_fallthru
        _
      // Predicated region
      $region37: #{sea_ice_convlstm.1} parent=11 // pred_check
        %p308 = pneg %p207
      $region38: #{sea_ice_convlstm.1} parent=11 // pred_check_branch
        %310 = sbr.rel (%p308) target = $region40
      $region39: #{sea_ice_convlstm.1} parent=11 // pred_region
        _
      $region40: #{sea_ice_convlstm.1} parent=11 // pred_fallthru
        _
      // Predicated region
      $region41: #{sea_ice_convlstm.1} parent=11 // pred_check
        %p311 = pneg %p228
      $region42: #{sea_ice_convlstm.1} parent=11 // pred_check_branch
        %313 = sbr.rel (%p311) target = $region44
      $region43: #{sea_ice_convlstm.1} parent=11 // pred_region
        _
      $region44: #{sea_ice_convlstm.1} parent=11 // pred_fallthru
        _
      // Predicated region
      $region45: #{sea_ice_convlstm.1} parent=11 // pred_check
        %p314 = pneg %p249
      $region46: #{sea_ice_convlstm.1} parent=11 // pred_check_branch
        %316 = sbr.rel (%p314) target = $region48
      $region47: #{sea_ice_convlstm.1} parent=11 // pred_region
        _
      $region48: #{sea_ice_convlstm.1} parent=11 // pred_fallthru
        _
    $region12: #{sea_ice_convlstm.1} parent=5 // pred_fallthru
      _
    %p317 = scmp.lt.s32.totalorder %s18, 16
    // Predicated region
    $region49: #{sea_ice_convlstm.1} parent=5 // pred_check
      %p318 = pneg %p317
    $region50: #{sea_ice_convlstm.1} parent=5 // pred_check_branch
      %320 = sbr.rel (%p318) target = $region52
    $region51: #{sea_ice_convlstm.1} parent=5 // pred_region
      // Predicated region
      $region53: #{sea_ice_convlstm.1} parent=51 // pred_check
        %p321 = pneg %p54
      $region54: #{sea_ice_convlstm.1} parent=51 // pred_check_branch
        %323 = sbr.rel (%p321) target = $region56
      $region55: #{sea_ice_convlstm.1} parent=51 // pred_region
        %s324 = smul.u32 %s25, 8
        %s325 = sadd.s32 %s324, %s26
        %p326 = scmp.lt.s32.totalorder %s325, 15
        %s327 = scalar_select %p326, %s325, 15
        %s328 = smul.addr %s327, 32
        %s329 = smul.addr %s328, 8
        %s330 = scalar_lea.vmem %s0, %s329
        %s331 = smul.u32 %s25, 8
        %s332 = sadd.s32 %s331, %s26
      $region56: #{sea_ice_convlstm.1} parent=51 // pred_fallthru
        _
    $region52: #{sea_ice_convlstm.1} parent=5 // pred_fallthru
      _
    %p333 = scmp.le.s32.totalorder 1, %s18
    %p334 = scmp.lt.s32.totalorder %s18, 17
    %p335 = pnand %p333, %p334
    %p336 = pneg %p335
    // Predicated region
    $region57: #{sea_ice_convlstm.1} parent=5 // pred_check
      _
    $region58: #{sea_ice_convlstm.1} parent=5 // pred_check_branch
      %338 = sbr.rel (%p335) target = $region60
    $region59: #{sea_ice_convlstm.1} parent=5 // pred_region
      %s339 = ssub.s32 %s18, 1
      %s340 = smul.u32 %s27, 8
      %s341 = sadd.s32 %s340, %s28
      %p342 = scmp.lt.s32.totalorder %s341, 15
      %s343 = scalar_select %p342, %s341, 15
      %s344 = smul.addr %s343, 32
      %s345 = smul.addr %s344, 8
      %s346 = scalar_lea.vmem %s0, %s345
      %p347 = pneg %p60
      %p348 = pneg %p57
      %p349 = pneg %p81
      %p350 = pneg %p78
      %p351 = pneg %p102
      %p352 = pneg %p99
      %p353 = pneg %p123
      %p354 = pneg %p120
      %p355 = pneg %p144
      %p356 = pneg %p141
      %p357 = pneg %p165
      %p358 = pneg %p162
      %p359 = pneg %p186
      %p360 = pneg %p183
      %p361 = pneg %p207
      %p362 = pneg %p204
      %p363 = pneg %p228
      %p364 = pneg %p225
      %p365 = pneg %p249
      %p366 = pneg %p246
      %p367 = pneg %p275
      %p368 = pneg %p272
      %p369 = scmp.lt.s32.totalorder %s27, 1
      %s370 = scalar_select %p369, %s27, 1
      %s371 = smul.addr %s370, 32
      %s372 = smul.addr %s371, 8
      %s373 = scalar_lea.vmem %s10, %s372
      %s374 = smul.u32 %s27, 8
      %s375 = sadd.s32 %s374, %s28
      %p376 = scmp.lt.s32.totalorder %s375, 15
      %s377 = scalar_select %p376, %s375, 15
      %s378 = smul.addr %s377, 32
      %s379 = smul.addr %s378, 8
      %s380 = scalar_lea.vmem %s0, %s379
      %s381 = smul.u32 %s27, 8
      %s382 = sadd.s32 %s381, %s28
      %p383 = scmp.lt.s32.totalorder %s27, 1
      %s384 = scalar_select %p383, %s27, 1
      %s385 = smul.addr %s384, 32
      %s386 = smul.addr %s385, 8
      %s387 = scalar_lea.vmem %s10, %s386
      %p388 = scmp.eq.s32.totalorder %s28, 0
      // Predicated region
      $region61: #{sea_ice_convlstm.1} parent=59 // pred_check
        %p389 = pneg %p388
      $region62: #{sea_ice_convlstm.1} parent=59 // pred_check_branch
        %391 = sbr.rel (%p389) target = $region64
      $region63: #{sea_ice_convlstm.1} parent=59 // pred_region
        %vm392 = vcmask 261120
        %393 = vst.msk [vmem:[#allocation2] sm:$0xff] %vm392, 0.0
        %394 = vst.msk [vmem:[#allocation2 + $0x8] sm:$0xff] %vm392, 0.0
        %395 = vst.msk [vmem:[#allocation2 + $0x10] sm:$0xff] %vm392, 0.0
        %396 = vst.msk [vmem:[#allocation2 + $0x18] sm:$0xff] %vm392, 0.0
        %397 = vst.msk [vmem:[#allocation2 + $0x20] sm:$0xff] %vm392, 0.0
        %398 = vst.msk [vmem:[#allocation2 + $0x28] sm:$0xff] %vm392, 0.0
        %399 = vst.msk [vmem:[#allocation2 + $0x30] sm:$0xff] %vm392, 0.0
        %400 = vst.msk [vmem:[#allocation2 + $0x38] sm:$0xff] %vm392, 0.0
        %401 = vst.msk [vmem:[#allocation2 + $0x40] sm:$0xff] %vm392, 0.0
        %402 = vst.msk [vmem:[#allocation2 + $0x48] sm:$0xff] %vm392, 0.0
        %403 = vst.msk [vmem:[#allocation2 + $0x50] sm:$0xff] %vm392, 0.0
        %404 = vst.msk [vmem:[#allocation2 + $0x58] sm:$0xff] %vm392, 0.0
        %405 = vst.msk [vmem:[#allocation2 + $0x60] sm:$0xff] %vm392, 0.0
        %406 = vst.msk [vmem:[#allocation2 + $0x68] sm:$0xff] %vm392, 0.0
        %407 = vst.msk [vmem:[#allocation2 + $0x70] sm:$0xff] %vm392, 0.0
        %408 = vst.msk [vmem:[#allocation2 + $0x78] sm:$0xff] %vm392, 0.0
        %409 = vst.msk [vmem:[#allocation2 + $0x80] sm:$0xff] %vm392, 0.0
        %410 = vst.msk [vmem:[#allocation2 + $0x88] sm:$0xff] %vm392, 0.0
        %411 = vst.msk [vmem:[#allocation2 + $0x90] sm:$0xff] %vm392, 0.0
        %412 = vst.msk [vmem:[#allocation2 + $0x98] sm:$0xff] %vm392, 0.0
        %413 = vst.msk [vmem:[#allocation2 + $0xa0] sm:$0xff] %vm392, 0.0
        %414 = vst.msk [vmem:[#allocation2 + $0xa8] sm:$0xff] %vm392, 0.0
        %415 = vst.msk [vmem:[#allocation2 + $0xb0] sm:$0xff] %vm392, 0.0
        %416 = vst.msk [vmem:[#allocation2 + $0xb8] sm:$0xff] %vm392, 0.0
        %417 = vst.msk [vmem:[#allocation2 + $0xc0] sm:$0xff] %vm392, 0.0
        %418 = vst.msk [vmem:[#allocation2 + $0xc8] sm:$0xff] %vm392, 0.0
        %419 = vst.msk [vmem:[#allocation2 + $0xd0] sm:$0xff] %vm392, 0.0
        %420 = vst.msk [vmem:[#allocation2 + $0xd8] sm:$0xff] %vm392, 0.0
        %421 = vst.msk [vmem:[#allocation2 + $0xe0] sm:$0xff] %vm392, 0.0
        %422 = vst.msk [vmem:[#allocation2 + $0xe8] sm:$0xff] %vm392, 0.0
        %423 = vst.msk [vmem:[#allocation2 + $0xf0] sm:$0xff] %vm392, 0.0
        %424 = vst.msk [vmem:[#allocation2 + $0xf8] sm:$0xff] %vm392, 0.0
        %425 = vst.msk [vmem:[#allocation2 + $0x100] sm:$0xff] %vm392, 0.0
        %426 = vst.msk [vmem:[#allocation2 + $0x108] sm:$0xff] %vm392, 0.0
        %427 = vst.msk [vmem:[#allocation2 + $0x110] sm:$0xff] %vm392, 0.0
        %428 = vst.msk [vmem:[#allocation2 + $0x118] sm:$0xff] %vm392, 0.0
        %429 = vst.msk [vmem:[#allocation3] sm:$0xff] %vm392, 0.0
        %430 = vst.msk [vmem:[#allocation3 + $0x8] sm:$0xff] %vm392, 0.0
        %431 = vst.msk [vmem:[#allocation3 + $0x10] sm:$0xff] %vm392, 0.0
        %432 = vst.msk [vmem:[#allocation3 + $0x18] sm:$0xff] %vm392, 0.0
        %433 = vst.msk [vmem:[#allocation3 + $0x20] sm:$0xff] %vm392, 0.0
        %434 = vst.msk [vmem:[#allocation3 + $0x28] sm:$0xff] %vm392, 0.0
        %435 = vst.msk [vmem:[#allocation3 + $0x30] sm:$0xff] %vm392, 0.0
        %436 = vst.msk [vmem:[#allocation3 + $0x38] sm:$0xff] %vm392, 0.0
        %437 = vst.msk [vmem:[#allocation3 + $0x40] sm:$0xff] %vm392, 0.0
        %438 = vst.msk [vmem:[#allocation3 + $0x48] sm:$0xff] %vm392, 0.0
        %439 = vst.msk [vmem:[#allocation3 + $0x50] sm:$0xff] %vm392, 0.0
        %440 = vst.msk [vmem:[#allocation3 + $0x58] sm:$0xff] %vm392, 0.0
        %441 = vst.msk [vmem:[#allocation3 + $0x60] sm:$0xff] %vm392, 0.0
        %442 = vst.msk [vmem:[#allocation3 + $0x68] sm:$0xff] %vm392, 0.0
        %443 = vst.msk [vmem:[#allocation3 + $0x70] sm:$0xff] %vm392, 0.0
        %444 = vst.msk [vmem:[#allocation3 + $0x78] sm:$0xff] %vm392, 0.0
        %445 = vst.msk [vmem:[#allocation3 + $0x80] sm:$0xff] %vm392, 0.0
        %446 = vst.msk [vmem:[#allocation3 + $0x88] sm:$0xff] %vm392, 0.0
        %447 = vst.msk [vmem:[#allocation3 + $0x90] sm:$0xff] %vm392, 0.0
        %448 = vst.msk [vmem:[#allocation3 + $0x98] sm:$0xff] %vm392, 0.0
        %449 = vst.msk [vmem:[#allocation3 + $0xa0] sm:$0xff] %vm392, 0.0
        %450 = vst.msk [vmem:[#allocation3 + $0xa8] sm:$0xff] %vm392, 0.0
        %451 = vst.msk [vmem:[#allocation3 + $0xb0] sm:$0xff] %vm392, 0.0
        %452 = vst.msk [vmem:[#allocation3 + $0xb8] sm:$0xff] %vm392, 0.0
        %453 = vst.msk [vmem:[#allocation3 + $0xc0] sm:$0xff] %vm392, 0.0
        %454 = vst.msk [vmem:[#allocation3 + $0xc8] sm:$0xff] %vm392, 0.0
        %455 = vst.msk [vmem:[#allocation3 + $0xd0] sm:$0xff] %vm392, 0.0
        %456 = vst.msk [vmem:[#allocation3 + $0xd8] sm:$0xff] %vm392, 0.0
        %457 = vst.msk [vmem:[#allocation3 + $0xe0] sm:$0xff] %vm392, 0.0
        %458 = vst.msk [vmem:[#allocation3 + $0xe8] sm:$0xff] %vm392, 0.0
        %459 = vst.msk [vmem:[#allocation3 + $0xf0] sm:$0xff] %vm392, 0.0
        %460 = vst.msk [vmem:[#allocation3 + $0xf8] sm:$0xff] %vm392, 0.0
      $region64: #{sea_ice_convlstm.1} parent=59 // pred_fallthru
        _
      %v461 = vld [vmem:[%s1] sm:$0xff]
      %v462 = vld [vmem:[%s1 + $0x8] sm:$0xff]
      %v463 = vld [vmem:[%s1 + $0x10] sm:$0xff]
      %v464 = vld [vmem:[%s1 + $0x18] sm:$0xff]
      %v465 = vld [vmem:[%s1 + $0x20] sm:$0xff]
      %v466 = vld [vmem:[%s1 + $0x28] sm:$0xff]
      %v467 = vld [vmem:[%s1 + $0x30] sm:$0xff]
      %v468 = vld [vmem:[%s1 + $0x38] sm:$0xff]
      %v469 = vld [vmem:[%s1 + $0x40] sm:$0xff]
      %v470 = vld [vmem:[%s1 + $0x48] sm:$0xff]
      %v471 = vld [vmem:[%s1 + $0x50] sm:$0xff]
      %v472 = vld [vmem:[%s1 + $0x58] sm:$0xff]
      %v473 = vld [vmem:[%s1 + $0x60] sm:$0xff]
      %v474 = vld [vmem:[%s1 + $0x68] sm:$0xff]
      %v475 = vld [vmem:[%s1 + $0x70] sm:$0xff]
      %v476 = vld [vmem:[%s1 + $0x78] sm:$0xff]
      %v477 = vld [vmem:[%s1 + $0x80] sm:$0xff]
      %v478 = vld [vmem:[%s1 + $0x88] sm:$0xff]
      %v479 = vld [vmem:[%s1 + $0x90] sm:$0xff]
      %v480 = vld [vmem:[%s1 + $0x98] sm:$0xff]
      %v481 = vld [vmem:[%s1 + $0xa0] sm:$0xff]
      %v482 = vld [vmem:[%s1 + $0xa8] sm:$0xff]
      %v483 = vld [vmem:[%s1 + $0xb0] sm:$0xff]
      %v484 = vld [vmem:[%s1 + $0xb8] sm:$0xff]
      %v485 = vld [vmem:[%s1 + $0xc0] sm:$0xff]
      %v486 = vld [vmem:[%s1 + $0xc8] sm:$0xff]
      %v487 = vld [vmem:[%s1 + $0xd0] sm:$0xff]
      %v488 = vld [vmem:[%s1 + $0xd8] sm:$0xff]
      %v489 = vld [vmem:[%s1 + $0xe0] sm:$0xff]
      %v490 = vld [vmem:[%s1 + $0xe8] sm:$0xff]
      %v491 = vld [vmem:[%s1 + $0xf0] sm:$0xff]
      %v492 = vld [vmem:[%s1 + $0xf8] sm:$0xff]
      %v493 = vld [vmem:[%s2] sm:$0xff]
      %v494 = vld [vmem:[%s2 + $0x8] sm:$0xff]
      %v495 = vld [vmem:[%s2 + $0x10] sm:$0xff]
      %v496 = vld [vmem:[%s2 + $0x18] sm:$0xff]
      %v497 = vld [vmem:[%s2 + $0x20] sm:$0xff]
      %v498 = vld [vmem:[%s2 + $0x28] sm:$0xff]
      %v499 = vld [vmem:[%s2 + $0x30] sm:$0xff]
      %v500 = vld [vmem:[%s2 + $0x38] sm:$0xff]
      %v501 = vld [vmem:[%s2 + $0x40] sm:$0xff]
      %v502 = vld [vmem:[%s2 + $0x48] sm:$0xff]
      %v503 = vld [vmem:[%s2 + $0x50] sm:$0xff]
      %v504 = vld [vmem:[%s2 + $0x58] sm:$0xff]
      %v505 = vld [vmem:[%s2 + $0x60] sm:$0xff]
      %v506 = vld [vmem:[%s2 + $0x68] sm:$0xff]
      %v507 = vld [vmem:[%s2 + $0x70] sm:$0xff]
      %v508 = vld [vmem:[%s2 + $0x78] sm:$0xff]
      %v509 = vld [vmem:[%s2 + $0x80] sm:$0xff]
      %v510 = vld [vmem:[%s2 + $0x88] sm:$0xff]
      %v511 = vld [vmem:[%s2 + $0x90] sm:$0xff]
      %v512 = vld [vmem:[%s2 + $0x98] sm:$0xff]
      %v513 = vld [vmem:[%s2 + $0xa0] sm:$0xff]
      %v514 = vld [vmem:[%s2 + $0xa8] sm:$0xff]
      %v515 = vld [vmem:[%s2 + $0xb0] sm:$0xff]
      %v516 = vld [vmem:[%s2 + $0xb8] sm:$0xff]
      %v517 = vld [vmem:[%s2 + $0xc0] sm:$0xff]
      %v518 = vld [vmem:[%s2 + $0xc8] sm:$0xff]
      %v519 = vld [vmem:[%s2 + $0xd0] sm:$0xff]
      %v520 = vld [vmem:[%s2 + $0xd8] sm:$0xff]
      %v521 = vld [vmem:[%s2 + $0xe0] sm:$0xff]
      %v522 = vld [vmem:[%s2 + $0xe8] sm:$0xff]
      %v523 = vld [vmem:[%s2 + $0xf0] sm:$0xff]
      %v524 = vld [vmem:[%s2 + $0xf8] sm:$0xff]
      %v525 = vld [vmem:[#allocation2] sm:$0xff]
      %v526 = vld [vmem:[#allocation2 + $0x8] sm:$0xff]
      %v527 = vld [vmem:[#allocation2 + $0x10] sm:$0xff]
      %v528 = vld [vmem:[#allocation2 + $0x18] sm:$0xff]
      %v529 = vld [vmem:[#allocation2 + $0x20] sm:$0xff]
      %v530 = vld [vmem:[#allocation2 + $0x28] sm:$0xff]
      %v531 = vld [vmem:[#allocation2 + $0x30] sm:$0xff]
      %v532 = vld [vmem:[#allocation2 + $0x38] sm:$0xff]
      %v533 = vld [vmem:[#allocation2 + $0x40] sm:$0xff]
      %v534 = vld [vmem:[#allocation2 + $0x48] sm:$0xff]
      %v535 = vld [vmem:[#allocation2 + $0x50] sm:$0xff]
      %v536 = vld [vmem:[#allocation2 + $0x58] sm:$0xff]
      %v537 = vld [vmem:[#allocation2 + $0x60] sm:$0xff]
      %v538 = vld [vmem:[#allocation2 + $0x68] sm:$0xff]
      %v539 = vld [vmem:[#allocation2 + $0x70] sm:$0xff]
      %v540 = vld [vmem:[#allocation2 + $0x78] sm:$0xff]
      %v541 = vld [vmem:[#allocation2 + $0x80] sm:$0xff]
      %v542 = vld [vmem:[#allocation2 + $0x88] sm:$0xff]
      %v543 = vld [vmem:[#allocation2 + $0x90] sm:$0xff]
      %v544 = vld [vmem:[#allocation2 + $0x98] sm:$0xff]
      %v545 = vld [vmem:[#allocation2 + $0xa0] sm:$0xff]
      %v546 = vld [vmem:[#allocation2 + $0xa8] sm:$0xff]
      %v547 = vld [vmem:[#allocation2 + $0xb0] sm:$0xff]
      %v548 = vld [vmem:[#allocation2 + $0xb8] sm:$0xff]
      %v549 = vld [vmem:[#allocation2 + $0xc0] sm:$0xff]
      %v550 = vld [vmem:[#allocation2 + $0xc8] sm:$0xff]
      %v551 = vld [vmem:[#allocation2 + $0xd0] sm:$0xff]
      %v552 = vld [vmem:[#allocation2 + $0xd8] sm:$0xff]
      %v553 = vld [vmem:[#allocation2 + $0xe0] sm:$0xff]
      %v554 = vld [vmem:[#allocation2 + $0xe8] sm:$0xff]
      %v555 = vld [vmem:[#allocation2 + $0xf0] sm:$0xff]
      %v556 = vld [vmem:[#allocation2 + $0xf8] sm:$0xff]
      %v557 = vld [vmem:[#allocation2 + $0x100] sm:$0xff]
      %v558 = vld [vmem:[#allocation2 + $0x108] sm:$0xff]
      %v559 = vld [vmem:[#allocation2 + $0x110] sm:$0xff]
      %v560 = vld [vmem:[#allocation2 + $0x118] sm:$0xff]
      %v561 = vrot.slane %v525, 7
      %v562 = vrot.slane %v526, 7
      %v563 = vrot.slane %v527, 7
      %v564 = vrot.slane %v528, 7
      %v565 = vrot.slane %v529, 7
      %v566 = vrot.slane %v530, 7
      %v567 = vrot.slane %v531, 7
      %v568 = vrot.slane %v532, 7
      %v569 = vrot.slane %v533, 7
      %v570 = vrot.slane %v534, 7
      %v571 = vrot.slane %v535, 7
      %v572 = vrot.slane %v536, 7
      %v573 = vrot.slane %v537, 7
      %v574 = vrot.slane %v538, 7
      %v575 = vrot.slane %v539, 7
      %v576 = vrot.slane %v540, 7
      %v577 = vrot.slane %v541, 7
      %v578 = vrot.slane %v542, 7
      %v579 = vrot.slane %v543, 7
      %v580 = vrot.slane %v544, 7
      %v581 = vrot.slane %v545, 7
      %v582 = vrot.slane %v546, 7
      %v583 = vrot.slane %v547, 7
      %v584 = vrot.slane %v548, 7
      %v585 = vrot.slane %v549, 7
      %v586 = vrot.slane %v550, 7
      %v587 = vrot.slane %v551, 7
      %v588 = vrot.slane %v552, 7
      %v589 = vrot.slane %v553, 7
      %v590 = vrot.slane %v554, 7
      %v591 = vrot.slane %v555, 7
      %v592 = vrot.slane %v556, 7
      %v593 = vrot.slane %v560, 7
      %v594 = vlaneseq
      %v595 = vshrl.u32 %v594, 7
      %vm596 = vcmp.lt.s32.totalorder %v595, 1
      %v597 = vsel %vm596, %v591, %v592
      %v598 = vsel %vm596, %v590, %v591
      %v599 = vsel %vm596, %v589, %v590
      %v600 = vsel %vm596, %v588, %v589
      %v601 = vsel %vm596, %v587, %v588
      %v602 = vsel %vm596, %v586, %v587
      %v603 = vsel %vm596, %v585, %v586
      %v604 = vsel %vm596, %v584, %v585
      %v605 = vsel %vm596, %v583, %v584
      %v606 = vsel %vm596, %v582, %v583
      %v607 = vsel %vm596, %v581, %v582
      %v608 = vsel %vm596, %v580, %v581
      %v609 = vsel %vm596, %v579, %v580
      %v610 = vsel %vm596, %v578, %v579
      %v611 = vsel %vm596, %v577, %v578
      %v612 = vsel %vm596, %v576, %v577
      %v613 = vsel %vm596, %v575, %v576
      %v614 = vsel %vm596, %v574, %v575
      %v615 = vsel %vm596, %v573, %v574
      %v616 = vsel %vm596, %v572, %v573
      %v617 = vsel %vm596, %v571, %v572
      %v618 = vsel %vm596, %v570, %v571
      %v619 = vsel %vm596, %v569, %v570
      %v620 = vsel %vm596, %v568, %v569
      %v621 = vsel %vm596, %v567, %v568
      %v622 = vsel %vm596, %v566, %v567
      %v623 = vsel %vm596, %v565, %v566
      %v624 = vsel %vm596, %v564, %v565
      %v625 = vsel %vm596, %v563, %v564
      %v626 = vsel %vm596, %v562, %v563
      %v627 = vsel %vm596, %v561, %v562
      %v628 = vsel %vm596, %v593, %v561
      %630 = vset.pattern.permute.xlu0 0
      %631 = vperm.xlu0 %630, %v461
      %v632 = vpop.permute.xlu0 %631
      %635 = vset.pattern.permute.xlu0 0
      %636 = vperm.xlu0 %635, %v462
      %v637 = vpop.permute.xlu0 %636
      %640 = vset.pattern.permute.xlu0 0
      %641 = vperm.xlu0 %640, %v463
      %v642 = vpop.permute.xlu0 %641
      %645 = vset.pattern.permute.xlu0 0
      %646 = vperm.xlu0 %645, %v464
      %v647 = vpop.permute.xlu0 %646
      %650 = vset.pattern.permute.xlu0 0
      %651 = vperm.xlu0 %650, %v465
      %v652 = vpop.permute.xlu0 %651
      %655 = vset.pattern.permute.xlu0 0
      %656 = vperm.xlu0 %655, %v466
      %v657 = vpop.permute.xlu0 %656
      %660 = vset.pattern.permute.xlu0 0
      %661 = vperm.xlu0 %660, %v467
      %v662 = vpop.permute.xlu0 %661
      %665 = vset.pattern.permute.xlu0 0
      %666 = vperm.xlu0 %665, %v468
      %v667 = vpop.permute.xlu0 %666
      %670 = vset.pattern.permute.xlu0 0
      %671 = vperm.xlu0 %670, %v469
      %v672 = vpop.permute.xlu0 %671
      %675 = vset.pattern.permute.xlu0 0
      %676 = vperm.xlu0 %675, %v470
      %v677 = vpop.permute.xlu0 %676
      %680 = vset.pattern.permute.xlu0 0
      %681 = vperm.xlu0 %680, %v471
      %v682 = vpop.permute.xlu0 %681
      %685 = vset.pattern.permute.xlu0 0
      %686 = vperm.xlu0 %685, %v472
      %v687 = vpop.permute.xlu0 %686
      %690 = vset.pattern.permute.xlu0 0
      %691 = vperm.xlu0 %690, %v473
      %v692 = vpop.permute.xlu0 %691
      %695 = vset.pattern.permute.xlu0 0
      %696 = vperm.xlu0 %695, %v474
      %v697 = vpop.permute.xlu0 %696
      %700 = vset.pattern.permute.xlu0 0
      %701 = vperm.xlu0 %700, %v475
      %v702 = vpop.permute.xlu0 %701
      %705 = vset.pattern.permute.xlu0 0
      %706 = vperm.xlu0 %705, %v476
      %v707 = vpop.permute.xlu0 %706
      %710 = vset.pattern.permute.xlu0 0
      %711 = vperm.xlu0 %710, %v477
      %v712 = vpop.permute.xlu0 %711
      %715 = vset.pattern.permute.xlu0 0
      %716 = vperm.xlu0 %715, %v478
      %v717 = vpop.permute.xlu0 %716
      %720 = vset.pattern.permute.xlu0 0
      %721 = vperm.xlu0 %720, %v479
      %v722 = vpop.permute.xlu0 %721
      %725 = vset.pattern.permute.xlu0 0
      %726 = vperm.xlu0 %725, %v480
      %v727 = vpop.permute.xlu0 %726
      %730 = vset.pattern.permute.xlu0 0
      %731 = vperm.xlu0 %730, %v481
      %v732 = vpop.permute.xlu0 %731
      %735 = vset.pattern.permute.xlu0 0
      %736 = vperm.xlu0 %735, %v482
      %v737 = vpop.permute.xlu0 %736
      %740 = vset.pattern.permute.xlu0 0
      %741 = vperm.xlu0 %740, %v483
      %v742 = vpop.permute.xlu0 %741
      %745 = vset.pattern.permute.xlu0 0
      %746 = vperm.xlu0 %745, %v484
      %v747 = vpop.permute.xlu0 %746
      %750 = vset.pattern.permute.xlu0 0
      %751 = vperm.xlu0 %750, %v485
      %v752 = vpop.permute.xlu0 %751
      %755 = vset.pattern.permute.xlu0 0
      %756 = vperm.xlu0 %755, %v486
      %v757 = vpop.permute.xlu0 %756
      %760 = vset.pattern.permute.xlu0 0
      %761 = vperm.xlu0 %760, %v487
      %v762 = vpop.permute.xlu0 %761
      %765 = vset.pattern.permute.xlu0 0
      %766 = vperm.xlu0 %765, %v488
      %v767 = vpop.permute.xlu0 %766
      %770 = vset.pattern.permute.xlu0 0
      %771 = vperm.xlu0 %770, %v489
      %v772 = vpop.permute.xlu0 %771
      %775 = vset.pattern.permute.xlu0 0
      %776 = vperm.xlu0 %775, %v490
      %v777 = vpop.permute.xlu0 %776
      %780 = vset.pattern.permute.xlu0 0
      %781 = vperm.xlu0 %780, %v491
      %v782 = vpop.permute.xlu0 %781
      %785 = vset.pattern.permute.xlu0 0
      %786 = vperm.xlu0 %785, %v492
      %v787 = vpop.permute.xlu0 %786
      %v789 = vmul.f32 %v628, %v632
      %v790 = vmul.f32 %v627, %v637
      %v791 = vmul.f32 %v626, %v642
      %v792 = vmul.f32 %v625, %v647
      %v793 = vmul.f32 %v624, %v652
      %v794 = vmul.f32 %v623, %v657
      %v795 = vmul.f32 %v622, %v662
      %v796 = vmul.f32 %v621, %v667
      %v797 = vmul.f32 %v620, %v672
      %v798 = vmul.f32 %v619, %v677
      %v799 = vmul.f32 %v618, %v682
      %v800 = vmul.f32 %v617, %v687
      %v801 = vmul.f32 %v616, %v692
      %v802 = vmul.f32 %v615, %v697
      %v803 = vmul.f32 %v614, %v702
      %v804 = vmul.f32 %v613, %v707
      %v805 = vmul.f32 %v612, %v712
      %v806 = vmul.f32 %v611, %v717
      %v807 = vmul.f32 %v610, %v722
      %v808 = vmul.f32 %v609, %v727
      %v809 = vmul.f32 %v608, %v732
      %v810 = vmul.f32 %v607, %v737
      %v811 = vmul.f32 %v606, %v742
      %v812 = vmul.f32 %v605, %v747
      %v813 = vmul.f32 %v604, %v752
      %v814 = vmul.f32 %v603, %v757
      %v815 = vmul.f32 %v602, %v762
      %v816 = vmul.f32 %v601, %v767
      %v817 = vmul.f32 %v600, %v772
      %v818 = vmul.f32 %v599, %v777
      %v819 = vmul.f32 %v598, %v782
      %v820 = vmul.f32 %v597, %v787
      %v821 = vrot.slane %v525, 1
      %v822 = vrot.slane %v526, 1
      %v823 = vrot.slane %v527, 1
      %v824 = vrot.slane %v528, 1
      %v825 = vrot.slane %v529, 1
      %v826 = vrot.slane %v530, 1
      %v827 = vrot.slane %v531, 1
      %v828 = vrot.slane %v532, 1
      %v829 = vrot.slane %v533, 1
      %v830 = vrot.slane %v534, 1
      %v831 = vrot.slane %v535, 1
      %v832 = vrot.slane %v536, 1
      %v833 = vrot.slane %v537, 1
      %v834 = vrot.slane %v538, 1
      %v835 = vrot.slane %v539, 1
      %v836 = vrot.slane %v540, 1
      %v837 = vrot.slane %v541, 1
      %v838 = vrot.slane %v542, 1
      %v839 = vrot.slane %v543, 1
      %v840 = vrot.slane %v544, 1
      %v841 = vrot.slane %v545, 1
      %v842 = vrot.slane %v546, 1
      %v843 = vrot.slane %v547, 1
      %v844 = vrot.slane %v548, 1
      %v845 = vrot.slane %v549, 1
      %v846 = vrot.slane %v550, 1
      %v847 = vrot.slane %v551, 1
      %v848 = vrot.slane %v552, 1
      %v849 = vrot.slane %v553, 1
      %v850 = vrot.slane %v554, 1
      %v851 = vrot.slane %v555, 1
      %v852 = vrot.slane %v556, 1
      %v853 = vrot.slane %v557, 1
      %vm854 = vcmp.lt.s32.totalorder %v595, 7
      %v855 = vsel %vm854, %v852, %v853
      %v856 = vsel %vm854, %v851, %v852
      %v857 = vsel %vm854, %v850, %v851
      %v858 = vsel %vm854, %v849, %v850
      %v859 = vsel %vm854, %v848, %v849
      %v860 = vsel %vm854, %v847, %v848
      %v861 = vsel %vm854, %v846, %v847
      %v862 = vsel %vm854, %v845, %v846
      %v863 = vsel %vm854, %v844, %v845
      %v864 = vsel %vm854, %v843, %v844
      %v865 = vsel %vm854, %v842, %v843
      %v866 = vsel %vm854, %v841, %v842
      %v867 = vsel %vm854, %v840, %v841
      %v868 = vsel %vm854, %v839, %v840
      %v869 = vsel %vm854, %v838, %v839
      %v870 = vsel %vm854, %v837, %v838
      %v871 = vsel %vm854, %v836, %v837
      %v872 = vsel %vm854, %v835, %v836
      %v873 = vsel %vm854, %v834, %v835
      %v874 = vsel %vm854, %v833, %v834
      %v875 = vsel %vm854, %v832, %v833
      %v876 = vsel %vm854, %v831, %v832
      %v877 = vsel %vm854, %v830, %v831
      %v878 = vsel %vm854, %v829, %v830
      %v879 = vsel %vm854, %v828, %v829
      %v880 = vsel %vm854, %v827, %v828
      %v881 = vsel %vm854, %v826, %v827
      %v882 = vsel %vm854, %v825, %v826
      %v883 = vsel %vm854, %v824, %v825
      %v884 = vsel %vm854, %v823, %v824
      %v885 = vsel %vm854, %v822, %v823
      %v886 = vsel %vm854, %v821, %v822
      %888 = vset.pattern.permute.xlu0 0
      %889 = vperm.xlu0 %888, %v493
      %v890 = vpop.permute.xlu0 %889
      %893 = vset.pattern.permute.xlu0 0
      %894 = vperm.xlu0 %893, %v494
      %v895 = vpop.permute.xlu0 %894
      %898 = vset.pattern.permute.xlu0 0
      %899 = vperm.xlu0 %898, %v495
      %v900 = vpop.permute.xlu0 %899
      %903 = vset.pattern.permute.xlu0 0
      %904 = vperm.xlu0 %903, %v496
      %v905 = vpop.permute.xlu0 %904
      %908 = vset.pattern.permute.xlu0 0
      %909 = vperm.xlu0 %908, %v497
      %v910 = vpop.permute.xlu0 %909
      %913 = vset.pattern.permute.xlu0 0
      %914 = vperm.xlu0 %913, %v498
      %v915 = vpop.permute.xlu0 %914
      %918 = vset.pattern.permute.xlu0 0
      %919 = vperm.xlu0 %918, %v499
      %v920 = vpop.permute.xlu0 %919
      %923 = vset.pattern.permute.xlu0 0
      %924 = vperm.xlu0 %923, %v500
      %v925 = vpop.permute.xlu0 %924
      %928 = vset.pattern.permute.xlu0 0
      %929 = vperm.xlu0 %928, %v501
      %v930 = vpop.permute.xlu0 %929
      %933 = vset.pattern.permute.xlu0 0
      %934 = vperm.xlu0 %933, %v502
      %v935 = vpop.permute.xlu0 %934
      %938 = vset.pattern.permute.xlu0 0
      %939 = vperm.xlu0 %938, %v503
      %v940 = vpop.permute.xlu0 %939
      %943 = vset.pattern.permute.xlu0 0
      %944 = vperm.xlu0 %943, %v504
      %v945 = vpop.permute.xlu0 %944
      %948 = vset.pattern.permute.xlu0 0
      %949 = vperm.xlu0 %948, %v505
      %v950 = vpop.permute.xlu0 %949
      %953 = vset.pattern.permute.xlu0 0
      %954 = vperm.xlu0 %953, %v506
      %v955 = vpop.permute.xlu0 %954
      %958 = vset.pattern.permute.xlu0 0
      %959 = vperm.xlu0 %958, %v507
      %v960 = vpop.permute.xlu0 %959
      %963 = vset.pattern.permute.xlu0 0
      %964 = vperm.xlu0 %963, %v508
      %v965 = vpop.permute.xlu0 %964
      %968 = vset.pattern.permute.xlu0 0
      %969 = vperm.xlu0 %968, %v509
      %v970 = vpop.permute.xlu0 %969
      %973 = vset.pattern.permute.xlu0 0
      %974 = vperm.xlu0 %973, %v510
      %v975 = vpop.permute.xlu0 %974
      %978 = vset.pattern.permute.xlu0 0
      %979 = vperm.xlu0 %978, %v511
      %v980 = vpop.permute.xlu0 %979
      %983 = vset.pattern.permute.xlu0 0
      %984 = vperm.xlu0 %983, %v512
      %v985 = vpop.permute.xlu0 %984
      %988 = vset.pattern.permute.xlu0 0
      %989 = vperm.xlu0 %988, %v513
      %v990 = vpop.permute.xlu0 %989
      %993 = vset.pattern.permute.xlu0 0
      %994 = vperm.xlu0 %993, %v514
      %v995 = vpop.permute.xlu0 %994
      %998 = vset.pattern.permute.xlu0 0
      %999 = vperm.xlu0 %998, %v515
      %v1000 = vpop.permute.xlu0 %999
      %1003 = vset.pattern.permute.xlu0 0
      %1004 = vperm.xlu0 %1003, %v516
      %v1005 = vpop.permute.xlu0 %1004
      %1008 = vset.pattern.permute.xlu0 0
      %1009 = vperm.xlu0 %1008, %v517
      %v1010 = vpop.permute.xlu0 %1009
      %1013 = vset.pattern.permute.xlu0 0
      %1014 = vperm.xlu0 %1013, %v518
      %v1015 = vpop.permute.xlu0 %1014
      %1018 = vset.pattern.permute.xlu0 0
      %1019 = vperm.xlu0 %1018, %v519
      %v1020 = vpop.permute.xlu0 %1019
      %1023 = vset.pattern.permute.xlu0 0
      %1024 = vperm.xlu0 %1023, %v520
      %v1025 = vpop.permute.xlu0 %1024
      %1028 = vset.pattern.permute.xlu0 0
      %1029 = vperm.xlu0 %1028, %v521
      %v1030 = vpop.permute.xlu0 %1029
      %1033 = vset.pattern.permute.xlu0 0
      %1034 = vperm.xlu0 %1033, %v522
      %v1035 = vpop.permute.xlu0 %1034
      %1038 = vset.pattern.permute.xlu0 0
      %1039 = vperm.xlu0 %1038, %v523
      %v1040 = vpop.permute.xlu0 %1039
      %1043 = vset.pattern.permute.xlu0 0
      %1044 = vperm.xlu0 %1043, %v524
      %v1045 = vpop.permute.xlu0 %1044
      %v1047 = vmul.f32 %v886, %v890
      %v1048 = vmul.f32 %v885, %v895
      %v1049 = vmul.f32 %v884, %v900
      %v1050 = vmul.f32 %v883, %v905
      %v1051 = vmul.f32 %v882, %v910
      %v1052 = vmul.f32 %v881, %v915
      %v1053 = vmul.f32 %v880, %v920
      %v1054 = vmul.f32 %v879, %v925
      %v1055 = vmul.f32 %v878, %v930
      %v1056 = vmul.f32 %v877, %v935
      %v1057 = vmul.f32 %v876, %v940
      %v1058 = vmul.f32 %v875, %v945
      %v1059 = vmul.f32 %v874, %v950
      %v1060 = vmul.f32 %v873, %v955
      %v1061 = vmul.f32 %v872, %v960
      %v1062 = vmul.f32 %v871, %v965
      %v1063 = vmul.f32 %v870, %v970
      %v1064 = vmul.f32 %v869, %v975
      %v1065 = vmul.f32 %v868, %v980
      %v1066 = vmul.f32 %v867, %v985
      %v1067 = vmul.f32 %v866, %v990
      %v1068 = vmul.f32 %v865, %v995
      %v1069 = vmul.f32 %v864, %v1000
      %v1070 = vmul.f32 %v863, %v1005
      %v1071 = vmul.f32 %v862, %v1010
      %v1072 = vmul.f32 %v861, %v1015
      %v1073 = vmul.f32 %v860, %v1020
      %v1074 = vmul.f32 %v859, %v1025
      %v1075 = vmul.f32 %v858, %v1030
      %v1076 = vmul.f32 %v857, %v1035
      %v1077 = vmul.f32 %v856, %v1040
      %v1078 = vmul.f32 %v855, %v1045
      %v1079 = vrot.slane %v557, 7
      %v1080 = vrot.slane %v558, 7
      %v1081 = vsel %vm596, %v1079, %v1080
      %v1082 = vsel %vm596, %v592, %v1079
      %v1083 = vmul.f32 %v626, %v632
      %v1084 = vmul.f32 %v625, %v637
      %v1085 = vmul.f32 %v624, %v642
      %v1086 = vmul.f32 %v623, %v647
      %v1087 = vmul.f32 %v622, %v652
      %v1088 = vmul.f32 %v621, %v657
      %v1089 = vmul.f32 %v620, %v662
      %v1090 = vmul.f32 %v619, %v667
      %v1091 = vmul.f32 %v618, %v672
      %v1092 = vmul.f32 %v617, %v677
      %v1093 = vmul.f32 %v616, %v682
      %v1094 = vmul.f32 %v615, %v687
      %v1095 = vmul.f32 %v614, %v692
      %v1096 = vmul.f32 %v613, %v697
      %v1097 = vmul.f32 %v612, %v702
      %v1098 = vmul.f32 %v611, %v707
      %v1099 = vmul.f32 %v610, %v712
      %v1100 = vmul.f32 %v609, %v717
      %v1101 = vmul.f32 %v608, %v722
      %v1102 = vmul.f32 %v607, %v727
      %v1103 = vmul.f32 %v606, %v732
      %v1104 = vmul.f32 %v605, %v737
      %v1105 = vmul.f32 %v604, %v742
      %v1106 = vmul.f32 %v603, %v747
      %v1107 = vmul.f32 %v602, %v752
      %v1108 = vmul.f32 %v601, %v757
      %v1109 = vmul.f32 %v600, %v762
      %v1110 = vmul.f32 %v599, %v767
      %v1111 = vmul.f32 %v598, %v772
      %v1112 = vmul.f32 %v597, %v777
      %v1113 = vmul.f32 %v1082, %v782
      %v1114 = vmul.f32 %v1081, %v787
      %v1115 = vrot.slane %v558, 1
      %v1116 = vrot.slane %v559, 1
      %v1117 = vsel %vm854, %v1115, %v1116
      %v1118 = vsel %vm854, %v853, %v1115
      %v1119 = vmul.f32 %v884, %v890
      %v1120 = vmul.f32 %v883, %v895
      %v1121 = vmul.f32 %v882, %v900
      %v1122 = vmul.f32 %v881, %v905
      %v1123 = vmul.f32 %v880, %v910
      %v1124 = vmul.f32 %v879, %v915
      %v1125 = vmul.f32 %v878, %v920
      %v1126 = vmul.f32 %v877, %v925
      %v1127 = vmul.f32 %v876, %v930
      %v1128 = vmul.f32 %v875, %v935
      %v1129 = vmul.f32 %v874, %v940
      %v1130 = vmul.f32 %v873, %v945
      %v1131 = vmul.f32 %v872, %v950
      %v1132 = vmul.f32 %v871, %v955
      %v1133 = vmul.f32 %v870, %v960
      %v1134 = vmul.f32 %v869, %v965
      %v1135 = vmul.f32 %v868, %v970
      %v1136 = vmul.f32 %v867, %v975
      %v1137 = vmul.f32 %v866, %v980
      %v1138 = vmul.f32 %v865, %v985
      %v1139 = vmul.f32 %v864, %v990
      %v1140 = vmul.f32 %v863, %v995
      %v1141 = vmul.f32 %v862, %v1000
      %v1142 = vmul.f32 %v861, %v1005
      %v1143 = vmul.f32 %v860, %v1010
      %v1144 = vmul.f32 %v859, %v1015
      %v1145 = vmul.f32 %v858, %v1020
      %v1146 = vmul.f32 %v857, %v1025
      %v1147 = vmul.f32 %v856, %v1030
      %v1148 = vmul.f32 %v855, %v1035
      %v1149 = vmul.f32 %v1118, %v1040
      %v1150 = vmul.f32 %v1117, %v1045
      %v1151 = vrot.slane %v559, 7
      %v1152 = vsel %vm596, %v1151, %v593
      %v1153 = vsel %vm596, %v1080, %v1151
      %v1154 = vmul.f32 %v624, %v632
      %v1155 = vmul.f32 %v623, %v637
      %v1156 = vmul.f32 %v622, %v642
      %v1157 = vmul.f32 %v621, %v647
      %v1158 = vmul.f32 %v620, %v652
      %v1159 = vmul.f32 %v619, %v657
      %v1160 = vmul.f32 %v618, %v662
      %v1161 = vmul.f32 %v617, %v667
      %v1162 = vmul.f32 %v616, %v672
      %v1163 = vmul.f32 %v615, %v677
      %v1164 = vmul.f32 %v614, %v682
      %v1165 = vmul.f32 %v613, %v687
      %v1166 = vmul.f32 %v612, %v692
      %v1167 = vmul.f32 %v611, %v697
      %v1168 = vmul.f32 %v610, %v702
      %v1169 = vmul.f32 %v609, %v707
      %v1170 = vmul.f32 %v608, %v712
      %v1171 = vmul.f32 %v607, %v717
      %v1172 = vmul.f32 %v606, %v722
      %v1173 = vmul.f32 %v605, %v727
      %v1174 = vmul.f32 %v604, %v732
      %v1175 = vmul.f32 %v603, %v737
      %v1176 = vmul.f32 %v602, %v742
      %v1177 = vmul.f32 %v601, %v747
      %v1178 = vmul.f32 %v600, %v752
      %v1179 = vmul.f32 %v599, %v757
      %v1180 = vmul.f32 %v598, %v762
      %v1181 = vmul.f32 %v597, %v767
      %v1182 = vmul.f32 %v1082, %v772
      %v1183 = vmul.f32 %v1081, %v777
      %v1184 = vmul.f32 %v1153, %v782
      %v1185 = vmul.f32 %v1152, %v787
      %v1186 = vrot.slane %v560, 1
      %v1187 = vsel %vm854, %v1116, %v1186
      %v1188 = vsel %vm854, %v1186, %v821
      %v1189 = vmul.f32 %v882, %v890
      %v1190 = vmul.f32 %v881, %v895
      %v1191 = vmul.f32 %v880, %v900
      %v1192 = vmul.f32 %v879, %v905
      %v1193 = vmul.f32 %v878, %v910
      %v1194 = vmul.f32 %v877, %v915
      %v1195 = vmul.f32 %v876, %v920
      %v1196 = vmul.f32 %v875, %v925
      %v1197 = vmul.f32 %v874, %v930
      %v1198 = vmul.f32 %v873, %v935
      %v1199 = vmul.f32 %v872, %v940
      %v1200 = vmul.f32 %v871, %v945
      %v1201 = vmul.f32 %v870, %v950
      %v1202 = vmul.f32 %v869, %v955
      %v1203 = vmul.f32 %v868, %v960
      %v1204 = vmul.f32 %v867, %v965
      %v1205 = vmul.f32 %v866, %v970
      %v1206 = vmul.f32 %v865, %v975
      %v1207 = vmul.f32 %v864, %v980
      %v1208 = vmul.f32 %v863, %v985
      %v1209 = vmul.f32 %v862, %v990
      %v1210 = vmul.f32 %v861, %v995
      %v1211 = vmul.f32 %v860, %v1000
      %v1212 = vmul.f32 %v859, %v1005
      %v1213 = vmul.f32 %v858, %v1010
      %v1214 = vmul.f32 %v857, %v1015
      %v1215 = vmul.f32 %v856, %v1020
      %v1216 = vmul.f32 %v855, %v1025
      %v1217 = vmul.f32 %v1118, %v1030
      %v1218 = vmul.f32 %v1117, %v1035
      %v1219 = vmul.f32 %v1187, %v1040
      %v1220 = vmul.f32 %v1188, %v1045
      %1253 = vrot.lane.b32.xlu0 %v525, 32
      %v1254 = vpop.permute.xlu0 %1253
      %1255 = vrot.lane.b32.xlu0 %v526, 32
      %v1256 = vpop.permute.xlu0 %1255
      %1257 = vrot.lane.b32.xlu0 %v527, 32
      %v1258 = vpop.permute.xlu0 %1257
      %1259 = vrot.lane.b32.xlu0 %v528, 32
      %v1260 = vpop.permute.xlu0 %1259
      %1261 = vrot.lane.b32.xlu0 %v529, 32
      %v1262 = vpop.permute.xlu0 %1261
      %1263 = vrot.lane.b32.xlu0 %v530, 32
      %v1264 = vpop.permute.xlu0 %1263
      %1265 = vrot.lane.b32.xlu0 %v531, 32
      %v1266 = vpop.permute.xlu0 %1265
      %1267 = vrot.lane.b32.xlu0 %v532, 32
      %v1268 = vpop.permute.xlu0 %1267
      %1269 = vrot.lane.b32.xlu0 %v533, 32
      %v1270 = vpop.permute.xlu0 %1269
      %1271 = vrot.lane.b32.xlu0 %v534, 32
      %v1272 = vpop.permute.xlu0 %1271
      %1273 = vrot.lane.b32.xlu0 %v535, 32
      %v1274 = vpop.permute.xlu0 %1273
      %1275 = vrot.lane.b32.xlu0 %v536, 32
      %v1276 = vpop.permute.xlu0 %1275
      %1277 = vrot.lane.b32.xlu0 %v537, 32
      %v1278 = vpop.permute.xlu0 %1277
      %1279 = vrot.lane.b32.xlu0 %v538, 32
      %v1280 = vpop.permute.xlu0 %1279
      %1281 = vrot.lane.b32.xlu0 %v539, 32
      %v1282 = vpop.permute.xlu0 %1281
      %1283 = vrot.lane.b32.xlu0 %v540, 32
      %v1284 = vpop.permute.xlu0 %1283
      %1285 = vrot.lane.b32.xlu0 %v541, 32
      %v1286 = vpop.permute.xlu0 %1285
      %1287 = vrot.lane.b32.xlu0 %v542, 32
      %v1288 = vpop.permute.xlu0 %1287
      %1289 = vrot.lane.b32.xlu0 %v543, 32
      %v1290 = vpop.permute.xlu0 %1289
      %1291 = vrot.lane.b32.xlu0 %v544, 32
      %v1292 = vpop.permute.xlu0 %1291
      %1293 = vrot.lane.b32.xlu0 %v545, 32
      %v1294 = vpop.permute.xlu0 %1293
      %1295 = vrot.lane.b32.xlu0 %v546, 32
      %v1296 = vpop.permute.xlu0 %1295
      %1297 = vrot.lane.b32.xlu0 %v547, 32
      %v1298 = vpop.permute.xlu0 %1297
      %1299 = vrot.lane.b32.xlu0 %v548, 32
      %v1300 = vpop.permute.xlu0 %1299
      %1301 = vrot.lane.b32.xlu0 %v549, 32
      %v1302 = vpop.permute.xlu0 %1301
      %1303 = vrot.lane.b32.xlu0 %v550, 32
      %v1304 = vpop.permute.xlu0 %1303
      %1305 = vrot.lane.b32.xlu0 %v551, 32
      %v1306 = vpop.permute.xlu0 %1305
      %1307 = vrot.lane.b32.xlu0 %v552, 32
      %v1308 = vpop.permute.xlu0 %1307
      %1309 = vrot.lane.b32.xlu0 %v553, 32
      %v1310 = vpop.permute.xlu0 %1309
      %1311 = vrot.lane.b32.xlu0 %v554, 32
      %v1312 = vpop.permute.xlu0 %1311
      %1313 = vrot.lane.b32.xlu0 %v555, 32
      %v1314 = vpop.permute.xlu0 %1313
      %1315 = vrot.lane.b32.xlu0 %v556, 32
      %v1316 = vpop.permute.xlu0 %1315
      %1381 = vrot.lane.b32.xlu0 %v1047, 64
      %v1382 = vpop.permute.xlu0 %1381
      %1383 = vrot.lane.b32.xlu0 %v1048, 64
      %v1384 = vpop.permute.xlu0 %1383
      %1385 = vrot.lane.b32.xlu0 %v1049, 64
      %v1386 = vpop.permute.xlu0 %1385
      %1387 = vrot.lane.b32.xlu0 %v1050, 64
      %v1388 = vpop.permute.xlu0 %1387
      %1389 = vrot.lane.b32.xlu0 %v1051, 64
      %v1390 = vpop.permute.xlu0 %1389
      %1391 = vrot.lane.b32.xlu0 %v1052, 64
      %v1392 = vpop.permute.xlu0 %1391
      %1393 = vrot.lane.b32.xlu0 %v1053, 64
      %v1394 = vpop.permute.xlu0 %1393
      %1395 = vrot.lane.b32.xlu0 %v1054, 64
      %v1396 = vpop.permute.xlu0 %1395
      %1397 = vrot.lane.b32.xlu0 %v1055, 64
      %v1398 = vpop.permute.xlu0 %1397
      %1399 = vrot.lane.b32.xlu0 %v1056, 64
      %v1400 = vpop.permute.xlu0 %1399
      %1401 = vrot.lane.b32.xlu0 %v1057, 64
      %v1402 = vpop.permute.xlu0 %1401
      %1403 = vrot.lane.b32.xlu0 %v1058, 64
      %v1404 = vpop.permute.xlu0 %1403
      %1405 = vrot.lane.b32.xlu0 %v1059, 64
      %v1406 = vpop.permute.xlu0 %1405
      %1407 = vrot.lane.b32.xlu0 %v1060, 64
      %v1408 = vpop.permute.xlu0 %1407
      %1409 = vrot.lane.b32.xlu0 %v1061, 64
      %v1410 = vpop.permute.xlu0 %1409
      %1411 = vrot.lane.b32.xlu0 %v1062, 64
      %v1412 = vpop.permute.xlu0 %1411
      %1413 = vrot.lane.b32.xlu0 %v1063, 64
      %v1414 = vpop.permute.xlu0 %1413
      %1415 = vrot.lane.b32.xlu0 %v1064, 64
      %v1416 = vpop.permute.xlu0 %1415
      %1417 = vrot.lane.b32.xlu0 %v1065, 64
      %v1418 = vpop.permute.xlu0 %1417
      %1419 = vrot.lane.b32.xlu0 %v1066, 64
      %v1420 = vpop.permute.xlu0 %1419
      %1421 = vrot.lane.b32.xlu0 %v1067, 64
      %v1422 = vpop.permute.xlu0 %1421
      %1423 = vrot.lane.b32.xlu0 %v1068, 64
      %v1424 = vpop.permute.xlu0 %1423
      %1425 = vrot.lane.b32.xlu0 %v1069, 64
      %v1426 = vpop.permute.xlu0 %1425
      %1427 = vrot.lane.b32.xlu0 %v1070, 64
      %v1428 = vpop.permute.xlu0 %1427
      %1429 = vrot.lane.b32.xlu0 %v1071, 64
      %v1430 = vpop.permute.xlu0 %1429
      %1431 = vrot.lane.b32.xlu0 %v1072, 64
      %v1432 = vpop.permute.xlu0 %1431
      %1433 = vrot.lane.b32.xlu0 %v1073, 64
      %v1434 = vpop.permute.xlu0 %1433
      %1435 = vrot.lane.b32.xlu0 %v1074, 64
      %v1436 = vpop.permute.xlu0 %1435
      %1437 = vrot.lane.b32.xlu0 %v1075, 64
      %v1438 = vpop.permute.xlu0 %1437
      %1439 = vrot.lane.b32.xlu0 %v1076, 64
      %v1440 = vpop.permute.xlu0 %1439
      %1441 = vrot.lane.b32.xlu0 %v1077, 64
      %v1442 = vpop.permute.xlu0 %1441
      %1443 = vrot.lane.b32.xlu0 %v1078, 64
      %v1444 = vpop.permute.xlu0 %1443
      %1509 = vrot.lane.b32.xlu0 %v1083, 96
      %v1510 = vpop.permute.xlu0 %1509
      %1511 = vrot.lane.b32.xlu0 %v1084, 96
      %v1512 = vpop.permute.xlu0 %1511
      %1513 = vrot.lane.b32.xlu0 %v1085, 96
      %v1514 = vpop.permute.xlu0 %1513
      %1515 = vrot.lane.b32.xlu0 %v1086, 96
      %v1516 = vpop.permute.xlu0 %1515
      %1517 = vrot.lane.b32.xlu0 %v1087, 96
      %v1518 = vpop.permute.xlu0 %1517
      %1519 = vrot.lane.b32.xlu0 %v1088, 96
      %v1520 = vpop.permute.xlu0 %1519
      %1521 = vrot.lane.b32.xlu0 %v1089, 96
      %v1522 = vpop.permute.xlu0 %1521
      %1523 = vrot.lane.b32.xlu0 %v1090, 96
      %v1524 = vpop.permute.xlu0 %1523
      %1525 = vrot.lane.b32.xlu0 %v1091, 96
      %v1526 = vpop.permute.xlu0 %1525
      %1527 = vrot.lane.b32.xlu0 %v1092, 96
      %v1528 = vpop.permute.xlu0 %1527
      %1529 = vrot.lane.b32.xlu0 %v1093, 96
      %v1530 = vpop.permute.xlu0 %1529
      %1531 = vrot.lane.b32.xlu0 %v1094, 96
      %v1532 = vpop.permute.xlu0 %1531
      %1533 = vrot.lane.b32.xlu0 %v1095, 96
      %v1534 = vpop.permute.xlu0 %1533
      %1535 = vrot.lane.b32.xlu0 %v1096, 96
      %v1536 = vpop.permute.xlu0 %1535
      %1537 = vrot.lane.b32.xlu0 %v1097, 96
      %v1538 = vpop.permute.xlu0 %1537
      %1539 = vrot.lane.b32.xlu0 %v1098, 96
      %v1540 = vpop.permute.xlu0 %1539
      %1541 = vrot.lane.b32.xlu0 %v1099, 96
      %v1542 = vpop.permute.xlu0 %1541
      %1543 = vrot.lane.b32.xlu0 %v1100, 96
      %v1544 = vpop.permute.xlu0 %1543
      %1545 = vrot.lane.b32.xlu0 %v1101, 96
      %v1546 = vpop.permute.xlu0 %1545
      %1547 = vrot.lane.b32.xlu0 %v1102, 96
      %v1548 = vpop.permute.xlu0 %1547
      %1549 = vrot.lane.b32.xlu0 %v1103, 96
      %v1550 = vpop.permute.xlu0 %1549
      %1551 = vrot.lane.b32.xlu0 %v1104, 96
      %v1552 = vpop.permute.xlu0 %1551
      %1553 = vrot.lane.b32.xlu0 %v1105, 96
      %v1554 = vpop.permute.xlu0 %1553
      %1555 = vrot.lane.b32.xlu0 %v1106, 96
      %v1556 = vpop.permute.xlu0 %1555
      %1557 = vrot.lane.b32.xlu0 %v1107, 96
      %v1558 = vpop.permute.xlu0 %1557
      %1559 = vrot.lane.b32.xlu0 %v1108, 96
      %v1560 = vpop.permute.xlu0 %1559
      %1561 = vrot.lane.b32.xlu0 %v1109, 96
      %v1562 = vpop.permute.xlu0 %1561
      %1563 = vrot.lane.b32.xlu0 %v1110, 96
      %v1564 = vpop.permute.xlu0 %1563
      %1565 = vrot.lane.b32.xlu0 %v1111, 96
      %v1566 = vpop.permute.xlu0 %1565
      %1567 = vrot.lane.b32.xlu0 %v1112, 96
      %v1568 = vpop.permute.xlu0 %1567
      %1569 = vrot.lane.b32.xlu0 %v1113, 96
      %v1570 = vpop.permute.xlu0 %1569
      %1571 = vrot.lane.b32.xlu0 %v1114, 96
      %v1572 = vpop.permute.xlu0 %1571
      %1637 = vrot.lane.b32.xlu0 %v1119, 32
      %v1638 = vpop.permute.xlu0 %1637
      %1639 = vrot.lane.b32.xlu0 %v1120, 32
      %v1640 = vpop.permute.xlu0 %1639
      %1641 = vrot.lane.b32.xlu0 %v1121, 32
      %v1642 = vpop.permute.xlu0 %1641
      %1643 = vrot.lane.b32.xlu0 %v1122, 32
      %v1644 = vpop.permute.xlu0 %1643
      %1645 = vrot.lane.b32.xlu0 %v1123, 32
      %v1646 = vpop.permute.xlu0 %1645
      %1647 = vrot.lane.b32.xlu0 %v1124, 32
      %v1648 = vpop.permute.xlu0 %1647
      %1649 = vrot.lane.b32.xlu0 %v1125, 32
      %v1650 = vpop.permute.xlu0 %1649
      %1651 = vrot.lane.b32.xlu0 %v1126, 32
      %v1652 = vpop.permute.xlu0 %1651
      %1653 = vrot.lane.b32.xlu0 %v1127, 32
      %v1654 = vpop.permute.xlu0 %1653
      %1655 = vrot.lane.b32.xlu0 %v1128, 32
      %v1656 = vpop.permute.xlu0 %1655
      %1657 = vrot.lane.b32.xlu0 %v1129, 32
      %v1658 = vpop.permute.xlu0 %1657
      %1659 = vrot.lane.b32.xlu0 %v1130, 32
      %v1660 = vpop.permute.xlu0 %1659
      %1661 = vrot.lane.b32.xlu0 %v1131, 32
      %v1662 = vpop.permute.xlu0 %1661
      %1663 = vrot.lane.b32.xlu0 %v1132, 32
      %v1664 = vpop.permute.xlu0 %1663
      %1665 = vrot.lane.b32.xlu0 %v1133, 32
      %v1666 = vpop.permute.xlu0 %1665
      %1667 = vrot.lane.b32.xlu0 %v1134, 32
      %v1668 = vpop.permute.xlu0 %1667
      %1669 = vrot.lane.b32.xlu0 %v1135, 32
      %v1670 = vpop.permute.xlu0 %1669
      %1671 = vrot.lane.b32.xlu0 %v1136, 32
      %v1672 = vpop.permute.xlu0 %1671
      %1673 = vrot.lane.b32.xlu0 %v1137, 32
      %v1674 = vpop.permute.xlu0 %1673
      %1675 = vrot.lane.b32.xlu0 %v1138, 32
      %v1676 = vpop.permute.xlu0 %1675
      %1677 = vrot.lane.b32.xlu0 %v1139, 32
      %v1678 = vpop.permute.xlu0 %1677
      %1679 = vrot.lane.b32.xlu0 %v1140, 32
      %v1680 = vpop.permute.xlu0 %1679
      %1681 = vrot.lane.b32.xlu0 %v1141, 32
      %v1682 = vpop.permute.xlu0 %1681
      %1683 = vrot.lane.b32.xlu0 %v1142, 32
      %v1684 = vpop.permute.xlu0 %1683
      %1685 = vrot.lane.b32.xlu0 %v1143, 32
      %v1686 = vpop.permute.xlu0 %1685
      %1687 = vrot.lane.b32.xlu0 %v1144, 32
      %v1688 = vpop.permute.xlu0 %1687
      %1689 = vrot.lane.b32.xlu0 %v1145, 32
      %v1690 = vpop.permute.xlu0 %1689
      %1691 = vrot.lane.b32.xlu0 %v1146, 32
      %v1692 = vpop.permute.xlu0 %1691
      %1693 = vrot.lane.b32.xlu0 %v1147, 32
      %v1694 = vpop.permute.xlu0 %1693
      %1695 = vrot.lane.b32.xlu0 %v1148, 32
      %v1696 = vpop.permute.xlu0 %1695
      %1697 = vrot.lane.b32.xlu0 %v1149, 32
      %v1698 = vpop.permute.xlu0 %1697
      %1699 = vrot.lane.b32.xlu0 %v1150, 32
      %v1700 = vpop.permute.xlu0 %1699
      %1765 = vrot.lane.b32.xlu0 %v1154, 64
      %v1766 = vpop.permute.xlu0 %1765
      %1767 = vrot.lane.b32.xlu0 %v1155, 64
      %v1768 = vpop.permute.xlu0 %1767
      %1769 = vrot.lane.b32.xlu0 %v1156, 64
      %v1770 = vpop.permute.xlu0 %1769
      %1771 = vrot.lane.b32.xlu0 %v1157, 64
      %v1772 = vpop.permute.xlu0 %1771
      %1773 = vrot.lane.b32.xlu0 %v1158, 64
      %v1774 = vpop.permute.xlu0 %1773
      %1775 = vrot.lane.b32.xlu0 %v1159, 64
      %v1776 = vpop.permute.xlu0 %1775
      %1777 = vrot.lane.b32.xlu0 %v1160, 64
      %v1778 = vpop.permute.xlu0 %1777
      %1779 = vrot.lane.b32.xlu0 %v1161, 64
      %v1780 = vpop.permute.xlu0 %1779
      %1781 = vrot.lane.b32.xlu0 %v1162, 64
      %v1782 = vpop.permute.xlu0 %1781
      %1783 = vrot.lane.b32.xlu0 %v1163, 64
      %v1784 = vpop.permute.xlu0 %1783
      %1785 = vrot.lane.b32.xlu0 %v1164, 64
      %v1786 = vpop.permute.xlu0 %1785
      %1787 = vrot.lane.b32.xlu0 %v1165, 64
      %v1788 = vpop.permute.xlu0 %1787
      %1789 = vrot.lane.b32.xlu0 %v1166, 64
      %v1790 = vpop.permute.xlu0 %1789
      %1791 = vrot.lane.b32.xlu0 %v1167, 64
      %v1792 = vpop.permute.xlu0 %1791
      %1793 = vrot.lane.b32.xlu0 %v1168, 64
      %v1794 = vpop.permute.xlu0 %1793
      %1795 = vrot.lane.b32.xlu0 %v1169, 64
      %v1796 = vpop.permute.xlu0 %1795
      %1797 = vrot.lane.b32.xlu0 %v1170, 64
      %v1798 = vpop.permute.xlu0 %1797
      %1799 = vrot.lane.b32.xlu0 %v1171, 64
      %v1800 = vpop.permute.xlu0 %1799
      %1801 = vrot.lane.b32.xlu0 %v1172, 64
      %v1802 = vpop.permute.xlu0 %1801
      %1803 = vrot.lane.b32.xlu0 %v1173, 64
      %v1804 = vpop.permute.xlu0 %1803
      %1805 = vrot.lane.b32.xlu0 %v1174, 64
      %v1806 = vpop.permute.xlu0 %1805
      %1807 = vrot.lane.b32.xlu0 %v1175, 64
      %v1808 = vpop.permute.xlu0 %1807
      %1809 = vrot.lane.b32.xlu0 %v1176, 64
      %v1810 = vpop.permute.xlu0 %1809
      %1811 = vrot.lane.b32.xlu0 %v1177, 64
      %v1812 = vpop.permute.xlu0 %1811
      %1813 = vrot.lane.b32.xlu0 %v1178, 64
      %v1814 = vpop.permute.xlu0 %1813
      %1815 = vrot.lane.b32.xlu0 %v1179, 64
      %v1816 = vpop.permute.xlu0 %1815
      %1817 = vrot.lane.b32.xlu0 %v1180, 64
      %v1818 = vpop.permute.xlu0 %1817
      %1819 = vrot.lane.b32.xlu0 %v1181, 64
      %v1820 = vpop.permute.xlu0 %1819
      %1821 = vrot.lane.b32.xlu0 %v1182, 64
      %v1822 = vpop.permute.xlu0 %1821
      %1823 = vrot.lane.b32.xlu0 %v1183, 64
      %v1824 = vpop.permute.xlu0 %1823
      %1825 = vrot.lane.b32.xlu0 %v1184, 64
      %v1826 = vpop.permute.xlu0 %1825
      %1827 = vrot.lane.b32.xlu0 %v1185, 64
      %v1828 = vpop.permute.xlu0 %1827
      %1865 = vrot.lane.b32.xlu0 %v529, 96
      %v1866 = vpop.permute.xlu0 %1865
      %1867 = vrot.lane.b32.xlu0 %v530, 96
      %v1868 = vpop.permute.xlu0 %1867
      %1869 = vrot.lane.b32.xlu0 %v531, 96
      %v1870 = vpop.permute.xlu0 %1869
      %1871 = vrot.lane.b32.xlu0 %v532, 96
      %v1872 = vpop.permute.xlu0 %1871
      %1873 = vrot.lane.b32.xlu0 %v533, 96
      %v1874 = vpop.permute.xlu0 %1873
      %1875 = vrot.lane.b32.xlu0 %v534, 96
      %v1876 = vpop.permute.xlu0 %1875
      %1877 = vrot.lane.b32.xlu0 %v535, 96
      %v1878 = vpop.permute.xlu0 %1877
      %1879 = vrot.lane.b32.xlu0 %v536, 96
      %v1880 = vpop.permute.xlu0 %1879
      %1881 = vrot.lane.b32.xlu0 %v537, 96
      %v1882 = vpop.permute.xlu0 %1881
      %1883 = vrot.lane.b32.xlu0 %v538, 96
      %v1884 = vpop.permute.xlu0 %1883
      %1885 = vrot.lane.b32.xlu0 %v539, 96
      %v1886 = vpop.permute.xlu0 %1885
      %1887 = vrot.lane.b32.xlu0 %v540, 96
      %v1888 = vpop.permute.xlu0 %1887
      %1889 = vrot.lane.b32.xlu0 %v541, 96
      %v1890 = vpop.permute.xlu0 %1889
      %1891 = vrot.lane.b32.xlu0 %v542, 96
      %v1892 = vpop.permute.xlu0 %1891
      %1893 = vrot.lane.b32.xlu0 %v543, 96
      %v1894 = vpop.permute.xlu0 %1893
      %1895 = vrot.lane.b32.xlu0 %v544, 96
      %v1896 = vpop.permute.xlu0 %1895
      %1897 = vrot.lane.b32.xlu0 %v545, 96
      %v1898 = vpop.permute.xlu0 %1897
      %1899 = vrot.lane.b32.xlu0 %v546, 96
      %v1900 = vpop.permute.xlu0 %1899
      %1901 = vrot.lane.b32.xlu0 %v547, 96
      %v1902 = vpop.permute.xlu0 %1901
      %1903 = vrot.lane.b32.xlu0 %v548, 96
      %v1904 = vpop.permute.xlu0 %1903
      %1905 = vrot.lane.b32.xlu0 %v549, 96
      %v1906 = vpop.permute.xlu0 %1905
      %1907 = vrot.lane.b32.xlu0 %v550, 96
      %v1908 = vpop.permute.xlu0 %1907
      %1909 = vrot.lane.b32.xlu0 %v551, 96
      %v1910 = vpop.permute.xlu0 %1909
      %1911 = vrot.lane.b32.xlu0 %v552, 96
      %v1912 = vpop.permute.xlu0 %1911
      %1913 = vrot.lane.b32.xlu0 %v553, 96
      %v1914 = vpop.permute.xlu0 %1913
      %1915 = vrot.lane.b32.xlu0 %v554, 96
      %v1916 = vpop.permute.xlu0 %1915
      %1917 = vrot.lane.b32.xlu0 %v555, 96
      %v1918 = vpop.permute.xlu0 %1917
      %1919 = vrot.lane.b32.xlu0 %v556, 96
      %v1920 = vpop.permute.xlu0 %1919
      %1921 = vrot.lane.b32.xlu0 %v557, 96
      %v1922 = vpop.permute.xlu0 %1921
      %1923 = vrot.lane.b32.xlu0 %v558, 96
      %v1924 = vpop.permute.xlu0 %1923
      %1925 = vrot.lane.b32.xlu0 %v559, 96
      %v1926 = vpop.permute.xlu0 %1925
      %1927 = vrot.lane.b32.xlu0 %v560, 96
      %v1928 = vpop.permute.xlu0 %1927
      %vm1961 = vcmask 261120
      %v1962 = vsel %vm1961, %v789, %v1254
      %v1963 = vsel %vm1961, %v790, %v1256
      %v1964 = vsel %vm1961, %v791, %v1258
      %v1965 = vsel %vm1961, %v792, %v1260
      %v1966 = vsel %vm1961, %v793, %v1262
      %v1967 = vsel %vm1961, %v794, %v1264
      %v1968 = vsel %vm1961, %v795, %v1266
      %v1969 = vsel %vm1961, %v796, %v1268
      %v1970 = vsel %vm1961, %v797, %v1270
      %v1971 = vsel %vm1961, %v798, %v1272
      %v1972 = vsel %vm1961, %v799, %v1274
      %v1973 = vsel %vm1961, %v800, %v1276
      %v1974 = vsel %vm1961, %v801, %v1278
      %v1975 = vsel %vm1961, %v802, %v1280
      %v1976 = vsel %vm1961, %v803, %v1282
      %v1977 = vsel %vm1961, %v804, %v1284
      %v1978 = vsel %vm1961, %v805, %v1286
      %v1979 = vsel %vm1961, %v806, %v1288
      %v1980 = vsel %vm1961, %v807, %v1290
      %v1981 = vsel %vm1961, %v808, %v1292
      %v1982 = vsel %vm1961, %v809, %v1294
      %v1983 = vsel %vm1961, %v810, %v1296
      %v1984 = vsel %vm1961, %v811, %v1298
      %v1985 = vsel %vm1961, %v812, %v1300
      %v1986 = vsel %vm1961, %v813, %v1302
      %v1987 = vsel %vm1961, %v814, %v1304
      %v1988 = vsel %vm1961, %v815, %v1306
      %v1989 = vsel %vm1961, %v816, %v1308
      %v1990 = vsel %vm1961, %v817, %v1310
      %v1991 = vsel %vm1961, %v818, %v1312
      %v1992 = vsel %vm1961, %v819, %v1314
      %v1993 = vsel %vm1961, %v820, %v1316
      %vm1994 = vcmask 523264
      %v1995 = vsel %vm1994, %v1962, %v1382
      %v1996 = vsel %vm1994, %v1963, %v1384
      %v1997 = vsel %vm1994, %v1964, %v1386
      %v1998 = vsel %vm1994, %v1965, %v1388
      %v1999 = vsel %vm1994, %v1966, %v1390
      %v2000 = vsel %vm1994, %v1967, %v1392
      %v2001 = vsel %vm1994, %v1968, %v1394
      %v2002 = vsel %vm1994, %v1969, %v1396
      %v2003 = vsel %vm1994, %v1970, %v1398
      %v2004 = vsel %vm1994, %v1971, %v1400
      %v2005 = vsel %vm1994, %v1972, %v1402
      %v2006 = vsel %vm1994, %v1973, %v1404
      %v2007 = vsel %vm1994, %v1974, %v1406
      %v2008 = vsel %vm1994, %v1975, %v1408
      %v2009 = vsel %vm1994, %v1976, %v1410
      %v2010 = vsel %vm1994, %v1977, %v1412
      %v2011 = vsel %vm1994, %v1978, %v1414
      %v2012 = vsel %vm1994, %v1979, %v1416
      %v2013 = vsel %vm1994, %v1980, %v1418
      %v2014 = vsel %vm1994, %v1981, %v1420
      %v2015 = vsel %vm1994, %v1982, %v1422
      %v2016 = vsel %vm1994, %v1983, %v1424
      %v2017 = vsel %vm1994, %v1984, %v1426
      %v2018 = vsel %vm1994, %v1985, %v1428
      %v2019 = vsel %vm1994, %v1986, %v1430
      %v2020 = vsel %vm1994, %v1987, %v1432
      %v2021 = vsel %vm1994, %v1988, %v1434
      %v2022 = vsel %vm1994, %v1989, %v1436
      %v2023 = vsel %vm1994, %v1990, %v1438
      %v2024 = vsel %vm1994, %v1991, %v1440
      %v2025 = vsel %vm1994, %v1992, %v1442
      %v2026 = vsel %vm1994, %v1993, %v1444
      %vm2027 = vcmask 785408
      %v2028 = vsel %vm2027, %v1995, %v1510
      %v2029 = vsel %vm2027, %v1996, %v1512
      %v2030 = vsel %vm2027, %v1997, %v1514
      %v2031 = vsel %vm2027, %v1998, %v1516
      %v2032 = vsel %vm2027, %v1999, %v1518
      %v2033 = vsel %vm2027, %v2000, %v1520
      %v2034 = vsel %vm2027, %v2001, %v1522
      %v2035 = vsel %vm2027, %v2002, %v1524
      %v2036 = vsel %vm2027, %v2003, %v1526
      %v2037 = vsel %vm2027, %v2004, %v1528
      %v2038 = vsel %vm2027, %v2005, %v1530
      %v2039 = vsel %vm2027, %v2006, %v1532
      %v2040 = vsel %vm2027, %v2007, %v1534
      %v2041 = vsel %vm2027, %v2008, %v1536
      %v2042 = vsel %vm2027, %v2009, %v1538
      %v2043 = vsel %vm2027, %v2010, %v1540
      %v2044 = vsel %vm2027, %v2011, %v1542
      %v2045 = vsel %vm2027, %v2012, %v1544
      %v2046 = vsel %vm2027, %v2013, %v1546
      %v2047 = vsel %vm2027, %v2014, %v1548
      %v2048 = vsel %vm2027, %v2015, %v1550
      %v2049 = vsel %vm2027, %v2016, %v1552
      %v2050 = vsel %vm2027, %v2017, %v1554
      %v2051 = vsel %vm2027, %v2018, %v1556
      %v2052 = vsel %vm2027, %v2019, %v1558
      %v2053 = vsel %vm2027, %v2020, %v1560
      %v2054 = vsel %vm2027, %v2021, %v1562
      %v2055 = vsel %vm2027, %v2022, %v1564
      %v2056 = vsel %vm2027, %v2023, %v1566
      %v2057 = vsel %vm2027, %v2024, %v1568
      %v2058 = vsel %vm2027, %v2025, %v1570
      %v2059 = vsel %vm2027, %v2026, %v1572
      %v2060 = vsel %vm1961, %v527, %v1638
      %v2061 = vsel %vm1961, %v528, %v1640
      %v2062 = vsel %vm1961, %v529, %v1642
      %v2063 = vsel %vm1961, %v530, %v1644
      %v2064 = vsel %vm1961, %v531, %v1646
      %v2065 = vsel %vm1961, %v532, %v1648
      %v2066 = vsel %vm1961, %v533, %v1650
      %v2067 = vsel %vm1961, %v534, %v1652
      %v2068 = vsel %vm1961, %v535, %v1654
      %v2069 = vsel %vm1961, %v536, %v1656
      %v2070 = vsel %vm1961, %v537, %v1658
      %v2071 = vsel %vm1961, %v538, %v1660
      %v2072 = vsel %vm1961, %v539, %v1662
      %v2073 = vsel %vm1961, %v540, %v1664
      %v2074 = vsel %vm1961, %v541, %v1666
      %v2075 = vsel %vm1961, %v542, %v1668
      %v2076 = vsel %vm1961, %v543, %v1670
      %v2077 = vsel %vm1961, %v544, %v1672
      %v2078 = vsel %vm1961, %v545, %v1674
      %v2079 = vsel %vm1961, %v546, %v1676
      %v2080 = vsel %vm1961, %v547, %v1678
      %v2081 = vsel %vm1961, %v548, %v1680
      %v2082 = vsel %vm1961, %v549, %v1682
      %v2083 = vsel %vm1961, %v550, %v1684
      %v2084 = vsel %vm1961, %v551, %v1686
      %v2085 = vsel %vm1961, %v552, %v1688
      %v2086 = vsel %vm1961, %v553, %v1690
      %v2087 = vsel %vm1961, %v554, %v1692
      %v2088 = vsel %vm1961, %v555, %v1694
      %v2089 = vsel %vm1961, %v556, %v1696
      %v2090 = vsel %vm1961, %v557, %v1698
      %v2091 = vsel %vm1961, %v558, %v1700
      %v2092 = vsel %vm1994, %v2060, %v1766
      %v2093 = vsel %vm1994, %v2061, %v1768
      %v2094 = vsel %vm1994, %v2062, %v1770
      %v2095 = vsel %vm1994, %v2063, %v1772
      %v2096 = vsel %vm1994, %v2064, %v1774
      %v2097 = vsel %vm1994, %v2065, %v1776
      %v2098 = vsel %vm1994, %v2066, %v1778
      %v2099 = vsel %vm1994, %v2067, %v1780
      %v2100 = vsel %vm1994, %v2068, %v1782
      %v2101 = vsel %vm1994, %v2069, %v1784
      %v2102 = vsel %vm1994, %v2070, %v1786
      %v2103 = vsel %vm1994, %v2071, %v1788
      %v2104 = vsel %vm1994, %v2072, %v1790
      %v2105 = vsel %vm1994, %v2073, %v1792
      %v2106 = vsel %vm1994, %v2074, %v1794
      %v2107 = vsel %vm1994, %v2075, %v1796
      %v2108 = vsel %vm1994, %v2076, %v1798
      %v2109 = vsel %vm1994, %v2077, %v1800
      %v2110 = vsel %vm1994, %v2078, %v1802
      %v2111 = vsel %vm1994, %v2079, %v1804
      %v2112 = vsel %vm1994, %v2080, %v1806
      %v2113 = vsel %vm1994, %v2081, %v1808
      %v2114 = vsel %vm1994, %v2082, %v1810
      %v2115 = vsel %vm1994, %v2083, %v1812
      %v2116 = vsel %vm1994, %v2084, %v1814
      %v2117 = vsel %vm1994, %v2085, %v1816
      %v2118 = vsel %vm1994, %v2086, %v1818
      %v2119 = vsel %vm1994, %v2087, %v1820
      %v2120 = vsel %vm1994, %v2088, %v1822
      %v2121 = vsel %vm1994, %v2089, %v1824
      %v2122 = vsel %vm1994, %v2090, %v1826
      %v2123 = vsel %vm1994, %v2091, %v1828
      %v2124 = vsel %vm2027, %v2092, %v1866
      %v2125 = vsel %vm2027, %v2093, %v1868
      %v2126 = vsel %vm2027, %v2094, %v1870
      %v2127 = vsel %vm2027, %v2095, %v1872
      %v2128 = vsel %vm2027, %v2096, %v1874
      %v2129 = vsel %vm2027, %v2097, %v1876
      %v2130 = vsel %vm2027, %v2098, %v1878
      %v2131 = vsel %vm2027, %v2099, %v1880
      %v2132 = vsel %vm2027, %v2100, %v1882
      %v2133 = vsel %vm2027, %v2101, %v1884
      %v2134 = vsel %vm2027, %v2102, %v1886
      %v2135 = vsel %vm2027, %v2103, %v1888
      %v2136 = vsel %vm2027, %v2104, %v1890
      %v2137 = vsel %vm2027, %v2105, %v1892
      %v2138 = vsel %vm2027, %v2106, %v1894
      %v2139 = vsel %vm2027, %v2107, %v1896
      %v2140 = vsel %vm2027, %v2108, %v1898
      %v2141 = vsel %vm2027, %v2109, %v1900
      %v2142 = vsel %vm2027, %v2110, %v1902
      %v2143 = vsel %vm2027, %v2111, %v1904
      %v2144 = vsel %vm2027, %v2112, %v1906
      %v2145 = vsel %vm2027, %v2113, %v1908
      %v2146 = vsel %vm2027, %v2114, %v1910
      %v2147 = vsel %vm2027, %v2115, %v1912
      %v2148 = vsel %vm2027, %v2116, %v1914
      %v2149 = vsel %vm2027, %v2117, %v1916
      %v2150 = vsel %vm2027, %v2118, %v1918
      %v2151 = vsel %vm2027, %v2119, %v1920
      %v2152 = vsel %vm2027, %v2120, %v1922
      %v2153 = vsel %vm2027, %v2121, %v1924
      %v2154 = vsel %vm2027, %v2122, %v1926
      %v2155 = vsel %vm2027, %v2123, %v1928
      %v2156 = vld [vmem:[%s380] sm:$0xff]
      %v2157 = vld [vmem:[%s380 + $0x8] sm:$0xff]
      %v2158 = vld [vmem:[%s380 + $0x10] sm:$0xff]
      %v2159 = vld [vmem:[%s380 + $0x18] sm:$0xff]
      %v2160 = vld [vmem:[%s380 + $0x20] sm:$0xff]
      %v2161 = vld [vmem:[%s380 + $0x28] sm:$0xff]
      %v2162 = vld [vmem:[%s380 + $0x30] sm:$0xff]
      %v2163 = vld [vmem:[%s380 + $0x38] sm:$0xff]
      %v2164 = vld [vmem:[%s380 + $0x40] sm:$0xff]
      %v2165 = vld [vmem:[%s380 + $0x48] sm:$0xff]
      %v2166 = vld [vmem:[%s380 + $0x50] sm:$0xff]
      %v2167 = vld [vmem:[%s380 + $0x58] sm:$0xff]
      %v2168 = vld [vmem:[%s380 + $0x60] sm:$0xff]
      %v2169 = vld [vmem:[%s380 + $0x68] sm:$0xff]
      %v2170 = vld [vmem:[%s380 + $0x70] sm:$0xff]
      %v2171 = vld [vmem:[%s380 + $0x78] sm:$0xff]
      %v2172 = vld [vmem:[%s380 + $0x80] sm:$0xff]
      %v2173 = vld [vmem:[%s380 + $0x88] sm:$0xff]
      %v2174 = vld [vmem:[%s380 + $0x90] sm:$0xff]
      %v2175 = vld [vmem:[%s380 + $0x98] sm:$0xff]
      %v2176 = vld [vmem:[%s380 + $0xa0] sm:$0xff]
      %v2177 = vld [vmem:[%s380 + $0xa8] sm:$0xff]
      %v2178 = vld [vmem:[%s380 + $0xb0] sm:$0xff]
      %v2179 = vld [vmem:[%s380 + $0xb8] sm:$0xff]
      %v2180 = vld [vmem:[%s380 + $0xc0] sm:$0xff]
      %v2181 = vld [vmem:[%s380 + $0xc8] sm:$0xff]
      %v2182 = vld [vmem:[%s380 + $0xd0] sm:$0xff]
      %v2183 = vld [vmem:[%s380 + $0xd8] sm:$0xff]
      %v2184 = vld [vmem:[%s380 + $0xe0] sm:$0xff]
      %v2185 = vld [vmem:[%s380 + $0xe8] sm:$0xff]
      %v2186 = vld [vmem:[%s380 + $0xf0] sm:$0xff]
      %v2187 = vld [vmem:[%s380 + $0xf8] sm:$0xff]
      %v2188 = vld [vmem:[%s3] sm:$0xff]
      %v2189 = vld [vmem:[%s3 + $0x8] sm:$0xff]
      %v2190 = vld [vmem:[%s3 + $0x10] sm:$0xff]
      %v2191 = vld [vmem:[%s3 + $0x18] sm:$0xff]
      %v2192 = vld [vmem:[%s3 + $0x20] sm:$0xf]
      %v2193 = vld [vmem:[%s4] sm:$0xff]
      %v2194 = vld [vmem:[%s4 + $0x8] sm:$0xff]
      %v2195 = vld [vmem:[%s4 + $0x10] sm:$0xff]
      %v2196 = vld [vmem:[%s4 + $0x18] sm:$0xff]
      %v2197 = vld [vmem:[%s4 + $0x20] sm:$0xff]
      %v2198 = vld [vmem:[%s4 + $0x28] sm:$0xff]
      %v2199 = vld [vmem:[%s4 + $0x30] sm:$0xff]
      %v2200 = vld [vmem:[%s4 + $0x38] sm:$0xff]
      %v2201 = vld [vmem:[%s4 + $0x40] sm:$0xff]
      %v2202 = vld [vmem:[%s4 + $0x48] sm:$0xff]
      %v2203 = vld [vmem:[%s4 + $0x50] sm:$0xff]
      %v2204 = vld [vmem:[%s4 + $0x58] sm:$0xff]
      %v2205 = vld [vmem:[%s4 + $0x60] sm:$0xff]
      %v2206 = vld [vmem:[%s4 + $0x68] sm:$0xff]
      %v2207 = vld [vmem:[%s4 + $0x70] sm:$0xff]
      %v2208 = vld [vmem:[%s4 + $0x78] sm:$0xff]
      %v2209 = vld [vmem:[%s4 + $0x80] sm:$0xff]
      %v2210 = vld [vmem:[%s4 + $0x88] sm:$0xff]
      %v2211 = vld [vmem:[%s4 + $0x90] sm:$0xff]
      %v2212 = vld [vmem:[%s4 + $0x98] sm:$0xff]
      %v2213 = vld [vmem:[%s4 + $0xa0] sm:$0xff]
      %v2214 = vld [vmem:[%s4 + $0xa8] sm:$0xff]
      %v2215 = vld [vmem:[%s4 + $0xb0] sm:$0xff]
      %v2216 = vld [vmem:[%s4 + $0xb8] sm:$0xff]
      %v2217 = vld [vmem:[%s4 + $0xc0] sm:$0xff]
      %v2218 = vld [vmem:[%s4 + $0xc8] sm:$0xff]
      %v2219 = vld [vmem:[%s4 + $0xd0] sm:$0xff]
      %v2220 = vld [vmem:[%s4 + $0xd8] sm:$0xff]
      %v2221 = vld [vmem:[%s4 + $0xe0] sm:$0xff]
      %v2222 = vld [vmem:[%s4 + $0xe8] sm:$0xff]
      %v2223 = vld [vmem:[%s4 + $0xf0] sm:$0xff]
      %v2224 = vld [vmem:[%s4 + $0xf8] sm:$0xff]
      %v2225 = vld [vmem:[%s4 + $0x100] sm:$0xff]
      %v2226 = vld [vmem:[%s4 + $0x108] sm:$0xff]
      %v2227 = vld [vmem:[%s4 + $0x110] sm:$0xff]
      %v2228 = vld [vmem:[%s4 + $0x118] sm:$0xff]
      %v2230 = vsel %vm1961, %v1189, 0
      %v2233 = vsel %vm1961, %v1190, 0
      %v2236 = vsel %vm1961, %v1191, 0
      %v2239 = vsel %vm1961, %v1192, 0
      %v2242 = vsel %vm1961, %v1193, 0
      %v2245 = vsel %vm1961, %v1194, 0
      %v2248 = vsel %vm1961, %v1195, 0
      %v2251 = vsel %vm1961, %v1196, 0
      %v2254 = vsel %vm1961, %v1197, 0
      %v2257 = vsel %vm1961, %v1198, 0
      %v2260 = vsel %vm1961, %v1199, 0
      %v2263 = vsel %vm1961, %v1200, 0
      %v2266 = vsel %vm1961, %v1201, 0
      %v2269 = vsel %vm1961, %v1202, 0
      %v2272 = vsel %vm1961, %v1203, 0
      %v2275 = vsel %vm1961, %v1204, 0
      %v2278 = vsel %vm1961, %v1205, 0
      %v2281 = vsel %vm1961, %v1206, 0
      %v2284 = vsel %vm1961, %v1207, 0
      %v2287 = vsel %vm1961, %v1208, 0
      %v2290 = vsel %vm1961, %v1209, 0
      %v2293 = vsel %vm1961, %v1210, 0
      %v2296 = vsel %vm1961, %v1211, 0
      %v2299 = vsel %vm1961, %v1212, 0
      %v2302 = vsel %vm1961, %v1213, 0
      %v2305 = vsel %vm1961, %v1214, 0
      %v2308 = vsel %vm1961, %v1215, 0
      %v2311 = vsel %vm1961, %v1216, 0
      %v2314 = vsel %vm1961, %v1217, 0
      %v2317 = vsel %vm1961, %v1218, 0
      %v2320 = vsel %vm1961, %v1219, 0
      %v2323 = vsel %vm1961, %v1220, 0
      %2325 = vmatprep.subr.mxu0 0.0
      %2326 = vmatpush1.msra.mxu0 %v2193
      %2327 = vmatprep.subr.mxu0 0.0
      %2328 = vmatpush1.msra.mxu0 %v2194
      %2329 = vmatprep.subr.mxu0 0.0
      %2330 = vmatpush1.msra.mxu0 %v2195
      %2331 = vmatprep.subr.mxu0 0.0
      %2332 = vmatpush1.msra.mxu0 %v2196
      %2333 = vmatprep.subr.mxu0 0.0
      %2334 = vmatpush1.msra.mxu0 %v2197
      %2335 = vmatprep.subr.mxu0 0.0
      %2336 = vmatpush1.msra.mxu0 %v2198
      %2337 = vmatprep.subr.mxu0 0.0
      %2338 = vmatpush1.msra.mxu0 %v2199
      %2339 = vmatprep.subr.mxu0 0.0
      %2340 = vmatpush1.msra.mxu0 %v2200
      %2341 = vmatprep.subr.mxu0 0.0
      %2342 = vmatpush1.msra.mxu0 %v2201
      %2343 = vmatprep.subr.mxu0 0.0
      %2344 = vmatpush1.msra.mxu0 %v2202
      %2345 = vmatprep.subr.mxu0 0.0
      %2346 = vmatpush1.msra.mxu0 %v2203
      %2347 = vmatprep.subr.mxu0 0.0
      %2348 = vmatpush1.msra.mxu0 %v2204
      %2349 = vmatprep.subr.mxu0 0.0
      %2350 = vmatpush1.msra.mxu0 %v2205
      %2351 = vmatprep.subr.mxu0 0.0
      %2352 = vmatpush1.msra.mxu0 %v2206
      %2353 = vmatprep.subr.mxu0 0.0
      %2354 = vmatpush1.msra.mxu0 %v2207
      %2355 = vmatprep.subr.mxu0 0.0
      %2356 = vmatpush1.msra.mxu0 %v2208
      %2357 = vmatprep.subr.mxu0 0.0
      %2358 = vmatpush1.msra.mxu0 %v2209
      %2359 = vmatprep.subr.mxu0 0.0
      %2360 = vmatpush1.msra.mxu0 %v2210
      %2361 = vmatprep.subr.mxu0 0.0
      %2362 = vmatpush1.msra.mxu0 %v2211
      %2363 = vmatprep.subr.mxu0 0.0
      %2364 = vmatpush1.msra.mxu0 %v2212
      %2365 = vmatprep.subr.mxu0 0.0
      %2366 = vmatpush1.msra.mxu0 %v2213
      %2367 = vmatprep.subr.mxu0 0.0
      %2368 = vmatpush1.msra.mxu0 %v2214
      %2369 = vmatprep.subr.mxu0 0.0
      %2370 = vmatpush1.msra.mxu0 %v2215
      %2371 = vmatprep.subr.mxu0 0.0
      %2372 = vmatpush1.msra.mxu0 %v2216
      %2373 = vmatprep.subr.mxu0 0.0
      %2374 = vmatpush1.msra.mxu0 %v2217
      %2375 = vmatprep.subr.mxu0 0.0
      %2376 = vmatpush1.msra.mxu0 %v2218
      %2377 = vmatprep.subr.mxu0 0.0
      %2378 = vmatpush1.msra.mxu0 %v2219
      %2379 = vmatprep.subr.mxu0 0.0
      %2380 = vmatpush1.msra.mxu0 %v2220
      %2381 = vmatprep.subr.mxu0 0.0
      %2382 = vmatpush1.msra.mxu0 %v2221
      %2383 = vmatprep.subr.mxu0 0.0
      %2384 = vmatpush1.msra.mxu0 %v2222
      %2385 = vmatprep.subr.mxu0 0.0
      %2386 = vmatpush1.msra.mxu0 %v2223
      %2387 = vmatprep.subr.mxu0 0.0
      %2388 = vmatpush1.msra.mxu0 %v2224
      %2389 = vmatprep.mubr.f32.mxu0 %v2124
      %2390 = vmatmul.mubr.f32.gmra.mrb[0].mxu0 %v2028
      %v2391 = vpop.f32.mrb[0].mxu0
      %v2392 = vadd.f32 0.0, %v2391
      %v2393 = vpop.f32.mrb[0].mxu0
      %2394 = vmatprep.mubr.f32.mxu0 %v2125
      %2395 = vmatmul.mubr.f32.gmra.mrb[0].mxu0 %v2029
      %v2396 = vpop.f32.mrb[0].mxu0
      %v2397 = vadd.f32 0.0, %v2396
      %v2398 = vpop.f32.mrb[0].mxu0
      %2399 = vmatprep.mubr.f32.mxu0 %v2126
      %2400 = vmatmul.mubr.f32.gmra.mrb[0].mxu0 %v2030
      %v2401 = vpop.f32.mrb[0].mxu0
      %v2402 = vadd.f32 0.0, %v2401
      %v2403 = vpop.f32.mrb[0].mxu0
      %2404 = vmatprep.mubr.f32.mxu0 %v2127
      %2405 = vmatmul.mubr.f32.gmra.mrb[0].mxu0 %v2031
      %v2406 = vpop.f32.mrb[0].mxu0
      %v2407 = vadd.f32 0.0, %v2406
      %v2408 = vpop.f32.mrb[0].mxu0
      %2409 = vmatprep.mubr.f32.mxu0 %v2128
      %2410 = vmatmul.mubr.f32.gmra.mrb[0].mxu0 %v2032
      %v2411 = vpop.f32.mrb[0].mxu0
      %v2412 = vadd.f32 0.0, %v2411
      %v2413 = vpop.f32.mrb[0].mxu0
      %2414 = vmatprep.mubr.f32.mxu0 %v2129
      %2415 = vmatmul.mubr.f32.gmra.mrb[0].mxu0 %v2033
      %v2416 = vpop.f32.mrb[0].mxu0
      %v2417 = vadd.f32 0.0, %v2416
      %v2418 = vpop.f32.mrb[0].mxu0
      %2419 = vmatprep.mubr.f32.mxu0 %v2130
      %2420 = vmatmul.mubr.f32.gmra.mrb[0].mxu0 %v2034
      %v2421 = vpop.f32.mrb[0].mxu0
      %v2422 = vadd.f32 0.0, %v2421
      %v2423 = vpop.f32.mrb[0].mxu0
      %2424 = vmatprep.mubr.f32.mxu0 %v2131
      %2425 = vmatmul.mubr.f32.gmra.mrb[0].mxu0 %v2035
      %v2426 = vpop.f32.mrb[0].mxu0
      %v2427 = vadd.f32 0.0, %v2426
      %v2428 = vpop.f32.mrb[0].mxu0
      %2429 = vmatprep.mubr.f32.mxu0 %v2132
      %2430 = vmatmul.mubr.f32.gmra.mrb[0].mxu0 %v2036
      %v2431 = vpop.f32.mrb[0].mxu0
      %v2432 = vadd.f32 0.0, %v2431
      %v2433 = vpop.f32.mrb[0].mxu0
      %2434 = vmatprep.mubr.f32.mxu0 %v2133
      %2435 = vmatmul.mubr.f32.gmra.mrb[0].mxu0 %v2037
      %v2436 = vpop.f32.mrb[0].mxu0
      %v2437 = vadd.f32 0.0, %v2436
      %v2438 = vpop.f32.mrb[0].mxu0
      %2439 = vmatprep.mubr.f32.mxu0 %v2134
      %2440 = vmatmul.mubr.f32.gmra.mrb[0].mxu0 %v2038
      %v2441 = vpop.f32.mrb[0].mxu0
      %v2442 = vadd.f32 0.0, %v2441
      %v2443 = vpop.f32.mrb[0].mxu0
      %2444 = vmatprep.mubr.f32.mxu0 %v2135
      %2445 = vmatmul.mubr.f32.gmra.mrb[0].mxu0 %v2039
      %v2446 = vpop.f32.mrb[0].mxu0
      %v2447 = vadd.f32 0.0, %v2446
      %v2448 = vpop.f32.mrb[0].mxu0
      %2449 = vmatprep.mubr.f32.mxu0 %v2136
      %2450 = vmatmul.mubr.f32.gmra.mrb[0].mxu0 %v2040
      %v2451 = vpop.f32.mrb[0].mxu0
      %v2452 = vadd.f32 0.0, %v2451
      %v2453 = vpop.f32.mrb[0].mxu0
      %2454 = vmatprep.mubr.f32.mxu0 %v2137
      %2455 = vmatmul.mubr.f32.gmra.mrb[0].mxu0 %v2041
      %v2456 = vpop.f32.mrb[0].mxu0
      %v2457 = vadd.f32 0.0, %v2456
      %v2458 = vpop.f32.mrb[0].mxu0
      %2459 = vmatprep.mubr.f32.mxu0 %v2138
      %2460 = vmatmul.mubr.f32.gmra.mrb[0].mxu0 %v2042
      %v2461 = vpop.f32.mrb[0].mxu0
      %v2462 = vadd.f32 0.0, %v2461
      %v2463 = vpop.f32.mrb[0].mxu0
      %2464 = vmatprep.mubr.f32.mxu0 %v2139
      %2465 = vmatmul.mubr.f32.gmra.mrb[0].mxu0 %v2043
      %v2466 = vpop.f32.mrb[0].mxu0
      %v2467 = vadd.f32 0.0, %v2466
      %v2468 = vpop.f32.mrb[0].mxu0
      %2469 = vmatprep.mubr.f32.mxu0 %v2140
      %2470 = vmatmul.mubr.f32.gmra.mrb[0].mxu0 %v2044
      %v2471 = vpop.f32.mrb[0].mxu0
      %v2472 = vadd.f32 0.0, %v2471
      %v2473 = vpop.f32.mrb[0].mxu0
      %2474 = vmatprep.mubr.f32.mxu0 %v2141
      %2475 = vmatmul.mubr.f32.gmra.mrb[0].mxu0 %v2045
      %v2476 = vpop.f32.mrb[0].mxu0
      %v2477 = vadd.f32 0.0, %v2476
      %v2478 = vpop.f32.mrb[0].mxu0
      %2479 = vmatprep.mubr.f32.mxu0 %v2142
      %2480 = vmatmul.mubr.f32.gmra.mrb[0].mxu0 %v2046
      %v2481 = vpop.f32.mrb[0].mxu0
      %v2482 = vadd.f32 0.0, %v2481
      %v2483 = vpop.f32.mrb[0].mxu0
      %2484 = vmatprep.mubr.f32.mxu0 %v2143
      %2485 = vmatmul.mubr.f32.gmra.mrb[0].mxu0 %v2047
      %v2486 = vpop.f32.mrb[0].mxu0
      %v2487 = vadd.f32 0.0, %v2486
      %v2488 = vpop.f32.mrb[0].mxu0
      %2489 = vmatprep.mubr.f32.mxu0 %v2144
      %2490 = vmatmul.mubr.f32.gmra.mrb[0].mxu0 %v2048
      %v2491 = vpop.f32.mrb[0].mxu0
      %v2492 = vadd.f32 0.0, %v2491
      %v2493 = vpop.f32.mrb[0].mxu0
      %2494 = vmatprep.mubr.f32.mxu0 %v2145
      %2495 = vmatmul.mubr.f32.gmra.mrb[0].mxu0 %v2049
      %v2496 = vpop.f32.mrb[0].mxu0
      %v2497 = vadd.f32 0.0, %v2496
      %v2498 = vpop.f32.mrb[0].mxu0
      %2499 = vmatprep.mubr.f32.mxu0 %v2146
      %2500 = vmatmul.mubr.f32.gmra.mrb[0].mxu0 %v2050
      %v2501 = vpop.f32.mrb[0].mxu0
      %v2502 = vadd.f32 0.0, %v2501
      %v2503 = vpop.f32.mrb[0].mxu0
      %2504 = vmatprep.mubr.f32.mxu0 %v2147
      %2505 = vmatmul.mubr.f32.gmra.mrb[0].mxu0 %v2051
      %v2506 = vpop.f32.mrb[0].mxu0
      %v2507 = vadd.f32 0.0, %v2506
      %v2508 = vpop.f32.mrb[0].mxu0
      %2509 = vmatprep.mubr.f32.mxu0 %v2148
      %2510 = vmatmul.mubr.f32.gmra.mrb[0].mxu0 %v2052
      %v2511 = vpop.f32.mrb[0].mxu0
      %v2512 = vadd.f32 0.0, %v2511
      %v2513 = vpop.f32.mrb[0].mxu0
      %2514 = vmatprep.mubr.f32.mxu0 %v2149
      %2515 = vmatmul.mubr.f32.gmra.mrb[0].mxu0 %v2053
      %v2516 = vpop.f32.mrb[0].mxu0
      %v2517 = vadd.f32 0.0, %v2516
      %v2518 = vpop.f32.mrb[0].mxu0
      %2519 = vmatprep.mubr.f32.mxu0 %v2150
      %2520 = vmatmul.mubr.f32.gmra.mrb[0].mxu0 %v2054
      %v2521 = vpop.f32.mrb[0].mxu0
      %v2522 = vadd.f32 0.0, %v2521
      %v2523 = vpop.f32.mrb[0].mxu0
      %2524 = vmatprep.mubr.f32.mxu0 %v2151
      %2525 = vmatmul.mubr.f32.gmra.mrb[0].mxu0 %v2055
      %v2526 = vpop.f32.mrb[0].mxu0
      %v2527 = vadd.f32 0.0, %v2526
      %v2528 = vpop.f32.mrb[0].mxu0
      %2529 = vmatprep.mubr.f32.mxu0 %v2152
      %2530 = vmatmul.mubr.f32.gmra.mrb[0].mxu0 %v2056
      %v2531 = vpop.f32.mrb[0].mxu0
      %v2532 = vadd.f32 0.0, %v2531
      %v2533 = vpop.f32.mrb[0].mxu0
      %2534 = vmatprep.mubr.f32.mxu0 %v2153
      %2535 = vmatmul.mubr.f32.gmra.mrb[0].mxu0 %v2057
      %v2536 = vpop.f32.mrb[0].mxu0
      %v2537 = vadd.f32 0.0, %v2536
      %v2538 = vpop.f32.mrb[0].mxu0
      %2539 = vmatprep.mubr.f32.mxu0 %v2154
      %2540 = vmatmul.mubr.f32.gmra.mrb[0].mxu0 %v2058
      %v2541 = vpop.f32.mrb[0].mxu0
      %v2542 = vadd.f32 0.0, %v2541
      %v2543 = vpop.f32.mrb[0].mxu0
      %2544 = vmatprep.mubr.f32.mxu0 %v2155
      %2545 = vmatmul.mubr.f32.gmra.mrb[0].mxu0 %v2059
      %v2546 = vpop.f32.mrb[0].mxu0
      %v2547 = vadd.f32 0.0, %v2546
      %v2548 = vpop.f32.mrb[0].mxu0
      %2549 = vdwg.mxu0
      %2550 = vmatprep.subr.mxu0 0.0
      %2551 = vmatpush1.msra.mxu0 %v2225
      %2552 = vmatprep.subr.mxu0 0.0
      %2553 = vmatpush1.msra.mxu0 %v2226
      %2554 = vmatprep.subr.mxu0 0.0
      %2555 = vmatpush1.msra.mxu0 %v2227
      %2556 = vmatprep.subr.mxu0 0.0
      %2557 = vmatpush1.msra.mxu0 %v2228
      %2558 = vmatprep.subr.mxu0 0.0
      %2559 = vmatpush1.msra.mxu0 0.0
      %2560 = vmatprep.subr.mxu0 0.0
      %2561 = vmatpush1.msra.mxu0 0.0
      %2562 = vmatprep.subr.mxu0 0.0
      %2563 = vmatpush1.msra.mxu0 0.0
      %2564 = vmatprep.subr.mxu0 0.0
      %2565 = vmatpush1.msra.mxu0 0.0
      %2566 = vmatprep.subr.mxu0 0.0
      %2567 = vmatpush1.msra.mxu0 0.0
      %2568 = vmatprep.subr.mxu0 0.0
      %2569 = vmatpush1.msra.mxu0 0.0
      %2570 = vmatprep.subr.mxu0 0.0
      %2571 = vmatpush1.msra.mxu0 0.0
      %2572 = vmatprep.subr.mxu0 0.0
      %2573 = vmatpush1.msra.mxu0 0.0
      %2574 = vmatprep.subr.mxu0 0.0
      %2575 = vmatpush1.msra.mxu0 0.0
      %2576 = vmatprep.subr.mxu0 0.0
      %2577 = vmatpush1.msra.mxu0 0.0
      %2578 = vmatprep.subr.mxu0 0.0
      %2579 = vmatpush1.msra.mxu0 0.0
      %2580 = vmatprep.subr.mxu0 0.0
      %2581 = vmatpush1.msra.mxu0 0.0
      %2582 = vmatprep.subr.mxu0 0.0
      %2583 = vmatpush1.msra.mxu0 0.0
      %2584 = vmatprep.subr.mxu0 0.0
      %2585 = vmatpush1.msra.mxu0 0.0
      %2586 = vmatprep.subr.mxu0 0.0
      %2587 = vmatpush1.msra.mxu0 0.0
      %2588 = vmatprep.subr.mxu0 0.0
      %2589 = vmatpush1.msra.mxu0 0.0
      %2590 = vmatprep.subr.mxu0 0.0
      %2591 = vmatpush1.msra.mxu0 0.0
      %2592 = vmatprep.subr.mxu0 0.0
      %2593 = vmatpush1.msra.mxu0 0.0
      %2594 = vmatprep.subr.mxu0 0.0
      %2595 = vmatpush1.msra.mxu0 0.0
      %2596 = vmatprep.subr.mxu0 0.0
      %2597 = vmatpush1.msra.mxu0 0.0
      %2598 = vmatprep.subr.mxu0 0.0
      %2599 = vmatpush1.msra.mxu0 0.0
      %2600 = vmatprep.subr.mxu0 0.0
      %2601 = vmatpush1.msra.mxu0 0.0
      %2602 = vmatprep.subr.mxu0 0.0
      %2603 = vmatpush1.msra.mxu0 0.0
      %2604 = vmatprep.subr.mxu0 0.0
      %2605 = vmatpush1.msra.mxu0 0.0
      %2606 = vmatprep.subr.mxu0 0.0
      %2607 = vmatpush1.msra.mxu0 0.0
      %2608 = vmatprep.subr.mxu0 0.0
      %2609 = vmatpush1.msra.mxu0 0.0
      %2610 = vmatprep.subr.mxu0 0.0
      %2611 = vmatpush1.msra.mxu0 0.0
      %2612 = vmatprep.subr.mxu0 0.0
      %2613 = vmatpush1.msra.mxu0 0.0
      %2614 = vmatprep.mubr.f32.mxu0 0.0
      %2615 = vmatmul.mubr.f32.gmra.mrb[0].mxu0 %v2230
      %v2616 = vpop.f32.mrb[0].mxu0
      %v2617 = vadd.f32 %v2392, %v2616
      %v2618 = vpop.f32.mrb[0].mxu0
      %2619 = vmatprep.mubr.f32.mxu0 0.0
      %2620 = vmatmul.mubr.f32.gmra.mrb[0].mxu0 %v2233
      %v2621 = vpop.f32.mrb[0].mxu0
      %v2622 = vadd.f32 %v2397, %v2621
      %v2623 = vpop.f32.mrb[0].mxu0
      %2624 = vmatprep.mubr.f32.mxu0 0.0
      %2625 = vmatmul.mubr.f32.gmra.mrb[0].mxu0 %v2236
      %v2626 = vpop.f32.mrb[0].mxu0
      %v2627 = vadd.f32 %v2402, %v2626
      %v2628 = vpop.f32.mrb[0].mxu0
      %2629 = vmatprep.mubr.f32.mxu0 0.0
      %2630 = vmatmul.mubr.f32.gmra.mrb[0].mxu0 %v2239
      %v2631 = vpop.f32.mrb[0].mxu0
      %v2632 = vadd.f32 %v2407, %v2631
      %v2633 = vpop.f32.mrb[0].mxu0
      %2634 = vmatprep.mubr.f32.mxu0 0.0
      %2635 = vmatmul.mubr.f32.gmra.mrb[0].mxu0 %v2242
      %v2636 = vpop.f32.mrb[0].mxu0
      %v2637 = vadd.f32 %v2412, %v2636
      %v2638 = vpop.f32.mrb[0].mxu0
      %2639 = vmatprep.mubr.f32.mxu0 0.0
      %2640 = vmatmul.mubr.f32.gmra.mrb[0].mxu0 %v2245
      %v2641 = vpop.f32.mrb[0].mxu0
      %v2642 = vadd.f32 %v2417, %v2641
      %v2643 = vpop.f32.mrb[0].mxu0
      %2644 = vmatprep.mubr.f32.mxu0 0.0
      %2645 = vmatmul.mubr.f32.gmra.mrb[0].mxu0 %v2248
      %v2646 = vpop.f32.mrb[0].mxu0
      %v2647 = vadd.f32 %v2422, %v2646
      %v2648 = vpop.f32.mrb[0].mxu0
      %2649 = vmatprep.mubr.f32.mxu0 0.0
      %2650 = vmatmul.mubr.f32.gmra.mrb[0].mxu0 %v2251
      %v2651 = vpop.f32.mrb[0].mxu0
      %v2652 = vadd.f32 %v2427, %v2651
      %v2653 = vpop.f32.mrb[0].mxu0
      %2654 = vmatprep.mubr.f32.mxu0 0.0
      %2655 = vmatmul.mubr.f32.gmra.mrb[0].mxu0 %v2254
      %v2656 = vpop.f32.mrb[0].mxu0
      %v2657 = vadd.f32 %v2432, %v2656
      %v2658 = vpop.f32.mrb[0].mxu0
      %2659 = vmatprep.mubr.f32.mxu0 0.0
      %2660 = vmatmul.mubr.f32.gmra.mrb[0].mxu0 %v2257
      %v2661 = vpop.f32.mrb[0].mxu0
      %v2662 = vadd.f32 %v2437, %v2661
      %v2663 = vpop.f32.mrb[0].mxu0
      %2664 = vmatprep.mubr.f32.mxu0 0.0
      %2665 = vmatmul.mubr.f32.gmra.mrb[0].mxu0 %v2260
      %v2666 = vpop.f32.mrb[0].mxu0
      %v2667 = vadd.f32 %v2442, %v2666
      %v2668 = vpop.f32.mrb[0].mxu0
      %2669 = vmatprep.mubr.f32.mxu0 0.0
      %2670 = vmatmul.mubr.f32.gmra.mrb[0].mxu0 %v2263
      %v2671 = vpop.f32.mrb[0].mxu0
      %v2672 = vadd.f32 %v2447, %v2671
      %v2673 = vpop.f32.mrb[0].mxu0
      %2674 = vmatprep.mubr.f32.mxu0 0.0
      %2675 = vmatmul.mubr.f32.gmra.mrb[0].mxu0 %v2266
      %v2676 = vpop.f32.mrb[0].mxu0
      %v2677 = vadd.f32 %v2452, %v2676
      %v2678 = vpop.f32.mrb[0].mxu0
      %2679 = vmatprep.mubr.f32.mxu0 0.0
      %2680 = vmatmul.mubr.f32.gmra.mrb[0].mxu0 %v2269
      %v2681 = vpop.f32.mrb[0].mxu0
      %v2682 = vadd.f32 %v2457, %v2681
      %v2683 = vpop.f32.mrb[0].mxu0
      %2684 = vmatprep.mubr.f32.mxu0 0.0
      %2685 = vmatmul.mubr.f32.gmra.mrb[0].mxu0 %v2272
      %v2686 = vpop.f32.mrb[0].mxu0
      %v2687 = vadd.f32 %v2462, %v2686
      %v2688 = vpop.f32.mrb[0].mxu0
      %2689 = vmatprep.mubr.f32.mxu0 0.0
      %2690 = vmatmul.mubr.f32.gmra.mrb[0].mxu0 %v2275
      %v2691 = vpop.f32.mrb[0].mxu0
      %v2692 = vadd.f32 %v2467, %v2691
      %v2693 = vpop.f32.mrb[0].mxu0
      %2694 = vmatprep.mubr.f32.mxu0 0.0
      %2695 = vmatmul.mubr.f32.gmra.mrb[0].mxu0 %v2278
      %v2696 = vpop.f32.mrb[0].mxu0
      %v2697 = vadd.f32 %v2472, %v2696
      %v2698 = vpop.f32.mrb[0].mxu0
      %2699 = vmatprep.mubr.f32.mxu0 0.0
      %2700 = vmatmul.mubr.f32.gmra.mrb[0].mxu0 %v2281
      %v2701 = vpop.f32.mrb[0].mxu0
      %v2702 = vadd.f32 %v2477, %v2701
      %v2703 = vpop.f32.mrb[0].mxu0
      %2704 = vmatprep.mubr.f32.mxu0 0.0
      %2705 = vmatmul.mubr.f32.gmra.mrb[0].mxu0 %v2284
      %v2706 = vpop.f32.mrb[0].mxu0
      %v2707 = vadd.f32 %v2482, %v2706
      %v2708 = vpop.f32.mrb[0].mxu0
      %2709 = vmatprep.mubr.f32.mxu0 0.0
      %2710 = vmatmul.mubr.f32.gmra.mrb[0].mxu0 %v2287
      %v2711 = vpop.f32.mrb[0].mxu0
      %v2712 = vadd.f32 %v2487, %v2711
      %v2713 = vpop.f32.mrb[0].mxu0
      %2714 = vmatprep.mubr.f32.mxu0 0.0
      %2715 = vmatmul.mubr.f32.gmra.mrb[0].mxu0 %v2290
      %v2716 = vpop.f32.mrb[0].mxu0
      %v2717 = vadd.f32 %v2492, %v2716
      %v2718 = vpop.f32.mrb[0].mxu0
      %2719 = vmatprep.mubr.f32.mxu0 0.0
      %2720 = vmatmul.mubr.f32.gmra.mrb[0].mxu0 %v2293
      %v2721 = vpop.f32.mrb[0].mxu0
      %v2722 = vadd.f32 %v2497, %v2721
      %v2723 = vpop.f32.mrb[0].mxu0
      %2724 = vmatprep.mubr.f32.mxu0 0.0
      %2725 = vmatmul.mubr.f32.gmra.mrb[0].mxu0 %v2296
      %v2726 = vpop.f32.mrb[0].mxu0
      %v2727 = vadd.f32 %v2502, %v2726
      %v2728 = vpop.f32.mrb[0].mxu0
      %2729 = vmatprep.mubr.f32.mxu0 0.0
      %2730 = vmatmul.mubr.f32.gmra.mrb[0].mxu0 %v2299
      %v2731 = vpop.f32.mrb[0].mxu0
      %v2732 = vadd.f32 %v2507, %v2731
      %v2733 = vpop.f32.mrb[0].mxu0
      %2734 = vmatprep.mubr.f32.mxu0 0.0
      %2735 = vmatmul.mubr.f32.gmra.mrb[0].mxu0 %v2302
      %v2736 = vpop.f32.mrb[0].mxu0
      %v2737 = vadd.f32 %v2512, %v2736
      %v2738 = vpop.f32.mrb[0].mxu0
      %2739 = vmatprep.mubr.f32.mxu0 0.0
      %2740 = vmatmul.mubr.f32.gmra.mrb[0].mxu0 %v2305
      %v2741 = vpop.f32.mrb[0].mxu0
      %v2742 = vadd.f32 %v2517, %v2741
      %v2743 = vpop.f32.mrb[0].mxu0
      %2744 = vmatprep.mubr.f32.mxu0 0.0
      %2745 = vmatmul.mubr.f32.gmra.mrb[0].mxu0 %v2308
      %v2746 = vpop.f32.mrb[0].mxu0
      %v2747 = vadd.f32 %v2522, %v2746
      %v2748 = vpop.f32.mrb[0].mxu0
      %2749 = vmatprep.mubr.f32.mxu0 0.0
      %2750 = vmatmul.mubr.f32.gmra.mrb[0].mxu0 %v2311
      %v2751 = vpop.f32.mrb[0].mxu0
      %v2752 = vadd.f32 %v2527, %v2751
      %v2753 = vpop.f32.mrb[0].mxu0
      %2754 = vmatprep.mubr.f32.mxu0 0.0
      %2755 = vmatmul.mubr.f32.gmra.mrb[0].mxu0 %v2314
      %v2756 = vpop.f32.mrb[0].mxu0
      %v2757 = vadd.f32 %v2532, %v2756
      %v2758 = vpop.f32.mrb[0].mxu0
      %2759 = vmatprep.mubr.f32.mxu0 0.0
      %2760 = vmatmul.mubr.f32.gmra.mrb[0].mxu0 %v2317
      %v2761 = vpop.f32.mrb[0].mxu0
      %v2762 = vadd.f32 %v2537, %v2761
      %v2763 = vpop.f32.mrb[0].mxu0
      %2764 = vmatprep.mubr.f32.mxu0 0.0
      %2765 = vmatmul.mubr.f32.gmra.mrb[0].mxu0 %v2320
      %v2766 = vpop.f32.mrb[0].mxu0
      %v2767 = vadd.f32 %v2542, %v2766
      %v2768 = vpop.f32.mrb[0].mxu0
      %2769 = vmatprep.mubr.f32.mxu0 0.0
      %2770 = vmatmul.mubr.f32.gmra.mrb[0].mxu0 %v2323
      %v2771 = vpop.f32.mrb[0].mxu0
      %v2772 = vadd.f32 %v2547, %v2771
      %v2773 = vpop.f32.mrb[0].mxu0
      %2774 = vdwg.mxu0
      %vm2775 = vcmask 293888
      %v2777 = vsel %vm2775, %v2156, 0
      %v2780 = vsel %vm2775, %v2157, 0
      %v2783 = vsel %vm2775, %v2158, 0
      %v2786 = vsel %vm2775, %v2159, 0
      %v2789 = vsel %vm2775, %v2160, 0
      %v2792 = vsel %vm2775, %v2161, 0
      %v2795 = vsel %vm2775, %v2162, 0
      %v2798 = vsel %vm2775, %v2163, 0
      %v2801 = vsel %vm2775, %v2164, 0
      %v2804 = vsel %vm2775, %v2165, 0
      %v2807 = vsel %vm2775, %v2166, 0
      %v2810 = vsel %vm2775, %v2167, 0
      %v2813 = vsel %vm2775, %v2168, 0
      %v2816 = vsel %vm2775, %v2169, 0
      %v2819 = vsel %vm2775, %v2170, 0
      %v2822 = vsel %vm2775, %v2171, 0
      %v2825 = vsel %vm2775, %v2172, 0
      %v2828 = vsel %vm2775, %v2173, 0
      %v2831 = vsel %vm2775, %v2174, 0
      %v2834 = vsel %vm2775, %v2175, 0
      %v2837 = vsel %vm2775, %v2176, 0
      %v2840 = vsel %vm2775, %v2177, 0
      %v2843 = vsel %vm2775, %v2178, 0
      %v2846 = vsel %vm2775, %v2179, 0
      %v2849 = vsel %vm2775, %v2180, 0
      %v2852 = vsel %vm2775, %v2181, 0
      %v2855 = vsel %vm2775, %v2182, 0
      %v2858 = vsel %vm2775, %v2183, 0
      %v2861 = vsel %vm2775, %v2184, 0
      %v2864 = vsel %vm2775, %v2185, 0
      %v2867 = vsel %vm2775, %v2186, 0
      %v2870 = vsel %vm2775, %v2187, 0
      %vm2872 = vcmask 1043456
      %v2874 = vsel %vm2872, %v2192, 0
      %2876 = vmatprep.subr.mxu0 0.0
      %2877 = vmatpush1.msra.mxu0 %v2188
      %2878 = vmatprep.subr.mxu0 0.0
      %2879 = vmatpush1.msra.mxu0 %v2189
      %2880 = vmatprep.subr.mxu0 0.0
      %2881 = vmatpush1.msra.mxu0 %v2190
      %2882 = vmatprep.subr.mxu0 0.0
      %2883 = vmatpush1.msra.mxu0 %v2191
      %2884 = vmatprep.subr.mxu0 0.0
      %2885 = vmatpush1.msra.mxu0 %v2874
      %2886 = vmatprep.subr.mxu0 0.0
      %2887 = vmatpush1.msra.mxu0 0.0
      %2888 = vmatprep.subr.mxu0 0.0
      %2889 = vmatpush1.msra.mxu0 0.0
      %2890 = vmatprep.subr.mxu0 0.0
      %2891 = vmatpush1.msra.mxu0 0.0
      %2892 = vmatprep.subr.mxu0 0.0
      %2893 = vmatpush1.msra.mxu0 0.0
      %2894 = vmatprep.subr.mxu0 0.0
      %2895 = vmatpush1.msra.mxu0 0.0
      %2896 = vmatprep.subr.mxu0 0.0
      %2897 = vmatpush1.msra.mxu0 0.0
      %2898 = vmatprep.subr.mxu0 0.0
      %2899 = vmatpush1.msra.mxu0 0.0
      %2900 = vmatprep.subr.mxu0 0.0
      %2901 = vmatpush1.msra.mxu0 0.0
      %2902 = vmatprep.subr.mxu0 0.0
      %2903 = vmatpush1.msra.mxu0 0.0
      %2904 = vmatprep.subr.mxu0 0.0
      %2905 = vmatpush1.msra.mxu0 0.0
      %2906 = vmatprep.subr.mxu0 0.0
      %2907 = vmatpush1.msra.mxu0 0.0
      %2908 = vmatprep.subr.mxu0 0.0
      %2909 = vmatpush1.msra.mxu0 0.0
      %2910 = vmatprep.subr.mxu0 0.0
      %2911 = vmatpush1.msra.mxu0 0.0
      %2912 = vmatprep.subr.mxu0 0.0
      %2913 = vmatpush1.msra.mxu0 0.0
      %2914 = vmatprep.subr.mxu0 0.0
      %2915 = vmatpush1.msra.mxu0 0.0
      %2916 = vmatprep.subr.mxu0 0.0
      %2917 = vmatpush1.msra.mxu0 0.0
      %2918 = vmatprep.subr.mxu0 0.0
      %2919 = vmatpush1.msra.mxu0 0.0
      %2920 = vmatprep.subr.mxu0 0.0
      %2921 = vmatpush1.msra.mxu0 0.0
      %2922 = vmatprep.subr.mxu0 0.0
      %2923 = vmatpush1.msra.mxu0 0.0
      %2924 = vmatprep.subr.mxu0 0.0
      %2925 = vmatpush1.msra.mxu0 0.0
      %2926 = vmatprep.subr.mxu0 0.0
      %2927 = vmatpush1.msra.mxu0 0.0
      %2928 = vmatprep.subr.mxu0 0.0
      %2929 = vmatpush1.msra.mxu0 0.0
      %2930 = vmatprep.subr.mxu0 0.0
      %2931 = vmatpush1.msra.mxu0 0.0
      %2932 = vmatprep.subr.mxu0 0.0
      %2933 = vmatpush1.msra.mxu0 0.0
      %2934 = vmatprep.subr.mxu0 0.0
      %2935 = vmatpush1.msra.mxu0 0.0
      %2936 = vmatprep.subr.mxu0 0.0
      %2937 = vmatpush1.msra.mxu0 0.0
      %2938 = vmatprep.subr.mxu0 0.0
      %2939 = vmatpush1.msra.mxu0 0.0
      %2940 = vmatprep.mubr.f32.mxu0 0.0
      %2941 = vmatmul.mubr.f32.gmra.mrb[0].mxu0 %v2777
      %v2942 = vpop.f32.mrb[0].mxu0
      %v2943 = vadd.f32 %v2617, %v2942
      %v2944 = vpop.f32.mrb[0].mxu0
      %2945 = vmatprep.mubr.f32.mxu0 0.0
      %2946 = vmatmul.mubr.f32.gmra.mrb[0].mxu0 %v2780
      %v2947 = vpop.f32.mrb[0].mxu0
      %v2948 = vadd.f32 %v2622, %v2947
      %v2949 = vpop.f32.mrb[0].mxu0
      %2950 = vmatprep.mubr.f32.mxu0 0.0
      %2951 = vmatmul.mubr.f32.gmra.mrb[0].mxu0 %v2783
      %v2952 = vpop.f32.mrb[0].mxu0
      %v2953 = vadd.f32 %v2627, %v2952
      %v2954 = vpop.f32.mrb[0].mxu0
      %2955 = vmatprep.mubr.f32.mxu0 0.0
      %2956 = vmatmul.mubr.f32.gmra.mrb[0].mxu0 %v2786
      %v2957 = vpop.f32.mrb[0].mxu0
      %v2958 = vadd.f32 %v2632, %v2957
      %v2959 = vpop.f32.mrb[0].mxu0
      %2960 = vmatprep.mubr.f32.mxu0 0.0
      %2961 = vmatmul.mubr.f32.gmra.mrb[0].mxu0 %v2789
      %v2962 = vpop.f32.mrb[0].mxu0
      %v2963 = vadd.f32 %v2637, %v2962
      %v2964 = vpop.f32.mrb[0].mxu0
      %2965 = vmatprep.mubr.f32.mxu0 0.0
      %2966 = vmatmul.mubr.f32.gmra.mrb[0].mxu0 %v2792
      %v2967 = vpop.f32.mrb[0].mxu0
      %v2968 = vadd.f32 %v2642, %v2967
      %v2969 = vpop.f32.mrb[0].mxu0
      %2970 = vmatprep.mubr.f32.mxu0 0.0
      %2971 = vmatmul.mubr.f32.gmra.mrb[0].mxu0 %v2795
      %v2972 = vpop.f32.mrb[0].mxu0
      %v2973 = vadd.f32 %v2647, %v2972
      %v2974 = vpop.f32.mrb[0].mxu0
      %2975 = vmatprep.mubr.f32.mxu0 0.0
      %2976 = vmatmul.mubr.f32.gmra.mrb[0].mxu0 %v2798
      %v2977 = vpop.f32.mrb[0].mxu0
      %v2978 = vadd.f32 %v2652, %v2977
      %v2979 = vpop.f32.mrb[0].mxu0
      %2980 = vmatprep.mubr.f32.mxu0 0.0
      %2981 = vmatmul.mubr.f32.gmra.mrb[0].mxu0 %v2801
      %v2982 = vpop.f32.mrb[0].mxu0
      %v2983 = vadd.f32 %v2657, %v2982
      %v2984 = vpop.f32.mrb[0].mxu0
      %2985 = vmatprep.mubr.f32.mxu0 0.0
      %2986 = vmatmul.mubr.f32.gmra.mrb[0].mxu0 %v2804
      %v2987 = vpop.f32.mrb[0].mxu0
      %v2988 = vadd.f32 %v2662, %v2987
      %v2989 = vpop.f32.mrb[0].mxu0
      %2990 = vmatprep.mubr.f32.mxu0 0.0
      %2991 = vmatmul.mubr.f32.gmra.mrb[0].mxu0 %v2807
      %v2992 = vpop.f32.mrb[0].mxu0
      %v2993 = vadd.f32 %v2667, %v2992
      %v2994 = vpop.f32.mrb[0].mxu0
      %2995 = vmatprep.mubr.f32.mxu0 0.0
      %2996 = vmatmul.mubr.f32.gmra.mrb[0].mxu0 %v2810
      %v2997 = vpop.f32.mrb[0].mxu0
      %v2998 = vadd.f32 %v2672, %v2997
      %v2999 = vpop.f32.mrb[0].mxu0
      %3000 = vmatprep.mubr.f32.mxu0 0.0
      %3001 = vmatmul.mubr.f32.gmra.mrb[0].mxu0 %v2813
      %v3002 = vpop.f32.mrb[0].mxu0
      %v3003 = vadd.f32 %v2677, %v3002
      %v3004 = vpop.f32.mrb[0].mxu0
      %3005 = vmatprep.mubr.f32.mxu0 0.0
      %3006 = vmatmul.mubr.f32.gmra.mrb[0].mxu0 %v2816
      %v3007 = vpop.f32.mrb[0].mxu0
      %v3008 = vadd.f32 %v2682, %v3007
      %v3009 = vpop.f32.mrb[0].mxu0
      %3010 = vmatprep.mubr.f32.mxu0 0.0
      %3011 = vmatmul.mubr.f32.gmra.mrb[0].mxu0 %v2819
      %v3012 = vpop.f32.mrb[0].mxu0
      %v3013 = vadd.f32 %v2687, %v3012
      %v3014 = vpop.f32.mrb[0].mxu0
      %3015 = vmatprep.mubr.f32.mxu0 0.0
      %3016 = vmatmul.mubr.f32.gmra.mrb[0].mxu0 %v2822
      %v3017 = vpop.f32.mrb[0].mxu0
      %v3018 = vadd.f32 %v2692, %v3017
      %v3019 = vpop.f32.mrb[0].mxu0
      %3020 = vmatprep.mubr.f32.mxu0 0.0
      %3021 = vmatmul.mubr.f32.gmra.mrb[0].mxu0 %v2825
      %v3022 = vpop.f32.mrb[0].mxu0
      %v3023 = vadd.f32 %v2697, %v3022
      %v3024 = vpop.f32.mrb[0].mxu0
      %3025 = vmatprep.mubr.f32.mxu0 0.0
      %3026 = vmatmul.mubr.f32.gmra.mrb[0].mxu0 %v2828
      %v3027 = vpop.f32.mrb[0].mxu0
      %v3028 = vadd.f32 %v2702, %v3027
      %v3029 = vpop.f32.mrb[0].mxu0
      %3030 = vmatprep.mubr.f32.mxu0 0.0
      %3031 = vmatmul.mubr.f32.gmra.mrb[0].mxu0 %v2831
      %v3032 = vpop.f32.mrb[0].mxu0
      %v3033 = vadd.f32 %v2707, %v3032
      %v3034 = vpop.f32.mrb[0].mxu0
      %3035 = vmatprep.mubr.f32.mxu0 0.0
      %3036 = vmatmul.mubr.f32.gmra.mrb[0].mxu0 %v2834
      %v3037 = vpop.f32.mrb[0].mxu0
      %v3038 = vadd.f32 %v2712, %v3037
      %v3039 = vpop.f32.mrb[0].mxu0
      %3040 = vmatprep.mubr.f32.mxu0 0.0
      %3041 = vmatmul.mubr.f32.gmra.mrb[0].mxu0 %v2837
      %v3042 = vpop.f32.mrb[0].mxu0
      %v3043 = vadd.f32 %v2717, %v3042
      %v3044 = vpop.f32.mrb[0].mxu0
      %3045 = vmatprep.mubr.f32.mxu0 0.0
      %3046 = vmatmul.mubr.f32.gmra.mrb[0].mxu0 %v2840
      %v3047 = vpop.f32.mrb[0].mxu0
      %v3048 = vadd.f32 %v2722, %v3047
      %v3049 = vpop.f32.mrb[0].mxu0
      %3050 = vmatprep.mubr.f32.mxu0 0.0
      %3051 = vmatmul.mubr.f32.gmra.mrb[0].mxu0 %v2843
      %v3052 = vpop.f32.mrb[0].mxu0
      %v3053 = vadd.f32 %v2727, %v3052
      %v3054 = vpop.f32.mrb[0].mxu0
      %3055 = vmatprep.mubr.f32.mxu0 0.0
      %3056 = vmatmul.mubr.f32.gmra.mrb[0].mxu0 %v2846
      %v3057 = vpop.f32.mrb[0].mxu0
      %v3058 = vadd.f32 %v2732, %v3057
      %v3059 = vpop.f32.mrb[0].mxu0
      %3060 = vmatprep.mubr.f32.mxu0 0.0
      %3061 = vmatmul.mubr.f32.gmra.mrb[0].mxu0 %v2849
      %v3062 = vpop.f32.mrb[0].mxu0
      %v3063 = vadd.f32 %v2737, %v3062
      %v3064 = vpop.f32.mrb[0].mxu0
      %3065 = vmatprep.mubr.f32.mxu0 0.0
      %3066 = vmatmul.mubr.f32.gmra.mrb[0].mxu0 %v2852
      %v3067 = vpop.f32.mrb[0].mxu0
      %v3068 = vadd.f32 %v2742, %v3067
      %v3069 = vpop.f32.mrb[0].mxu0
      %3070 = vmatprep.mubr.f32.mxu0 0.0
      %3071 = vmatmul.mubr.f32.gmra.mrb[0].mxu0 %v2855
      %v3072 = vpop.f32.mrb[0].mxu0
      %v3073 = vadd.f32 %v2747, %v3072
      %v3074 = vpop.f32.mrb[0].mxu0
      %3075 = vmatprep.mubr.f32.mxu0 0.0
      %3076 = vmatmul.mubr.f32.gmra.mrb[0].mxu0 %v2858
      %v3077 = vpop.f32.mrb[0].mxu0
      %v3078 = vadd.f32 %v2752, %v3077
      %v3079 = vpop.f32.mrb[0].mxu0
      %3080 = vmatprep.mubr.f32.mxu0 0.0
      %3081 = vmatmul.mubr.f32.gmra.mrb[0].mxu0 %v2861
      %v3082 = vpop.f32.mrb[0].mxu0
      %v3083 = vadd.f32 %v2757, %v3082
      %v3084 = vpop.f32.mrb[0].mxu0
      %3085 = vmatprep.mubr.f32.mxu0 0.0
      %3086 = vmatmul.mubr.f32.gmra.mrb[0].mxu0 %v2864
      %v3087 = vpop.f32.mrb[0].mxu0
      %v3088 = vadd.f32 %v2762, %v3087
      %v3089 = vpop.f32.mrb[0].mxu0
      %3090 = vmatprep.mubr.f32.mxu0 0.0
      %3091 = vmatmul.mubr.f32.gmra.mrb[0].mxu0 %v2867
      %v3092 = vpop.f32.mrb[0].mxu0
      %v3093 = vadd.f32 %v2767, %v3092
      %v3094 = vpop.f32.mrb[0].mxu0
      %3095 = vmatprep.mubr.f32.mxu0 0.0
      %3096 = vmatmul.mubr.f32.gmra.mrb[0].mxu0 %v2870
      %v3097 = vpop.f32.mrb[0].mxu0
      %v3098 = vadd.f32 %v2772, %v3097
      %v3099 = vpop.f32.mrb[0].mxu0
      %3100 = vdwg.mxu0
      %v3101 = vld [vmem:[%s5] sm:$0x1]
      %v3103 = vlaneseq
      %v3104 = vshrl.u32 %v3103, 7
      %v3105 = vsub.s32 0, %v3104
      %v3106 = vrot.slane %v3101, %v3105
      %v3108 = vadd.f32 %v2943, %v3106
      %v3109 = vadd.f32 %v2948, %v3106
      %v3110 = vadd.f32 %v2953, %v3106
      %v3111 = vadd.f32 %v2958, %v3106
      %v3112 = vadd.f32 %v2963, %v3106
      %v3113 = vadd.f32 %v2968, %v3106
      %v3114 = vadd.f32 %v2973, %v3106
      %v3115 = vadd.f32 %v2978, %v3106
      %v3116 = vadd.f32 %v2983, %v3106
      %v3117 = vadd.f32 %v2988, %v3106
      %v3118 = vadd.f32 %v2993, %v3106
      %v3119 = vadd.f32 %v2998, %v3106
      %v3120 = vadd.f32 %v3003, %v3106
      %v3121 = vadd.f32 %v3008, %v3106
      %v3122 = vadd.f32 %v3013, %v3106
      %v3123 = vadd.f32 %v3018, %v3106
      %v3124 = vadd.f32 %v3023, %v3106
      %v3125 = vadd.f32 %v3028, %v3106
      %v3126 = vadd.f32 %v3033, %v3106
      %v3127 = vadd.f32 %v3038, %v3106
      %v3128 = vadd.f32 %v3043, %v3106
      %v3129 = vadd.f32 %v3048, %v3106
      %v3130 = vadd.f32 %v3053, %v3106
      %v3131 = vadd.f32 %v3058, %v3106
      %v3132 = vadd.f32 %v3063, %v3106
      %v3133 = vadd.f32 %v3068, %v3106
      %v3134 = vadd.f32 %v3073, %v3106
      %v3135 = vadd.f32 %v3078, %v3106
      %v3136 = vadd.f32 %v3083, %v3106
      %v3137 = vadd.f32 %v3088, %v3106
      %v3138 = vadd.f32 %v3093, %v3106
      %v3139 = vadd.f32 %v3098, %v3106
      %v3140 = vxor.u32 %v3108, 2147483648
      %v3141 = vxor.u32 %v3109, 2147483648
      %v3142 = vxor.u32 %v3110, 2147483648
      %v3143 = vxor.u32 %v3111, 2147483648
      %v3144 = vxor.u32 %v3112, 2147483648
      %v3145 = vxor.u32 %v3113, 2147483648
      %v3146 = vxor.u32 %v3114, 2147483648
      %v3147 = vxor.u32 %v3115, 2147483648
      %v3148 = vxor.u32 %v3116, 2147483648
      %v3149 = vxor.u32 %v3117, 2147483648
      %v3150 = vxor.u32 %v3118, 2147483648
      %v3151 = vxor.u32 %v3119, 2147483648
      %v3152 = vxor.u32 %v3120, 2147483648
      %v3153 = vxor.u32 %v3121, 2147483648
      %v3154 = vxor.u32 %v3122, 2147483648
      %v3155 = vxor.u32 %v3123, 2147483648
      %v3156 = vxor.u32 %v3124, 2147483648
      %v3157 = vxor.u32 %v3125, 2147483648
      %v3158 = vxor.u32 %v3126, 2147483648
      %v3159 = vxor.u32 %v3127, 2147483648
      %v3160 = vxor.u32 %v3128, 2147483648
      %v3161 = vxor.u32 %v3129, 2147483648
      %v3162 = vxor.u32 %v3130, 2147483648
      %v3163 = vxor.u32 %v3131, 2147483648
      %v3164 = vxor.u32 %v3132, 2147483648
      %v3165 = vxor.u32 %v3133, 2147483648
      %v3166 = vxor.u32 %v3134, 2147483648
      %v3167 = vxor.u32 %v3135, 2147483648
      %v3168 = vxor.u32 %v3136, 2147483648
      %v3169 = vxor.u32 %v3137, 2147483648
      %v3170 = vxor.u32 %v3138, 2147483648
      %v3171 = vxor.u32 %v3139, 2147483648
      %v3172 = vmul.f32 %v3140, 1.442695
      %v3173 = vpow.pop %v3172
      %v3174 = vmul.f32 %v3141, 1.442695
      %v3175 = vpow.pop %v3174
      %v3176 = vmul.f32 %v3142, 1.442695
      %v3177 = vpow.pop %v3176
      %v3178 = vmul.f32 %v3143, 1.442695
      %v3179 = vpow.pop %v3178
      %v3180 = vmul.f32 %v3144, 1.442695
      %v3181 = vpow.pop %v3180
      %v3182 = vmul.f32 %v3145, 1.442695
      %v3183 = vpow.pop %v3182
      %v3184 = vmul.f32 %v3146, 1.442695
      %v3185 = vpow.pop %v3184
      %v3186 = vmul.f32 %v3147, 1.442695
      %v3187 = vpow.pop %v3186
      %v3188 = vmul.f32 %v3148, 1.442695
      %v3189 = vpow.pop %v3188
      %v3190 = vmul.f32 %v3149, 1.442695
      %v3191 = vpow.pop %v3190
      %v3192 = vmul.f32 %v3150, 1.442695
      %v3193 = vpow.pop %v3192
      %v3194 = vmul.f32 %v3151, 1.442695
      %v3195 = vpow.pop %v3194
      %v3196 = vmul.f32 %v3152, 1.442695
      %v3197 = vpow.pop %v3196
      %v3198 = vmul.f32 %v3153, 1.442695
      %v3199 = vpow.pop %v3198
      %v3200 = vmul.f32 %v3154, 1.442695
      %v3201 = vpow.pop %v3200
      %v3202 = vmul.f32 %v3155, 1.442695
      %v3203 = vpow.pop %v3202
      %v3204 = vmul.f32 %v3156, 1.442695
      %v3205 = vpow.pop %v3204
      %v3206 = vmul.f32 %v3157, 1.442695
      %v3207 = vpow.pop %v3206
      %v3208 = vmul.f32 %v3158, 1.442695
      %v3209 = vpow.pop %v3208
      %v3210 = vmul.f32 %v3159, 1.442695
      %v3211 = vpow.pop %v3210
      %v3212 = vmul.f32 %v3160, 1.442695
      %v3213 = vpow.pop %v3212
      %v3214 = vmul.f32 %v3161, 1.442695
      %v3215 = vpow.pop %v3214
      %v3216 = vmul.f32 %v3162, 1.442695
      %v3217 = vpow.pop %v3216
      %v3218 = vmul.f32 %v3163, 1.442695
      %v3219 = vpow.pop %v3218
      %v3220 = vmul.f32 %v3164, 1.442695
      %v3221 = vpow.pop %v3220
      %v3222 = vmul.f32 %v3165, 1.442695
      %v3223 = vpow.pop %v3222
      %v3224 = vmul.f32 %v3166, 1.442695
      %v3225 = vpow.pop %v3224
      %v3226 = vmul.f32 %v3167, 1.442695
      %v3227 = vpow.pop %v3226
      %v3228 = vmul.f32 %v3168, 1.442695
      %v3229 = vpow.pop %v3228
      %v3230 = vmul.f32 %v3169, 1.442695
      %v3231 = vpow.pop %v3230
      %v3232 = vmul.f32 %v3170, 1.442695
      %v3233 = vpow.pop %v3232
      %v3234 = vmul.f32 %v3171, 1.442695
      %v3235 = vpow.pop %v3234
      %v3236 = vadd.f32 %v3173, 1.0
      %v3237 = vadd.f32 %v3175, 1.0
      %v3238 = vadd.f32 %v3177, 1.0
      %v3239 = vadd.f32 %v3179, 1.0
      %v3240 = vadd.f32 %v3181, 1.0
      %v3241 = vadd.f32 %v3183, 1.0
      %v3242 = vadd.f32 %v3185, 1.0
      %v3243 = vadd.f32 %v3187, 1.0
      %v3244 = vadd.f32 %v3189, 1.0
      %v3245 = vadd.f32 %v3191, 1.0
      %v3246 = vadd.f32 %v3193, 1.0
      %v3247 = vadd.f32 %v3195, 1.0
      %v3248 = vadd.f32 %v3197, 1.0
      %v3249 = vadd.f32 %v3199, 1.0
      %v3250 = vadd.f32 %v3201, 1.0
      %v3251 = vadd.f32 %v3203, 1.0
      %v3252 = vadd.f32 %v3205, 1.0
      %v3253 = vadd.f32 %v3207, 1.0
      %v3254 = vadd.f32 %v3209, 1.0
      %v3255 = vadd.f32 %v3211, 1.0
      %v3256 = vadd.f32 %v3213, 1.0
      %v3257 = vadd.f32 %v3215, 1.0
      %v3258 = vadd.f32 %v3217, 1.0
      %v3259 = vadd.f32 %v3219, 1.0
      %v3260 = vadd.f32 %v3221, 1.0
      %v3261 = vadd.f32 %v3223, 1.0
      %v3262 = vadd.f32 %v3225, 1.0
      %v3263 = vadd.f32 %v3227, 1.0
      %v3264 = vadd.f32 %v3229, 1.0
      %v3265 = vadd.f32 %v3231, 1.0
      %v3266 = vadd.f32 %v3233, 1.0
      %v3267 = vadd.f32 %v3235, 1.0
      %v3268 = vrcp.pop %v3236
      %v3269 = vmul.f32 1.0, %v3268
      %v3270 = vrcp.pop %v3237
      %v3271 = vmul.f32 1.0, %v3270
      %v3272 = vrcp.pop %v3238
      %v3273 = vmul.f32 1.0, %v3272
      %v3274 = vrcp.pop %v3239
      %v3275 = vmul.f32 1.0, %v3274
      %v3276 = vrcp.pop %v3240
      %v3277 = vmul.f32 1.0, %v3276
      %v3278 = vrcp.pop %v3241
      %v3279 = vmul.f32 1.0, %v3278
      %v3280 = vrcp.pop %v3242
      %v3281 = vmul.f32 1.0, %v3280
      %v3282 = vrcp.pop %v3243
      %v3283 = vmul.f32 1.0, %v3282
      %v3284 = vrcp.pop %v3244
      %v3285 = vmul.f32 1.0, %v3284
      %v3286 = vrcp.pop %v3245
      %v3287 = vmul.f32 1.0, %v3286
      %v3288 = vrcp.pop %v3246
      %v3289 = vmul.f32 1.0, %v3288
      %v3290 = vrcp.pop %v3247
      %v3291 = vmul.f32 1.0, %v3290
      %v3292 = vrcp.pop %v3248
      %v3293 = vmul.f32 1.0, %v3292
      %v3294 = vrcp.pop %v3249
      %v3295 = vmul.f32 1.0, %v3294
      %v3296 = vrcp.pop %v3250
      %v3297 = vmul.f32 1.0, %v3296
      %v3298 = vrcp.pop %v3251
      %v3299 = vmul.f32 1.0, %v3298
      %v3300 = vrcp.pop %v3252
      %v3301 = vmul.f32 1.0, %v3300
      %v3302 = vrcp.pop %v3253
      %v3303 = vmul.f32 1.0, %v3302
      %v3304 = vrcp.pop %v3254
      %v3305 = vmul.f32 1.0, %v3304
      %v3306 = vrcp.pop %v3255
      %v3307 = vmul.f32 1.0, %v3306
      %v3308 = vrcp.pop %v3256
      %v3309 = vmul.f32 1.0, %v3308
      %v3310 = vrcp.pop %v3257
      %v3311 = vmul.f32 1.0, %v3310
      %v3312 = vrcp.pop %v3258
      %v3313 = vmul.f32 1.0, %v3312
      %v3314 = vrcp.pop %v3259
      %v3315 = vmul.f32 1.0, %v3314
      %v3316 = vrcp.pop %v3260
      %v3317 = vmul.f32 1.0, %v3316
      %v3318 = vrcp.pop %v3261
      %v3319 = vmul.f32 1.0, %v3318
      %v3320 = vrcp.pop %v3262
      %v3321 = vmul.f32 1.0, %v3320
      %v3322 = vrcp.pop %v3263
      %v3323 = vmul.f32 1.0, %v3322
      %v3324 = vrcp.pop %v3264
      %v3325 = vmul.f32 1.0, %v3324
      %v3326 = vrcp.pop %v3265
      %v3327 = vmul.f32 1.0, %v3326
      %v3328 = vrcp.pop %v3266
      %v3329 = vmul.f32 1.0, %v3328
      %v3330 = vrcp.pop %v3267
      %v3331 = vmul.f32 1.0, %v3330
      %v3332 = vtanh.pop %v3108
      %v3333 = vtanh.pop %v3109
      %v3334 = vtanh.pop %v3110
      %v3335 = vtanh.pop %v3111
      %v3336 = vtanh.pop %v3112
      %v3337 = vtanh.pop %v3113
      %v3338 = vtanh.pop %v3114
      %v3339 = vtanh.pop %v3115
      %v3340 = vtanh.pop %v3116
      %v3341 = vtanh.pop %v3117
      %v3342 = vtanh.pop %v3118
      %v3343 = vtanh.pop %v3119
      %v3344 = vtanh.pop %v3120
      %v3345 = vtanh.pop %v3121
      %v3346 = vtanh.pop %v3122
      %v3347 = vtanh.pop %v3123
      %v3348 = vtanh.pop %v3124
      %v3349 = vtanh.pop %v3125
      %v3350 = vtanh.pop %v3126
      %v3351 = vtanh.pop %v3127
      %v3352 = vtanh.pop %v3128
      %v3353 = vtanh.pop %v3129
      %v3354 = vtanh.pop %v3130
      %v3355 = vtanh.pop %v3131
      %v3356 = vtanh.pop %v3132
      %v3357 = vtanh.pop %v3133
      %v3358 = vtanh.pop %v3134
      %v3359 = vtanh.pop %v3135
      %v3360 = vtanh.pop %v3136
      %v3361 = vtanh.pop %v3137
      %v3362 = vtanh.pop %v3138
      %v3363 = vtanh.pop %v3139
      %v3364 = vld [vmem:[#allocation3] sm:$0xff]
      %v3365 = vld [vmem:[#allocation3 + $0x8] sm:$0xff]
      %v3366 = vld [vmem:[#allocation3 + $0x10] sm:$0xff]
      %v3367 = vld [vmem:[#allocation3 + $0x18] sm:$0xff]
      %v3368 = vld [vmem:[#allocation3 + $0x20] sm:$0xff]
      %v3369 = vld [vmem:[#allocation3 + $0x28] sm:$0xff]
      %v3370 = vld [vmem:[#allocation3 + $0x30] sm:$0xff]
      %v3371 = vld [vmem:[#allocation3 + $0x38] sm:$0xff]
      %v3372 = vld [vmem:[#allocation3 + $0x40] sm:$0xff]
      %v3373 = vld [vmem:[#allocation3 + $0x48] sm:$0xff]
      %v3374 = vld [vmem:[#allocation3 + $0x50] sm:$0xff]
      %v3375 = vld [vmem:[#allocation3 + $0x58] sm:$0xff]
      %v3376 = vld [vmem:[#allocation3 + $0x60] sm:$0xff]
      %v3377 = vld [vmem:[#allocation3 + $0x68] sm:$0xff]
      %v3378 = vld [vmem:[#allocation3 + $0x70] sm:$0xff]
      %v3379 = vld [vmem:[#allocation3 + $0x78] sm:$0xff]
      %v3380 = vld [vmem:[#allocation3 + $0x80] sm:$0xff]
      %v3381 = vld [vmem:[#allocation3 + $0x88] sm:$0xff]
      %v3382 = vld [vmem:[#allocation3 + $0x90] sm:$0xff]
      %v3383 = vld [vmem:[#allocation3 + $0x98] sm:$0xff]
      %v3384 = vld [vmem:[#allocation3 + $0xa0] sm:$0xff]
      %v3385 = vld [vmem:[#allocation3 + $0xa8] sm:$0xff]
      %v3386 = vld [vmem:[#allocation3 + $0xb0] sm:$0xff]
      %v3387 = vld [vmem:[#allocation3 + $0xb8] sm:$0xff]
      %v3388 = vld [vmem:[#allocation3 + $0xc0] sm:$0xff]
      %v3389 = vld [vmem:[#allocation3 + $0xc8] sm:$0xff]
      %v3390 = vld [vmem:[#allocation3 + $0xd0] sm:$0xff]
      %v3391 = vld [vmem:[#allocation3 + $0xd8] sm:$0xff]
      %v3392 = vld [vmem:[#allocation3 + $0xe0] sm:$0xff]
      %v3393 = vld [vmem:[#allocation3 + $0xe8] sm:$0xff]
      %v3394 = vld [vmem:[#allocation3 + $0xf0] sm:$0xff]
      %v3395 = vld [vmem:[#allocation3 + $0xf8] sm:$0xff]
      %3428 = vrot.lane.b32.xlu0 %v3364, 32
      %v3429 = vpop.permute.xlu0 %3428
      %3430 = vrot.lane.b32.xlu0 %v3365, 32
      %v3431 = vpop.permute.xlu0 %3430
      %3432 = vrot.lane.b32.xlu0 %v3366, 32
      %v3433 = vpop.permute.xlu0 %3432
      %3434 = vrot.lane.b32.xlu0 %v3367, 32
      %v3435 = vpop.permute.xlu0 %3434
      %3436 = vrot.lane.b32.xlu0 %v3368, 32
      %v3437 = vpop.permute.xlu0 %3436
      %3438 = vrot.lane.b32.xlu0 %v3369, 32
      %v3439 = vpop.permute.xlu0 %3438
      %3440 = vrot.lane.b32.xlu0 %v3370, 32
      %v3441 = vpop.permute.xlu0 %3440
      %3442 = vrot.lane.b32.xlu0 %v3371, 32
      %v3443 = vpop.permute.xlu0 %3442
      %3444 = vrot.lane.b32.xlu0 %v3372, 32
      %v3445 = vpop.permute.xlu0 %3444
      %3446 = vrot.lane.b32.xlu0 %v3373, 32
      %v3447 = vpop.permute.xlu0 %3446
      %3448 = vrot.lane.b32.xlu0 %v3374, 32
      %v3449 = vpop.permute.xlu0 %3448
      %3450 = vrot.lane.b32.xlu0 %v3375, 32
      %v3451 = vpop.permute.xlu0 %3450
      %3452 = vrot.lane.b32.xlu0 %v3376, 32
      %v3453 = vpop.permute.xlu0 %3452
      %3454 = vrot.lane.b32.xlu0 %v3377, 32
      %v3455 = vpop.permute.xlu0 %3454
      %3456 = vrot.lane.b32.xlu0 %v3378, 32
      %v3457 = vpop.permute.xlu0 %3456
      %3458 = vrot.lane.b32.xlu0 %v3379, 32
      %v3459 = vpop.permute.xlu0 %3458
      %3460 = vrot.lane.b32.xlu0 %v3380, 32
      %v3461 = vpop.permute.xlu0 %3460
      %3462 = vrot.lane.b32.xlu0 %v3381, 32
      %v3463 = vpop.permute.xlu0 %3462
      %3464 = vrot.lane.b32.xlu0 %v3382, 32
      %v3465 = vpop.permute.xlu0 %3464
      %3466 = vrot.lane.b32.xlu0 %v3383, 32
      %v3467 = vpop.permute.xlu0 %3466
      %3468 = vrot.lane.b32.xlu0 %v3384, 32
      %v3469 = vpop.permute.xlu0 %3468
      %3470 = vrot.lane.b32.xlu0 %v3385, 32
      %v3471 = vpop.permute.xlu0 %3470
      %3472 = vrot.lane.b32.xlu0 %v3386, 32
      %v3473 = vpop.permute.xlu0 %3472
      %3474 = vrot.lane.b32.xlu0 %v3387, 32
      %v3475 = vpop.permute.xlu0 %3474
      %3476 = vrot.lane.b32.xlu0 %v3388, 32
      %v3477 = vpop.permute.xlu0 %3476
      %3478 = vrot.lane.b32.xlu0 %v3389, 32
      %v3479 = vpop.permute.xlu0 %3478
      %3480 = vrot.lane.b32.xlu0 %v3390, 32
      %v3481 = vpop.permute.xlu0 %3480
      %3482 = vrot.lane.b32.xlu0 %v3391, 32
      %v3483 = vpop.permute.xlu0 %3482
      %3484 = vrot.lane.b32.xlu0 %v3392, 32
      %v3485 = vpop.permute.xlu0 %3484
      %3486 = vrot.lane.b32.xlu0 %v3393, 32
      %v3487 = vpop.permute.xlu0 %3486
      %3488 = vrot.lane.b32.xlu0 %v3394, 32
      %v3489 = vpop.permute.xlu0 %3488
      %3490 = vrot.lane.b32.xlu0 %v3395, 32
      %v3491 = vpop.permute.xlu0 %3490
      %v3524 = vmul.f32 %v3269, %v3429
      %v3525 = vmul.f32 %v3271, %v3431
      %v3526 = vmul.f32 %v3273, %v3433
      %v3527 = vmul.f32 %v3275, %v3435
      %v3528 = vmul.f32 %v3277, %v3437
      %v3529 = vmul.f32 %v3279, %v3439
      %v3530 = vmul.f32 %v3281, %v3441
      %v3531 = vmul.f32 %v3283, %v3443
      %v3532 = vmul.f32 %v3285, %v3445
      %v3533 = vmul.f32 %v3287, %v3447
      %v3534 = vmul.f32 %v3289, %v3449
      %v3535 = vmul.f32 %v3291, %v3451
      %v3536 = vmul.f32 %v3293, %v3453
      %v3537 = vmul.f32 %v3295, %v3455
      %v3538 = vmul.f32 %v3297, %v3457
      %v3539 = vmul.f32 %v3299, %v3459
      %v3540 = vmul.f32 %v3301, %v3461
      %v3541 = vmul.f32 %v3303, %v3463
      %v3542 = vmul.f32 %v3305, %v3465
      %v3543 = vmul.f32 %v3307, %v3467
      %v3544 = vmul.f32 %v3309, %v3469
      %v3545 = vmul.f32 %v3311, %v3471
      %v3546 = vmul.f32 %v3313, %v3473
      %v3547 = vmul.f32 %v3315, %v3475
      %v3548 = vmul.f32 %v3317, %v3477
      %v3549 = vmul.f32 %v3319, %v3479
      %v3550 = vmul.f32 %v3321, %v3481
      %v3551 = vmul.f32 %v3323, %v3483
      %v3552 = vmul.f32 %v3325, %v3485
      %v3553 = vmul.f32 %v3327, %v3487
      %v3554 = vmul.f32 %v3329, %v3489
      %v3555 = vmul.f32 %v3331, %v3491
      %3588 = vrot.lane.b32.xlu0 %v3332, 32
      %v3589 = vpop.permute.xlu0 %3588
      %3590 = vrot.lane.b32.xlu0 %v3333, 32
      %v3591 = vpop.permute.xlu0 %3590
      %3592 = vrot.lane.b32.xlu0 %v3334, 32
      %v3593 = vpop.permute.xlu0 %3592
      %3594 = vrot.lane.b32.xlu0 %v3335, 32
      %v3595 = vpop.permute.xlu0 %3594
      %3596 = vrot.lane.b32.xlu0 %v3336, 32
      %v3597 = vpop.permute.xlu0 %3596
      %3598 = vrot.lane.b32.xlu0 %v3337, 32
      %v3599 = vpop.permute.xlu0 %3598
      %3600 = vrot.lane.b32.xlu0 %v3338, 32
      %v3601 = vpop.permute.xlu0 %3600
      %3602 = vrot.lane.b32.xlu0 %v3339, 32
      %v3603 = vpop.permute.xlu0 %3602
      %3604 = vrot.lane.b32.xlu0 %v3340, 32
      %v3605 = vpop.permute.xlu0 %3604
      %3606 = vrot.lane.b32.xlu0 %v3341, 32
      %v3607 = vpop.permute.xlu0 %3606
      %3608 = vrot.lane.b32.xlu0 %v3342, 32
      %v3609 = vpop.permute.xlu0 %3608
      %3610 = vrot.lane.b32.xlu0 %v3343, 32
      %v3611 = vpop.permute.xlu0 %3610
      %3612 = vrot.lane.b32.xlu0 %v3344, 32
      %v3613 = vpop.permute.xlu0 %3612
      %3614 = vrot.lane.b32.xlu0 %v3345, 32
      %v3615 = vpop.permute.xlu0 %3614
      %3616 = vrot.lane.b32.xlu0 %v3346, 32
      %v3617 = vpop.permute.xlu0 %3616
      %3618 = vrot.lane.b32.xlu0 %v3347, 32
      %v3619 = vpop.permute.xlu0 %3618
      %3620 = vrot.lane.b32.xlu0 %v3348, 32
      %v3621 = vpop.permute.xlu0 %3620
      %3622 = vrot.lane.b32.xlu0 %v3349, 32
      %v3623 = vpop.permute.xlu0 %3622
      %3624 = vrot.lane.b32.xlu0 %v3350, 32
      %v3625 = vpop.permute.xlu0 %3624
      %3626 = vrot.lane.b32.xlu0 %v3351, 32
      %v3627 = vpop.permute.xlu0 %3626
      %3628 = vrot.lane.b32.xlu0 %v3352, 32
      %v3629 = vpop.permute.xlu0 %3628
      %3630 = vrot.lane.b32.xlu0 %v3353, 32
      %v3631 = vpop.permute.xlu0 %3630
      %3632 = vrot.lane.b32.xlu0 %v3354, 32
      %v3633 = vpop.permute.xlu0 %3632
      %3634 = vrot.lane.b32.xlu0 %v3355, 32
      %v3635 = vpop.permute.xlu0 %3634
      %3636 = vrot.lane.b32.xlu0 %v3356, 32
      %v3637 = vpop.permute.xlu0 %3636
      %3638 = vrot.lane.b32.xlu0 %v3357, 32
      %v3639 = vpop.permute.xlu0 %3638
      %3640 = vrot.lane.b32.xlu0 %v3358, 32
      %v3641 = vpop.permute.xlu0 %3640
      %3642 = vrot.lane.b32.xlu0 %v3359, 32
      %v3643 = vpop.permute.xlu0 %3642
      %3644 = vrot.lane.b32.xlu0 %v3360, 32
      %v3645 = vpop.permute.xlu0 %3644
      %3646 = vrot.lane.b32.xlu0 %v3361, 32
      %v3647 = vpop.permute.xlu0 %3646
      %3648 = vrot.lane.b32.xlu0 %v3362, 32
      %v3649 = vpop.permute.xlu0 %3648
      %3650 = vrot.lane.b32.xlu0 %v3363, 32
      %v3651 = vpop.permute.xlu0 %3650
      %v3684 = vmul.f32 %v3269, %v3589
      %v3685 = vmul.f32 %v3271, %v3591
      %v3686 = vmul.f32 %v3273, %v3593
      %v3687 = vmul.f32 %v3275, %v3595
      %v3688 = vmul.f32 %v3277, %v3597
      %v3689 = vmul.f32 %v3279, %v3599
      %v3690 = vmul.f32 %v3281, %v3601
      %v3691 = vmul.f32 %v3283, %v3603
      %v3692 = vmul.f32 %v3285, %v3605
      %v3693 = vmul.f32 %v3287, %v3607
      %v3694 = vmul.f32 %v3289, %v3609
      %v3695 = vmul.f32 %v3291, %v3611
      %v3696 = vmul.f32 %v3293, %v3613
      %v3697 = vmul.f32 %v3295, %v3615
      %v3698 = vmul.f32 %v3297, %v3617
      %v3699 = vmul.f32 %v3299, %v3619
      %v3700 = vmul.f32 %v3301, %v3621
      %v3701 = vmul.f32 %v3303, %v3623
      %v3702 = vmul.f32 %v3305, %v3625
      %v3703 = vmul.f32 %v3307, %v3627
      %v3704 = vmul.f32 %v3309, %v3629
      %v3705 = vmul.f32 %v3311, %v3631
      %v3706 = vmul.f32 %v3313, %v3633
      %v3707 = vmul.f32 %v3315, %v3635
      %v3708 = vmul.f32 %v3317, %v3637
      %v3709 = vmul.f32 %v3319, %v3639
      %v3710 = vmul.f32 %v3321, %v3641
      %v3711 = vmul.f32 %v3323, %v3643
      %v3712 = vmul.f32 %v3325, %v3645
      %v3713 = vmul.f32 %v3327, %v3647
      %v3714 = vmul.f32 %v3329, %v3649
      %v3715 = vmul.f32 %v3331, %v3651
      %3748 = vrot.lane.b32.xlu0 %v3684, 32
      %v3749 = vpop.permute.xlu0 %3748
      %3750 = vrot.lane.b32.xlu0 %v3685, 32
      %v3751 = vpop.permute.xlu0 %3750
      %3752 = vrot.lane.b32.xlu0 %v3686, 32
      %v3753 = vpop.permute.xlu0 %3752
      %3754 = vrot.lane.b32.xlu0 %v3687, 32
      %v3755 = vpop.permute.xlu0 %3754
      %3756 = vrot.lane.b32.xlu0 %v3688, 32
      %v3757 = vpop.permute.xlu0 %3756
      %3758 = vrot.lane.b32.xlu0 %v3689, 32
      %v3759 = vpop.permute.xlu0 %3758
      %3760 = vrot.lane.b32.xlu0 %v3690, 32
      %v3761 = vpop.permute.xlu0 %3760
      %3762 = vrot.lane.b32.xlu0 %v3691, 32
      %v3763 = vpop.permute.xlu0 %3762
      %3764 = vrot.lane.b32.xlu0 %v3692, 32
      %v3765 = vpop.permute.xlu0 %3764
      %3766 = vrot.lane.b32.xlu0 %v3693, 32
      %v3767 = vpop.permute.xlu0 %3766
      %3768 = vrot.lane.b32.xlu0 %v3694, 32
      %v3769 = vpop.permute.xlu0 %3768
      %3770 = vrot.lane.b32.xlu0 %v3695, 32
      %v3771 = vpop.permute.xlu0 %3770
      %3772 = vrot.lane.b32.xlu0 %v3696, 32
      %v3773 = vpop.permute.xlu0 %3772
      %3774 = vrot.lane.b32.xlu0 %v3697, 32
      %v3775 = vpop.permute.xlu0 %3774
      %3776 = vrot.lane.b32.xlu0 %v3698, 32
      %v3777 = vpop.permute.xlu0 %3776
      %3778 = vrot.lane.b32.xlu0 %v3699, 32
      %v3779 = vpop.permute.xlu0 %3778
      %3780 = vrot.lane.b32.xlu0 %v3700, 32
      %v3781 = vpop.permute.xlu0 %3780
      %3782 = vrot.lane.b32.xlu0 %v3701, 32
      %v3783 = vpop.permute.xlu0 %3782
      %3784 = vrot.lane.b32.xlu0 %v3702, 32
      %v3785 = vpop.permute.xlu0 %3784
      %3786 = vrot.lane.b32.xlu0 %v3703, 32
      %v3787 = vpop.permute.xlu0 %3786
      %3788 = vrot.lane.b32.xlu0 %v3704, 32
      %v3789 = vpop.permute.xlu0 %3788
      %3790 = vrot.lane.b32.xlu0 %v3705, 32
      %v3791 = vpop.permute.xlu0 %3790
      %3792 = vrot.lane.b32.xlu0 %v3706, 32
      %v3793 = vpop.permute.xlu0 %3792
      %3794 = vrot.lane.b32.xlu0 %v3707, 32
      %v3795 = vpop.permute.xlu0 %3794
      %3796 = vrot.lane.b32.xlu0 %v3708, 32
      %v3797 = vpop.permute.xlu0 %3796
      %3798 = vrot.lane.b32.xlu0 %v3709, 32
      %v3799 = vpop.permute.xlu0 %3798
      %3800 = vrot.lane.b32.xlu0 %v3710, 32
      %v3801 = vpop.permute.xlu0 %3800
      %3802 = vrot.lane.b32.xlu0 %v3711, 32
      %v3803 = vpop.permute.xlu0 %3802
      %3804 = vrot.lane.b32.xlu0 %v3712, 32
      %v3805 = vpop.permute.xlu0 %3804
      %3806 = vrot.lane.b32.xlu0 %v3713, 32
      %v3807 = vpop.permute.xlu0 %3806
      %3808 = vrot.lane.b32.xlu0 %v3714, 32
      %v3809 = vpop.permute.xlu0 %3808
      %3810 = vrot.lane.b32.xlu0 %v3715, 32
      %v3811 = vpop.permute.xlu0 %3810
      %v3844 = vadd.f32 %v3524, %v3749
      %v3845 = vadd.f32 %v3525, %v3751
      %v3846 = vadd.f32 %v3526, %v3753
      %v3847 = vadd.f32 %v3527, %v3755
      %v3848 = vadd.f32 %v3528, %v3757
      %v3849 = vadd.f32 %v3529, %v3759
      %v3850 = vadd.f32 %v3530, %v3761
      %v3851 = vadd.f32 %v3531, %v3763
      %v3852 = vadd.f32 %v3532, %v3765
      %v3853 = vadd.f32 %v3533, %v3767
      %v3854 = vadd.f32 %v3534, %v3769
      %v3855 = vadd.f32 %v3535, %v3771
      %v3856 = vadd.f32 %v3536, %v3773
      %v3857 = vadd.f32 %v3537, %v3775
      %v3858 = vadd.f32 %v3538, %v3777
      %v3859 = vadd.f32 %v3539, %v3779
      %v3860 = vadd.f32 %v3540, %v3781
      %v3861 = vadd.f32 %v3541, %v3783
      %v3862 = vadd.f32 %v3542, %v3785
      %v3863 = vadd.f32 %v3543, %v3787
      %v3864 = vadd.f32 %v3544, %v3789
      %v3865 = vadd.f32 %v3545, %v3791
      %v3866 = vadd.f32 %v3546, %v3793
      %v3867 = vadd.f32 %v3547, %v3795
      %v3868 = vadd.f32 %v3548, %v3797
      %v3869 = vadd.f32 %v3549, %v3799
      %v3870 = vadd.f32 %v3550, %v3801
      %v3871 = vadd.f32 %v3551, %v3803
      %v3872 = vadd.f32 %v3552, %v3805
      %v3873 = vadd.f32 %v3553, %v3807
      %v3874 = vadd.f32 %v3554, %v3809
      %v3875 = vadd.f32 %v3555, %v3811
      %v3876 = vtanh.pop %v3844
      %v3877 = vtanh.pop %v3845
      %v3878 = vtanh.pop %v3846
      %v3879 = vtanh.pop %v3847
      %v3880 = vtanh.pop %v3848
      %v3881 = vtanh.pop %v3849
      %v3882 = vtanh.pop %v3850
      %v3883 = vtanh.pop %v3851
      %v3884 = vtanh.pop %v3852
      %v3885 = vtanh.pop %v3853
      %v3886 = vtanh.pop %v3854
      %v3887 = vtanh.pop %v3855
      %v3888 = vtanh.pop %v3856
      %v3889 = vtanh.pop %v3857
      %v3890 = vtanh.pop %v3858
      %v3891 = vtanh.pop %v3859
      %v3892 = vtanh.pop %v3860
      %v3893 = vtanh.pop %v3861
      %v3894 = vtanh.pop %v3862
      %v3895 = vtanh.pop %v3863
      %v3896 = vtanh.pop %v3864
      %v3897 = vtanh.pop %v3865
      %v3898 = vtanh.pop %v3866
      %v3899 = vtanh.pop %v3867
      %v3900 = vtanh.pop %v3868
      %v3901 = vtanh.pop %v3869
      %v3902 = vtanh.pop %v3870
      %v3903 = vtanh.pop %v3871
      %v3904 = vtanh.pop %v3872
      %v3905 = vtanh.pop %v3873
      %v3906 = vtanh.pop %v3874
      %v3907 = vtanh.pop %v3875
      %3940 = vrot.lane.b32.xlu0 %v3876, 32
      %v3941 = vpop.permute.xlu0 %3940
      %3942 = vrot.lane.b32.xlu0 %v3877, 32
      %v3943 = vpop.permute.xlu0 %3942
      %3944 = vrot.lane.b32.xlu0 %v3878, 32
      %v3945 = vpop.permute.xlu0 %3944
      %3946 = vrot.lane.b32.xlu0 %v3879, 32
      %v3947 = vpop.permute.xlu0 %3946
      %3948 = vrot.lane.b32.xlu0 %v3880, 32
      %v3949 = vpop.permute.xlu0 %3948
      %3950 = vrot.lane.b32.xlu0 %v3881, 32
      %v3951 = vpop.permute.xlu0 %3950
      %3952 = vrot.lane.b32.xlu0 %v3882, 32
      %v3953 = vpop.permute.xlu0 %3952
      %3954 = vrot.lane.b32.xlu0 %v3883, 32
      %v3955 = vpop.permute.xlu0 %3954
      %3956 = vrot.lane.b32.xlu0 %v3884, 32
      %v3957 = vpop.permute.xlu0 %3956
      %3958 = vrot.lane.b32.xlu0 %v3885, 32
      %v3959 = vpop.permute.xlu0 %3958
      %3960 = vrot.lane.b32.xlu0 %v3886, 32
      %v3961 = vpop.permute.xlu0 %3960
      %3962 = vrot.lane.b32.xlu0 %v3887, 32
      %v3963 = vpop.permute.xlu0 %3962
      %3964 = vrot.lane.b32.xlu0 %v3888, 32
      %v3965 = vpop.permute.xlu0 %3964
      %3966 = vrot.lane.b32.xlu0 %v3889, 32
      %v3967 = vpop.permute.xlu0 %3966
      %3968 = vrot.lane.b32.xlu0 %v3890, 32
      %v3969 = vpop.permute.xlu0 %3968
      %3970 = vrot.lane.b32.xlu0 %v3891, 32
      %v3971 = vpop.permute.xlu0 %3970
      %3972 = vrot.lane.b32.xlu0 %v3892, 32
      %v3973 = vpop.permute.xlu0 %3972
      %3974 = vrot.lane.b32.xlu0 %v3893, 32
      %v3975 = vpop.permute.xlu0 %3974
      %3976 = vrot.lane.b32.xlu0 %v3894, 32
      %v3977 = vpop.permute.xlu0 %3976
      %3978 = vrot.lane.b32.xlu0 %v3895, 32
      %v3979 = vpop.permute.xlu0 %3978
      %3980 = vrot.lane.b32.xlu0 %v3896, 32
      %v3981 = vpop.permute.xlu0 %3980
      %3982 = vrot.lane.b32.xlu0 %v3897, 32
      %v3983 = vpop.permute.xlu0 %3982
      %3984 = vrot.lane.b32.xlu0 %v3898, 32
      %v3985 = vpop.permute.xlu0 %3984
      %3986 = vrot.lane.b32.xlu0 %v3899, 32
      %v3987 = vpop.permute.xlu0 %3986
      %3988 = vrot.lane.b32.xlu0 %v3900, 32
      %v3989 = vpop.permute.xlu0 %3988
      %3990 = vrot.lane.b32.xlu0 %v3901, 32
      %v3991 = vpop.permute.xlu0 %3990
      %3992 = vrot.lane.b32.xlu0 %v3902, 32
      %v3993 = vpop.permute.xlu0 %3992
      %3994 = vrot.lane.b32.xlu0 %v3903, 32
      %v3995 = vpop.permute.xlu0 %3994
      %3996 = vrot.lane.b32.xlu0 %v3904, 32
      %v3997 = vpop.permute.xlu0 %3996
      %3998 = vrot.lane.b32.xlu0 %v3905, 32
      %v3999 = vpop.permute.xlu0 %3998
      %4000 = vrot.lane.b32.xlu0 %v3906, 32
      %v4001 = vpop.permute.xlu0 %4000
      %4002 = vrot.lane.b32.xlu0 %v3907, 32
      %v4003 = vpop.permute.xlu0 %4002
      %v4036 = vmul.f32 %v3269, %v3941
      %v4037 = vmul.f32 %v3271, %v3943
      %v4038 = vmul.f32 %v3273, %v3945
      %v4039 = vmul.f32 %v3275, %v3947
      %v4040 = vmul.f32 %v3277, %v3949
      %v4041 = vmul.f32 %v3279, %v3951
      %v4042 = vmul.f32 %v3281, %v3953
      %v4043 = vmul.f32 %v3283, %v3955
      %v4044 = vmul.f32 %v3285, %v3957
      %v4045 = vmul.f32 %v3287, %v3959
      %v4046 = vmul.f32 %v3289, %v3961
      %v4047 = vmul.f32 %v3291, %v3963
      %v4048 = vmul.f32 %v3293, %v3965
      %v4049 = vmul.f32 %v3295, %v3967
      %v4050 = vmul.f32 %v3297, %v3969
      %v4051 = vmul.f32 %v3299, %v3971
      %v4052 = vmul.f32 %v3301, %v3973
      %v4053 = vmul.f32 %v3303, %v3975
      %v4054 = vmul.f32 %v3305, %v3977
      %v4055 = vmul.f32 %v3307, %v3979
      %v4056 = vmul.f32 %v3309, %v3981
      %v4057 = vmul.f32 %v3311, %v3983
      %v4058 = vmul.f32 %v3313, %v3985
      %v4059 = vmul.f32 %v3315, %v3987
      %v4060 = vmul.f32 %v3317, %v3989
      %v4061 = vmul.f32 %v3319, %v3991
      %v4062 = vmul.f32 %v3321, %v3993
      %v4063 = vmul.f32 %v3323, %v3995
      %v4064 = vmul.f32 %v3325, %v3997
      %v4065 = vmul.f32 %v3327, %v3999
      %v4066 = vmul.f32 %v3329, %v4001
      %v4067 = vmul.f32 %v3331, %v4003
      %4100 = vrot.lane.b32.xlu0 %v3844, 96
      %v4101 = vpop.permute.xlu0 %4100
      %4102 = vrot.lane.b32.xlu0 %v3845, 96
      %v4103 = vpop.permute.xlu0 %4102
      %4104 = vrot.lane.b32.xlu0 %v3846, 96
      %v4105 = vpop.permute.xlu0 %4104
      %4106 = vrot.lane.b32.xlu0 %v3847, 96
      %v4107 = vpop.permute.xlu0 %4106
      %4108 = vrot.lane.b32.xlu0 %v3848, 96
      %v4109 = vpop.permute.xlu0 %4108
      %4110 = vrot.lane.b32.xlu0 %v3849, 96
      %v4111 = vpop.permute.xlu0 %4110
      %4112 = vrot.lane.b32.xlu0 %v3850, 96
      %v4113 = vpop.permute.xlu0 %4112
      %4114 = vrot.lane.b32.xlu0 %v3851, 96
      %v4115 = vpop.permute.xlu0 %4114
      %4116 = vrot.lane.b32.xlu0 %v3852, 96
      %v4117 = vpop.permute.xlu0 %4116
      %4118 = vrot.lane.b32.xlu0 %v3853, 96
      %v4119 = vpop.permute.xlu0 %4118
      %4120 = vrot.lane.b32.xlu0 %v3854, 96
      %v4121 = vpop.permute.xlu0 %4120
      %4122 = vrot.lane.b32.xlu0 %v3855, 96
      %v4123 = vpop.permute.xlu0 %4122
      %4124 = vrot.lane.b32.xlu0 %v3856, 96
      %v4125 = vpop.permute.xlu0 %4124
      %4126 = vrot.lane.b32.xlu0 %v3857, 96
      %v4127 = vpop.permute.xlu0 %4126
      %4128 = vrot.lane.b32.xlu0 %v3858, 96
      %v4129 = vpop.permute.xlu0 %4128
      %4130 = vrot.lane.b32.xlu0 %v3859, 96
      %v4131 = vpop.permute.xlu0 %4130
      %4132 = vrot.lane.b32.xlu0 %v3860, 96
      %v4133 = vpop.permute.xlu0 %4132
      %4134 = vrot.lane.b32.xlu0 %v3861, 96
      %v4135 = vpop.permute.xlu0 %4134
      %4136 = vrot.lane.b32.xlu0 %v3862, 96
      %v4137 = vpop.permute.xlu0 %4136
      %4138 = vrot.lane.b32.xlu0 %v3863, 96
      %v4139 = vpop.permute.xlu0 %4138
      %4140 = vrot.lane.b32.xlu0 %v3864, 96
      %v4141 = vpop.permute.xlu0 %4140
      %4142 = vrot.lane.b32.xlu0 %v3865, 96
      %v4143 = vpop.permute.xlu0 %4142
      %4144 = vrot.lane.b32.xlu0 %v3866, 96
      %v4145 = vpop.permute.xlu0 %4144
      %4146 = vrot.lane.b32.xlu0 %v3867, 96
      %v4147 = vpop.permute.xlu0 %4146
      %4148 = vrot.lane.b32.xlu0 %v3868, 96
      %v4149 = vpop.permute.xlu0 %4148
      %4150 = vrot.lane.b32.xlu0 %v3869, 96
      %v4151 = vpop.permute.xlu0 %4150
      %4152 = vrot.lane.b32.xlu0 %v3870, 96
      %v4153 = vpop.permute.xlu0 %4152
      %4154 = vrot.lane.b32.xlu0 %v3871, 96
      %v4155 = vpop.permute.xlu0 %4154
      %4156 = vrot.lane.b32.xlu0 %v3872, 96
      %v4157 = vpop.permute.xlu0 %4156
      %4158 = vrot.lane.b32.xlu0 %v3873, 96
      %v4159 = vpop.permute.xlu0 %4158
      %4160 = vrot.lane.b32.xlu0 %v3874, 96
      %v4161 = vpop.permute.xlu0 %4160
      %4162 = vrot.lane.b32.xlu0 %v3875, 96
      %v4163 = vpop.permute.xlu0 %4162
      %4196 = vst.msk [vmem:[#allocation3] sm:$0xff] %vm1961, %v4101
      %4197 = vst.msk [vmem:[#allocation3 + $0x8] sm:$0xff] %vm1961, %v4103
      %4198 = vst.msk [vmem:[#allocation3 + $0x10] sm:$0xff] %vm1961, %v4105
      %4199 = vst.msk [vmem:[#allocation3 + $0x18] sm:$0xff] %vm1961, %v4107
      %4200 = vst.msk [vmem:[#allocation3 + $0x20] sm:$0xff] %vm1961, %v4109
      %4201 = vst.msk [vmem:[#allocation3 + $0x28] sm:$0xff] %vm1961, %v4111
      %4202 = vst.msk [vmem:[#allocation3 + $0x30] sm:$0xff] %vm1961, %v4113
      %4203 = vst.msk [vmem:[#allocation3 + $0x38] sm:$0xff] %vm1961, %v4115
      %4204 = vst.msk [vmem:[#allocation3 + $0x40] sm:$0xff] %vm1961, %v4117
      %4205 = vst.msk [vmem:[#allocation3 + $0x48] sm:$0xff] %vm1961, %v4119
      %4206 = vst.msk [vmem:[#allocation3 + $0x50] sm:$0xff] %vm1961, %v4121
      %4207 = vst.msk [vmem:[#allocation3 + $0x58] sm:$0xff] %vm1961, %v4123
      %4208 = vst.msk [vmem:[#allocation3 + $0x60] sm:$0xff] %vm1961, %v4125
      %4209 = vst.msk [vmem:[#allocation3 + $0x68] sm:$0xff] %vm1961, %v4127
      %4210 = vst.msk [vmem:[#allocation3 + $0x70] sm:$0xff] %vm1961, %v4129
      %4211 = vst.msk [vmem:[#allocation3 + $0x78] sm:$0xff] %vm1961, %v4131
      %4212 = vst.msk [vmem:[#allocation3 + $0x80] sm:$0xff] %vm1961, %v4133
      %4213 = vst.msk [vmem:[#allocation3 + $0x88] sm:$0xff] %vm1961, %v4135
      %4214 = vst.msk [vmem:[#allocation3 + $0x90] sm:$0xff] %vm1961, %v4137
      %4215 = vst.msk [vmem:[#allocation3 + $0x98] sm:$0xff] %vm1961, %v4139
      %4216 = vst.msk [vmem:[#allocation3 + $0xa0] sm:$0xff] %vm1961, %v4141
      %4217 = vst.msk [vmem:[#allocation3 + $0xa8] sm:$0xff] %vm1961, %v4143
      %4218 = vst.msk [vmem:[#allocation3 + $0xb0] sm:$0xff] %vm1961, %v4145
      %4219 = vst.msk [vmem:[#allocation3 + $0xb8] sm:$0xff] %vm1961, %v4147
      %4220 = vst.msk [vmem:[#allocation3 + $0xc0] sm:$0xff] %vm1961, %v4149
      %4221 = vst.msk [vmem:[#allocation3 + $0xc8] sm:$0xff] %vm1961, %v4151
      %4222 = vst.msk [vmem:[#allocation3 + $0xd0] sm:$0xff] %vm1961, %v4153
      %4223 = vst.msk [vmem:[#allocation3 + $0xd8] sm:$0xff] %vm1961, %v4155
      %4224 = vst.msk [vmem:[#allocation3 + $0xe0] sm:$0xff] %vm1961, %v4157
      %4225 = vst.msk [vmem:[#allocation3 + $0xe8] sm:$0xff] %vm1961, %v4159
      %4226 = vst.msk [vmem:[#allocation3 + $0xf0] sm:$0xff] %vm1961, %v4161
      %4227 = vst.msk [vmem:[#allocation3 + $0xf8] sm:$0xff] %vm1961, %v4163
      %4260 = vrot.lane.b32.xlu0 %v4036, 64
      %v4261 = vpop.permute.xlu0 %4260
      %4262 = vrot.lane.b32.xlu0 %v4037, 64
      %v4263 = vpop.permute.xlu0 %4262
      %4264 = vrot.lane.b32.xlu0 %v4038, 64
      %v4265 = vpop.permute.xlu0 %4264
      %4266 = vrot.lane.b32.xlu0 %v4039, 64
      %v4267 = vpop.permute.xlu0 %4266
      %4268 = vrot.lane.b32.xlu0 %v4040, 64
      %v4269 = vpop.permute.xlu0 %4268
      %4270 = vrot.lane.b32.xlu0 %v4041, 64
      %v4271 = vpop.permute.xlu0 %4270
      %4272 = vrot.lane.b32.xlu0 %v4042, 64
      %v4273 = vpop.permute.xlu0 %4272
      %4274 = vrot.lane.b32.xlu0 %v4043, 64
      %v4275 = vpop.permute.xlu0 %4274
      %4276 = vrot.lane.b32.xlu0 %v4044, 64
      %v4277 = vpop.permute.xlu0 %4276
      %4278 = vrot.lane.b32.xlu0 %v4045, 64
      %v4279 = vpop.permute.xlu0 %4278
      %4280 = vrot.lane.b32.xlu0 %v4046, 64
      %v4281 = vpop.permute.xlu0 %4280
      %4282 = vrot.lane.b32.xlu0 %v4047, 64
      %v4283 = vpop.permute.xlu0 %4282
      %4284 = vrot.lane.b32.xlu0 %v4048, 64
      %v4285 = vpop.permute.xlu0 %4284
      %4286 = vrot.lane.b32.xlu0 %v4049, 64
      %v4287 = vpop.permute.xlu0 %4286
      %4288 = vrot.lane.b32.xlu0 %v4050, 64
      %v4289 = vpop.permute.xlu0 %4288
      %4290 = vrot.lane.b32.xlu0 %v4051, 64
      %v4291 = vpop.permute.xlu0 %4290
      %4292 = vrot.lane.b32.xlu0 %v4052, 64
      %v4293 = vpop.permute.xlu0 %4292
      %4294 = vrot.lane.b32.xlu0 %v4053, 64
      %v4295 = vpop.permute.xlu0 %4294
      %4296 = vrot.lane.b32.xlu0 %v4054, 64
      %v4297 = vpop.permute.xlu0 %4296
      %4298 = vrot.lane.b32.xlu0 %v4055, 64
      %v4299 = vpop.permute.xlu0 %4298
      %4300 = vrot.lane.b32.xlu0 %v4056, 64
      %v4301 = vpop.permute.xlu0 %4300
      %4302 = vrot.lane.b32.xlu0 %v4057, 64
      %v4303 = vpop.permute.xlu0 %4302
      %4304 = vrot.lane.b32.xlu0 %v4058, 64
      %v4305 = vpop.permute.xlu0 %4304
      %4306 = vrot.lane.b32.xlu0 %v4059, 64
      %v4307 = vpop.permute.xlu0 %4306
      %4308 = vrot.lane.b32.xlu0 %v4060, 64
      %v4309 = vpop.permute.xlu0 %4308
      %4310 = vrot.lane.b32.xlu0 %v4061, 64
      %v4311 = vpop.permute.xlu0 %4310
      %4312 = vrot.lane.b32.xlu0 %v4062, 64
      %v4313 = vpop.permute.xlu0 %4312
      %4314 = vrot.lane.b32.xlu0 %v4063, 64
      %v4315 = vpop.permute.xlu0 %4314
      %4316 = vrot.lane.b32.xlu0 %v4064, 64
      %v4317 = vpop.permute.xlu0 %4316
      %4318 = vrot.lane.b32.xlu0 %v4065, 64
      %v4319 = vpop.permute.xlu0 %4318
      %4320 = vrot.lane.b32.xlu0 %v4066, 64
      %v4321 = vpop.permute.xlu0 %4320
      %4322 = vrot.lane.b32.xlu0 %v4067, 64
      %v4323 = vpop.permute.xlu0 %4322
      %4356 = vst.msk [vmem:[#allocation2 + $0x10] sm:$0xff] %vm1961, %v4261
      %4357 = vst.msk [vmem:[#allocation2 + $0x18] sm:$0xff] %vm1961, %v4263
      %4358 = vst.msk [vmem:[#allocation2 + $0x20] sm:$0xff] %vm1961, %v4265
      %4359 = vst.msk [vmem:[#allocation2 + $0x28] sm:$0xff] %vm1961, %v4267
      %4360 = vst.msk [vmem:[#allocation2 + $0x30] sm:$0xff] %vm1961, %v4269
      %4361 = vst.msk [vmem:[#allocation2 + $0x38] sm:$0xff] %vm1961, %v4271
      %4362 = vst.msk [vmem:[#allocation2 + $0x40] sm:$0xff] %vm1961, %v4273
      %4363 = vst.msk [vmem:[#allocation2 + $0x48] sm:$0xff] %vm1961, %v4275
      %4364 = vst.msk [vmem:[#allocation2 + $0x50] sm:$0xff] %vm1961, %v4277
      %4365 = vst.msk [vmem:[#allocation2 + $0x58] sm:$0xff] %vm1961, %v4279
      %4366 = vst.msk [vmem:[#allocation2 + $0x60] sm:$0xff] %vm1961, %v4281
      %4367 = vst.msk [vmem:[#allocation2 + $0x68] sm:$0xff] %vm1961, %v4283
      %4368 = vst.msk [vmem:[#allocation2 + $0x70] sm:$0xff] %vm1961, %v4285
      %4369 = vst.msk [vmem:[#allocation2 + $0x78] sm:$0xff] %vm1961, %v4287
      %4370 = vst.msk [vmem:[#allocation2 + $0x80] sm:$0xff] %vm1961, %v4289
      %4371 = vst.msk [vmem:[#allocation2 + $0x88] sm:$0xff] %vm1961, %v4291
      %4372 = vst.msk [vmem:[#allocation2 + $0x90] sm:$0xff] %vm1961, %v4293
      %4373 = vst.msk [vmem:[#allocation2 + $0x98] sm:$0xff] %vm1961, %v4295
      %4374 = vst.msk [vmem:[#allocation2 + $0xa0] sm:$0xff] %vm1961, %v4297
      %4375 = vst.msk [vmem:[#allocation2 + $0xa8] sm:$0xff] %vm1961, %v4299
      %4376 = vst.msk [vmem:[#allocation2 + $0xb0] sm:$0xff] %vm1961, %v4301
      %4377 = vst.msk [vmem:[#allocation2 + $0xb8] sm:$0xff] %vm1961, %v4303
      %4378 = vst.msk [vmem:[#allocation2 + $0xc0] sm:$0xff] %vm1961, %v4305
      %4379 = vst.msk [vmem:[#allocation2 + $0xc8] sm:$0xff] %vm1961, %v4307
      %4380 = vst.msk [vmem:[#allocation2 + $0xd0] sm:$0xff] %vm1961, %v4309
      %4381 = vst.msk [vmem:[#allocation2 + $0xd8] sm:$0xff] %vm1961, %v4311
      %4382 = vst.msk [vmem:[#allocation2 + $0xe0] sm:$0xff] %vm1961, %v4313
      %4383 = vst.msk [vmem:[#allocation2 + $0xe8] sm:$0xff] %vm1961, %v4315
      %4384 = vst.msk [vmem:[#allocation2 + $0xf0] sm:$0xff] %vm1961, %v4317
      %4385 = vst.msk [vmem:[#allocation2 + $0xf8] sm:$0xff] %vm1961, %v4319
      %4386 = vst.msk [vmem:[#allocation2 + $0x100] sm:$0xff] %vm1961, %v4321
      %4387 = vst.msk [vmem:[#allocation2 + $0x108] sm:$0xff] %vm1961, %v4323
      %p4388 = scmp.eq.s32.totalorder %s28, 7
      // Predicated region
      $region65: #{sea_ice_convlstm.1} parent=59 // pred_check
        %p4389 = pneg %p4388
      $region66: #{sea_ice_convlstm.1} parent=59 // pred_check_branch
        %4391 = sbr.rel (%p4389) target = $region68
      $region67: #{sea_ice_convlstm.1} parent=59 // pred_region
        %v4392 = vld [vmem:[#allocation2] sm:$0xff]
        %v4393 = vld [vmem:[#allocation2 + $0x8] sm:$0xff]
        %v4394 = vld [vmem:[#allocation2 + $0x10] sm:$0xff]
        %v4395 = vld [vmem:[#allocation2 + $0x18] sm:$0xff]
        %v4396 = vld [vmem:[#allocation2 + $0x20] sm:$0xff]
        %v4397 = vld [vmem:[#allocation2 + $0x28] sm:$0xff]
        %v4398 = vld [vmem:[#allocation2 + $0x30] sm:$0xff]
        %v4399 = vld [vmem:[#allocation2 + $0x38] sm:$0xff]
        %v4400 = vld [vmem:[#allocation2 + $0x40] sm:$0xff]
        %v4401 = vld [vmem:[#allocation2 + $0x48] sm:$0xff]
        %v4402 = vld [vmem:[#allocation2 + $0x50] sm:$0xff]
        %v4403 = vld [vmem:[#allocation2 + $0x58] sm:$0xff]
        %v4404 = vld [vmem:[#allocation2 + $0x60] sm:$0xff]
        %v4405 = vld [vmem:[#allocation2 + $0x68] sm:$0xff]
        %v4406 = vld [vmem:[#allocation2 + $0x70] sm:$0xff]
        %v4407 = vld [vmem:[#allocation2 + $0x78] sm:$0xff]
        %v4408 = vld [vmem:[#allocation2 + $0x80] sm:$0xff]
        %v4409 = vld [vmem:[#allocation2 + $0x88] sm:$0xff]
        %v4410 = vld [vmem:[#allocation2 + $0x90] sm:$0xff]
        %v4411 = vld [vmem:[#allocation2 + $0x98] sm:$0xff]
        %v4412 = vld [vmem:[#allocation2 + $0xa0] sm:$0xff]
        %v4413 = vld [vmem:[#allocation2 + $0xa8] sm:$0xff]
        %v4414 = vld [vmem:[#allocation2 + $0xb0] sm:$0xff]
        %v4415 = vld [vmem:[#allocation2 + $0xb8] sm:$0xff]
        %v4416 = vld [vmem:[#allocation2 + $0xc0] sm:$0xff]
        %v4417 = vld [vmem:[#allocation2 + $0xc8] sm:$0xff]
        %v4418 = vld [vmem:[#allocation2 + $0xd0] sm:$0xff]
        %v4419 = vld [vmem:[#allocation2 + $0xd8] sm:$0xff]
        %v4420 = vld [vmem:[#allocation2 + $0xe0] sm:$0xff]
        %v4421 = vld [vmem:[#allocation2 + $0xe8] sm:$0xff]
        %v4422 = vld [vmem:[#allocation2 + $0xf0] sm:$0xff]
        %v4423 = vld [vmem:[#allocation2 + $0xf8] sm:$0xff]
        %v4424 = vld [vmem:[#allocation2 + $0x100] sm:$0xff]
        %v4425 = vld [vmem:[#allocation2 + $0x108] sm:$0xff]
        %v4426 = vld [vmem:[#allocation2 + $0x110] sm:$0xff]
        %v4427 = vld [vmem:[#allocation2 + $0x118] sm:$0xff]
        %v4428 = vrot.slane %v4392, 7
        %v4429 = vrot.slane %v4393, 7
        %v4430 = vrot.slane %v4394, 7
        %v4431 = vrot.slane %v4395, 7
        %v4432 = vrot.slane %v4396, 7
        %v4433 = vrot.slane %v4397, 7
        %v4434 = vrot.slane %v4398, 7
        %v4435 = vrot.slane %v4399, 7
        %v4436 = vrot.slane %v4400, 7
        %v4437 = vrot.slane %v4401, 7
        %v4438 = vrot.slane %v4402, 7
        %v4439 = vrot.slane %v4403, 7
        %v4440 = vrot.slane %v4404, 7
        %v4441 = vrot.slane %v4405, 7
        %v4442 = vrot.slane %v4406, 7
        %v4443 = vrot.slane %v4407, 7
        %v4444 = vrot.slane %v4408, 7
        %v4445 = vrot.slane %v4409, 7
        %v4446 = vrot.slane %v4410, 7
        %v4447 = vrot.slane %v4411, 7
        %v4448 = vrot.slane %v4412, 7
        %v4449 = vrot.slane %v4413, 7
        %v4450 = vrot.slane %v4414, 7
        %v4451 = vrot.slane %v4415, 7
        %v4452 = vrot.slane %v4416, 7
        %v4453 = vrot.slane %v4417, 7
        %v4454 = vrot.slane %v4418, 7
        %v4455 = vrot.slane %v4419, 7
        %v4456 = vrot.slane %v4420, 7
        %v4457 = vrot.slane %v4421, 7
        %v4458 = vrot.slane %v4422, 7
        %v4459 = vrot.slane %v4423, 7
        %v4460 = vrot.slane %v4427, 7
        %v4461 = vsel %vm596, %v4458, %v4459
        %v4462 = vsel %vm596, %v4457, %v4458
        %v4463 = vsel %vm596, %v4456, %v4457
        %v4464 = vsel %vm596, %v4455, %v4456
        %v4465 = vsel %vm596, %v4454, %v4455
        %v4466 = vsel %vm596, %v4453, %v4454
        %v4467 = vsel %vm596, %v4452, %v4453
        %v4468 = vsel %vm596, %v4451, %v4452
        %v4469 = vsel %vm596, %v4450, %v4451
        %v4470 = vsel %vm596, %v4449, %v4450
        %v4471 = vsel %vm596, %v4448, %v4449
        %v4472 = vsel %vm596, %v4447, %v4448
        %v4473 = vsel %vm596, %v4446, %v4447
        %v4474 = vsel %vm596, %v4445, %v4446
        %v4475 = vsel %vm596, %v4444, %v4445
        %v4476 = vsel %vm596, %v4443, %v4444
        %v4477 = vsel %vm596, %v4442, %v4443
        %v4478 = vsel %vm596, %v4441, %v4442
        %v4479 = vsel %vm596, %v4440, %v4441
        %v4480 = vsel %vm596, %v4439, %v4440
        %v4481 = vsel %vm596, %v4438, %v4439
        %v4482 = vsel %vm596, %v4437, %v4438
        %v4483 = vsel %vm596, %v4436, %v4437
        %v4484 = vsel %vm596, %v4435, %v4436
        %v4485 = vsel %vm596, %v4434, %v4435
        %v4486 = vsel %vm596, %v4433, %v4434
        %v4487 = vsel %vm596, %v4432, %v4433
        %v4488 = vsel %vm596, %v4431, %v4432
        %v4489 = vsel %vm596, %v4430, %v4431
        %v4490 = vsel %vm596, %v4429, %v4430
        %v4491 = vsel %vm596, %v4428, %v4429
        %v4492 = vsel %vm596, %v4460, %v4428
        %v4493 = vmul.f32 %v4492, %v632
        %v4494 = vmul.f32 %v4491, %v637
        %v4495 = vmul.f32 %v4490, %v642
        %v4496 = vmul.f32 %v4489, %v647
        %v4497 = vmul.f32 %v4488, %v652
        %v4498 = vmul.f32 %v4487, %v657
        %v4499 = vmul.f32 %v4486, %v662
        %v4500 = vmul.f32 %v4485, %v667
        %v4501 = vmul.f32 %v4484, %v672
        %v4502 = vmul.f32 %v4483, %v677
        %v4503 = vmul.f32 %v4482, %v682
        %v4504 = vmul.f32 %v4481, %v687
        %v4505 = vmul.f32 %v4480, %v692
        %v4506 = vmul.f32 %v4479, %v697
        %v4507 = vmul.f32 %v4478, %v702
        %v4508 = vmul.f32 %v4477, %v707
        %v4509 = vmul.f32 %v4476, %v712
        %v4510 = vmul.f32 %v4475, %v717
        %v4511 = vmul.f32 %v4474, %v722
        %v4512 = vmul.f32 %v4473, %v727
        %v4513 = vmul.f32 %v4472, %v732
        %v4514 = vmul.f32 %v4471, %v737
        %v4515 = vmul.f32 %v4470, %v742
        %v4516 = vmul.f32 %v4469, %v747
        %v4517 = vmul.f32 %v4468, %v752
        %v4518 = vmul.f32 %v4467, %v757
        %v4519 = vmul.f32 %v4466, %v762
        %v4520 = vmul.f32 %v4465, %v767
        %v4521 = vmul.f32 %v4464, %v772
        %v4522 = vmul.f32 %v4463, %v777
        %v4523 = vmul.f32 %v4462, %v782
        %v4524 = vmul.f32 %v4461, %v787
        %v4525 = vrot.slane %v4392, 1
        %v4526 = vrot.slane %v4393, 1
        %v4527 = vrot.slane %v4394, 1
        %v4528 = vrot.slane %v4395, 1
        %v4529 = vrot.slane %v4396, 1
        %v4530 = vrot.slane %v4397, 1
        %v4531 = vrot.slane %v4398, 1
        %v4532 = vrot.slane %v4399, 1
        %v4533 = vrot.slane %v4400, 1
        %v4534 = vrot.slane %v4401, 1
        %v4535 = vrot.slane %v4402, 1
        %v4536 = vrot.slane %v4403, 1
        %v4537 = vrot.slane %v4404, 1
        %v4538 = vrot.slane %v4405, 1
        %v4539 = vrot.slane %v4406, 1
        %v4540 = vrot.slane %v4407, 1
        %v4541 = vrot.slane %v4408, 1
        %v4542 = vrot.slane %v4409, 1
        %v4543 = vrot.slane %v4410, 1
        %v4544 = vrot.slane %v4411, 1
        %v4545 = vrot.slane %v4412, 1
        %v4546 = vrot.slane %v4413, 1
        %v4547 = vrot.slane %v4414, 1
        %v4548 = vrot.slane %v4415, 1
        %v4549 = vrot.slane %v4416, 1
        %v4550 = vrot.slane %v4417, 1
        %v4551 = vrot.slane %v4418, 1
        %v4552 = vrot.slane %v4419, 1
        %v4553 = vrot.slane %v4420, 1
        %v4554 = vrot.slane %v4421, 1
        %v4555 = vrot.slane %v4422, 1
        %v4556 = vrot.slane %v4423, 1
        %v4557 = vrot.slane %v4424, 1
        %v4558 = vsel %vm854, %v4556, %v4557
        %v4559 = vsel %vm854, %v4555, %v4556
        %v4560 = vsel %vm854, %v4554, %v4555
        %v4561 = vsel %vm854, %v4553, %v4554
        %v4562 = vsel %vm854, %v4552, %v4553
        %v4563 = vsel %vm854, %v4551, %v4552
        %v4564 = vsel %vm854, %v4550, %v4551
        %v4565 = vsel %vm854, %v4549, %v4550
        %v4566 = vsel %vm854, %v4548, %v4549
        %v4567 = vsel %vm854, %v4547, %v4548
        %v4568 = vsel %vm854, %v4546, %v4547
        %v4569 = vsel %vm854, %v4545, %v4546
        %v4570 = vsel %vm854, %v4544, %v4545
        %v4571 = vsel %vm854, %v4543, %v4544
        %v4572 = vsel %vm854, %v4542, %v4543
        %v4573 = vsel %vm854, %v4541, %v4542
        %v4574 = vsel %vm854, %v4540, %v4541
        %v4575 = vsel %vm854, %v4539, %v4540
        %v4576 = vsel %vm854, %v4538, %v4539
        %v4577 = vsel %vm854, %v4537, %v4538
        %v4578 = vsel %vm854, %v4536, %v4537
        %v4579 = vsel %vm854, %v4535, %v4536
        %v4580 = vsel %vm854, %v4534, %v4535
        %v4581 = vsel %vm854, %v4533, %v4534
        %v4582 = vsel %vm854, %v4532, %v4533
        %v4583 = vsel %vm854, %v4531, %v4532
        %v4584 = vsel %vm854, %v4530, %v4531
        %v4585 = vsel %vm854, %v4529, %v4530
        %v4586 = vsel %vm854, %v4528, %v4529
        %v4587 = vsel %vm854, %v4527, %v4528
        %v4588 = vsel %vm854, %v4526, %v4527
        %v4589 = vsel %vm854, %v4525, %v4526
        %v4590 = vmul.f32 %v4589, %v890
        %v4591 = vmul.f32 %v4588, %v895
        %v4592 = vmul.f32 %v4587, %v900
        %v4593 = vmul.f32 %v4586, %v905
        %v4594 = vmul.f32 %v4585, %v910
        %v4595 = vmul.f32 %v4584, %v915
        %v4596 = vmul.f32 %v4583, %v920
        %v4597 = vmul.f32 %v4582, %v925
        %v4598 = vmul.f32 %v4581, %v930
        %v4599 = vmul.f32 %v4580, %v935
        %v4600 = vmul.f32 %v4579, %v940
        %v4601 = vmul.f32 %v4578, %v945
        %v4602 = vmul.f32 %v4577, %v950
        %v4603 = vmul.f32 %v4576, %v955
        %v4604 = vmul.f32 %v4575, %v960
        %v4605 = vmul.f32 %v4574, %v965
        %v4606 = vmul.f32 %v4573, %v970
        %v4607 = vmul.f32 %v4572, %v975
        %v4608 = vmul.f32 %v4571, %v980
        %v4609 = vmul.f32 %v4570, %v985
        %v4610 = vmul.f32 %v4569, %v990
        %v4611 = vmul.f32 %v4568, %v995
        %v4612 = vmul.f32 %v4567, %v1000
        %v4613 = vmul.f32 %v4566, %v1005
        %v4614 = vmul.f32 %v4565, %v1010
        %v4615 = vmul.f32 %v4564, %v1015
        %v4616 = vmul.f32 %v4563, %v1020
        %v4617 = vmul.f32 %v4562, %v1025
        %v4618 = vmul.f32 %v4561, %v1030
        %v4619 = vmul.f32 %v4560, %v1035
        %v4620 = vmul.f32 %v4559, %v1040
        %v4621 = vmul.f32 %v4558, %v1045
        %v4622 = vrot.slane %v4424, 7
        %v4623 = vrot.slane %v4425, 7
        %v4624 = vsel %vm596, %v4622, %v4623
        %v4625 = vsel %vm596, %v4459, %v4622
        %v4626 = vmul.f32 %v4490, %v632
        %v4627 = vmul.f32 %v4489, %v637
        %v4628 = vmul.f32 %v4488, %v642
        %v4629 = vmul.f32 %v4487, %v647
        %v4630 = vmul.f32 %v4486, %v652
        %v4631 = vmul.f32 %v4485, %v657
        %v4632 = vmul.f32 %v4484, %v662
        %v4633 = vmul.f32 %v4483, %v667
        %v4634 = vmul.f32 %v4482, %v672
        %v4635 = vmul.f32 %v4481, %v677
        %v4636 = vmul.f32 %v4480, %v682
        %v4637 = vmul.f32 %v4479, %v687
        %v4638 = vmul.f32 %v4478, %v692
        %v4639 = vmul.f32 %v4477, %v697
        %v4640 = vmul.f32 %v4476, %v702
        %v4641 = vmul.f32 %v4475, %v707
        %v4642 = vmul.f32 %v4474, %v712
        %v4643 = vmul.f32 %v4473, %v717
        %v4644 = vmul.f32 %v4472, %v722
        %v4645 = vmul.f32 %v4471, %v727
        %v4646 = vmul.f32 %v4470, %v732
        %v4647 = vmul.f32 %v4469, %v737
        %v4648 = vmul.f32 %v4468, %v742
        %v4649 = vmul.f32 %v4467, %v747
        %v4650 = vmul.f32 %v4466, %v752
        %v4651 = vmul.f32 %v4465, %v757
        %v4652 = vmul.f32 %v4464, %v762
        %v4653 = vmul.f32 %v4463, %v767
        %v4654 = vmul.f32 %v4462, %v772
        %v4655 = vmul.f32 %v4461, %v777
        %v4656 = vmul.f32 %v4625, %v782
        %v4657 = vmul.f32 %v4624, %v787
        %v4658 = vrot.slane %v4425, 1
        %v4659 = vrot.slane %v4426, 1
        %v4660 = vsel %vm854, %v4658, %v4659
        %v4661 = vsel %vm854, %v4557, %v4658
        %v4662 = vmul.f32 %v4587, %v890
        %v4663 = vmul.f32 %v4586, %v895
        %v4664 = vmul.f32 %v4585, %v900
        %v4665 = vmul.f32 %v4584, %v905
        %v4666 = vmul.f32 %v4583, %v910
        %v4667 = vmul.f32 %v4582, %v915
        %v4668 = vmul.f32 %v4581, %v920
        %v4669 = vmul.f32 %v4580, %v925
        %v4670 = vmul.f32 %v4579, %v930
        %v4671 = vmul.f32 %v4578, %v935
        %v4672 = vmul.f32 %v4577, %v940
        %v4673 = vmul.f32 %v4576, %v945
        %v4674 = vmul.f32 %v4575, %v950
        %v4675 = vmul.f32 %v4574, %v955
        %v4676 = vmul.f32 %v4573, %v960
        %v4677 = vmul.f32 %v4572, %v965
        %v4678 = vmul.f32 %v4571, %v970
        %v4679 = vmul.f32 %v4570, %v975
        %v4680 = vmul.f32 %v4569, %v980
        %v4681 = vmul.f32 %v4568, %v985
        %v4682 = vmul.f32 %v4567, %v990
        %v4683 = vmul.f32 %v4566, %v995
        %v4684 = vmul.f32 %v4565, %v1000
        %v4685 = vmul.f32 %v4564, %v1005
        %v4686 = vmul.f32 %v4563, %v1010
        %v4687 = vmul.f32 %v4562, %v1015
        %v4688 = vmul.f32 %v4561, %v1020
        %v4689 = vmul.f32 %v4560, %v1025
        %v4690 = vmul.f32 %v4559, %v1030
        %v4691 = vmul.f32 %v4558, %v1035
        %v4692 = vmul.f32 %v4661, %v1040
        %v4693 = vmul.f32 %v4660, %v1045
        %v4694 = vrot.slane %v4426, 7
        %v4695 = vsel %vm596, %v4694, %v4460
        %v4696 = vsel %vm596, %v4623, %v4694
        %v4697 = vmul.f32 %v4488, %v632
        %v4698 = vmul.f32 %v4487, %v637
        %v4699 = vmul.f32 %v4486, %v642
        %v4700 = vmul.f32 %v4485, %v647
        %v4701 = vmul.f32 %v4484, %v652
        %v4702 = vmul.f32 %v4483, %v657
        %v4703 = vmul.f32 %v4482, %v662
        %v4704 = vmul.f32 %v4481, %v667
        %v4705 = vmul.f32 %v4480, %v672
        %v4706 = vmul.f32 %v4479, %v677
        %v4707 = vmul.f32 %v4478, %v682
        %v4708 = vmul.f32 %v4477, %v687
        %v4709 = vmul.f32 %v4476, %v692
        %v4710 = vmul.f32 %v4475, %v697
        %v4711 = vmul.f32 %v4474, %v702
        %v4712 = vmul.f32 %v4473, %v707
        %v4713 = vmul.f32 %v4472, %v712
        %v4714 = vmul.f32 %v4471, %v717
        %v4715 = vmul.f32 %v4470, %v722
        %v4716 = vmul.f32 %v4469, %v727
        %v4717 = vmul.f32 %v4468, %v732
        %v4718 = vmul.f32 %v4467, %v737
        %v4719 = vmul.f32 %v4466, %v742
        %v4720 = vmul.f32 %v4465, %v747
        %v4721 = vmul.f32 %v4464, %v752
        %v4722 = vmul.f32 %v4463, %v757
        %v4723 = vmul.f32 %v4462, %v762
        %v4724 = vmul.f32 %v4461, %v767
        %v4725 = vmul.f32 %v4625, %v772
        %v4726 = vmul.f32 %v4624, %v777
        %v4727 = vmul.f32 %v4696, %v782
        %v4728 = vmul.f32 %v4695, %v787
        %v4729 = vrot.slane %v4427, 1
        %v4730 = vsel %vm854, %v4659, %v4729
        %v4731 = vsel %vm854, %v4729, %v4525
        %v4732 = vmul.f32 %v4585, %v890
        %v4733 = vmul.f32 %v4584, %v895
        %v4734 = vmul.f32 %v4583, %v900
        %v4735 = vmul.f32 %v4582, %v905
        %v4736 = vmul.f32 %v4581, %v910
        %v4737 = vmul.f32 %v4580, %v915
        %v4738 = vmul.f32 %v4579, %v920
        %v4739 = vmul.f32 %v4578, %v925
        %v4740 = vmul.f32 %v4577, %v930
        %v4741 = vmul.f32 %v4576, %v935
        %v4742 = vmul.f32 %v4575, %v940
        %v4743 = vmul.f32 %v4574, %v945
        %v4744 = vmul.f32 %v4573, %v950
        %v4745 = vmul.f32 %v4572, %v955
        %v4746 = vmul.f32 %v4571, %v960
        %v4747 = vmul.f32 %v4570, %v965
        %v4748 = vmul.f32 %v4569, %v970
        %v4749 = vmul.f32 %v4568, %v975
        %v4750 = vmul.f32 %v4567, %v980
        %v4751 = vmul.f32 %v4566, %v985
        %v4752 = vmul.f32 %v4565, %v990
        %v4753 = vmul.f32 %v4564, %v995
        %v4754 = vmul.f32 %v4563, %v1000
        %v4755 = vmul.f32 %v4562, %v1005
        %v4756 = vmul.f32 %v4561, %v1010
        %v4757 = vmul.f32 %v4560, %v1015
        %v4758 = vmul.f32 %v4559, %v1020
        %v4759 = vmul.f32 %v4558, %v1025
        %v4760 = vmul.f32 %v4661, %v1030
        %v4761 = vmul.f32 %v4660, %v1035
        %v4762 = vmul.f32 %v4730, %v1040
        %v4763 = vmul.f32 %v4731, %v1045
        %4796 = vrot.lane.b32.xlu0 %v4392, 32
        %v4797 = vpop.permute.xlu0 %4796
        %4798 = vrot.lane.b32.xlu0 %v4393, 32
        %v4799 = vpop.permute.xlu0 %4798
        %4800 = vrot.lane.b32.xlu0 %v4394, 32
        %v4801 = vpop.permute.xlu0 %4800
        %4802 = vrot.lane.b32.xlu0 %v4395, 32
        %v4803 = vpop.permute.xlu0 %4802
        %4804 = vrot.lane.b32.xlu0 %v4396, 32
        %v4805 = vpop.permute.xlu0 %4804
        %4806 = vrot.lane.b32.xlu0 %v4397, 32
        %v4807 = vpop.permute.xlu0 %4806
        %4808 = vrot.lane.b32.xlu0 %v4398, 32
        %v4809 = vpop.permute.xlu0 %4808
        %4810 = vrot.lane.b32.xlu0 %v4399, 32
        %v4811 = vpop.permute.xlu0 %4810
        %4812 = vrot.lane.b32.xlu0 %v4400, 32
        %v4813 = vpop.permute.xlu0 %4812
        %4814 = vrot.lane.b32.xlu0 %v4401, 32
        %v4815 = vpop.permute.xlu0 %4814
        %4816 = vrot.lane.b32.xlu0 %v4402, 32
        %v4817 = vpop.permute.xlu0 %4816
        %4818 = vrot.lane.b32.xlu0 %v4403, 32
        %v4819 = vpop.permute.xlu0 %4818
        %4820 = vrot.lane.b32.xlu0 %v4404, 32
        %v4821 = vpop.permute.xlu0 %4820
        %4822 = vrot.lane.b32.xlu0 %v4405, 32
        %v4823 = vpop.permute.xlu0 %4822
        %4824 = vrot.lane.b32.xlu0 %v4406, 32
        %v4825 = vpop.permute.xlu0 %4824
        %4826 = vrot.lane.b32.xlu0 %v4407, 32
        %v4827 = vpop.permute.xlu0 %4826
        %4828 = vrot.lane.b32.xlu0 %v4408, 32
        %v4829 = vpop.permute.xlu0 %4828
        %4830 = vrot.lane.b32.xlu0 %v4409, 32
        %v4831 = vpop.permute.xlu0 %4830
        %4832 = vrot.lane.b32.xlu0 %v4410, 32
        %v4833 = vpop.permute.xlu0 %4832
        %4834 = vrot.lane.b32.xlu0 %v4411, 32
        %v4835 = vpop.permute.xlu0 %4834
        %4836 = vrot.lane.b32.xlu0 %v4412, 32
        %v4837 = vpop.permute.xlu0 %4836
        %4838 = vrot.lane.b32.xlu0 %v4413, 32
        %v4839 = vpop.permute.xlu0 %4838
        %4840 = vrot.lane.b32.xlu0 %v4414, 32
        %v4841 = vpop.permute.xlu0 %4840
        %4842 = vrot.lane.b32.xlu0 %v4415, 32
        %v4843 = vpop.permute.xlu0 %4842
        %4844 = vrot.lane.b32.xlu0 %v4416, 32
        %v4845 = vpop.permute.xlu0 %4844
        %4846 = vrot.lane.b32.xlu0 %v4417, 32
        %v4847 = vpop.permute.xlu0 %4846
        %4848 = vrot.lane.b32.xlu0 %v4418, 32
        %v4849 = vpop.permute.xlu0 %4848
        %4850 = vrot.lane.b32.xlu0 %v4419, 32
        %v4851 = vpop.permute.xlu0 %4850
        %4852 = vrot.lane.b32.xlu0 %v4420, 32
        %v4853 = vpop.permute.xlu0 %4852
        %4854 = vrot.lane.b32.xlu0 %v4421, 32
        %v4855 = vpop.permute.xlu0 %4854
        %4856 = vrot.lane.b32.xlu0 %v4422, 32
        %v4857 = vpop.permute.xlu0 %4856
        %4858 = vrot.lane.b32.xlu0 %v4423, 32
        %v4859 = vpop.permute.xlu0 %4858
        %4924 = vrot.lane.b32.xlu0 %v4590, 64
        %v4925 = vpop.permute.xlu0 %4924
        %4926 = vrot.lane.b32.xlu0 %v4591, 64
        %v4927 = vpop.permute.xlu0 %4926
        %4928 = vrot.lane.b32.xlu0 %v4592, 64
        %v4929 = vpop.permute.xlu0 %4928
        %4930 = vrot.lane.b32.xlu0 %v4593, 64
        %v4931 = vpop.permute.xlu0 %4930
        %4932 = vrot.lane.b32.xlu0 %v4594, 64
        %v4933 = vpop.permute.xlu0 %4932
        %4934 = vrot.lane.b32.xlu0 %v4595, 64
        %v4935 = vpop.permute.xlu0 %4934
        %4936 = vrot.lane.b32.xlu0 %v4596, 64
        %v4937 = vpop.permute.xlu0 %4936
        %4938 = vrot.lane.b32.xlu0 %v4597, 64
        %v4939 = vpop.permute.xlu0 %4938
        %4940 = vrot.lane.b32.xlu0 %v4598, 64
        %v4941 = vpop.permute.xlu0 %4940
        %4942 = vrot.lane.b32.xlu0 %v4599, 64
        %v4943 = vpop.permute.xlu0 %4942
        %4944 = vrot.lane.b32.xlu0 %v4600, 64
        %v4945 = vpop.permute.xlu0 %4944
        %4946 = vrot.lane.b32.xlu0 %v4601, 64
        %v4947 = vpop.permute.xlu0 %4946
        %4948 = vrot.lane.b32.xlu0 %v4602, 64
        %v4949 = vpop.permute.xlu0 %4948
        %4950 = vrot.lane.b32.xlu0 %v4603, 64
        %v4951 = vpop.permute.xlu0 %4950
        %4952 = vrot.lane.b32.xlu0 %v4604, 64
        %v4953 = vpop.permute.xlu0 %4952
        %4954 = vrot.lane.b32.xlu0 %v4605, 64
        %v4955 = vpop.permute.xlu0 %4954
        %4956 = vrot.lane.b32.xlu0 %v4606, 64
        %v4957 = vpop.permute.xlu0 %4956
        %4958 = vrot.lane.b32.xlu0 %v4607, 64
        %v4959 = vpop.permute.xlu0 %4958
        %4960 = vrot.lane.b32.xlu0 %v4608, 64
        %v4961 = vpop.permute.xlu0 %4960
        %4962 = vrot.lane.b32.xlu0 %v4609, 64
        %v4963 = vpop.permute.xlu0 %4962
        %4964 = vrot.lane.b32.xlu0 %v4610, 64
        %v4965 = vpop.permute.xlu0 %4964
        %4966 = vrot.lane.b32.xlu0 %v4611, 64
        %v4967 = vpop.permute.xlu0 %4966
        %4968 = vrot.lane.b32.xlu0 %v4612, 64
        %v4969 = vpop.permute.xlu0 %4968
        %4970 = vrot.lane.b32.xlu0 %v4613, 64
        %v4971 = vpop.permute.xlu0 %4970
        %4972 = vrot.lane.b32.xlu0 %v4614, 64
        %v4973 = vpop.permute.xlu0 %4972
        %4974 = vrot.lane.b32.xlu0 %v4615, 64
        %v4975 = vpop.permute.xlu0 %4974
        %4976 = vrot.lane.b32.xlu0 %v4616, 64
        %v4977 = vpop.permute.xlu0 %4976
        %4978 = vrot.lane.b32.xlu0 %v4617, 64
        %v4979 = vpop.permute.xlu0 %4978
        %4980 = vrot.lane.b32.xlu0 %v4618, 64
        %v4981 = vpop.permute.xlu0 %4980
        %4982 = vrot.lane.b32.xlu0 %v4619, 64
        %v4983 = vpop.permute.xlu0 %4982
        %4984 = vrot.lane.b32.xlu0 %v4620, 64
        %v4985 = vpop.permute.xlu0 %4984
        %4986 = vrot.lane.b32.xlu0 %v4621, 64
        %v4987 = vpop.permute.xlu0 %4986
        %5052 = vrot.lane.b32.xlu0 %v4626, 96
        %v5053 = vpop.permute.xlu0 %5052
        %5054 = vrot.lane.b32.xlu0 %v4627, 96
        %v5055 = vpop.permute.xlu0 %5054
        %5056 = vrot.lane.b32.xlu0 %v4628, 96
        %v5057 = vpop.permute.xlu0 %5056
        %5058 = vrot.lane.b32.xlu0 %v4629, 96
        %v5059 = vpop.permute.xlu0 %5058
        %5060 = vrot.lane.b32.xlu0 %v4630, 96
        %v5061 = vpop.permute.xlu0 %5060
        %5062 = vrot.lane.b32.xlu0 %v4631, 96
        %v5063 = vpop.permute.xlu0 %5062
        %5064 = vrot.lane.b32.xlu0 %v4632, 96
        %v5065 = vpop.permute.xlu0 %5064
        %5066 = vrot.lane.b32.xlu0 %v4633, 96
        %v5067 = vpop.permute.xlu0 %5066
        %5068 = vrot.lane.b32.xlu0 %v4634, 96
        %v5069 = vpop.permute.xlu0 %5068
        %5070 = vrot.lane.b32.xlu0 %v4635, 96
        %v5071 = vpop.permute.xlu0 %5070
        %5072 = vrot.lane.b32.xlu0 %v4636, 96
        %v5073 = vpop.permute.xlu0 %5072
        %5074 = vrot.lane.b32.xlu0 %v4637, 96
        %v5075 = vpop.permute.xlu0 %5074
        %5076 = vrot.lane.b32.xlu0 %v4638, 96
        %v5077 = vpop.permute.xlu0 %5076
        %5078 = vrot.lane.b32.xlu0 %v4639, 96
        %v5079 = vpop.permute.xlu0 %5078
        %5080 = vrot.lane.b32.xlu0 %v4640, 96
        %v5081 = vpop.permute.xlu0 %5080
        %5082 = vrot.lane.b32.xlu0 %v4641, 96
        %v5083 = vpop.permute.xlu0 %5082
        %5084 = vrot.lane.b32.xlu0 %v4642, 96
        %v5085 = vpop.permute.xlu0 %5084
        %5086 = vrot.lane.b32.xlu0 %v4643, 96
        %v5087 = vpop.permute.xlu0 %5086
        %5088 = vrot.lane.b32.xlu0 %v4644, 96
        %v5089 = vpop.permute.xlu0 %5088
        %5090 = vrot.lane.b32.xlu0 %v4645, 96
        %v5091 = vpop.permute.xlu0 %5090
        %5092 = vrot.lane.b32.xlu0 %v4646, 96
        %v5093 = vpop.permute.xlu0 %5092
        %5094 = vrot.lane.b32.xlu0 %v4647, 96
        %v5095 = vpop.permute.xlu0 %5094
        %5096 = vrot.lane.b32.xlu0 %v4648, 96
        %v5097 = vpop.permute.xlu0 %5096
        %5098 = vrot.lane.b32.xlu0 %v4649, 96
        %v5099 = vpop.permute.xlu0 %5098
        %5100 = vrot.lane.b32.xlu0 %v4650, 96
        %v5101 = vpop.permute.xlu0 %5100
        %5102 = vrot.lane.b32.xlu0 %v4651, 96
        %v5103 = vpop.permute.xlu0 %5102
        %5104 = vrot.lane.b32.xlu0 %v4652, 96
        %v5105 = vpop.permute.xlu0 %5104
        %5106 = vrot.lane.b32.xlu0 %v4653, 96
        %v5107 = vpop.permute.xlu0 %5106
        %5108 = vrot.lane.b32.xlu0 %v4654, 96
        %v5109 = vpop.permute.xlu0 %5108
        %5110 = vrot.lane.b32.xlu0 %v4655, 96
        %v5111 = vpop.permute.xlu0 %5110
        %5112 = vrot.lane.b32.xlu0 %v4656, 96
        %v5113 = vpop.permute.xlu0 %5112
        %5114 = vrot.lane.b32.xlu0 %v4657, 96
        %v5115 = vpop.permute.xlu0 %5114
        %5180 = vrot.lane.b32.xlu0 %v4662, 32
        %v5181 = vpop.permute.xlu0 %5180
        %5182 = vrot.lane.b32.xlu0 %v4663, 32
        %v5183 = vpop.permute.xlu0 %5182
        %5184 = vrot.lane.b32.xlu0 %v4664, 32
        %v5185 = vpop.permute.xlu0 %5184
        %5186 = vrot.lane.b32.xlu0 %v4665, 32
        %v5187 = vpop.permute.xlu0 %5186
        %5188 = vrot.lane.b32.xlu0 %v4666, 32
        %v5189 = vpop.permute.xlu0 %5188
        %5190 = vrot.lane.b32.xlu0 %v4667, 32
        %v5191 = vpop.permute.xlu0 %5190
        %5192 = vrot.lane.b32.xlu0 %v4668, 32
        %v5193 = vpop.permute.xlu0 %5192
        %5194 = vrot.lane.b32.xlu0 %v4669, 32
        %v5195 = vpop.permute.xlu0 %5194
        %5196 = vrot.lane.b32.xlu0 %v4670, 32
        %v5197 = vpop.permute.xlu0 %5196
        %5198 = vrot.lane.b32.xlu0 %v4671, 32
        %v5199 = vpop.permute.xlu0 %5198
        %5200 = vrot.lane.b32.xlu0 %v4672, 32
        %v5201 = vpop.permute.xlu0 %5200
        %5202 = vrot.lane.b32.xlu0 %v4673, 32
        %v5203 = vpop.permute.xlu0 %5202
        %5204 = vrot.lane.b32.xlu0 %v4674, 32
        %v5205 = vpop.permute.xlu0 %5204
        %5206 = vrot.lane.b32.xlu0 %v4675, 32
        %v5207 = vpop.permute.xlu0 %5206
        %5208 = vrot.lane.b32.xlu0 %v4676, 32
        %v5209 = vpop.permute.xlu0 %5208
        %5210 = vrot.lane.b32.xlu0 %v4677, 32
        %v5211 = vpop.permute.xlu0 %5210
        %5212 = vrot.lane.b32.xlu0 %v4678, 32
        %v5213 = vpop.permute.xlu0 %5212
        %5214 = vrot.lane.b32.xlu0 %v4679, 32
        %v5215 = vpop.permute.xlu0 %5214
        %5216 = vrot.lane.b32.xlu0 %v4680, 32
        %v5217 = vpop.permute.xlu0 %5216
        %5218 = vrot.lane.b32.xlu0 %v4681, 32
        %v5219 = vpop.permute.xlu0 %5218
        %5220 = vrot.lane.b32.xlu0 %v4682, 32
        %v5221 = vpop.permute.xlu0 %5220
        %5222 = vrot.lane.b32.xlu0 %v4683, 32
        %v5223 = vpop.permute.xlu0 %5222
        %5224 = vrot.lane.b32.xlu0 %v4684, 32
        %v5225 = vpop.permute.xlu0 %5224
        %5226 = vrot.lane.b32.xlu0 %v4685, 32
        %v5227 = vpop.permute.xlu0 %5226
        %5228 = vrot.lane.b32.xlu0 %v4686, 32
        %v5229 = vpop.permute.xlu0 %5228
        %5230 = vrot.lane.b32.xlu0 %v4687, 32
        %v5231 = vpop.permute.xlu0 %5230
        %5232 = vrot.lane.b32.xlu0 %v4688, 32
        %v5233 = vpop.permute.xlu0 %5232
        %5234 = vrot.lane.b32.xlu0 %v4689, 32
        %v5235 = vpop.permute.xlu0 %5234
        %5236 = vrot.lane.b32.xlu0 %v4690, 32
        %v5237 = vpop.permute.xlu0 %5236
        %5238 = vrot.lane.b32.xlu0 %v4691, 32
        %v5239 = vpop.permute.xlu0 %5238
        %5240 = vrot.lane.b32.xlu0 %v4692, 32
        %v5241 = vpop.permute.xlu0 %5240
        %5242 = vrot.lane.b32.xlu0 %v4693, 32
        %v5243 = vpop.permute.xlu0 %5242
        %5308 = vrot.lane.b32.xlu0 %v4697, 64
        %v5309 = vpop.permute.xlu0 %5308
        %5310 = vrot.lane.b32.xlu0 %v4698, 64
        %v5311 = vpop.permute.xlu0 %5310
        %5312 = vrot.lane.b32.xlu0 %v4699, 64
        %v5313 = vpop.permute.xlu0 %5312
        %5314 = vrot.lane.b32.xlu0 %v4700, 64
        %v5315 = vpop.permute.xlu0 %5314
        %5316 = vrot.lane.b32.xlu0 %v4701, 64
        %v5317 = vpop.permute.xlu0 %5316
        %5318 = vrot.lane.b32.xlu0 %v4702, 64
        %v5319 = vpop.permute.xlu0 %5318
        %5320 = vrot.lane.b32.xlu0 %v4703, 64
        %v5321 = vpop.permute.xlu0 %5320
        %5322 = vrot.lane.b32.xlu0 %v4704, 64
        %v5323 = vpop.permute.xlu0 %5322
        %5324 = vrot.lane.b32.xlu0 %v4705, 64
        %v5325 = vpop.permute.xlu0 %5324
        %5326 = vrot.lane.b32.xlu0 %v4706, 64
        %v5327 = vpop.permute.xlu0 %5326
        %5328 = vrot.lane.b32.xlu0 %v4707, 64
        %v5329 = vpop.permute.xlu0 %5328
        %5330 = vrot.lane.b32.xlu0 %v4708, 64
        %v5331 = vpop.permute.xlu0 %5330
        %5332 = vrot.lane.b32.xlu0 %v4709, 64
        %v5333 = vpop.permute.xlu0 %5332
        %5334 = vrot.lane.b32.xlu0 %v4710, 64
        %v5335 = vpop.permute.xlu0 %5334
        %5336 = vrot.lane.b32.xlu0 %v4711, 64
        %v5337 = vpop.permute.xlu0 %5336
        %5338 = vrot.lane.b32.xlu0 %v4712, 64
        %v5339 = vpop.permute.xlu0 %5338
        %5340 = vrot.lane.b32.xlu0 %v4713, 64
        %v5341 = vpop.permute.xlu0 %5340
        %5342 = vrot.lane.b32.xlu0 %v4714, 64
        %v5343 = vpop.permute.xlu0 %5342
        %5344 = vrot.lane.b32.xlu0 %v4715, 64
        %v5345 = vpop.permute.xlu0 %5344
        %5346 = vrot.lane.b32.xlu0 %v4716, 64
        %v5347 = vpop.permute.xlu0 %5346
        %5348 = vrot.lane.b32.xlu0 %v4717, 64
        %v5349 = vpop.permute.xlu0 %5348
        %5350 = vrot.lane.b32.xlu0 %v4718, 64
        %v5351 = vpop.permute.xlu0 %5350
        %5352 = vrot.lane.b32.xlu0 %v4719, 64
        %v5353 = vpop.permute.xlu0 %5352
        %5354 = vrot.lane.b32.xlu0 %v4720, 64
        %v5355 = vpop.permute.xlu0 %5354
        %5356 = vrot.lane.b32.xlu0 %v4721, 64
        %v5357 = vpop.permute.xlu0 %5356
        %5358 = vrot.lane.b32.xlu0 %v4722, 64
        %v5359 = vpop.permute.xlu0 %5358
        %5360 = vrot.lane.b32.xlu0 %v4723, 64
        %v5361 = vpop.permute.xlu0 %5360
        %5362 = vrot.lane.b32.xlu0 %v4724, 64
        %v5363 = vpop.permute.xlu0 %5362
        %5364 = vrot.lane.b32.xlu0 %v4725, 64
        %v5365 = vpop.permute.xlu0 %5364
        %5366 = vrot.lane.b32.xlu0 %v4726, 64
        %v5367 = vpop.permute.xlu0 %5366
        %5368 = vrot.lane.b32.xlu0 %v4727, 64
        %v5369 = vpop.permute.xlu0 %5368
        %5370 = vrot.lane.b32.xlu0 %v4728, 64
        %v5371 = vpop.permute.xlu0 %5370
        %5408 = vrot.lane.b32.xlu0 %v4396, 96
        %v5409 = vpop.permute.xlu0 %5408
        %5410 = vrot.lane.b32.xlu0 %v4397, 96
        %v5411 = vpop.permute.xlu0 %5410
        %5412 = vrot.lane.b32.xlu0 %v4398, 96
        %v5413 = vpop.permute.xlu0 %5412
        %5414 = vrot.lane.b32.xlu0 %v4399, 96
        %v5415 = vpop.permute.xlu0 %5414
        %5416 = vrot.lane.b32.xlu0 %v4400, 96
        %v5417 = vpop.permute.xlu0 %5416
        %5418 = vrot.lane.b32.xlu0 %v4401, 96
        %v5419 = vpop.permute.xlu0 %5418
        %5420 = vrot.lane.b32.xlu0 %v4402, 96
        %v5421 = vpop.permute.xlu0 %5420
        %5422 = vrot.lane.b32.xlu0 %v4403, 96
        %v5423 = vpop.permute.xlu0 %5422
        %5424 = vrot.lane.b32.xlu0 %v4404, 96
        %v5425 = vpop.permute.xlu0 %5424
        %5426 = vrot.lane.b32.xlu0 %v4405, 96
        %v5427 = vpop.permute.xlu0 %5426
        %5428 = vrot.lane.b32.xlu0 %v4406, 96
        %v5429 = vpop.permute.xlu0 %5428
        %5430 = vrot.lane.b32.xlu0 %v4407, 96
        %v5431 = vpop.permute.xlu0 %5430
        %5432 = vrot.lane.b32.xlu0 %v4408, 96
        %v5433 = vpop.permute.xlu0 %5432
        %5434 = vrot.lane.b32.xlu0 %v4409, 96
        %v5435 = vpop.permute.xlu0 %5434
        %5436 = vrot.lane.b32.xlu0 %v4410, 96
        %v5437 = vpop.permute.xlu0 %5436
        %5438 = vrot.lane.b32.xlu0 %v4411, 96
        %v5439 = vpop.permute.xlu0 %5438
        %5440 = vrot.lane.b32.xlu0 %v4412, 96
        %v5441 = vpop.permute.xlu0 %5440
        %5442 = vrot.lane.b32.xlu0 %v4413, 96
        %v5443 = vpop.permute.xlu0 %5442
        %5444 = vrot.lane.b32.xlu0 %v4414, 96
        %v5445 = vpop.permute.xlu0 %5444
        %5446 = vrot.lane.b32.xlu0 %v4415, 96
        %v5447 = vpop.permute.xlu0 %5446
        %5448 = vrot.lane.b32.xlu0 %v4416, 96
        %v5449 = vpop.permute.xlu0 %5448
        %5450 = vrot.lane.b32.xlu0 %v4417, 96
        %v5451 = vpop.permute.xlu0 %5450
        %5452 = vrot.lane.b32.xlu0 %v4418, 96
        %v5453 = vpop.permute.xlu0 %5452
        %5454 = vrot.lane.b32.xlu0 %v4419, 96
        %v5455 = vpop.permute.xlu0 %5454
        %5456 = vrot.lane.b32.xlu0 %v4420, 96
        %v5457 = vpop.permute.xlu0 %5456
        %5458 = vrot.lane.b32.xlu0 %v4421, 96
        %v5459 = vpop.permute.xlu0 %5458
        %5460 = vrot.lane.b32.xlu0 %v4422, 96
        %v5461 = vpop.permute.xlu0 %5460
        %5462 = vrot.lane.b32.xlu0 %v4423, 96
        %v5463 = vpop.permute.xlu0 %5462
        %5464 = vrot.lane.b32.xlu0 %v4424, 96
        %v5465 = vpop.permute.xlu0 %5464
        %5466 = vrot.lane.b32.xlu0 %v4425, 96
        %v5467 = vpop.permute.xlu0 %5466
        %5468 = vrot.lane.b32.xlu0 %v4426, 96
        %v5469 = vpop.permute.xlu0 %5468
        %5470 = vrot.lane.b32.xlu0 %v4427, 96
        %v5471 = vpop.permute.xlu0 %5470
        %v5504 = vsel %vm1961, %v4493, %v4797
        %v5505 = vsel %vm1961, %v4494, %v4799
        %v5506 = vsel %vm1961, %v4495, %v4801
        %v5507 = vsel %vm1961, %v4496, %v4803
        %v5508 = vsel %vm1961, %v4497, %v4805
        %v5509 = vsel %vm1961, %v4498, %v4807
        %v5510 = vsel %vm1961, %v4499, %v4809
        %v5511 = vsel %vm1961, %v4500, %v4811
        %v5512 = vsel %vm1961, %v4501, %v4813
        %v5513 = vsel %vm1961, %v4502, %v4815
        %v5514 = vsel %vm1961, %v4503, %v4817
        %v5515 = vsel %vm1961, %v4504, %v4819
        %v5516 = vsel %vm1961, %v4505, %v4821
        %v5517 = vsel %vm1961, %v4506, %v4823
        %v5518 = vsel %vm1961, %v4507, %v4825
        %v5519 = vsel %vm1961, %v4508, %v4827
        %v5520 = vsel %vm1961, %v4509, %v4829
        %v5521 = vsel %vm1961, %v4510, %v4831
        %v5522 = vsel %vm1961, %v4511, %v4833
        %v5523 = vsel %vm1961, %v4512, %v4835
        %v5524 = vsel %vm1961, %v4513, %v4837
        %v5525 = vsel %vm1961, %v4514, %v4839
        %v5526 = vsel %vm1961, %v4515, %v4841
        %v5527 = vsel %vm1961, %v4516, %v4843
        %v5528 = vsel %vm1961, %v4517, %v4845
        %v5529 = vsel %vm1961, %v4518, %v4847
        %v5530 = vsel %vm1961, %v4519, %v4849
        %v5531 = vsel %vm1961, %v4520, %v4851
        %v5532 = vsel %vm1961, %v4521, %v4853
        %v5533 = vsel %vm1961, %v4522, %v4855
        %v5534 = vsel %vm1961, %v4523, %v4857
        %v5535 = vsel %vm1961, %v4524, %v4859
        %v5536 = vsel %vm1994, %v5504, %v4925
        %v5537 = vsel %vm1994, %v5505, %v4927
        %v5538 = vsel %vm1994, %v5506, %v4929
        %v5539 = vsel %vm1994, %v5507, %v4931
        %v5540 = vsel %vm1994, %v5508, %v4933
        %v5541 = vsel %vm1994, %v5509, %v4935
        %v5542 = vsel %vm1994, %v5510, %v4937
        %v5543 = vsel %vm1994, %v5511, %v4939
        %v5544 = vsel %vm1994, %v5512, %v4941
        %v5545 = vsel %vm1994, %v5513, %v4943
        %v5546 = vsel %vm1994, %v5514, %v4945
        %v5547 = vsel %vm1994, %v5515, %v4947
        %v5548 = vsel %vm1994, %v5516, %v4949
        %v5549 = vsel %vm1994, %v5517, %v4951
        %v5550 = vsel %vm1994, %v5518, %v4953
        %v5551 = vsel %vm1994, %v5519, %v4955
        %v5552 = vsel %vm1994, %v5520, %v4957
        %v5553 = vsel %vm1994, %v5521, %v4959
        %v5554 = vsel %vm1994, %v5522, %v4961
        %v5555 = vsel %vm1994, %v5523, %v4963
        %v5556 = vsel %vm1994, %v5524, %v4965
        %v5557 = vsel %vm1994, %v5525, %v4967
        %v5558 = vsel %vm1994, %v5526, %v4969
        %v5559 = vsel %vm1994, %v5527, %v4971
        %v5560 = vsel %vm1994, %v5528, %v4973
        %v5561 = vsel %vm1994, %v5529, %v4975
        %v5562 = vsel %vm1994, %v5530, %v4977
        %v5563 = vsel %vm1994, %v5531, %v4979
        %v5564 = vsel %vm1994, %v5532, %v4981
        %v5565 = vsel %vm1994, %v5533, %v4983
        %v5566 = vsel %vm1994, %v5534, %v4985
        %v5567 = vsel %vm1994, %v5535, %v4987
        %v5568 = vsel %vm2027, %v5536, %v5053
        %v5569 = vsel %vm2027, %v5537, %v5055
        %v5570 = vsel %vm2027, %v5538, %v5057
        %v5571 = vsel %vm2027, %v5539, %v5059
        %v5572 = vsel %vm2027, %v5540, %v5061
        %v5573 = vsel %vm2027, %v5541, %v5063
        %v5574 = vsel %vm2027, %v5542, %v5065
        %v5575 = vsel %vm2027, %v5543, %v5067
        %v5576 = vsel %vm2027, %v5544, %v5069
        %v5577 = vsel %vm2027, %v5545, %v5071
        %v5578 = vsel %vm2027, %v5546, %v5073
        %v5579 = vsel %vm2027, %v5547, %v5075
        %v5580 = vsel %vm2027, %v5548, %v5077
        %v5581 = vsel %vm2027, %v5549, %v5079
        %v5582 = vsel %vm2027, %v5550, %v5081
        %v5583 = vsel %vm2027, %v5551, %v5083
        %v5584 = vsel %vm2027, %v5552, %v5085
        %v5585 = vsel %vm2027, %v5553, %v5087
        %v5586 = vsel %vm2027, %v5554, %v5089
        %v5587 = vsel %vm2027, %v5555, %v5091
        %v5588 = vsel %vm2027, %v5556, %v5093
        %v5589 = vsel %vm2027, %v5557, %v5095
        %v5590 = vsel %vm2027, %v5558, %v5097
        %v5591 = vsel %vm2027, %v5559, %v5099
        %v5592 = vsel %vm2027, %v5560, %v5101
        %v5593 = vsel %vm2027, %v5561, %v5103
        %v5594 = vsel %vm2027, %v5562, %v5105
        %v5595 = vsel %vm2027, %v5563, %v5107
        %v5596 = vsel %vm2027, %v5564, %v5109
        %v5597 = vsel %vm2027, %v5565, %v5111
        %v5598 = vsel %vm2027, %v5566, %v5113
        %v5599 = vsel %vm2027, %v5567, %v5115
        %v5600 = vsel %vm1961, %v4394, %v5181
        %v5601 = vsel %vm1961, %v4395, %v5183
        %v5602 = vsel %vm1961, %v4396, %v5185
        %v5603 = vsel %vm1961, %v4397, %v5187
        %v5604 = vsel %vm1961, %v4398, %v5189
        %v5605 = vsel %vm1961, %v4399, %v5191
        %v5606 = vsel %vm1961, %v4400, %v5193
        %v5607 = vsel %vm1961, %v4401, %v5195
        %v5608 = vsel %vm1961, %v4402, %v5197
        %v5609 = vsel %vm1961, %v4403, %v5199
        %v5610 = vsel %vm1961, %v4404, %v5201
        %v5611 = vsel %vm1961, %v4405, %v5203
        %v5612 = vsel %vm1961, %v4406, %v5205
        %v5613 = vsel %vm1961, %v4407, %v5207
        %v5614 = vsel %vm1961, %v4408, %v5209
        %v5615 = vsel %vm1961, %v4409, %v5211
        %v5616 = vsel %vm1961, %v4410, %v5213
        %v5617 = vsel %vm1961, %v4411, %v5215
        %v5618 = vsel %vm1961, %v4412, %v5217
        %v5619 = vsel %vm1961, %v4413, %v5219
        %v5620 = vsel %vm1961, %v4414, %v5221
        %v5621 = vsel %vm1961, %v4415, %v5223
        %v5622 = vsel %vm1961, %v4416, %v5225
        %v5623 = vsel %vm1961, %v4417, %v5227
        %v5624 = vsel %vm1961, %v4418, %v5229
        %v5625 = vsel %vm1961, %v4419, %v5231
        %v5626 = vsel %vm1961, %v4420, %v5233
        %v5627 = vsel %vm1961, %v4421, %v5235
        %v5628 = vsel %vm1961, %v4422, %v5237
        %v5629 = vsel %vm1961, %v4423, %v5239
        %v5630 = vsel %vm1961, %v4424, %v5241
        %v5631 = vsel %vm1961, %v4425, %v5243
        %v5632 = vsel %vm1994, %v5600, %v5309
        %v5633 = vsel %vm1994, %v5601, %v5311
        %v5634 = vsel %vm1994, %v5602, %v5313
        %v5635 = vsel %vm1994, %v5603, %v5315
        %v5636 = vsel %vm1994, %v5604, %v5317
        %v5637 = vsel %vm1994, %v5605, %v5319
        %v5638 = vsel %vm1994, %v5606, %v5321
        %v5639 = vsel %vm1994, %v5607, %v5323
        %v5640 = vsel %vm1994, %v5608, %v5325
        %v5641 = vsel %vm1994, %v5609, %v5327
        %v5642 = vsel %vm1994, %v5610, %v5329
        %v5643 = vsel %vm1994, %v5611, %v5331
        %v5644 = vsel %vm1994, %v5612, %v5333
        %v5645 = vsel %vm1994, %v5613, %v5335
        %v5646 = vsel %vm1994, %v5614, %v5337
        %v5647 = vsel %vm1994, %v5615, %v5339
        %v5648 = vsel %vm1994, %v5616, %v5341
        %v5649 = vsel %vm1994, %v5617, %v5343
        %v5650 = vsel %vm1994, %v5618, %v5345
        %v5651 = vsel %vm1994, %v5619, %v5347
        %v5652 = vsel %vm1994, %v5620, %v5349
        %v5653 = vsel %vm1994, %v5621, %v5351
        %v5654 = vsel %vm1994, %v5622, %v5353
        %v5655 = vsel %vm1994, %v5623, %v5355
        %v5656 = vsel %vm1994, %v5624, %v5357
        %v5657 = vsel %vm1994, %v5625, %v5359
        %v5658 = vsel %vm1994, %v5626, %v5361
        %v5659 = vsel %vm1994, %v5627, %v5363
        %v5660 = vsel %vm1994, %v5628, %v5365
        %v5661 = vsel %vm1994, %v5629, %v5367
        %v5662 = vsel %vm1994, %v5630, %v5369
        %v5663 = vsel %vm1994, %v5631, %v5371
        %v5664 = vsel %vm2027, %v5632, %v5409
        %v5665 = vsel %vm2027, %v5633, %v5411
        %v5666 = vsel %vm2027, %v5634, %v5413
        %v5667 = vsel %vm2027, %v5635, %v5415
        %v5668 = vsel %vm2027, %v5636, %v5417
        %v5669 = vsel %vm2027, %v5637, %v5419
        %v5670 = vsel %vm2027, %v5638, %v5421
        %v5671 = vsel %vm2027, %v5639, %v5423
        %v5672 = vsel %vm2027, %v5640, %v5425
        %v5673 = vsel %vm2027, %v5641, %v5427
        %v5674 = vsel %vm2027, %v5642, %v5429
        %v5675 = vsel %vm2027, %v5643, %v5431
        %v5676 = vsel %vm2027, %v5644, %v5433
        %v5677 = vsel %vm2027, %v5645, %v5435
        %v5678 = vsel %vm2027, %v5646, %v5437
        %v5679 = vsel %vm2027, %v5647, %v5439
        %v5680 = vsel %vm2027, %v5648, %v5441
        %v5681 = vsel %vm2027, %v5649, %v5443
        %v5682 = vsel %vm2027, %v5650, %v5445
        %v5683 = vsel %vm2027, %v5651, %v5447
        %v5684 = vsel %vm2027, %v5652, %v5449
        %v5685 = vsel %vm2027, %v5653, %v5451
        %v5686 = vsel %vm2027, %v5654, %v5453
        %v5687 = vsel %vm2027, %v5655, %v5455
        %v5688 = vsel %vm2027, %v5656, %v5457
        %v5689 = vsel %vm2027, %v5657, %v5459
        %v5690 = vsel %vm2027, %v5658, %v5461
        %v5691 = vsel %vm2027, %v5659, %v5463
        %v5692 = vsel %vm2027, %v5660, %v5465
        %v5693 = vsel %vm2027, %v5661, %v5467
        %v5694 = vsel %vm2027, %v5662, %v5469
        %v5695 = vsel %vm2027, %v5663, %v5471
        %v5696 = vld [vmem:[%s6] sm:$0xff]
        %v5697 = vld [vmem:[%s6 + $0x8] sm:$0xff]
        %v5698 = vld [vmem:[%s6 + $0x10] sm:$0xff]
        %v5699 = vld [vmem:[%s6 + $0x18] sm:$0xff]
        %v5700 = vld [vmem:[%s6 + $0x20] sm:$0xff]
        %v5701 = vld [vmem:[%s6 + $0x28] sm:$0xff]
        %v5702 = vld [vmem:[%s6 + $0x30] sm:$0xff]
        %v5703 = vld [vmem:[%s6 + $0x38] sm:$0xff]
        %v5704 = vld [vmem:[%s6 + $0x40] sm:$0xff]
        %v5705 = vld [vmem:[%s6 + $0x48] sm:$0xff]
        %v5706 = vld [vmem:[%s6 + $0x50] sm:$0xff]
        %v5707 = vld [vmem:[%s6 + $0x58] sm:$0xff]
        %v5708 = vld [vmem:[%s6 + $0x60] sm:$0xff]
        %v5709 = vld [vmem:[%s6 + $0x68] sm:$0xff]
        %v5710 = vld [vmem:[%s6 + $0x70] sm:$0xff]
        %v5711 = vld [vmem:[%s6 + $0x78] sm:$0xff]
        %v5712 = vld [vmem:[%s6 + $0x80] sm:$0xff]
        %v5713 = vld [vmem:[%s6 + $0x88] sm:$0xff]
        %v5714 = vld [vmem:[%s6 + $0x90] sm:$0xff]
        %v5715 = vld [vmem:[%s6 + $0x98] sm:$0xff]
        %v5716 = vld [vmem:[%s6 + $0xa0] sm:$0xff]
        %v5717 = vld [vmem:[%s6 + $0xa8] sm:$0xff]
        %v5718 = vld [vmem:[%s6 + $0xb0] sm:$0xff]
        %v5719 = vld [vmem:[%s6 + $0xb8] sm:$0xff]
        %v5720 = vld [vmem:[%s6 + $0xc0] sm:$0xff]
        %v5721 = vld [vmem:[%s6 + $0xc8] sm:$0xff]
        %v5722 = vld [vmem:[%s6 + $0xd0] sm:$0xff]
        %v5723 = vld [vmem:[%s6 + $0xd8] sm:$0xff]
        %v5724 = vld [vmem:[%s6 + $0xe0] sm:$0xff]
        %v5725 = vld [vmem:[%s6 + $0xe8] sm:$0xff]
        %v5726 = vld [vmem:[%s6 + $0xf0] sm:$0xff]
        %v5727 = vld [vmem:[%s6 + $0xf8] sm:$0xff]
        %v5728 = vld [vmem:[%s6 + $0x100] sm:$0xff]
        %v5729 = vld [vmem:[%s6 + $0x108] sm:$0xff]
        %v5730 = vld [vmem:[%s6 + $0x110] sm:$0xff]
        %v5731 = vld [vmem:[%s6 + $0x118] sm:$0xff]
        %v5732 = vld [vmem:[%s7] sm:$0x1]
        %v5734 = vlaneseq
        %v5735 = vshrl.u32 %v5734, 7
        %v5736 = vsub.s32 0, %v5735
        %v5737 = vrot.slane %v5732, %v5736
        %v5740 = vsel %vm1961, %v4732, 0
        %v5743 = vsel %vm1961, %v4733, 0
        %v5746 = vsel %vm1961, %v4734, 0
        %v5749 = vsel %vm1961, %v4735, 0
        %v5752 = vsel %vm1961, %v4736, 0
        %v5755 = vsel %vm1961, %v4737, 0
        %v5758 = vsel %vm1961, %v4738, 0
        %v5761 = vsel %vm1961, %v4739, 0
        %v5764 = vsel %vm1961, %v4740, 0
        %v5767 = vsel %vm1961, %v4741, 0
        %v5770 = vsel %vm1961, %v4742, 0
        %v5773 = vsel %vm1961, %v4743, 0
        %v5776 = vsel %vm1961, %v4744, 0
        %v5779 = vsel %vm1961, %v4745, 0
        %v5782 = vsel %vm1961, %v4746, 0
        %v5785 = vsel %vm1961, %v4747, 0
        %v5788 = vsel %vm1961, %v4748, 0
        %v5791 = vsel %vm1961, %v4749, 0
        %v5794 = vsel %vm1961, %v4750, 0
        %v5797 = vsel %vm1961, %v4751, 0
        %v5800 = vsel %vm1961, %v4752, 0
        %v5803 = vsel %vm1961, %v4753, 0
        %v5806 = vsel %vm1961, %v4754, 0
        %v5809 = vsel %vm1961, %v4755, 0
        %v5812 = vsel %vm1961, %v4756, 0
        %v5815 = vsel %vm1961, %v4757, 0
        %v5818 = vsel %vm1961, %v4758, 0
        %v5821 = vsel %vm1961, %v4759, 0
        %v5824 = vsel %vm1961, %v4760, 0
        %v5827 = vsel %vm1961, %v4761, 0
        %v5830 = vsel %vm1961, %v4762, 0
        %v5833 = vsel %vm1961, %v4763, 0
        %5835 = vmatprep.subr.mxu0 0.0
        %5836 = vmatpush1.msra.mxu0 %v5696
        %5837 = vmatprep.subr.mxu0 0.0
        %5838 = vmatpush1.msra.mxu0 %v5697
        %5839 = vmatprep.subr.mxu0 0.0
        %5840 = vmatpush1.msra.mxu0 %v5698
        %5841 = vmatprep.subr.mxu0 0.0
        %5842 = vmatpush1.msra.mxu0 %v5699
        %5843 = vmatprep.subr.mxu0 0.0
        %5844 = vmatpush1.msra.mxu0 %v5700
        %5845 = vmatprep.subr.mxu0 0.0
        %5846 = vmatpush1.msra.mxu0 %v5701
        %5847 = vmatprep.subr.mxu0 0.0
        %5848 = vmatpush1.msra.mxu0 %v5702
        %5849 = vmatprep.subr.mxu0 0.0
        %5850 = vmatpush1.msra.mxu0 %v5703
        %5851 = vmatprep.subr.mxu0 0.0
        %5852 = vmatpush1.msra.mxu0 %v5704
        %5853 = vmatprep.subr.mxu0 0.0
        %5854 = vmatpush1.msra.mxu0 %v5705
        %5855 = vmatprep.subr.mxu0 0.0
        %5856 = vmatpush1.msra.mxu0 %v5706
        %5857 = vmatprep.subr.mxu0 0.0
        %5858 = vmatpush1.msra.mxu0 %v5707
        %5859 = vmatprep.subr.mxu0 0.0
        %5860 = vmatpush1.msra.mxu0 %v5708
        %5861 = vmatprep.subr.mxu0 0.0
        %5862 = vmatpush1.msra.mxu0 %v5709
        %5863 = vmatprep.subr.mxu0 0.0
        %5864 = vmatpush1.msra.mxu0 %v5710
        %5865 = vmatprep.subr.mxu0 0.0
        %5866 = vmatpush1.msra.mxu0 %v5711
        %5867 = vmatprep.subr.mxu0 0.0
        %5868 = vmatpush1.msra.mxu0 %v5712
        %5869 = vmatprep.subr.mxu0 0.0
        %5870 = vmatpush1.msra.mxu0 %v5713
        %5871 = vmatprep.subr.mxu0 0.0
        %5872 = vmatpush1.msra.mxu0 %v5714
        %5873 = vmatprep.subr.mxu0 0.0
        %5874 = vmatpush1.msra.mxu0 %v5715
        %5875 = vmatprep.subr.mxu0 0.0
        %5876 = vmatpush1.msra.mxu0 %v5716
        %5877 = vmatprep.subr.mxu0 0.0
        %5878 = vmatpush1.msra.mxu0 %v5717
        %5879 = vmatprep.subr.mxu0 0.0
        %5880 = vmatpush1.msra.mxu0 %v5718
        %5881 = vmatprep.subr.mxu0 0.0
        %5882 = vmatpush1.msra.mxu0 %v5719
        %5883 = vmatprep.subr.mxu0 0.0
        %5884 = vmatpush1.msra.mxu0 %v5720
        %5885 = vmatprep.subr.mxu0 0.0
        %5886 = vmatpush1.msra.mxu0 %v5721
        %5887 = vmatprep.subr.mxu0 0.0
        %5888 = vmatpush1.msra.mxu0 %v5722
        %5889 = vmatprep.subr.mxu0 0.0
        %5890 = vmatpush1.msra.mxu0 %v5723
        %5891 = vmatprep.subr.mxu0 0.0
        %5892 = vmatpush1.msra.mxu0 %v5724
        %5893 = vmatprep.subr.mxu0 0.0
        %5894 = vmatpush1.msra.mxu0 %v5725
        %5895 = vmatprep.subr.mxu0 0.0
        %5896 = vmatpush1.msra.mxu0 %v5726
        %5897 = vmatprep.subr.mxu0 0.0
        %5898 = vmatpush1.msra.mxu0 %v5727
        %5899 = vmatprep.mubr.f32.mxu0 %v5664
        %5900 = vmatmul.mubr.f32.gmra.mrb[0].mxu0 %v5568
        %v5901 = vpop.f32.mrb[0].mxu0
        %v5902 = vadd.f32 %v5737, %v5901
        %v5903 = vpop.f32.mrb[0].mxu0
        %5904 = vmatprep.mubr.f32.mxu0 %v5665
        %5905 = vmatmul.mubr.f32.gmra.mrb[0].mxu0 %v5569
        %v5906 = vpop.f32.mrb[0].mxu0
        %v5907 = vadd.f32 %v5737, %v5906
        %v5908 = vpop.f32.mrb[0].mxu0
        %5909 = vmatprep.mubr.f32.mxu0 %v5666
        %5910 = vmatmul.mubr.f32.gmra.mrb[0].mxu0 %v5570
        %v5911 = vpop.f32.mrb[0].mxu0
        %v5912 = vadd.f32 %v5737, %v5911
        %v5913 = vpop.f32.mrb[0].mxu0
        %5914 = vmatprep.mubr.f32.mxu0 %v5667
        %5915 = vmatmul.mubr.f32.gmra.mrb[0].mxu0 %v5571
        %v5916 = vpop.f32.mrb[0].mxu0
        %v5917 = vadd.f32 %v5737, %v5916
        %v5918 = vpop.f32.mrb[0].mxu0
        %5919 = vmatprep.mubr.f32.mxu0 %v5668
        %5920 = vmatmul.mubr.f32.gmra.mrb[0].mxu0 %v5572
        %v5921 = vpop.f32.mrb[0].mxu0
        %v5922 = vadd.f32 %v5737, %v5921
        %v5923 = vpop.f32.mrb[0].mxu0
        %5924 = vmatprep.mubr.f32.mxu0 %v5669
        %5925 = vmatmul.mubr.f32.gmra.mrb[0].mxu0 %v5573
        %v5926 = vpop.f32.mrb[0].mxu0
        %v5927 = vadd.f32 %v5737, %v5926
        %v5928 = vpop.f32.mrb[0].mxu0
        %5929 = vmatprep.mubr.f32.mxu0 %v5670
        %5930 = vmatmul.mubr.f32.gmra.mrb[0].mxu0 %v5574
        %v5931 = vpop.f32.mrb[0].mxu0
        %v5932 = vadd.f32 %v5737, %v5931
        %v5933 = vpop.f32.mrb[0].mxu0
        %5934 = vmatprep.mubr.f32.mxu0 %v5671
        %5935 = vmatmul.mubr.f32.gmra.mrb[0].mxu0 %v5575
        %v5936 = vpop.f32.mrb[0].mxu0
        %v5937 = vadd.f32 %v5737, %v5936
        %v5938 = vpop.f32.mrb[0].mxu0
        %5939 = vmatprep.mubr.f32.mxu0 %v5672
        %5940 = vmatmul.mubr.f32.gmra.mrb[0].mxu0 %v5576
        %v5941 = vpop.f32.mrb[0].mxu0
        %v5942 = vadd.f32 %v5737, %v5941
        %v5943 = vpop.f32.mrb[0].mxu0
        %5944 = vmatprep.mubr.f32.mxu0 %v5673
        %5945 = vmatmul.mubr.f32.gmra.mrb[0].mxu0 %v5577
        %v5946 = vpop.f32.mrb[0].mxu0
        %v5947 = vadd.f32 %v5737, %v5946
        %v5948 = vpop.f32.mrb[0].mxu0
        %5949 = vmatprep.mubr.f32.mxu0 %v5674
        %5950 = vmatmul.mubr.f32.gmra.mrb[0].mxu0 %v5578
        %v5951 = vpop.f32.mrb[0].mxu0
        %v5952 = vadd.f32 %v5737, %v5951
        %v5953 = vpop.f32.mrb[0].mxu0
        %5954 = vmatprep.mubr.f32.mxu0 %v5675
        %5955 = vmatmul.mubr.f32.gmra.mrb[0].mxu0 %v5579
        %v5956 = vpop.f32.mrb[0].mxu0
        %v5957 = vadd.f32 %v5737, %v5956
        %v5958 = vpop.f32.mrb[0].mxu0
        %5959 = vmatprep.mubr.f32.mxu0 %v5676
        %5960 = vmatmul.mubr.f32.gmra.mrb[0].mxu0 %v5580
        %v5961 = vpop.f32.mrb[0].mxu0
        %v5962 = vadd.f32 %v5737, %v5961
        %v5963 = vpop.f32.mrb[0].mxu0
        %5964 = vmatprep.mubr.f32.mxu0 %v5677
        %5965 = vmatmul.mubr.f32.gmra.mrb[0].mxu0 %v5581
        %v5966 = vpop.f32.mrb[0].mxu0
        %v5967 = vadd.f32 %v5737, %v5966
        %v5968 = vpop.f32.mrb[0].mxu0
        %5969 = vmatprep.mubr.f32.mxu0 %v5678
        %5970 = vmatmul.mubr.f32.gmra.mrb[0].mxu0 %v5582
        %v5971 = vpop.f32.mrb[0].mxu0
        %v5972 = vadd.f32 %v5737, %v5971
        %v5973 = vpop.f32.mrb[0].mxu0
        %5974 = vmatprep.mubr.f32.mxu0 %v5679
        %5975 = vmatmul.mubr.f32.gmra.mrb[0].mxu0 %v5583
        %v5976 = vpop.f32.mrb[0].mxu0
        %v5977 = vadd.f32 %v5737, %v5976
        %v5978 = vpop.f32.mrb[0].mxu0
        %5979 = vmatprep.mubr.f32.mxu0 %v5680
        %5980 = vmatmul.mubr.f32.gmra.mrb[0].mxu0 %v5584
        %v5981 = vpop.f32.mrb[0].mxu0
        %v5982 = vadd.f32 %v5737, %v5981
        %v5983 = vpop.f32.mrb[0].mxu0
        %5984 = vmatprep.mubr.f32.mxu0 %v5681
        %5985 = vmatmul.mubr.f32.gmra.mrb[0].mxu0 %v5585
        %v5986 = vpop.f32.mrb[0].mxu0
        %v5987 = vadd.f32 %v5737, %v5986
        %v5988 = vpop.f32.mrb[0].mxu0
        %5989 = vmatprep.mubr.f32.mxu0 %v5682
        %5990 = vmatmul.mubr.f32.gmra.mrb[0].mxu0 %v5586
        %v5991 = vpop.f32.mrb[0].mxu0
        %v5992 = vadd.f32 %v5737, %v5991
        %v5993 = vpop.f32.mrb[0].mxu0
        %5994 = vmatprep.mubr.f32.mxu0 %v5683
        %5995 = vmatmul.mubr.f32.gmra.mrb[0].mxu0 %v5587
        %v5996 = vpop.f32.mrb[0].mxu0
        %v5997 = vadd.f32 %v5737, %v5996
        %v5998 = vpop.f32.mrb[0].mxu0
        %5999 = vmatprep.mubr.f32.mxu0 %v5684
        %6000 = vmatmul.mubr.f32.gmra.mrb[0].mxu0 %v5588
        %v6001 = vpop.f32.mrb[0].mxu0
        %v6002 = vadd.f32 %v5737, %v6001
        %v6003 = vpop.f32.mrb[0].mxu0
        %6004 = vmatprep.mubr.f32.mxu0 %v5685
        %6005 = vmatmul.mubr.f32.gmra.mrb[0].mxu0 %v5589
        %v6006 = vpop.f32.mrb[0].mxu0
        %v6007 = vadd.f32 %v5737, %v6006
        %v6008 = vpop.f32.mrb[0].mxu0
        %6009 = vmatprep.mubr.f32.mxu0 %v5686
        %6010 = vmatmul.mubr.f32.gmra.mrb[0].mxu0 %v5590
        %v6011 = vpop.f32.mrb[0].mxu0
        %v6012 = vadd.f32 %v5737, %v6011
        %v6013 = vpop.f32.mrb[0].mxu0
        %6014 = vmatprep.mubr.f32.mxu0 %v5687
        %6015 = vmatmul.mubr.f32.gmra.mrb[0].mxu0 %v5591
        %v6016 = vpop.f32.mrb[0].mxu0
        %v6017 = vadd.f32 %v5737, %v6016
        %v6018 = vpop.f32.mrb[0].mxu0
        %6019 = vmatprep.mubr.f32.mxu0 %v5688
        %6020 = vmatmul.mubr.f32.gmra.mrb[0].mxu0 %v5592
        %v6021 = vpop.f32.mrb[0].mxu0
        %v6022 = vadd.f32 %v5737, %v6021
        %v6023 = vpop.f32.mrb[0].mxu0
        %6024 = vmatprep.mubr.f32.mxu0 %v5689
        %6025 = vmatmul.mubr.f32.gmra.mrb[0].mxu0 %v5593
        %v6026 = vpop.f32.mrb[0].mxu0
        %v6027 = vadd.f32 %v5737, %v6026
        %v6028 = vpop.f32.mrb[0].mxu0
        %6029 = vmatprep.mubr.f32.mxu0 %v5690
        %6030 = vmatmul.mubr.f32.gmra.mrb[0].mxu0 %v5594
        %v6031 = vpop.f32.mrb[0].mxu0
        %v6032 = vadd.f32 %v5737, %v6031
        %v6033 = vpop.f32.mrb[0].mxu0
        %6034 = vmatprep.mubr.f32.mxu0 %v5691
        %6035 = vmatmul.mubr.f32.gmra.mrb[0].mxu0 %v5595
        %v6036 = vpop.f32.mrb[0].mxu0
        %v6037 = vadd.f32 %v5737, %v6036
        %v6038 = vpop.f32.mrb[0].mxu0
        %6039 = vmatprep.mubr.f32.mxu0 %v5692
        %6040 = vmatmul.mubr.f32.gmra.mrb[0].mxu0 %v5596
        %v6041 = vpop.f32.mrb[0].mxu0
        %v6042 = vadd.f32 %v5737, %v6041
        %v6043 = vpop.f32.mrb[0].mxu0
        %6044 = vmatprep.mubr.f32.mxu0 %v5693
        %6045 = vmatmul.mubr.f32.gmra.mrb[0].mxu0 %v5597
        %v6046 = vpop.f32.mrb[0].mxu0
        %v6047 = vadd.f32 %v5737, %v6046
        %v6048 = vpop.f32.mrb[0].mxu0
        %6049 = vmatprep.mubr.f32.mxu0 %v5694
        %6050 = vmatmul.mubr.f32.gmra.mrb[0].mxu0 %v5598
        %v6051 = vpop.f32.mrb[0].mxu0
        %v6052 = vadd.f32 %v5737, %v6051
        %v6053 = vpop.f32.mrb[0].mxu0
        %6054 = vmatprep.mubr.f32.mxu0 %v5695
        %6055 = vmatmul.mubr.f32.gmra.mrb[0].mxu0 %v5599
        %v6056 = vpop.f32.mrb[0].mxu0
        %v6057 = vadd.f32 %v5737, %v6056
        %v6058 = vpop.f32.mrb[0].mxu0
        %6059 = vdwg.mxu0
        %6060 = vmatprep.subr.mxu0 0.0
        %6061 = vmatpush1.msra.mxu0 %v5728
        %6062 = vmatprep.subr.mxu0 0.0
        %6063 = vmatpush1.msra.mxu0 %v5729
        %6064 = vmatprep.subr.mxu0 0.0
        %6065 = vmatpush1.msra.mxu0 %v5730
        %6066 = vmatprep.subr.mxu0 0.0
        %6067 = vmatpush1.msra.mxu0 %v5731
        %6068 = vmatprep.subr.mxu0 0.0
        %6069 = vmatpush1.msra.mxu0 0.0
        %6070 = vmatprep.subr.mxu0 0.0
        %6071 = vmatpush1.msra.mxu0 0.0
        %6072 = vmatprep.subr.mxu0 0.0
        %6073 = vmatpush1.msra.mxu0 0.0
        %6074 = vmatprep.subr.mxu0 0.0
        %6075 = vmatpush1.msra.mxu0 0.0
        %6076 = vmatprep.subr.mxu0 0.0
        %6077 = vmatpush1.msra.mxu0 0.0
        %6078 = vmatprep.subr.mxu0 0.0
        %6079 = vmatpush1.msra.mxu0 0.0
        %6080 = vmatprep.subr.mxu0 0.0
        %6081 = vmatpush1.msra.mxu0 0.0
        %6082 = vmatprep.subr.mxu0 0.0
        %6083 = vmatpush1.msra.mxu0 0.0
        %6084 = vmatprep.subr.mxu0 0.0
        %6085 = vmatpush1.msra.mxu0 0.0
        %6086 = vmatprep.subr.mxu0 0.0
        %6087 = vmatpush1.msra.mxu0 0.0
        %6088 = vmatprep.subr.mxu0 0.0
        %6089 = vmatpush1.msra.mxu0 0.0
        %6090 = vmatprep.subr.mxu0 0.0
        %6091 = vmatpush1.msra.mxu0 0.0
        %6092 = vmatprep.subr.mxu0 0.0
        %6093 = vmatpush1.msra.mxu0 0.0
        %6094 = vmatprep.subr.mxu0 0.0
        %6095 = vmatpush1.msra.mxu0 0.0
        %6096 = vmatprep.subr.mxu0 0.0
        %6097 = vmatpush1.msra.mxu0 0.0
        %6098 = vmatprep.subr.mxu0 0.0
        %6099 = vmatpush1.msra.mxu0 0.0
        %6100 = vmatprep.subr.mxu0 0.0
        %6101 = vmatpush1.msra.mxu0 0.0
        %6102 = vmatprep.subr.mxu0 0.0
        %6103 = vmatpush1.msra.mxu0 0.0
        %6104 = vmatprep.subr.mxu0 0.0
        %6105 = vmatpush1.msra.mxu0 0.0
        %6106 = vmatprep.subr.mxu0 0.0
        %6107 = vmatpush1.msra.mxu0 0.0
        %6108 = vmatprep.subr.mxu0 0.0
        %6109 = vmatpush1.msra.mxu0 0.0
        %6110 = vmatprep.subr.mxu0 0.0
        %6111 = vmatpush1.msra.mxu0 0.0
        %6112 = vmatprep.subr.mxu0 0.0
        %6113 = vmatpush1.msra.mxu0 0.0
        %6114 = vmatprep.subr.mxu0 0.0
        %6115 = vmatpush1.msra.mxu0 0.0
        %6116 = vmatprep.subr.mxu0 0.0
        %6117 = vmatpush1.msra.mxu0 0.0
        %6118 = vmatprep.subr.mxu0 0.0
        %6119 = vmatpush1.msra.mxu0 0.0
        %6120 = vmatprep.subr.mxu0 0.0
        %6121 = vmatpush1.msra.mxu0 0.0
        %6122 = vmatprep.subr.mxu0 0.0
        %6123 = vmatpush1.msra.mxu0 0.0
        %6124 = vmatprep.mubr.f32.mxu0 0.0
        %6125 = vmatmul.mubr.f32.gmra.mrb[0].mxu0 %v5740
        %v6126 = vpop.f32.mrb[0].mxu0
        %v6127 = vadd.f32 %v5902, %v6126
        %v6128 = vpop.f32.mrb[0].mxu0
        %6129 = vmatprep.mubr.f32.mxu0 0.0
        %6130 = vmatmul.mubr.f32.gmra.mrb[0].mxu0 %v5743
        %v6131 = vpop.f32.mrb[0].mxu0
        %v6132 = vadd.f32 %v5907, %v6131
        %v6133 = vpop.f32.mrb[0].mxu0
        %6134 = vmatprep.mubr.f32.mxu0 0.0
        %6135 = vmatmul.mubr.f32.gmra.mrb[0].mxu0 %v5746
        %v6136 = vpop.f32.mrb[0].mxu0
        %v6137 = vadd.f32 %v5912, %v6136
        %v6138 = vpop.f32.mrb[0].mxu0
        %6139 = vmatprep.mubr.f32.mxu0 0.0
        %6140 = vmatmul.mubr.f32.gmra.mrb[0].mxu0 %v5749
        %v6141 = vpop.f32.mrb[0].mxu0
        %v6142 = vadd.f32 %v5917, %v6141
        %v6143 = vpop.f32.mrb[0].mxu0
        %6144 = vmatprep.mubr.f32.mxu0 0.0
        %6145 = vmatmul.mubr.f32.gmra.mrb[0].mxu0 %v5752
        %v6146 = vpop.f32.mrb[0].mxu0
        %v6147 = vadd.f32 %v5922, %v6146
        %v6148 = vpop.f32.mrb[0].mxu0
        %6149 = vmatprep.mubr.f32.mxu0 0.0
        %6150 = vmatmul.mubr.f32.gmra.mrb[0].mxu0 %v5755
        %v6151 = vpop.f32.mrb[0].mxu0
        %v6152 = vadd.f32 %v5927, %v6151
        %v6153 = vpop.f32.mrb[0].mxu0
        %6154 = vmatprep.mubr.f32.mxu0 0.0
        %6155 = vmatmul.mubr.f32.gmra.mrb[0].mxu0 %v5758
        %v6156 = vpop.f32.mrb[0].mxu0
        %v6157 = vadd.f32 %v5932, %v6156
        %v6158 = vpop.f32.mrb[0].mxu0
        %6159 = vmatprep.mubr.f32.mxu0 0.0
        %6160 = vmatmul.mubr.f32.gmra.mrb[0].mxu0 %v5761
        %v6161 = vpop.f32.mrb[0].mxu0
        %v6162 = vadd.f32 %v5937, %v6161
        %v6163 = vpop.f32.mrb[0].mxu0
        %6164 = vmatprep.mubr.f32.mxu0 0.0
        %6165 = vmatmul.mubr.f32.gmra.mrb[0].mxu0 %v5764
        %v6166 = vpop.f32.mrb[0].mxu0
        %v6167 = vadd.f32 %v5942, %v6166
        %v6168 = vpop.f32.mrb[0].mxu0
        %6169 = vmatprep.mubr.f32.mxu0 0.0
        %6170 = vmatmul.mubr.f32.gmra.mrb[0].mxu0 %v5767
        %v6171 = vpop.f32.mrb[0].mxu0
        %v6172 = vadd.f32 %v5947, %v6171
        %v6173 = vpop.f32.mrb[0].mxu0
        %6174 = vmatprep.mubr.f32.mxu0 0.0
        %6175 = vmatmul.mubr.f32.gmra.mrb[0].mxu0 %v5770
        %v6176 = vpop.f32.mrb[0].mxu0
        %v6177 = vadd.f32 %v5952, %v6176
        %v6178 = vpop.f32.mrb[0].mxu0
        %6179 = vmatprep.mubr.f32.mxu0 0.0
        %6180 = vmatmul.mubr.f32.gmra.mrb[0].mxu0 %v5773
        %v6181 = vpop.f32.mrb[0].mxu0
        %v6182 = vadd.f32 %v5957, %v6181
        %v6183 = vpop.f32.mrb[0].mxu0
        %6184 = vmatprep.mubr.f32.mxu0 0.0
        %6185 = vmatmul.mubr.f32.gmra.mrb[0].mxu0 %v5776
        %v6186 = vpop.f32.mrb[0].mxu0
        %v6187 = vadd.f32 %v5962, %v6186
        %v6188 = vpop.f32.mrb[0].mxu0
        %6189 = vmatprep.mubr.f32.mxu0 0.0
        %6190 = vmatmul.mubr.f32.gmra.mrb[0].mxu0 %v5779
        %v6191 = vpop.f32.mrb[0].mxu0
        %v6192 = vadd.f32 %v5967, %v6191
        %v6193 = vpop.f32.mrb[0].mxu0
        %6194 = vmatprep.mubr.f32.mxu0 0.0
        %6195 = vmatmul.mubr.f32.gmra.mrb[0].mxu0 %v5782
        %v6196 = vpop.f32.mrb[0].mxu0
        %v6197 = vadd.f32 %v5972, %v6196
        %v6198 = vpop.f32.mrb[0].mxu0
        %6199 = vmatprep.mubr.f32.mxu0 0.0
        %6200 = vmatmul.mubr.f32.gmra.mrb[0].mxu0 %v5785
        %v6201 = vpop.f32.mrb[0].mxu0
        %v6202 = vadd.f32 %v5977, %v6201
        %v6203 = vpop.f32.mrb[0].mxu0
        %6204 = vmatprep.mubr.f32.mxu0 0.0
        %6205 = vmatmul.mubr.f32.gmra.mrb[0].mxu0 %v5788
        %v6206 = vpop.f32.mrb[0].mxu0
        %v6207 = vadd.f32 %v5982, %v6206
        %v6208 = vpop.f32.mrb[0].mxu0
        %6209 = vmatprep.mubr.f32.mxu0 0.0
        %6210 = vmatmul.mubr.f32.gmra.mrb[0].mxu0 %v5791
        %v6211 = vpop.f32.mrb[0].mxu0
        %v6212 = vadd.f32 %v5987, %v6211
        %v6213 = vpop.f32.mrb[0].mxu0
        %6214 = vmatprep.mubr.f32.mxu0 0.0
        %6215 = vmatmul.mubr.f32.gmra.mrb[0].mxu0 %v5794
        %v6216 = vpop.f32.mrb[0].mxu0
        %v6217 = vadd.f32 %v5992, %v6216
        %v6218 = vpop.f32.mrb[0].mxu0
        %6219 = vmatprep.mubr.f32.mxu0 0.0
        %6220 = vmatmul.mubr.f32.gmra.mrb[0].mxu0 %v5797
        %v6221 = vpop.f32.mrb[0].mxu0
        %v6222 = vadd.f32 %v5997, %v6221
        %v6223 = vpop.f32.mrb[0].mxu0
        %6224 = vmatprep.mubr.f32.mxu0 0.0
        %6225 = vmatmul.mubr.f32.gmra.mrb[0].mxu0 %v5800
        %v6226 = vpop.f32.mrb[0].mxu0
        %v6227 = vadd.f32 %v6002, %v6226
        %v6228 = vpop.f32.mrb[0].mxu0
        %6229 = vmatprep.mubr.f32.mxu0 0.0
        %6230 = vmatmul.mubr.f32.gmra.mrb[0].mxu0 %v5803
        %v6231 = vpop.f32.mrb[0].mxu0
        %v6232 = vadd.f32 %v6007, %v6231
        %v6233 = vpop.f32.mrb[0].mxu0
        %6234 = vmatprep.mubr.f32.mxu0 0.0
        %6235 = vmatmul.mubr.f32.gmra.mrb[0].mxu0 %v5806
        %v6236 = vpop.f32.mrb[0].mxu0
        %v6237 = vadd.f32 %v6012, %v6236
        %v6238 = vpop.f32.mrb[0].mxu0
        %6239 = vmatprep.mubr.f32.mxu0 0.0
        %6240 = vmatmul.mubr.f32.gmra.mrb[0].mxu0 %v5809
        %v6241 = vpop.f32.mrb[0].mxu0
        %v6242 = vadd.f32 %v6017, %v6241
        %v6243 = vpop.f32.mrb[0].mxu0
        %6244 = vmatprep.mubr.f32.mxu0 0.0
        %6245 = vmatmul.mubr.f32.gmra.mrb[0].mxu0 %v5812
        %v6246 = vpop.f32.mrb[0].mxu0
        %v6247 = vadd.f32 %v6022, %v6246
        %v6248 = vpop.f32.mrb[0].mxu0
        %6249 = vmatprep.mubr.f32.mxu0 0.0
        %6250 = vmatmul.mubr.f32.gmra.mrb[0].mxu0 %v5815
        %v6251 = vpop.f32.mrb[0].mxu0
        %v6252 = vadd.f32 %v6027, %v6251
        %v6253 = vpop.f32.mrb[0].mxu0
        %6254 = vmatprep.mubr.f32.mxu0 0.0
        %6255 = vmatmul.mubr.f32.gmra.mrb[0].mxu0 %v5818
        %v6256 = vpop.f32.mrb[0].mxu0
        %v6257 = vadd.f32 %v6032, %v6256
        %v6258 = vpop.f32.mrb[0].mxu0
        %6259 = vmatprep.mubr.f32.mxu0 0.0
        %6260 = vmatmul.mubr.f32.gmra.mrb[0].mxu0 %v5821
        %v6261 = vpop.f32.mrb[0].mxu0
        %v6262 = vadd.f32 %v6037, %v6261
        %v6263 = vpop.f32.mrb[0].mxu0
        %6264 = vmatprep.mubr.f32.mxu0 0.0
        %6265 = vmatmul.mubr.f32.gmra.mrb[0].mxu0 %v5824
        %v6266 = vpop.f32.mrb[0].mxu0
        %v6267 = vadd.f32 %v6042, %v6266
        %v6268 = vpop.f32.mrb[0].mxu0
        %6269 = vmatprep.mubr.f32.mxu0 0.0
        %6270 = vmatmul.mubr.f32.gmra.mrb[0].mxu0 %v5827
        %v6271 = vpop.f32.mrb[0].mxu0
        %v6272 = vadd.f32 %v6047, %v6271
        %v6273 = vpop.f32.mrb[0].mxu0
        %6274 = vmatprep.mubr.f32.mxu0 0.0
        %6275 = vmatmul.mubr.f32.gmra.mrb[0].mxu0 %v5830
        %v6276 = vpop.f32.mrb[0].mxu0
        %v6277 = vadd.f32 %v6052, %v6276
        %v6278 = vpop.f32.mrb[0].mxu0
        %6279 = vmatprep.mubr.f32.mxu0 0.0
        %6280 = vmatmul.mubr.f32.gmra.mrb[0].mxu0 %v5833
        %v6281 = vpop.f32.mrb[0].mxu0
        %v6282 = vadd.f32 %v6057, %v6281
        %v6283 = vpop.f32.mrb[0].mxu0
        %6284 = vdwg.mxu0
        %v6285 = vmax.f32 %v6127, 0.0
        %v6286 = vmax.f32 %v6132, 0.0
        %v6287 = vmax.f32 %v6137, 0.0
        %v6288 = vmax.f32 %v6142, 0.0
        %v6289 = vmax.f32 %v6147, 0.0
        %v6290 = vmax.f32 %v6152, 0.0
        %v6291 = vmax.f32 %v6157, 0.0
        %v6292 = vmax.f32 %v6162, 0.0
        %v6293 = vmax.f32 %v6167, 0.0
        %v6294 = vmax.f32 %v6172, 0.0
        %v6295 = vmax.f32 %v6177, 0.0
        %v6296 = vmax.f32 %v6182, 0.0
        %v6297 = vmax.f32 %v6187, 0.0
        %v6298 = vmax.f32 %v6192, 0.0
        %v6299 = vmax.f32 %v6197, 0.0
        %v6300 = vmax.f32 %v6202, 0.0
        %v6301 = vmax.f32 %v6207, 0.0
        %v6302 = vmax.f32 %v6212, 0.0
        %v6303 = vmax.f32 %v6217, 0.0
        %v6304 = vmax.f32 %v6222, 0.0
        %v6305 = vmax.f32 %v6227, 0.0
        %v6306 = vmax.f32 %v6232, 0.0
        %v6307 = vmax.f32 %v6237, 0.0
        %v6308 = vmax.f32 %v6242, 0.0
        %v6309 = vmax.f32 %v6247, 0.0
        %v6310 = vmax.f32 %v6252, 0.0
        %v6311 = vmax.f32 %v6257, 0.0
        %v6312 = vmax.f32 %v6262, 0.0
        %v6313 = vmax.f32 %v6267, 0.0
        %v6314 = vmax.f32 %v6272, 0.0
        %v6315 = vmax.f32 %v6277, 0.0
        %v6316 = vmax.f32 %v6282, 0.0
        %v6317 = vrot.slane %v6285, 7
        %v6318 = vrot.slane %v6286, 7
        %v6319 = vrot.slane %v6287, 7
        %v6320 = vrot.slane %v6288, 7
        %v6321 = vrot.slane %v6289, 7
        %v6322 = vrot.slane %v6290, 7
        %v6323 = vrot.slane %v6291, 7
        %v6324 = vrot.slane %v6292, 7
        %v6325 = vrot.slane %v6293, 7
        %v6326 = vrot.slane %v6294, 7
        %v6327 = vrot.slane %v6295, 7
        %v6328 = vrot.slane %v6296, 7
        %v6329 = vrot.slane %v6297, 7
        %v6330 = vrot.slane %v6298, 7
        %v6331 = vrot.slane %v6299, 7
        %v6332 = vrot.slane %v6300, 7
        %v6333 = vrot.slane %v6301, 7
        %v6334 = vrot.slane %v6302, 7
        %v6335 = vrot.slane %v6303, 7
        %v6336 = vrot.slane %v6304, 7
        %v6337 = vrot.slane %v6305, 7
        %v6338 = vrot.slane %v6306, 7
        %v6339 = vrot.slane %v6307, 7
        %v6340 = vrot.slane %v6308, 7
        %v6341 = vrot.slane %v6309, 7
        %v6342 = vrot.slane %v6310, 7
        %v6343 = vrot.slane %v6311, 7
        %v6344 = vrot.slane %v6312, 7
        %v6345 = vrot.slane %v6313, 7
        %v6346 = vrot.slane %v6314, 7
        %v6347 = vsel %vm596, %v6345, %v6346
        %v6348 = vsel %vm596, %v6344, %v6345
        %v6349 = vsel %vm596, %v6343, %v6344
        %v6350 = vsel %vm596, %v6342, %v6343
        %v6351 = vsel %vm596, %v6341, %v6342
        %v6352 = vsel %vm596, %v6340, %v6341
        %v6353 = vsel %vm596, %v6339, %v6340
        %v6354 = vsel %vm596, %v6338, %v6339
        %v6355 = vsel %vm596, %v6337, %v6338
        %v6356 = vsel %vm596, %v6336, %v6337
        %v6357 = vsel %vm596, %v6335, %v6336
        %v6358 = vsel %vm596, %v6334, %v6335
        %v6359 = vsel %vm596, %v6333, %v6334
        %v6360 = vsel %vm596, %v6332, %v6333
        %v6361 = vsel %vm596, %v6331, %v6332
        %v6362 = vsel %vm596, %v6330, %v6331
        %v6363 = vsel %vm596, %v6329, %v6330
        %v6364 = vsel %vm596, %v6328, %v6329
        %v6365 = vsel %vm596, %v6327, %v6328
        %v6366 = vsel %vm596, %v6326, %v6327
        %v6367 = vsel %vm596, %v6325, %v6326
        %v6368 = vsel %vm596, %v6324, %v6325
        %v6369 = vsel %vm596, %v6323, %v6324
        %v6370 = vsel %vm596, %v6322, %v6323
        %v6371 = vsel %vm596, %v6321, %v6322
        %v6372 = vsel %vm596, %v6320, %v6321
        %v6373 = vsel %vm596, %v6319, %v6320
        %v6374 = vsel %vm596, %v6318, %v6319
        %v6375 = vsel %vm596, %v6317, %v6318
        %v6376 = vsel %vm596, 0.0, %v6317
        %v6377 = vmul.f32 0.0, %v632
        %v6378 = vmul.f32 0.0, %v637
        %v6379 = vmul.f32 %v6376, %v642
        %v6380 = vmul.f32 %v6375, %v647
        %v6381 = vmul.f32 %v6374, %v652
        %v6382 = vmul.f32 %v6373, %v657
        %v6383 = vmul.f32 %v6372, %v662
        %v6384 = vmul.f32 %v6371, %v667
        %v6385 = vmul.f32 %v6370, %v672
        %v6386 = vmul.f32 %v6369, %v677
        %v6387 = vmul.f32 %v6368, %v682
        %v6388 = vmul.f32 %v6367, %v687
        %v6389 = vmul.f32 %v6366, %v692
        %v6390 = vmul.f32 %v6365, %v697
        %v6391 = vmul.f32 %v6364, %v702
        %v6392 = vmul.f32 %v6363, %v707
        %v6393 = vmul.f32 %v6362, %v712
        %v6394 = vmul.f32 %v6361, %v717
        %v6395 = vmul.f32 %v6360, %v722
        %v6396 = vmul.f32 %v6359, %v727
        %v6397 = vmul.f32 %v6358, %v732
        %v6398 = vmul.f32 %v6357, %v737
        %v6399 = vmul.f32 %v6356, %v742
        %v6400 = vmul.f32 %v6355, %v747
        %v6401 = vmul.f32 %v6354, %v752
        %v6402 = vmul.f32 %v6353, %v757
        %v6403 = vmul.f32 %v6352, %v762
        %v6404 = vmul.f32 %v6351, %v767
        %v6405 = vmul.f32 %v6350, %v772
        %v6406 = vmul.f32 %v6349, %v777
        %v6407 = vmul.f32 %v6348, %v782
        %v6408 = vmul.f32 %v6347, %v787
        %v6409 = vrot.slane %v6285, 1
        %v6410 = vrot.slane %v6286, 1
        %v6411 = vrot.slane %v6287, 1
        %v6412 = vrot.slane %v6288, 1
        %v6413 = vrot.slane %v6289, 1
        %v6414 = vrot.slane %v6290, 1
        %v6415 = vrot.slane %v6291, 1
        %v6416 = vrot.slane %v6292, 1
        %v6417 = vrot.slane %v6293, 1
        %v6418 = vrot.slane %v6294, 1
        %v6419 = vrot.slane %v6295, 1
        %v6420 = vrot.slane %v6296, 1
        %v6421 = vrot.slane %v6297, 1
        %v6422 = vrot.slane %v6298, 1
        %v6423 = vrot.slane %v6299, 1
        %v6424 = vrot.slane %v6300, 1
        %v6425 = vrot.slane %v6301, 1
        %v6426 = vrot.slane %v6302, 1
        %v6427 = vrot.slane %v6303, 1
        %v6428 = vrot.slane %v6304, 1
        %v6429 = vrot.slane %v6305, 1
        %v6430 = vrot.slane %v6306, 1
        %v6431 = vrot.slane %v6307, 1
        %v6432 = vrot.slane %v6308, 1
        %v6433 = vrot.slane %v6309, 1
        %v6434 = vrot.slane %v6310, 1
        %v6435 = vrot.slane %v6311, 1
        %v6436 = vrot.slane %v6312, 1
        %v6437 = vrot.slane %v6313, 1
        %v6438 = vrot.slane %v6314, 1
        %v6439 = vrot.slane %v6315, 1
        %v6440 = vsel %vm854, %v6438, %v6439
        %v6441 = vsel %vm854, %v6437, %v6438
        %v6442 = vsel %vm854, %v6436, %v6437
        %v6443 = vsel %vm854, %v6435, %v6436
        %v6444 = vsel %vm854, %v6434, %v6435
        %v6445 = vsel %vm854, %v6433, %v6434
        %v6446 = vsel %vm854, %v6432, %v6433
        %v6447 = vsel %vm854, %v6431, %v6432
        %v6448 = vsel %vm854, %v6430, %v6431
        %v6449 = vsel %vm854, %v6429, %v6430
        %v6450 = vsel %vm854, %v6428, %v6429
        %v6451 = vsel %vm854, %v6427, %v6428
        %v6452 = vsel %vm854, %v6426, %v6427
        %v6453 = vsel %vm854, %v6425, %v6426
        %v6454 = vsel %vm854, %v6424, %v6425
        %v6455 = vsel %vm854, %v6423, %v6424
        %v6456 = vsel %vm854, %v6422, %v6423
        %v6457 = vsel %vm854, %v6421, %v6422
        %v6458 = vsel %vm854, %v6420, %v6421
        %v6459 = vsel %vm854, %v6419, %v6420
        %v6460 = vsel %vm854, %v6418, %v6419
        %v6461 = vsel %vm854, %v6417, %v6418
        %v6462 = vsel %vm854, %v6416, %v6417
        %v6463 = vsel %vm854, %v6415, %v6416
        %v6464 = vsel %vm854, %v6414, %v6415
        %v6465 = vsel %vm854, %v6413, %v6414
        %v6466 = vsel %vm854, %v6412, %v6413
        %v6467 = vsel %vm854, %v6411, %v6412
        %v6468 = vsel %vm854, %v6410, %v6411
        %v6469 = vsel %vm854, %v6409, %v6410
        %v6470 = vsel %vm854, 0.0, %v6409
        %v6471 = vmul.f32 0.0, %v890
        %v6472 = vmul.f32 %v6470, %v895
        %v6473 = vmul.f32 %v6469, %v900
        %v6474 = vmul.f32 %v6468, %v905
        %v6475 = vmul.f32 %v6467, %v910
        %v6476 = vmul.f32 %v6466, %v915
        %v6477 = vmul.f32 %v6465, %v920
        %v6478 = vmul.f32 %v6464, %v925
        %v6479 = vmul.f32 %v6463, %v930
        %v6480 = vmul.f32 %v6462, %v935
        %v6481 = vmul.f32 %v6461, %v940
        %v6482 = vmul.f32 %v6460, %v945
        %v6483 = vmul.f32 %v6459, %v950
        %v6484 = vmul.f32 %v6458, %v955
        %v6485 = vmul.f32 %v6457, %v960
        %v6486 = vmul.f32 %v6456, %v965
        %v6487 = vmul.f32 %v6455, %v970
        %v6488 = vmul.f32 %v6454, %v975
        %v6489 = vmul.f32 %v6453, %v980
        %v6490 = vmul.f32 %v6452, %v985
        %v6491 = vmul.f32 %v6451, %v990
        %v6492 = vmul.f32 %v6450, %v995
        %v6493 = vmul.f32 %v6449, %v1000
        %v6494 = vmul.f32 %v6448, %v1005
        %v6495 = vmul.f32 %v6447, %v1010
        %v6496 = vmul.f32 %v6446, %v1015
        %v6497 = vmul.f32 %v6445, %v1020
        %v6498 = vmul.f32 %v6444, %v1025
        %v6499 = vmul.f32 %v6443, %v1030
        %v6500 = vmul.f32 %v6442, %v1035
        %v6501 = vmul.f32 %v6441, %v1040
        %v6502 = vmul.f32 %v6440, %v1045
        %v6503 = vrot.slane %v6315, 7
        %v6504 = vrot.slane %v6316, 7
        %v6505 = vsel %vm596, %v6503, %v6504
        %v6506 = vsel %vm596, %v6346, %v6503
        %v6507 = vmul.f32 %v6376, %v632
        %v6508 = vmul.f32 %v6375, %v637
        %v6509 = vmul.f32 %v6374, %v642
        %v6510 = vmul.f32 %v6373, %v647
        %v6511 = vmul.f32 %v6372, %v652
        %v6512 = vmul.f32 %v6371, %v657
        %v6513 = vmul.f32 %v6370, %v662
        %v6514 = vmul.f32 %v6369, %v667
        %v6515 = vmul.f32 %v6368, %v672
        %v6516 = vmul.f32 %v6367, %v677
        %v6517 = vmul.f32 %v6366, %v682
        %v6518 = vmul.f32 %v6365, %v687
        %v6519 = vmul.f32 %v6364, %v692
        %v6520 = vmul.f32 %v6363, %v697
        %v6521 = vmul.f32 %v6362, %v702
        %v6522 = vmul.f32 %v6361, %v707
        %v6523 = vmul.f32 %v6360, %v712
        %v6524 = vmul.f32 %v6359, %v717
        %v6525 = vmul.f32 %v6358, %v722
        %v6526 = vmul.f32 %v6357, %v727
        %v6527 = vmul.f32 %v6356, %v732
        %v6528 = vmul.f32 %v6355, %v737
        %v6529 = vmul.f32 %v6354, %v742
        %v6530 = vmul.f32 %v6353, %v747
        %v6531 = vmul.f32 %v6352, %v752
        %v6532 = vmul.f32 %v6351, %v757
        %v6533 = vmul.f32 %v6350, %v762
        %v6534 = vmul.f32 %v6349, %v767
        %v6535 = vmul.f32 %v6348, %v772
        %v6536 = vmul.f32 %v6347, %v777
        %v6537 = vmul.f32 %v6506, %v782
        %v6538 = vmul.f32 %v6505, %v787
        %v6539 = vrot.slane %v6316, 1
        %v6540 = vsel %vm854, %v6539, 0.0
        %v6541 = vsel %vm854, %v6439, %v6539
        %v6542 = vmul.f32 %v6469, %v890
        %v6543 = vmul.f32 %v6468, %v895
        %v6544 = vmul.f32 %v6467, %v900
        %v6545 = vmul.f32 %v6466, %v905
        %v6546 = vmul.f32 %v6465, %v910
        %v6547 = vmul.f32 %v6464, %v915
        %v6548 = vmul.f32 %v6463, %v920
        %v6549 = vmul.f32 %v6462, %v925
        %v6550 = vmul.f32 %v6461, %v930
        %v6551 = vmul.f32 %v6460, %v935
        %v6552 = vmul.f32 %v6459, %v940
        %v6553 = vmul.f32 %v6458, %v945
        %v6554 = vmul.f32 %v6457, %v950
        %v6555 = vmul.f32 %v6456, %v955
        %v6556 = vmul.f32 %v6455, %v960
        %v6557 = vmul.f32 %v6454, %v965
        %v6558 = vmul.f32 %v6453, %v970
        %v6559 = vmul.f32 %v6452, %v975
        %v6560 = vmul.f32 %v6451, %v980
        %v6561 = vmul.f32 %v6450, %v985
        %v6562 = vmul.f32 %v6449, %v990
        %v6563 = vmul.f32 %v6448, %v995
        %v6564 = vmul.f32 %v6447, %v1000
        %v6565 = vmul.f32 %v6446, %v1005
        %v6566 = vmul.f32 %v6445, %v1010
        %v6567 = vmul.f32 %v6444, %v1015
        %v6568 = vmul.f32 %v6443, %v1020
        %v6569 = vmul.f32 %v6442, %v1025
        %v6570 = vmul.f32 %v6441, %v1030
        %v6571 = vmul.f32 %v6440, %v1035
        %v6572 = vmul.f32 %v6541, %v1040
        %v6573 = vmul.f32 %v6540, %v1045
        %v6574 = vsel %vm596, %v6504, 0.0
        %v6575 = vmul.f32 %v6374, %v632
        %v6576 = vmul.f32 %v6373, %v637
        %v6577 = vmul.f32 %v6372, %v642
        %v6578 = vmul.f32 %v6371, %v647
        %v6579 = vmul.f32 %v6370, %v652
        %v6580 = vmul.f32 %v6369, %v657
        %v6581 = vmul.f32 %v6368, %v662
        %v6582 = vmul.f32 %v6367, %v667
        %v6583 = vmul.f32 %v6366, %v672
        %v6584 = vmul.f32 %v6365, %v677
        %v6585 = vmul.f32 %v6364, %v682
        %v6586 = vmul.f32 %v6363, %v687
        %v6587 = vmul.f32 %v6362, %v692
        %v6588 = vmul.f32 %v6361, %v697
        %v6589 = vmul.f32 %v6360, %v702
        %v6590 = vmul.f32 %v6359, %v707
        %v6591 = vmul.f32 %v6358, %v712
        %v6592 = vmul.f32 %v6357, %v717
        %v6593 = vmul.f32 %v6356, %v722
        %v6594 = vmul.f32 %v6355, %v727
        %v6595 = vmul.f32 %v6354, %v732
        %v6596 = vmul.f32 %v6353, %v737
        %v6597 = vmul.f32 %v6352, %v742
        %v6598 = vmul.f32 %v6351, %v747
        %v6599 = vmul.f32 %v6350, %v752
        %v6600 = vmul.f32 %v6349, %v757
        %v6601 = vmul.f32 %v6348, %v762
        %v6602 = vmul.f32 %v6347, %v767
        %v6603 = vmul.f32 %v6506, %v772
        %v6604 = vmul.f32 %v6505, %v777
        %v6605 = vmul.f32 %v6574, %v782
        %v6606 = vmul.f32 0.0, %v787
        %v6607 = vmul.f32 %v6467, %v890
        %v6608 = vmul.f32 %v6466, %v895
        %v6609 = vmul.f32 %v6465, %v900
        %v6610 = vmul.f32 %v6464, %v905
        %v6611 = vmul.f32 %v6463, %v910
        %v6612 = vmul.f32 %v6462, %v915
        %v6613 = vmul.f32 %v6461, %v920
        %v6614 = vmul.f32 %v6460, %v925
        %v6615 = vmul.f32 %v6459, %v930
        %v6616 = vmul.f32 %v6458, %v935
        %v6617 = vmul.f32 %v6457, %v940
        %v6618 = vmul.f32 %v6456, %v945
        %v6619 = vmul.f32 %v6455, %v950
        %v6620 = vmul.f32 %v6454, %v955
        %v6621 = vmul.f32 %v6453, %v960
        %v6622 = vmul.f32 %v6452, %v965
        %v6623 = vmul.f32 %v6451, %v970
        %v6624 = vmul.f32 %v6450, %v975
        %v6625 = vmul.f32 %v6449, %v980
        %v6626 = vmul.f32 %v6448, %v985
        %v6627 = vmul.f32 %v6447, %v990
        %v6628 = vmul.f32 %v6446, %v995
        %v6629 = vmul.f32 %v6445, %v1000
        %v6630 = vmul.f32 %v6444, %v1005
        %v6631 = vmul.f32 %v6443, %v1010
        %v6632 = vmul.f32 %v6442, %v1015
        %v6633 = vmul.f32 %v6441, %v1020
        %v6634 = vmul.f32 %v6440, %v1025
        %v6635 = vmul.f32 %v6541, %v1030
        %v6636 = vmul.f32 %v6540, %v1035
        %v6637 = vmul.f32 0.0, %v1040
        %v6638 = vmul.f32 0.0, %v1045
        %6670 = vrot.lane.b32.xlu0 0.0, 32
        %v6671 = vpop.permute.xlu0 %6670
        %6672 = vrot.lane.b32.xlu0 %v6285, 32
        %v6673 = vpop.permute.xlu0 %6672
        %6674 = vrot.lane.b32.xlu0 %v6286, 32
        %v6675 = vpop.permute.xlu0 %6674
        %6676 = vrot.lane.b32.xlu0 %v6287, 32
        %v6677 = vpop.permute.xlu0 %6676
        %6678 = vrot.lane.b32.xlu0 %v6288, 32
        %v6679 = vpop.permute.xlu0 %6678
        %6680 = vrot.lane.b32.xlu0 %v6289, 32
        %v6681 = vpop.permute.xlu0 %6680
        %6682 = vrot.lane.b32.xlu0 %v6290, 32
        %v6683 = vpop.permute.xlu0 %6682
        %6684 = vrot.lane.b32.xlu0 %v6291, 32
        %v6685 = vpop.permute.xlu0 %6684
        %6686 = vrot.lane.b32.xlu0 %v6292, 32
        %v6687 = vpop.permute.xlu0 %6686
        %6688 = vrot.lane.b32.xlu0 %v6293, 32
        %v6689 = vpop.permute.xlu0 %6688
        %6690 = vrot.lane.b32.xlu0 %v6294, 32
        %v6691 = vpop.permute.xlu0 %6690
        %6692 = vrot.lane.b32.xlu0 %v6295, 32
        %v6693 = vpop.permute.xlu0 %6692
        %6694 = vrot.lane.b32.xlu0 %v6296, 32
        %v6695 = vpop.permute.xlu0 %6694
        %6696 = vrot.lane.b32.xlu0 %v6297, 32
        %v6697 = vpop.permute.xlu0 %6696
        %6698 = vrot.lane.b32.xlu0 %v6298, 32
        %v6699 = vpop.permute.xlu0 %6698
        %6700 = vrot.lane.b32.xlu0 %v6299, 32
        %v6701 = vpop.permute.xlu0 %6700
        %6702 = vrot.lane.b32.xlu0 %v6300, 32
        %v6703 = vpop.permute.xlu0 %6702
        %6704 = vrot.lane.b32.xlu0 %v6301, 32
        %v6705 = vpop.permute.xlu0 %6704
        %6706 = vrot.lane.b32.xlu0 %v6302, 32
        %v6707 = vpop.permute.xlu0 %6706
        %6708 = vrot.lane.b32.xlu0 %v6303, 32
        %v6709 = vpop.permute.xlu0 %6708
        %6710 = vrot.lane.b32.xlu0 %v6304, 32
        %v6711 = vpop.permute.xlu0 %6710
        %6712 = vrot.lane.b32.xlu0 %v6305, 32
        %v6713 = vpop.permute.xlu0 %6712
        %6714 = vrot.lane.b32.xlu0 %v6306, 32
        %v6715 = vpop.permute.xlu0 %6714
        %6716 = vrot.lane.b32.xlu0 %v6307, 32
        %v6717 = vpop.permute.xlu0 %6716
        %6718 = vrot.lane.b32.xlu0 %v6308, 32
        %v6719 = vpop.permute.xlu0 %6718
        %6720 = vrot.lane.b32.xlu0 %v6309, 32
        %v6721 = vpop.permute.xlu0 %6720
        %6722 = vrot.lane.b32.xlu0 %v6310, 32
        %v6723 = vpop.permute.xlu0 %6722
        %6724 = vrot.lane.b32.xlu0 %v6311, 32
        %v6725 = vpop.permute.xlu0 %6724
        %6726 = vrot.lane.b32.xlu0 %v6312, 32
        %v6727 = vpop.permute.xlu0 %6726
        %6728 = vrot.lane.b32.xlu0 %v6313, 32
        %v6729 = vpop.permute.xlu0 %6728
        %6730 = vrot.lane.b32.xlu0 %v6314, 32
        %v6731 = vpop.permute.xlu0 %6730
        %6795 = vrot.lane.b32.xlu0 %v6471, 64
        %v6796 = vpop.permute.xlu0 %6795
        %6797 = vrot.lane.b32.xlu0 %v6472, 64
        %v6798 = vpop.permute.xlu0 %6797
        %6799 = vrot.lane.b32.xlu0 %v6473, 64
        %v6800 = vpop.permute.xlu0 %6799
        %6801 = vrot.lane.b32.xlu0 %v6474, 64
        %v6802 = vpop.permute.xlu0 %6801
        %6803 = vrot.lane.b32.xlu0 %v6475, 64
        %v6804 = vpop.permute.xlu0 %6803
        %6805 = vrot.lane.b32.xlu0 %v6476, 64
        %v6806 = vpop.permute.xlu0 %6805
        %6807 = vrot.lane.b32.xlu0 %v6477, 64
        %v6808 = vpop.permute.xlu0 %6807
        %6809 = vrot.lane.b32.xlu0 %v6478, 64
        %v6810 = vpop.permute.xlu0 %6809
        %6811 = vrot.lane.b32.xlu0 %v6479, 64
        %v6812 = vpop.permute.xlu0 %6811
        %6813 = vrot.lane.b32.xlu0 %v6480, 64
        %v6814 = vpop.permute.xlu0 %6813
        %6815 = vrot.lane.b32.xlu0 %v6481, 64
        %v6816 = vpop.permute.xlu0 %6815
        %6817 = vrot.lane.b32.xlu0 %v6482, 64
        %v6818 = vpop.permute.xlu0 %6817
        %6819 = vrot.lane.b32.xlu0 %v6483, 64
        %v6820 = vpop.permute.xlu0 %6819
        %6821 = vrot.lane.b32.xlu0 %v6484, 64
        %v6822 = vpop.permute.xlu0 %6821
        %6823 = vrot.lane.b32.xlu0 %v6485, 64
        %v6824 = vpop.permute.xlu0 %6823
        %6825 = vrot.lane.b32.xlu0 %v6486, 64
        %v6826 = vpop.permute.xlu0 %6825
        %6827 = vrot.lane.b32.xlu0 %v6487, 64
        %v6828 = vpop.permute.xlu0 %6827
        %6829 = vrot.lane.b32.xlu0 %v6488, 64
        %v6830 = vpop.permute.xlu0 %6829
        %6831 = vrot.lane.b32.xlu0 %v6489, 64
        %v6832 = vpop.permute.xlu0 %6831
        %6833 = vrot.lane.b32.xlu0 %v6490, 64
        %v6834 = vpop.permute.xlu0 %6833
        %6835 = vrot.lane.b32.xlu0 %v6491, 64
        %v6836 = vpop.permute.xlu0 %6835
        %6837 = vrot.lane.b32.xlu0 %v6492, 64
        %v6838 = vpop.permute.xlu0 %6837
        %6839 = vrot.lane.b32.xlu0 %v6493, 64
        %v6840 = vpop.permute.xlu0 %6839
        %6841 = vrot.lane.b32.xlu0 %v6494, 64
        %v6842 = vpop.permute.xlu0 %6841
        %6843 = vrot.lane.b32.xlu0 %v6495, 64
        %v6844 = vpop.permute.xlu0 %6843
        %6845 = vrot.lane.b32.xlu0 %v6496, 64
        %v6846 = vpop.permute.xlu0 %6845
        %6847 = vrot.lane.b32.xlu0 %v6497, 64
        %v6848 = vpop.permute.xlu0 %6847
        %6849 = vrot.lane.b32.xlu0 %v6498, 64
        %v6850 = vpop.permute.xlu0 %6849
        %6851 = vrot.lane.b32.xlu0 %v6499, 64
        %v6852 = vpop.permute.xlu0 %6851
        %6853 = vrot.lane.b32.xlu0 %v6500, 64
        %v6854 = vpop.permute.xlu0 %6853
        %6855 = vrot.lane.b32.xlu0 %v6501, 64
        %v6856 = vpop.permute.xlu0 %6855
        %6857 = vrot.lane.b32.xlu0 %v6502, 64
        %v6858 = vpop.permute.xlu0 %6857
        %6923 = vrot.lane.b32.xlu0 %v6507, 96
        %v6924 = vpop.permute.xlu0 %6923
        %6925 = vrot.lane.b32.xlu0 %v6508, 96
        %v6926 = vpop.permute.xlu0 %6925
        %6927 = vrot.lane.b32.xlu0 %v6509, 96
        %v6928 = vpop.permute.xlu0 %6927
        %6929 = vrot.lane.b32.xlu0 %v6510, 96
        %v6930 = vpop.permute.xlu0 %6929
        %6931 = vrot.lane.b32.xlu0 %v6511, 96
        %v6932 = vpop.permute.xlu0 %6931
        %6933 = vrot.lane.b32.xlu0 %v6512, 96
        %v6934 = vpop.permute.xlu0 %6933
        %6935 = vrot.lane.b32.xlu0 %v6513, 96
        %v6936 = vpop.permute.xlu0 %6935
        %6937 = vrot.lane.b32.xlu0 %v6514, 96
        %v6938 = vpop.permute.xlu0 %6937
        %6939 = vrot.lane.b32.xlu0 %v6515, 96
        %v6940 = vpop.permute.xlu0 %6939
        %6941 = vrot.lane.b32.xlu0 %v6516, 96
        %v6942 = vpop.permute.xlu0 %6941
        %6943 = vrot.lane.b32.xlu0 %v6517, 96
        %v6944 = vpop.permute.xlu0 %6943
        %6945 = vrot.lane.b32.xlu0 %v6518, 96
        %v6946 = vpop.permute.xlu0 %6945
        %6947 = vrot.lane.b32.xlu0 %v6519, 96
        %v6948 = vpop.permute.xlu0 %6947
        %6949 = vrot.lane.b32.xlu0 %v6520, 96
        %v6950 = vpop.permute.xlu0 %6949
        %6951 = vrot.lane.b32.xlu0 %v6521, 96
        %v6952 = vpop.permute.xlu0 %6951
        %6953 = vrot.lane.b32.xlu0 %v6522, 96
        %v6954 = vpop.permute.xlu0 %6953
        %6955 = vrot.lane.b32.xlu0 %v6523, 96
        %v6956 = vpop.permute.xlu0 %6955
        %6957 = vrot.lane.b32.xlu0 %v6524, 96
        %v6958 = vpop.permute.xlu0 %6957
        %6959 = vrot.lane.b32.xlu0 %v6525, 96
        %v6960 = vpop.permute.xlu0 %6959
        %6961 = vrot.lane.b32.xlu0 %v6526, 96
        %v6962 = vpop.permute.xlu0 %6961
        %6963 = vrot.lane.b32.xlu0 %v6527, 96
        %v6964 = vpop.permute.xlu0 %6963
        %6965 = vrot.lane.b32.xlu0 %v6528, 96
        %v6966 = vpop.permute.xlu0 %6965
        %6967 = vrot.lane.b32.xlu0 %v6529, 96
        %v6968 = vpop.permute.xlu0 %6967
        %6969 = vrot.lane.b32.xlu0 %v6530, 96
        %v6970 = vpop.permute.xlu0 %6969
        %6971 = vrot.lane.b32.xlu0 %v6531, 96
        %v6972 = vpop.permute.xlu0 %6971
        %6973 = vrot.lane.b32.xlu0 %v6532, 96
        %v6974 = vpop.permute.xlu0 %6973
        %6975 = vrot.lane.b32.xlu0 %v6533, 96
        %v6976 = vpop.permute.xlu0 %6975
        %6977 = vrot.lane.b32.xlu0 %v6534, 96
        %v6978 = vpop.permute.xlu0 %6977
        %6979 = vrot.lane.b32.xlu0 %v6535, 96
        %v6980 = vpop.permute.xlu0 %6979
        %6981 = vrot.lane.b32.xlu0 %v6536, 96
        %v6982 = vpop.permute.xlu0 %6981
        %6983 = vrot.lane.b32.xlu0 %v6537, 96
        %v6984 = vpop.permute.xlu0 %6983
        %6985 = vrot.lane.b32.xlu0 %v6538, 96
        %v6986 = vpop.permute.xlu0 %6985
        %7051 = vrot.lane.b32.xlu0 %v6542, 32
        %v7052 = vpop.permute.xlu0 %7051
        %7053 = vrot.lane.b32.xlu0 %v6543, 32
        %v7054 = vpop.permute.xlu0 %7053
        %7055 = vrot.lane.b32.xlu0 %v6544, 32
        %v7056 = vpop.permute.xlu0 %7055
        %7057 = vrot.lane.b32.xlu0 %v6545, 32
        %v7058 = vpop.permute.xlu0 %7057
        %7059 = vrot.lane.b32.xlu0 %v6546, 32
        %v7060 = vpop.permute.xlu0 %7059
        %7061 = vrot.lane.b32.xlu0 %v6547, 32
        %v7062 = vpop.permute.xlu0 %7061
        %7063 = vrot.lane.b32.xlu0 %v6548, 32
        %v7064 = vpop.permute.xlu0 %7063
        %7065 = vrot.lane.b32.xlu0 %v6549, 32
        %v7066 = vpop.permute.xlu0 %7065
        %7067 = vrot.lane.b32.xlu0 %v6550, 32
        %v7068 = vpop.permute.xlu0 %7067
        %7069 = vrot.lane.b32.xlu0 %v6551, 32
        %v7070 = vpop.permute.xlu0 %7069
        %7071 = vrot.lane.b32.xlu0 %v6552, 32
        %v7072 = vpop.permute.xlu0 %7071
        %7073 = vrot.lane.b32.xlu0 %v6553, 32
        %v7074 = vpop.permute.xlu0 %7073
        %7075 = vrot.lane.b32.xlu0 %v6554, 32
        %v7076 = vpop.permute.xlu0 %7075
        %7077 = vrot.lane.b32.xlu0 %v6555, 32
        %v7078 = vpop.permute.xlu0 %7077
        %7079 = vrot.lane.b32.xlu0 %v6556, 32
        %v7080 = vpop.permute.xlu0 %7079
        %7081 = vrot.lane.b32.xlu0 %v6557, 32
        %v7082 = vpop.permute.xlu0 %7081
        %7083 = vrot.lane.b32.xlu0 %v6558, 32
        %v7084 = vpop.permute.xlu0 %7083
        %7085 = vrot.lane.b32.xlu0 %v6559, 32
        %v7086 = vpop.permute.xlu0 %7085
        %7087 = vrot.lane.b32.xlu0 %v6560, 32
        %v7088 = vpop.permute.xlu0 %7087
        %7089 = vrot.lane.b32.xlu0 %v6561, 32
        %v7090 = vpop.permute.xlu0 %7089
        %7091 = vrot.lane.b32.xlu0 %v6562, 32
        %v7092 = vpop.permute.xlu0 %7091
        %7093 = vrot.lane.b32.xlu0 %v6563, 32
        %v7094 = vpop.permute.xlu0 %7093
        %7095 = vrot.lane.b32.xlu0 %v6564, 32
        %v7096 = vpop.permute.xlu0 %7095
        %7097 = vrot.lane.b32.xlu0 %v6565, 32
        %v7098 = vpop.permute.xlu0 %7097
        %7099 = vrot.lane.b32.xlu0 %v6566, 32
        %v7100 = vpop.permute.xlu0 %7099
        %7101 = vrot.lane.b32.xlu0 %v6567, 32
        %v7102 = vpop.permute.xlu0 %7101
        %7103 = vrot.lane.b32.xlu0 %v6568, 32
        %v7104 = vpop.permute.xlu0 %7103
        %7105 = vrot.lane.b32.xlu0 %v6569, 32
        %v7106 = vpop.permute.xlu0 %7105
        %7107 = vrot.lane.b32.xlu0 %v6570, 32
        %v7108 = vpop.permute.xlu0 %7107
        %7109 = vrot.lane.b32.xlu0 %v6571, 32
        %v7110 = vpop.permute.xlu0 %7109
        %7111 = vrot.lane.b32.xlu0 %v6572, 32
        %v7112 = vpop.permute.xlu0 %7111
        %7113 = vrot.lane.b32.xlu0 %v6573, 32
        %v7114 = vpop.permute.xlu0 %7113
        %7179 = vrot.lane.b32.xlu0 %v6575, 64
        %v7180 = vpop.permute.xlu0 %7179
        %7181 = vrot.lane.b32.xlu0 %v6576, 64
        %v7182 = vpop.permute.xlu0 %7181
        %7183 = vrot.lane.b32.xlu0 %v6577, 64
        %v7184 = vpop.permute.xlu0 %7183
        %7185 = vrot.lane.b32.xlu0 %v6578, 64
        %v7186 = vpop.permute.xlu0 %7185
        %7187 = vrot.lane.b32.xlu0 %v6579, 64
        %v7188 = vpop.permute.xlu0 %7187
        %7189 = vrot.lane.b32.xlu0 %v6580, 64
        %v7190 = vpop.permute.xlu0 %7189
        %7191 = vrot.lane.b32.xlu0 %v6581, 64
        %v7192 = vpop.permute.xlu0 %7191
        %7193 = vrot.lane.b32.xlu0 %v6582, 64
        %v7194 = vpop.permute.xlu0 %7193
        %7195 = vrot.lane.b32.xlu0 %v6583, 64
        %v7196 = vpop.permute.xlu0 %7195
        %7197 = vrot.lane.b32.xlu0 %v6584, 64
        %v7198 = vpop.permute.xlu0 %7197
        %7199 = vrot.lane.b32.xlu0 %v6585, 64
        %v7200 = vpop.permute.xlu0 %7199
        %7201 = vrot.lane.b32.xlu0 %v6586, 64
        %v7202 = vpop.permute.xlu0 %7201
        %7203 = vrot.lane.b32.xlu0 %v6587, 64
        %v7204 = vpop.permute.xlu0 %7203
        %7205 = vrot.lane.b32.xlu0 %v6588, 64
        %v7206 = vpop.permute.xlu0 %7205
        %7207 = vrot.lane.b32.xlu0 %v6589, 64
        %v7208 = vpop.permute.xlu0 %7207
        %7209 = vrot.lane.b32.xlu0 %v6590, 64
        %v7210 = vpop.permute.xlu0 %7209
        %7211 = vrot.lane.b32.xlu0 %v6591, 64
        %v7212 = vpop.permute.xlu0 %7211
        %7213 = vrot.lane.b32.xlu0 %v6592, 64
        %v7214 = vpop.permute.xlu0 %7213
        %7215 = vrot.lane.b32.xlu0 %v6593, 64
        %v7216 = vpop.permute.xlu0 %7215
        %7217 = vrot.lane.b32.xlu0 %v6594, 64
        %v7218 = vpop.permute.xlu0 %7217
        %7219 = vrot.lane.b32.xlu0 %v6595, 64
        %v7220 = vpop.permute.xlu0 %7219
        %7221 = vrot.lane.b32.xlu0 %v6596, 64
        %v7222 = vpop.permute.xlu0 %7221
        %7223 = vrot.lane.b32.xlu0 %v6597, 64
        %v7224 = vpop.permute.xlu0 %7223
        %7225 = vrot.lane.b32.xlu0 %v6598, 64
        %v7226 = vpop.permute.xlu0 %7225
        %7227 = vrot.lane.b32.xlu0 %v6599, 64
        %v7228 = vpop.permute.xlu0 %7227
        %7229 = vrot.lane.b32.xlu0 %v6600, 64
        %v7230 = vpop.permute.xlu0 %7229
        %7231 = vrot.lane.b32.xlu0 %v6601, 64
        %v7232 = vpop.permute.xlu0 %7231
        %7233 = vrot.lane.b32.xlu0 %v6602, 64
        %v7234 = vpop.permute.xlu0 %7233
        %7235 = vrot.lane.b32.xlu0 %v6603, 64
        %v7236 = vpop.permute.xlu0 %7235
        %7237 = vrot.lane.b32.xlu0 %v6604, 64
        %v7238 = vpop.permute.xlu0 %7237
        %7239 = vrot.lane.b32.xlu0 %v6605, 64
        %v7240 = vpop.permute.xlu0 %7239
        %7241 = vrot.lane.b32.xlu0 %v6606, 64
        %v7242 = vpop.permute.xlu0 %7241
        %7277 = vrot.lane.b32.xlu0 %v6287, 96
        %v7278 = vpop.permute.xlu0 %7277
        %7279 = vrot.lane.b32.xlu0 %v6288, 96
        %v7280 = vpop.permute.xlu0 %7279
        %7281 = vrot.lane.b32.xlu0 %v6289, 96
        %v7282 = vpop.permute.xlu0 %7281
        %7283 = vrot.lane.b32.xlu0 %v6290, 96
        %v7284 = vpop.permute.xlu0 %7283
        %7285 = vrot.lane.b32.xlu0 %v6291, 96
        %v7286 = vpop.permute.xlu0 %7285
        %7287 = vrot.lane.b32.xlu0 %v6292, 96
        %v7288 = vpop.permute.xlu0 %7287
        %7289 = vrot.lane.b32.xlu0 %v6293, 96
        %v7290 = vpop.permute.xlu0 %7289
        %7291 = vrot.lane.b32.xlu0 %v6294, 96
        %v7292 = vpop.permute.xlu0 %7291
        %7293 = vrot.lane.b32.xlu0 %v6295, 96
        %v7294 = vpop.permute.xlu0 %7293
        %7295 = vrot.lane.b32.xlu0 %v6296, 96
        %v7296 = vpop.permute.xlu0 %7295
        %7297 = vrot.lane.b32.xlu0 %v6297, 96
        %v7298 = vpop.permute.xlu0 %7297
        %7299 = vrot.lane.b32.xlu0 %v6298, 96
        %v7300 = vpop.permute.xlu0 %7299
        %7301 = vrot.lane.b32.xlu0 %v6299, 96
        %v7302 = vpop.permute.xlu0 %7301
        %7303 = vrot.lane.b32.xlu0 %v6300, 96
        %v7304 = vpop.permute.xlu0 %7303
        %7305 = vrot.lane.b32.xlu0 %v6301, 96
        %v7306 = vpop.permute.xlu0 %7305
        %7307 = vrot.lane.b32.xlu0 %v6302, 96
        %v7308 = vpop.permute.xlu0 %7307
        %7309 = vrot.lane.b32.xlu0 %v6303, 96
        %v7310 = vpop.permute.xlu0 %7309
        %7311 = vrot.lane.b32.xlu0 %v6304, 96
        %v7312 = vpop.permute.xlu0 %7311
        %7313 = vrot.lane.b32.xlu0 %v6305, 96
        %v7314 = vpop.permute.xlu0 %7313
        %7315 = vrot.lane.b32.xlu0 %v6306, 96
        %v7316 = vpop.permute.xlu0 %7315
        %7317 = vrot.lane.b32.xlu0 %v6307, 96
        %v7318 = vpop.permute.xlu0 %7317
        %7319 = vrot.lane.b32.xlu0 %v6308, 96
        %v7320 = vpop.permute.xlu0 %7319
        %7321 = vrot.lane.b32.xlu0 %v6309, 96
        %v7322 = vpop.permute.xlu0 %7321
        %7323 = vrot.lane.b32.xlu0 %v6310, 96
        %v7324 = vpop.permute.xlu0 %7323
        %7325 = vrot.lane.b32.xlu0 %v6311, 96
        %v7326 = vpop.permute.xlu0 %7325
        %7327 = vrot.lane.b32.xlu0 %v6312, 96
        %v7328 = vpop.permute.xlu0 %7327
        %7329 = vrot.lane.b32.xlu0 %v6313, 96
        %v7330 = vpop.permute.xlu0 %7329
        %7331 = vrot.lane.b32.xlu0 %v6314, 96
        %v7332 = vpop.permute.xlu0 %7331
        %7333 = vrot.lane.b32.xlu0 %v6315, 96
        %v7334 = vpop.permute.xlu0 %7333
        %7335 = vrot.lane.b32.xlu0 %v6316, 96
        %v7336 = vpop.permute.xlu0 %7335
        %7337 = vrot.lane.b32.xlu0 0.0, 96
        %v7338 = vpop.permute.xlu0 %7337
        %v7370 = vsel %vm1961, %v6377, %v6671
        %v7371 = vsel %vm1961, %v6378, %v6671
        %v7372 = vsel %vm1961, %v6379, %v6673
        %v7373 = vsel %vm1961, %v6380, %v6675
        %v7374 = vsel %vm1961, %v6381, %v6677
        %v7375 = vsel %vm1961, %v6382, %v6679
        %v7376 = vsel %vm1961, %v6383, %v6681
        %v7377 = vsel %vm1961, %v6384, %v6683
        %v7378 = vsel %vm1961, %v6385, %v6685
        %v7379 = vsel %vm1961, %v6386, %v6687
        %v7380 = vsel %vm1961, %v6387, %v6689
        %v7381 = vsel %vm1961, %v6388, %v6691
        %v7382 = vsel %vm1961, %v6389, %v6693
        %v7383 = vsel %vm1961, %v6390, %v6695
        %v7384 = vsel %vm1961, %v6391, %v6697
        %v7385 = vsel %vm1961, %v6392, %v6699
        %v7386 = vsel %vm1961, %v6393, %v6701
        %v7387 = vsel %vm1961, %v6394, %v6703
        %v7388 = vsel %vm1961, %v6395, %v6705
        %v7389 = vsel %vm1961, %v6396, %v6707
        %v7390 = vsel %vm1961, %v6397, %v6709
        %v7391 = vsel %vm1961, %v6398, %v6711
        %v7392 = vsel %vm1961, %v6399, %v6713
        %v7393 = vsel %vm1961, %v6400, %v6715
        %v7394 = vsel %vm1961, %v6401, %v6717
        %v7395 = vsel %vm1961, %v6402, %v6719
        %v7396 = vsel %vm1961, %v6403, %v6721
        %v7397 = vsel %vm1961, %v6404, %v6723
        %v7398 = vsel %vm1961, %v6405, %v6725
        %v7399 = vsel %vm1961, %v6406, %v6727
        %v7400 = vsel %vm1961, %v6407, %v6729
        %v7401 = vsel %vm1961, %v6408, %v6731
        %v7402 = vsel %vm1994, %v7370, %v6796
        %v7403 = vsel %vm1994, %v7371, %v6798
        %v7404 = vsel %vm1994, %v7372, %v6800
        %v7405 = vsel %vm1994, %v7373, %v6802
        %v7406 = vsel %vm1994, %v7374, %v6804
        %v7407 = vsel %vm1994, %v7375, %v6806
        %v7408 = vsel %vm1994, %v7376, %v6808
        %v7409 = vsel %vm1994, %v7377, %v6810
        %v7410 = vsel %vm1994, %v7378, %v6812
        %v7411 = vsel %vm1994, %v7379, %v6814
        %v7412 = vsel %vm1994, %v7380, %v6816
        %v7413 = vsel %vm1994, %v7381, %v6818
        %v7414 = vsel %vm1994, %v7382, %v6820
        %v7415 = vsel %vm1994, %v7383, %v6822
        %v7416 = vsel %vm1994, %v7384, %v6824
        %v7417 = vsel %vm1994, %v7385, %v6826
        %v7418 = vsel %vm1994, %v7386, %v6828
        %v7419 = vsel %vm1994, %v7387, %v6830
        %v7420 = vsel %vm1994, %v7388, %v6832
        %v7421 = vsel %vm1994, %v7389, %v6834
        %v7422 = vsel %vm1994, %v7390, %v6836
        %v7423 = vsel %vm1994, %v7391, %v6838
        %v7424 = vsel %vm1994, %v7392, %v6840
        %v7425 = vsel %vm1994, %v7393, %v6842
        %v7426 = vsel %vm1994, %v7394, %v6844
        %v7427 = vsel %vm1994, %v7395, %v6846
        %v7428 = vsel %vm1994, %v7396, %v6848
        %v7429 = vsel %vm1994, %v7397, %v6850
        %v7430 = vsel %vm1994, %v7398, %v6852
        %v7431 = vsel %vm1994, %v7399, %v6854
        %v7432 = vsel %vm1994, %v7400, %v6856
        %v7433 = vsel %vm1994, %v7401, %v6858
        %v7434 = vsel %vm2027, %v7402, %v6924
        %v7435 = vsel %vm2027, %v7403, %v6926
        %v7436 = vsel %vm2027, %v7404, %v6928
        %v7437 = vsel %vm2027, %v7405, %v6930
        %v7438 = vsel %vm2027, %v7406, %v6932
        %v7439 = vsel %vm2027, %v7407, %v6934
        %v7440 = vsel %vm2027, %v7408, %v6936
        %v7441 = vsel %vm2027, %v7409, %v6938
        %v7442 = vsel %vm2027, %v7410, %v6940
        %v7443 = vsel %vm2027, %v7411, %v6942
        %v7444 = vsel %vm2027, %v7412, %v6944
        %v7445 = vsel %vm2027, %v7413, %v6946
        %v7446 = vsel %vm2027, %v7414, %v6948
        %v7447 = vsel %vm2027, %v7415, %v6950
        %v7448 = vsel %vm2027, %v7416, %v6952
        %v7449 = vsel %vm2027, %v7417, %v6954
        %v7450 = vsel %vm2027, %v7418, %v6956
        %v7451 = vsel %vm2027, %v7419, %v6958
        %v7452 = vsel %vm2027, %v7420, %v6960
        %v7453 = vsel %vm2027, %v7421, %v6962
        %v7454 = vsel %vm2027, %v7422, %v6964
        %v7455 = vsel %vm2027, %v7423, %v6966
        %v7456 = vsel %vm2027, %v7424, %v6968
        %v7457 = vsel %vm2027, %v7425, %v6970
        %v7458 = vsel %vm2027, %v7426, %v6972
        %v7459 = vsel %vm2027, %v7427, %v6974
        %v7460 = vsel %vm2027, %v7428, %v6976
        %v7461 = vsel %vm2027, %v7429, %v6978
        %v7462 = vsel %vm2027, %v7430, %v6980
        %v7463 = vsel %vm2027, %v7431, %v6982
        %v7464 = vsel %vm2027, %v7432, %v6984
        %v7465 = vsel %vm2027, %v7433, %v6986
        %v7466 = vsel %vm1961, %v6285, %v7052
        %v7467 = vsel %vm1961, %v6286, %v7054
        %v7468 = vsel %vm1961, %v6287, %v7056
        %v7469 = vsel %vm1961, %v6288, %v7058
        %v7470 = vsel %vm1961, %v6289, %v7060
        %v7471 = vsel %vm1961, %v6290, %v7062
        %v7472 = vsel %vm1961, %v6291, %v7064
        %v7473 = vsel %vm1961, %v6292, %v7066
        %v7474 = vsel %vm1961, %v6293, %v7068
        %v7475 = vsel %vm1961, %v6294, %v7070
        %v7476 = vsel %vm1961, %v6295, %v7072
        %v7477 = vsel %vm1961, %v6296, %v7074
        %v7478 = vsel %vm1961, %v6297, %v7076
        %v7479 = vsel %vm1961, %v6298, %v7078
        %v7480 = vsel %vm1961, %v6299, %v7080
        %v7481 = vsel %vm1961, %v6300, %v7082
        %v7482 = vsel %vm1961, %v6301, %v7084
        %v7483 = vsel %vm1961, %v6302, %v7086
        %v7484 = vsel %vm1961, %v6303, %v7088
        %v7485 = vsel %vm1961, %v6304, %v7090
        %v7486 = vsel %vm1961, %v6305, %v7092
        %v7487 = vsel %vm1961, %v6306, %v7094
        %v7488 = vsel %vm1961, %v6307, %v7096
        %v7489 = vsel %vm1961, %v6308, %v7098
        %v7490 = vsel %vm1961, %v6309, %v7100
        %v7491 = vsel %vm1961, %v6310, %v7102
        %v7492 = vsel %vm1961, %v6311, %v7104
        %v7493 = vsel %vm1961, %v6312, %v7106
        %v7494 = vsel %vm1961, %v6313, %v7108
        %v7495 = vsel %vm1961, %v6314, %v7110
        %v7496 = vsel %vm1961, %v6315, %v7112
        %v7497 = vsel %vm1961, %v6316, %v7114
        %v7498 = vsel %vm1994, %v7466, %v7180
        %v7499 = vsel %vm1994, %v7467, %v7182
        %v7500 = vsel %vm1994, %v7468, %v7184
        %v7501 = vsel %vm1994, %v7469, %v7186
        %v7502 = vsel %vm1994, %v7470, %v7188
        %v7503 = vsel %vm1994, %v7471, %v7190
        %v7504 = vsel %vm1994, %v7472, %v7192
        %v7505 = vsel %vm1994, %v7473, %v7194
        %v7506 = vsel %vm1994, %v7474, %v7196
        %v7507 = vsel %vm1994, %v7475, %v7198
        %v7508 = vsel %vm1994, %v7476, %v7200
        %v7509 = vsel %vm1994, %v7477, %v7202
        %v7510 = vsel %vm1994, %v7478, %v7204
        %v7511 = vsel %vm1994, %v7479, %v7206
        %v7512 = vsel %vm1994, %v7480, %v7208
        %v7513 = vsel %vm1994, %v7481, %v7210
        %v7514 = vsel %vm1994, %v7482, %v7212
        %v7515 = vsel %vm1994, %v7483, %v7214
        %v7516 = vsel %vm1994, %v7484, %v7216
        %v7517 = vsel %vm1994, %v7485, %v7218
        %v7518 = vsel %vm1994, %v7486, %v7220
        %v7519 = vsel %vm1994, %v7487, %v7222
        %v7520 = vsel %vm1994, %v7488, %v7224
        %v7521 = vsel %vm1994, %v7489, %v7226
        %v7522 = vsel %vm1994, %v7490, %v7228
        %v7523 = vsel %vm1994, %v7491, %v7230
        %v7524 = vsel %vm1994, %v7492, %v7232
        %v7525 = vsel %vm1994, %v7493, %v7234
        %v7526 = vsel %vm1994, %v7494, %v7236
        %v7527 = vsel %vm1994, %v7495, %v7238
        %v7528 = vsel %vm1994, %v7496, %v7240
        %v7529 = vsel %vm1994, %v7497, %v7242
        %v7530 = vsel %vm2027, %v7498, %v7278
        %v7531 = vsel %vm2027, %v7499, %v7280
        %v7532 = vsel %vm2027, %v7500, %v7282
        %v7533 = vsel %vm2027, %v7501, %v7284
        %v7534 = vsel %vm2027, %v7502, %v7286
        %v7535 = vsel %vm2027, %v7503, %v7288
        %v7536 = vsel %vm2027, %v7504, %v7290
        %v7537 = vsel %vm2027, %v7505, %v7292
        %v7538 = vsel %vm2027, %v7506, %v7294
        %v7539 = vsel %vm2027, %v7507, %v7296
        %v7540 = vsel %vm2027, %v7508, %v7298
        %v7541 = vsel %vm2027, %v7509, %v7300
        %v7542 = vsel %vm2027, %v7510, %v7302
        %v7543 = vsel %vm2027, %v7511, %v7304
        %v7544 = vsel %vm2027, %v7512, %v7306
        %v7545 = vsel %vm2027, %v7513, %v7308
        %v7546 = vsel %vm2027, %v7514, %v7310
        %v7547 = vsel %vm2027, %v7515, %v7312
        %v7548 = vsel %vm2027, %v7516, %v7314
        %v7549 = vsel %vm2027, %v7517, %v7316
        %v7550 = vsel %vm2027, %v7518, %v7318
        %v7551 = vsel %vm2027, %v7519, %v7320
        %v7552 = vsel %vm2027, %v7520, %v7322
        %v7553 = vsel %vm2027, %v7521, %v7324
        %v7554 = vsel %vm2027, %v7522, %v7326
        %v7555 = vsel %vm2027, %v7523, %v7328
        %v7556 = vsel %vm2027, %v7524, %v7330
        %v7557 = vsel %vm2027, %v7525, %v7332
        %v7558 = vsel %vm2027, %v7526, %v7334
        %v7559 = vsel %vm2027, %v7527, %v7336
        %v7560 = vsel %vm2027, %v7528, %v7338
        %v7561 = vsel %vm2027, %v7529, %v7338
        %v7562 = vld [vmem:[%s8] sm:$0xff]
        %v7563 = vld [vmem:[%s8 + $0x8] sm:$0xff]
        %v7564 = vld [vmem:[%s8 + $0x10] sm:$0xff]
        %v7565 = vld [vmem:[%s8 + $0x18] sm:$0xff]
        %v7566 = vld [vmem:[%s8 + $0x20] sm:$0xff]
        %v7567 = vld [vmem:[%s8 + $0x28] sm:$0xff]
        %v7568 = vld [vmem:[%s8 + $0x30] sm:$0xff]
        %v7569 = vld [vmem:[%s8 + $0x38] sm:$0xff]
        %v7570 = vld [vmem:[%s8 + $0x40] sm:$0xff]
        %v7571 = vld [vmem:[%s8 + $0x48] sm:$0xff]
        %v7572 = vld [vmem:[%s8 + $0x50] sm:$0xff]
        %v7573 = vld [vmem:[%s8 + $0x58] sm:$0xff]
        %v7574 = vld [vmem:[%s8 + $0x60] sm:$0xff]
        %v7575 = vld [vmem:[%s8 + $0x68] sm:$0xff]
        %v7576 = vld [vmem:[%s8 + $0x70] sm:$0xff]
        %v7577 = vld [vmem:[%s8 + $0x78] sm:$0xff]
        %v7578 = vld [vmem:[%s8 + $0x80] sm:$0xff]
        %v7579 = vld [vmem:[%s8 + $0x88] sm:$0xff]
        %v7580 = vld [vmem:[%s8 + $0x90] sm:$0xff]
        %v7581 = vld [vmem:[%s8 + $0x98] sm:$0xff]
        %v7582 = vld [vmem:[%s8 + $0xa0] sm:$0xff]
        %v7583 = vld [vmem:[%s8 + $0xa8] sm:$0xff]
        %v7584 = vld [vmem:[%s8 + $0xb0] sm:$0xff]
        %v7585 = vld [vmem:[%s8 + $0xb8] sm:$0xff]
        %v7586 = vld [vmem:[%s8 + $0xc0] sm:$0xff]
        %v7587 = vld [vmem:[%s8 + $0xc8] sm:$0xff]
        %v7588 = vld [vmem:[%s8 + $0xd0] sm:$0xff]
        %v7589 = vld [vmem:[%s8 + $0xd8] sm:$0xff]
        %v7590 = vld [vmem:[%s8 + $0xe0] sm:$0xff]
        %v7591 = vld [vmem:[%s8 + $0xe8] sm:$0xff]
        %v7592 = vld [vmem:[%s8 + $0xf0] sm:$0xff]
        %v7593 = vld [vmem:[%s8 + $0xf8] sm:$0xff]
        %v7594 = vld [vmem:[%s8 + $0x100] sm:$0xff]
        %v7595 = vld [vmem:[%s8 + $0x108] sm:$0xff]
        %v7596 = vld [vmem:[%s8 + $0x110] sm:$0xff]
        %v7597 = vld [vmem:[%s8 + $0x118] sm:$0xff]
        %v7598 = vld [vmem:[#allocation4] sm:$0x1]
        %v7600 = vlaneseq
        %v7601 = vshrl.u32 %v7600, 7
        %v7602 = vsub.s32 0, %v7601
        %v7603 = vrot.slane %v7598, %v7602
        %7604 = vset.pattern.permute.xlu0 0
        %7605 = vperm.xlu0 %7604, %v7603
        %v7606 = vpop.permute.xlu0 %7605
        %v7609 = vsel %vm1961, %v6607, 0
        %v7612 = vsel %vm1961, %v6608, 0
        %v7615 = vsel %vm1961, %v6609, 0
        %v7618 = vsel %vm1961, %v6610, 0
        %v7621 = vsel %vm1961, %v6611, 0
        %v7624 = vsel %vm1961, %v6612, 0
        %v7627 = vsel %vm1961, %v6613, 0
        %v7630 = vsel %vm1961, %v6614, 0
        %v7633 = vsel %vm1961, %v6615, 0
        %v7636 = vsel %vm1961, %v6616, 0
        %v7639 = vsel %vm1961, %v6617, 0
        %v7642 = vsel %vm1961, %v6618, 0
        %v7645 = vsel %vm1961, %v6619, 0
        %v7648 = vsel %vm1961, %v6620, 0
        %v7651 = vsel %vm1961, %v6621, 0
        %v7654 = vsel %vm1961, %v6622, 0
        %v7657 = vsel %vm1961, %v6623, 0
        %v7660 = vsel %vm1961, %v6624, 0
        %v7663 = vsel %vm1961, %v6625, 0
        %v7666 = vsel %vm1961, %v6626, 0
        %v7669 = vsel %vm1961, %v6627, 0
        %v7672 = vsel %vm1961, %v6628, 0
        %v7675 = vsel %vm1961, %v6629, 0
        %v7678 = vsel %vm1961, %v6630, 0
        %v7681 = vsel %vm1961, %v6631, 0
        %v7684 = vsel %vm1961, %v6632, 0
        %v7687 = vsel %vm1961, %v6633, 0
        %v7690 = vsel %vm1961, %v6634, 0
        %v7693 = vsel %vm1961, %v6635, 0
        %v7696 = vsel %vm1961, %v6636, 0
        %v7699 = vsel %vm1961, %v6637, 0
        %v7702 = vsel %vm1961, %v6638, 0
        %7704 = vmatprep.subr.mxu0 0.0
        %7705 = vmatpush1.msra.mxu0 %v7562
        %7706 = vmatprep.subr.mxu0 0.0
        %7707 = vmatpush1.msra.mxu0 %v7563
        %7708 = vmatprep.subr.mxu0 0.0
        %7709 = vmatpush1.msra.mxu0 %v7564
        %7710 = vmatprep.subr.mxu0 0.0
        %7711 = vmatpush1.msra.mxu0 %v7565
        %7712 = vmatprep.subr.mxu0 0.0
        %7713 = vmatpush1.msra.mxu0 %v7566
        %7714 = vmatprep.subr.mxu0 0.0
        %7715 = vmatpush1.msra.mxu0 %v7567
        %7716 = vmatprep.subr.mxu0 0.0
        %7717 = vmatpush1.msra.mxu0 %v7568
        %7718 = vmatprep.subr.mxu0 0.0
        %7719 = vmatpush1.msra.mxu0 %v7569
        %7720 = vmatprep.subr.mxu0 0.0
        %7721 = vmatpush1.msra.mxu0 %v7570
        %7722 = vmatprep.subr.mxu0 0.0
        %7723 = vmatpush1.msra.mxu0 %v7571
        %7724 = vmatprep.subr.mxu0 0.0
        %7725 = vmatpush1.msra.mxu0 %v7572
        %7726 = vmatprep.subr.mxu0 0.0
        %7727 = vmatpush1.msra.mxu0 %v7573
        %7728 = vmatprep.subr.mxu0 0.0
        %7729 = vmatpush1.msra.mxu0 %v7574
        %7730 = vmatprep.subr.mxu0 0.0
        %7731 = vmatpush1.msra.mxu0 %v7575
        %7732 = vmatprep.subr.mxu0 0.0
        %7733 = vmatpush1.msra.mxu0 %v7576
        %7734 = vmatprep.subr.mxu0 0.0
        %7735 = vmatpush1.msra.mxu0 %v7577
        %7736 = vmatprep.subr.mxu0 0.0
        %7737 = vmatpush1.msra.mxu0 %v7578
        %7738 = vmatprep.subr.mxu0 0.0
        %7739 = vmatpush1.msra.mxu0 %v7579
        %7740 = vmatprep.subr.mxu0 0.0
        %7741 = vmatpush1.msra.mxu0 %v7580
        %7742 = vmatprep.subr.mxu0 0.0
        %7743 = vmatpush1.msra.mxu0 %v7581
        %7744 = vmatprep.subr.mxu0 0.0
        %7745 = vmatpush1.msra.mxu0 %v7582
        %7746 = vmatprep.subr.mxu0 0.0
        %7747 = vmatpush1.msra.mxu0 %v7583
        %7748 = vmatprep.subr.mxu0 0.0
        %7749 = vmatpush1.msra.mxu0 %v7584
        %7750 = vmatprep.subr.mxu0 0.0
        %7751 = vmatpush1.msra.mxu0 %v7585
        %7752 = vmatprep.subr.mxu0 0.0
        %7753 = vmatpush1.msra.mxu0 %v7586
        %7754 = vmatprep.subr.mxu0 0.0
        %7755 = vmatpush1.msra.mxu0 %v7587
        %7756 = vmatprep.subr.mxu0 0.0
        %7757 = vmatpush1.msra.mxu0 %v7588
        %7758 = vmatprep.subr.mxu0 0.0
        %7759 = vmatpush1.msra.mxu0 %v7589
        %7760 = vmatprep.subr.mxu0 0.0
        %7761 = vmatpush1.msra.mxu0 %v7590
        %7762 = vmatprep.subr.mxu0 0.0
        %7763 = vmatpush1.msra.mxu0 %v7591
        %7764 = vmatprep.subr.mxu0 0.0
        %7765 = vmatpush1.msra.mxu0 %v7592
        %7766 = vmatprep.subr.mxu0 0.0
        %7767 = vmatpush1.msra.mxu0 %v7593
        %7768 = vmatprep.mubr.f32.mxu0 %v7530
        %7769 = vmatmul.mubr.f32.gmra.mrb[0].mxu0 %v7434
        %v7770 = vpop.f32.mrb[0].mxu0
        %v7771 = vadd.f32 %v7606, %v7770
        %v7772 = vpop.f32.mrb[0].mxu0
        %7773 = vmatprep.mubr.f32.mxu0 %v7531
        %7774 = vmatmul.mubr.f32.gmra.mrb[0].mxu0 %v7435
        %v7775 = vpop.f32.mrb[0].mxu0
        %v7776 = vadd.f32 %v7606, %v7775
        %v7777 = vpop.f32.mrb[0].mxu0
        %7778 = vmatprep.mubr.f32.mxu0 %v7532
        %7779 = vmatmul.mubr.f32.gmra.mrb[0].mxu0 %v7436
        %v7780 = vpop.f32.mrb[0].mxu0
        %v7781 = vadd.f32 %v7606, %v7780
        %v7782 = vpop.f32.mrb[0].mxu0
        %7783 = vmatprep.mubr.f32.mxu0 %v7533
        %7784 = vmatmul.mubr.f32.gmra.mrb[0].mxu0 %v7437
        %v7785 = vpop.f32.mrb[0].mxu0
        %v7786 = vadd.f32 %v7606, %v7785
        %v7787 = vpop.f32.mrb[0].mxu0
        %7788 = vmatprep.mubr.f32.mxu0 %v7534
        %7789 = vmatmul.mubr.f32.gmra.mrb[0].mxu0 %v7438
        %v7790 = vpop.f32.mrb[0].mxu0
        %v7791 = vadd.f32 %v7606, %v7790
        %v7792 = vpop.f32.mrb[0].mxu0
        %7793 = vmatprep.mubr.f32.mxu0 %v7535
        %7794 = vmatmul.mubr.f32.gmra.mrb[0].mxu0 %v7439
        %v7795 = vpop.f32.mrb[0].mxu0
        %v7796 = vadd.f32 %v7606, %v7795
        %v7797 = vpop.f32.mrb[0].mxu0
        %7798 = vmatprep.mubr.f32.mxu0 %v7536
        %7799 = vmatmul.mubr.f32.gmra.mrb[0].mxu0 %v7440
        %v7800 = vpop.f32.mrb[0].mxu0
        %v7801 = vadd.f32 %v7606, %v7800
        %v7802 = vpop.f32.mrb[0].mxu0
        %7803 = vmatprep.mubr.f32.mxu0 %v7537
        %7804 = vmatmul.mubr.f32.gmra.mrb[0].mxu0 %v7441
        %v7805 = vpop.f32.mrb[0].mxu0
        %v7806 = vadd.f32 %v7606, %v7805
        %v7807 = vpop.f32.mrb[0].mxu0
        %7808 = vmatprep.mubr.f32.mxu0 %v7538
        %7809 = vmatmul.mubr.f32.gmra.mrb[0].mxu0 %v7442
        %v7810 = vpop.f32.mrb[0].mxu0
        %v7811 = vadd.f32 %v7606, %v7810
        %v7812 = vpop.f32.mrb[0].mxu0
        %7813 = vmatprep.mubr.f32.mxu0 %v7539
        %7814 = vmatmul.mubr.f32.gmra.mrb[0].mxu0 %v7443
        %v7815 = vpop.f32.mrb[0].mxu0
        %v7816 = vadd.f32 %v7606, %v7815
        %v7817 = vpop.f32.mrb[0].mxu0
        %7818 = vmatprep.mubr.f32.mxu0 %v7540
        %7819 = vmatmul.mubr.f32.gmra.mrb[0].mxu0 %v7444
        %v7820 = vpop.f32.mrb[0].mxu0
        %v7821 = vadd.f32 %v7606, %v7820
        %v7822 = vpop.f32.mrb[0].mxu0
        %7823 = vmatprep.mubr.f32.mxu0 %v7541
        %7824 = vmatmul.mubr.f32.gmra.mrb[0].mxu0 %v7445
        %v7825 = vpop.f32.mrb[0].mxu0
        %v7826 = vadd.f32 %v7606, %v7825
        %v7827 = vpop.f32.mrb[0].mxu0
        %7828 = vmatprep.mubr.f32.mxu0 %v7542
        %7829 = vmatmul.mubr.f32.gmra.mrb[0].mxu0 %v7446
        %v7830 = vpop.f32.mrb[0].mxu0
        %v7831 = vadd.f32 %v7606, %v7830
        %v7832 = vpop.f32.mrb[0].mxu0
        %7833 = vmatprep.mubr.f32.mxu0 %v7543
        %7834 = vmatmul.mubr.f32.gmra.mrb[0].mxu0 %v7447
        %v7835 = vpop.f32.mrb[0].mxu0
        %v7836 = vadd.f32 %v7606, %v7835
        %v7837 = vpop.f32.mrb[0].mxu0
        %7838 = vmatprep.mubr.f32.mxu0 %v7544
        %7839 = vmatmul.mubr.f32.gmra.mrb[0].mxu0 %v7448
        %v7840 = vpop.f32.mrb[0].mxu0
        %v7841 = vadd.f32 %v7606, %v7840
        %v7842 = vpop.f32.mrb[0].mxu0
        %7843 = vmatprep.mubr.f32.mxu0 %v7545
        %7844 = vmatmul.mubr.f32.gmra.mrb[0].mxu0 %v7449
        %v7845 = vpop.f32.mrb[0].mxu0
        %v7846 = vadd.f32 %v7606, %v7845
        %v7847 = vpop.f32.mrb[0].mxu0
        %7848 = vmatprep.mubr.f32.mxu0 %v7546
        %7849 = vmatmul.mubr.f32.gmra.mrb[0].mxu0 %v7450
        %v7850 = vpop.f32.mrb[0].mxu0
        %v7851 = vadd.f32 %v7606, %v7850
        %v7852 = vpop.f32.mrb[0].mxu0
        %7853 = vmatprep.mubr.f32.mxu0 %v7547
        %7854 = vmatmul.mubr.f32.gmra.mrb[0].mxu0 %v7451
        %v7855 = vpop.f32.mrb[0].mxu0
        %v7856 = vadd.f32 %v7606, %v7855
        %v7857 = vpop.f32.mrb[0].mxu0
        %7858 = vmatprep.mubr.f32.mxu0 %v7548
        %7859 = vmatmul.mubr.f32.gmra.mrb[0].mxu0 %v7452
        %v7860 = vpop.f32.mrb[0].mxu0
        %v7861 = vadd.f32 %v7606, %v7860
        %v7862 = vpop.f32.mrb[0].mxu0
        %7863 = vmatprep.mubr.f32.mxu0 %v7549
        %7864 = vmatmul.mubr.f32.gmra.mrb[0].mxu0 %v7453
        %v7865 = vpop.f32.mrb[0].mxu0
        %v7866 = vadd.f32 %v7606, %v7865
        %v7867 = vpop.f32.mrb[0].mxu0
        %7868 = vmatprep.mubr.f32.mxu0 %v7550
        %7869 = vmatmul.mubr.f32.gmra.mrb[0].mxu0 %v7454
        %v7870 = vpop.f32.mrb[0].mxu0
        %v7871 = vadd.f32 %v7606, %v7870
        %v7872 = vpop.f32.mrb[0].mxu0
        %7873 = vmatprep.mubr.f32.mxu0 %v7551
        %7874 = vmatmul.mubr.f32.gmra.mrb[0].mxu0 %v7455
        %v7875 = vpop.f32.mrb[0].mxu0
        %v7876 = vadd.f32 %v7606, %v7875
        %v7877 = vpop.f32.mrb[0].mxu0
        %7878 = vmatprep.mubr.f32.mxu0 %v7552
        %7879 = vmatmul.mubr.f32.gmra.mrb[0].mxu0 %v7456
        %v7880 = vpop.f32.mrb[0].mxu0
        %v7881 = vadd.f32 %v7606, %v7880
        %v7882 = vpop.f32.mrb[0].mxu0
        %7883 = vmatprep.mubr.f32.mxu0 %v7553
        %7884 = vmatmul.mubr.f32.gmra.mrb[0].mxu0 %v7457
        %v7885 = vpop.f32.mrb[0].mxu0
        %v7886 = vadd.f32 %v7606, %v7885
        %v7887 = vpop.f32.mrb[0].mxu0
        %7888 = vmatprep.mubr.f32.mxu0 %v7554
        %7889 = vmatmul.mubr.f32.gmra.mrb[0].mxu0 %v7458
        %v7890 = vpop.f32.mrb[0].mxu0
        %v7891 = vadd.f32 %v7606, %v7890
        %v7892 = vpop.f32.mrb[0].mxu0
        %7893 = vmatprep.mubr.f32.mxu0 %v7555
        %7894 = vmatmul.mubr.f32.gmra.mrb[0].mxu0 %v7459
        %v7895 = vpop.f32.mrb[0].mxu0
        %v7896 = vadd.f32 %v7606, %v7895
        %v7897 = vpop.f32.mrb[0].mxu0
        %7898 = vmatprep.mubr.f32.mxu0 %v7556
        %7899 = vmatmul.mubr.f32.gmra.mrb[0].mxu0 %v7460
        %v7900 = vpop.f32.mrb[0].mxu0
        %v7901 = vadd.f32 %v7606, %v7900
        %v7902 = vpop.f32.mrb[0].mxu0
        %7903 = vmatprep.mubr.f32.mxu0 %v7557
        %7904 = vmatmul.mubr.f32.gmra.mrb[0].mxu0 %v7461
        %v7905 = vpop.f32.mrb[0].mxu0
        %v7906 = vadd.f32 %v7606, %v7905
        %v7907 = vpop.f32.mrb[0].mxu0
        %7908 = vmatprep.mubr.f32.mxu0 %v7558
        %7909 = vmatmul.mubr.f32.gmra.mrb[0].mxu0 %v7462
        %v7910 = vpop.f32.mrb[0].mxu0
        %v7911 = vadd.f32 %v7606, %v7910
        %v7912 = vpop.f32.mrb[0].mxu0
        %7913 = vmatprep.mubr.f32.mxu0 %v7559
        %7914 = vmatmul.mubr.f32.gmra.mrb[0].mxu0 %v7463
        %v7915 = vpop.f32.mrb[0].mxu0
        %v7916 = vadd.f32 %v7606, %v7915
        %v7917 = vpop.f32.mrb[0].mxu0
        %7918 = vmatprep.mubr.f32.mxu0 %v7560
        %7919 = vmatmul.mubr.f32.gmra.mrb[0].mxu0 %v7464
        %v7920 = vpop.f32.mrb[0].mxu0
        %v7921 = vadd.f32 %v7606, %v7920
        %v7922 = vpop.f32.mrb[0].mxu0
        %7923 = vmatprep.mubr.f32.mxu0 %v7561
        %7924 = vmatmul.mubr.f32.gmra.mrb[0].mxu0 %v7465
        %v7925 = vpop.f32.mrb[0].mxu0
        %v7926 = vadd.f32 %v7606, %v7925
        %v7927 = vpop.f32.mrb[0].mxu0
        %7928 = vdwg.mxu0
        %7929 = vmatprep.subr.mxu0 0.0
        %7930 = vmatpush1.msra.mxu0 %v7594
        %7931 = vmatprep.subr.mxu0 0.0
        %7932 = vmatpush1.msra.mxu0 %v7595
        %7933 = vmatprep.subr.mxu0 0.0
        %7934 = vmatpush1.msra.mxu0 %v7596
        %7935 = vmatprep.subr.mxu0 0.0
        %7936 = vmatpush1.msra.mxu0 %v7597
        %7937 = vmatprep.subr.mxu0 0.0
        %7938 = vmatpush1.msra.mxu0 0.0
        %7939 = vmatprep.subr.mxu0 0.0
        %7940 = vmatpush1.msra.mxu0 0.0
        %7941 = vmatprep.subr.mxu0 0.0
        %7942 = vmatpush1.msra.mxu0 0.0
        %7943 = vmatprep.subr.mxu0 0.0
        %7944 = vmatpush1.msra.mxu0 0.0
        %7945 = vmatprep.subr.mxu0 0.0
        %7946 = vmatpush1.msra.mxu0 0.0
        %7947 = vmatprep.subr.mxu0 0.0
        %7948 = vmatpush1.msra.mxu0 0.0
        %7949 = vmatprep.subr.mxu0 0.0
        %7950 = vmatpush1.msra.mxu0 0.0
        %7951 = vmatprep.subr.mxu0 0.0
        %7952 = vmatpush1.msra.mxu0 0.0
        %7953 = vmatprep.subr.mxu0 0.0
        %7954 = vmatpush1.msra.mxu0 0.0
        %7955 = vmatprep.subr.mxu0 0.0
        %7956 = vmatpush1.msra.mxu0 0.0
        %7957 = vmatprep.subr.mxu0 0.0
        %7958 = vmatpush1.msra.mxu0 0.0
        %7959 = vmatprep.subr.mxu0 0.0
        %7960 = vmatpush1.msra.mxu0 0.0
        %7961 = vmatprep.subr.mxu0 0.0
        %7962 = vmatpush1.msra.mxu0 0.0
        %7963 = vmatprep.subr.mxu0 0.0
        %7964 = vmatpush1.msra.mxu0 0.0
        %7965 = vmatprep.subr.mxu0 0.0
        %7966 = vmatpush1.msra.mxu0 0.0
        %7967 = vmatprep.subr.mxu0 0.0
        %7968 = vmatpush1.msra.mxu0 0.0
        %7969 = vmatprep.subr.mxu0 0.0
        %7970 = vmatpush1.msra.mxu0 0.0
        %7971 = vmatprep.subr.mxu0 0.0
        %7972 = vmatpush1.msra.mxu0 0.0
        %7973 = vmatprep.subr.mxu0 0.0
        %7974 = vmatpush1.msra.mxu0 0.0
        %7975 = vmatprep.subr.mxu0 0.0
        %7976 = vmatpush1.msra.mxu0 0.0
        %7977 = vmatprep.subr.mxu0 0.0
        %7978 = vmatpush1.msra.mxu0 0.0
        %7979 = vmatprep.subr.mxu0 0.0
        %7980 = vmatpush1.msra.mxu0 0.0
        %7981 = vmatprep.subr.mxu0 0.0
        %7982 = vmatpush1.msra.mxu0 0.0
        %7983 = vmatprep.subr.mxu0 0.0
        %7984 = vmatpush1.msra.mxu0 0.0
        %7985 = vmatprep.subr.mxu0 0.0
        %7986 = vmatpush1.msra.mxu0 0.0
        %7987 = vmatprep.subr.mxu0 0.0
        %7988 = vmatpush1.msra.mxu0 0.0
        %7989 = vmatprep.subr.mxu0 0.0
        %7990 = vmatpush1.msra.mxu0 0.0
        %7991 = vmatprep.subr.mxu0 0.0
        %7992 = vmatpush1.msra.mxu0 0.0
        %7993 = vmatprep.mubr.f32.mxu0 0.0
        %7994 = vmatmul.mubr.f32.gmra.mrb[0].mxu0 %v7609
        %v7995 = vpop.f32.mrb[0].mxu0
        %v7996 = vadd.f32 %v7771, %v7995
        %v7997 = vpop.f32.mrb[0].mxu0
        %7998 = vmatprep.mubr.f32.mxu0 0.0
        %7999 = vmatmul.mubr.f32.gmra.mrb[0].mxu0 %v7612
        %v8000 = vpop.f32.mrb[0].mxu0
        %v8001 = vadd.f32 %v7776, %v8000
        %v8002 = vpop.f32.mrb[0].mxu0
        %8003 = vmatprep.mubr.f32.mxu0 0.0
        %8004 = vmatmul.mubr.f32.gmra.mrb[0].mxu0 %v7615
        %v8005 = vpop.f32.mrb[0].mxu0
        %v8006 = vadd.f32 %v7781, %v8005
        %v8007 = vpop.f32.mrb[0].mxu0
        %8008 = vmatprep.mubr.f32.mxu0 0.0
        %8009 = vmatmul.mubr.f32.gmra.mrb[0].mxu0 %v7618
        %v8010 = vpop.f32.mrb[0].mxu0
        %v8011 = vadd.f32 %v7786, %v8010
        %v8012 = vpop.f32.mrb[0].mxu0
        %8013 = vmatprep.mubr.f32.mxu0 0.0
        %8014 = vmatmul.mubr.f32.gmra.mrb[0].mxu0 %v7621
        %v8015 = vpop.f32.mrb[0].mxu0
        %v8016 = vadd.f32 %v7791, %v8015
        %v8017 = vpop.f32.mrb[0].mxu0
        %8018 = vmatprep.mubr.f32.mxu0 0.0
        %8019 = vmatmul.mubr.f32.gmra.mrb[0].mxu0 %v7624
        %v8020 = vpop.f32.mrb[0].mxu0
        %v8021 = vadd.f32 %v7796, %v8020
        %v8022 = vpop.f32.mrb[0].mxu0
        %8023 = vmatprep.mubr.f32.mxu0 0.0
        %8024 = vmatmul.mubr.f32.gmra.mrb[0].mxu0 %v7627
        %v8025 = vpop.f32.mrb[0].mxu0
        %v8026 = vadd.f32 %v7801, %v8025
        %v8027 = vpop.f32.mrb[0].mxu0
        %8028 = vmatprep.mubr.f32.mxu0 0.0
        %8029 = vmatmul.mubr.f32.gmra.mrb[0].mxu0 %v7630
        %v8030 = vpop.f32.mrb[0].mxu0
        %v8031 = vadd.f32 %v7806, %v8030
        %v8032 = vpop.f32.mrb[0].mxu0
        %8033 = vmatprep.mubr.f32.mxu0 0.0
        %8034 = vmatmul.mubr.f32.gmra.mrb[0].mxu0 %v7633
        %v8035 = vpop.f32.mrb[0].mxu0
        %v8036 = vadd.f32 %v7811, %v8035
        %v8037 = vpop.f32.mrb[0].mxu0
        %8038 = vmatprep.mubr.f32.mxu0 0.0
        %8039 = vmatmul.mubr.f32.gmra.mrb[0].mxu0 %v7636
        %v8040 = vpop.f32.mrb[0].mxu0
        %v8041 = vadd.f32 %v7816, %v8040
        %v8042 = vpop.f32.mrb[0].mxu0
        %8043 = vmatprep.mubr.f32.mxu0 0.0
        %8044 = vmatmul.mubr.f32.gmra.mrb[0].mxu0 %v7639
        %v8045 = vpop.f32.mrb[0].mxu0
        %v8046 = vadd.f32 %v7821, %v8045
        %v8047 = vpop.f32.mrb[0].mxu0
        %8048 = vmatprep.mubr.f32.mxu0 0.0
        %8049 = vmatmul.mubr.f32.gmra.mrb[0].mxu0 %v7642
        %v8050 = vpop.f32.mrb[0].mxu0
        %v8051 = vadd.f32 %v7826, %v8050
        %v8052 = vpop.f32.mrb[0].mxu0
        %8053 = vmatprep.mubr.f32.mxu0 0.0
        %8054 = vmatmul.mubr.f32.gmra.mrb[0].mxu0 %v7645
        %v8055 = vpop.f32.mrb[0].mxu0
        %v8056 = vadd.f32 %v7831, %v8055
        %v8057 = vpop.f32.mrb[0].mxu0
        %8058 = vmatprep.mubr.f32.mxu0 0.0
        %8059 = vmatmul.mubr.f32.gmra.mrb[0].mxu0 %v7648
        %v8060 = vpop.f32.mrb[0].mxu0
        %v8061 = vadd.f32 %v7836, %v8060
        %v8062 = vpop.f32.mrb[0].mxu0
        %8063 = vmatprep.mubr.f32.mxu0 0.0
        %8064 = vmatmul.mubr.f32.gmra.mrb[0].mxu0 %v7651
        %v8065 = vpop.f32.mrb[0].mxu0
        %v8066 = vadd.f32 %v7841, %v8065
        %v8067 = vpop.f32.mrb[0].mxu0
        %8068 = vmatprep.mubr.f32.mxu0 0.0
        %8069 = vmatmul.mubr.f32.gmra.mrb[0].mxu0 %v7654
        %v8070 = vpop.f32.mrb[0].mxu0
        %v8071 = vadd.f32 %v7846, %v8070
        %v8072 = vpop.f32.mrb[0].mxu0
        %8073 = vmatprep.mubr.f32.mxu0 0.0
        %8074 = vmatmul.mubr.f32.gmra.mrb[0].mxu0 %v7657
        %v8075 = vpop.f32.mrb[0].mxu0
        %v8076 = vadd.f32 %v7851, %v8075
        %v8077 = vpop.f32.mrb[0].mxu0
        %8078 = vmatprep.mubr.f32.mxu0 0.0
        %8079 = vmatmul.mubr.f32.gmra.mrb[0].mxu0 %v7660
        %v8080 = vpop.f32.mrb[0].mxu0
        %v8081 = vadd.f32 %v7856, %v8080
        %v8082 = vpop.f32.mrb[0].mxu0
        %8083 = vmatprep.mubr.f32.mxu0 0.0
        %8084 = vmatmul.mubr.f32.gmra.mrb[0].mxu0 %v7663
        %v8085 = vpop.f32.mrb[0].mxu0
        %v8086 = vadd.f32 %v7861, %v8085
        %v8087 = vpop.f32.mrb[0].mxu0
        %8088 = vmatprep.mubr.f32.mxu0 0.0
        %8089 = vmatmul.mubr.f32.gmra.mrb[0].mxu0 %v7666
        %v8090 = vpop.f32.mrb[0].mxu0
        %v8091 = vadd.f32 %v7866, %v8090
        %v8092 = vpop.f32.mrb[0].mxu0
        %8093 = vmatprep.mubr.f32.mxu0 0.0
        %8094 = vmatmul.mubr.f32.gmra.mrb[0].mxu0 %v7669
        %v8095 = vpop.f32.mrb[0].mxu0
        %v8096 = vadd.f32 %v7871, %v8095
        %v8097 = vpop.f32.mrb[0].mxu0
        %8098 = vmatprep.mubr.f32.mxu0 0.0
        %8099 = vmatmul.mubr.f32.gmra.mrb[0].mxu0 %v7672
        %v8100 = vpop.f32.mrb[0].mxu0
        %v8101 = vadd.f32 %v7876, %v8100
        %v8102 = vpop.f32.mrb[0].mxu0
        %8103 = vmatprep.mubr.f32.mxu0 0.0
        %8104 = vmatmul.mubr.f32.gmra.mrb[0].mxu0 %v7675
        %v8105 = vpop.f32.mrb[0].mxu0
        %v8106 = vadd.f32 %v7881, %v8105
        %v8107 = vpop.f32.mrb[0].mxu0
        %8108 = vmatprep.mubr.f32.mxu0 0.0
        %8109 = vmatmul.mubr.f32.gmra.mrb[0].mxu0 %v7678
        %v8110 = vpop.f32.mrb[0].mxu0
        %v8111 = vadd.f32 %v7886, %v8110
        %v8112 = vpop.f32.mrb[0].mxu0
        %8113 = vmatprep.mubr.f32.mxu0 0.0
        %8114 = vmatmul.mubr.f32.gmra.mrb[0].mxu0 %v7681
        %v8115 = vpop.f32.mrb[0].mxu0
        %v8116 = vadd.f32 %v7891, %v8115
        %v8117 = vpop.f32.mrb[0].mxu0
        %8118 = vmatprep.mubr.f32.mxu0 0.0
        %8119 = vmatmul.mubr.f32.gmra.mrb[0].mxu0 %v7684
        %v8120 = vpop.f32.mrb[0].mxu0
        %v8121 = vadd.f32 %v7896, %v8120
        %v8122 = vpop.f32.mrb[0].mxu0
        %8123 = vmatprep.mubr.f32.mxu0 0.0
        %8124 = vmatmul.mubr.f32.gmra.mrb[0].mxu0 %v7687
        %v8125 = vpop.f32.mrb[0].mxu0
        %v8126 = vadd.f32 %v7901, %v8125
        %v8127 = vpop.f32.mrb[0].mxu0
        %8128 = vmatprep.mubr.f32.mxu0 0.0
        %8129 = vmatmul.mubr.f32.gmra.mrb[0].mxu0 %v7690
        %v8130 = vpop.f32.mrb[0].mxu0
        %v8131 = vadd.f32 %v7906, %v8130
        %v8132 = vpop.f32.mrb[0].mxu0
        %8133 = vmatprep.mubr.f32.mxu0 0.0
        %8134 = vmatmul.mubr.f32.gmra.mrb[0].mxu0 %v7693
        %v8135 = vpop.f32.mrb[0].mxu0
        %v8136 = vadd.f32 %v7911, %v8135
        %v8137 = vpop.f32.mrb[0].mxu0
        %8138 = vmatprep.mubr.f32.mxu0 0.0
        %8139 = vmatmul.mubr.f32.gmra.mrb[0].mxu0 %v7696
        %v8140 = vpop.f32.mrb[0].mxu0
        %v8141 = vadd.f32 %v7916, %v8140
        %v8142 = vpop.f32.mrb[0].mxu0
        %8143 = vmatprep.mubr.f32.mxu0 0.0
        %8144 = vmatmul.mubr.f32.gmra.mrb[0].mxu0 %v7699
        %v8145 = vpop.f32.mrb[0].mxu0
        %v8146 = vadd.f32 %v7921, %v8145
        %v8147 = vpop.f32.mrb[0].mxu0
        %8148 = vmatprep.mubr.f32.mxu0 0.0
        %8149 = vmatmul.mubr.f32.gmra.mrb[0].mxu0 %v7702
        %v8150 = vpop.f32.mrb[0].mxu0
        %v8151 = vadd.f32 %v7926, %v8150
        %v8152 = vpop.f32.mrb[0].mxu0
        %8153 = vdwg.mxu0
        %vm8154 = vcmask 64512
        %8155 = vst.msk [vmem:[%s387] sm:$0xff] %vm8154, %v7996
        %8156 = vst.msk [vmem:[%s387 + $0x8] sm:$0xff] %vm8154, %v8001
        %8157 = vst.msk [vmem:[%s387 + $0x10] sm:$0xff] %vm8154, %v8006
        %8158 = vst.msk [vmem:[%s387 + $0x18] sm:$0xff] %vm8154, %v8011
        %8159 = vst.msk [vmem:[%s387 + $0x20] sm:$0xff] %vm8154, %v8016
        %8160 = vst.msk [vmem:[%s387 + $0x28] sm:$0xff] %vm8154, %v8021
        %8161 = vst.msk [vmem:[%s387 + $0x30] sm:$0xff] %vm8154, %v8026
        %8162 = vst.msk [vmem:[%s387 + $0x38] sm:$0xff] %vm8154, %v8031
        %8163 = vst.msk [vmem:[%s387 + $0x40] sm:$0xff] %vm8154, %v8036
        %8164 = vst.msk [vmem:[%s387 + $0x48] sm:$0xff] %vm8154, %v8041
        %8165 = vst.msk [vmem:[%s387 + $0x50] sm:$0xff] %vm8154, %v8046
        %8166 = vst.msk [vmem:[%s387 + $0x58] sm:$0xff] %vm8154, %v8051
        %8167 = vst.msk [vmem:[%s387 + $0x60] sm:$0xff] %vm8154, %v8056
        %8168 = vst.msk [vmem:[%s387 + $0x68] sm:$0xff] %vm8154, %v8061
        %8169 = vst.msk [vmem:[%s387 + $0x70] sm:$0xff] %vm8154, %v8066
        %8170 = vst.msk [vmem:[%s387 + $0x78] sm:$0xff] %vm8154, %v8071
        %8171 = vst.msk [vmem:[%s387 + $0x80] sm:$0xff] %vm8154, %v8076
        %8172 = vst.msk [vmem:[%s387 + $0x88] sm:$0xff] %vm8154, %v8081
        %8173 = vst.msk [vmem:[%s387 + $0x90] sm:$0xff] %vm8154, %v8086
        %8174 = vst.msk [vmem:[%s387 + $0x98] sm:$0xff] %vm8154, %v8091
        %8175 = vst.msk [vmem:[%s387 + $0xa0] sm:$0xff] %vm8154, %v8096
        %8176 = vst.msk [vmem:[%s387 + $0xa8] sm:$0xff] %vm8154, %v8101
        %8177 = vst.msk [vmem:[%s387 + $0xb0] sm:$0xff] %vm8154, %v8106
        %8178 = vst.msk [vmem:[%s387 + $0xb8] sm:$0xff] %vm8154, %v8111
        %8179 = vst.msk [vmem:[%s387 + $0xc0] sm:$0xff] %vm8154, %v8116
        %8180 = vst.msk [vmem:[%s387 + $0xc8] sm:$0xff] %vm8154, %v8121
        %8181 = vst.msk [vmem:[%s387 + $0xd0] sm:$0xff] %vm8154, %v8126
        %8182 = vst.msk [vmem:[%s387 + $0xd8] sm:$0xff] %vm8154, %v8131
        %8183 = vst.msk [vmem:[%s387 + $0xe0] sm:$0xff] %vm8154, %v8136
        %8184 = vst.msk [vmem:[%s387 + $0xe8] sm:$0xff] %vm8154, %v8141
        %8185 = vst.msk [vmem:[%s387 + $0xf0] sm:$0xff] %vm8154, %v8146
        %8186 = vst.msk [vmem:[%s387 + $0xf8] sm:$0xff] %vm8154, %v8151
      $region68: #{sea_ice_convlstm.1} parent=59 // pred_fallthru
        _
      %p8187 = scmp.lt.s32.totalorder %s27, 1
      %s8188 = scalar_select %p8187, %s27, 1
      %s8189 = smul.addr %s8188, 32
      %s8190 = smul.addr %s8189, 8
      %s8191 = scalar_lea.vmem %s10, %s8190
      // Predicated region
      $region69: #{sea_ice_convlstm.1} parent=59 // pred_check
        %p8192 = pneg %p272
      $region70: #{sea_ice_convlstm.1} parent=59 // pred_check_branch
        %8194 = sbr.rel (%p8192) target = $region72
      $region71: #{sea_ice_convlstm.1} parent=59 // pred_region
        _
      $region72: #{sea_ice_convlstm.1} parent=59 // pred_fallthru
        _
    $region60: #{sea_ice_convlstm.1} parent=5 // pred_fallthru
      _
    %p8195 = scmp.le.s32.totalorder 2, %s18
    // Predicated region
    $region73: #{sea_ice_convlstm.1} parent=5 // pred_check
      %p8196 = pneg %p8195
    $region74: #{sea_ice_convlstm.1} parent=5 // pred_check_branch
      %8198 = sbr.rel (%p8196) target = $region76
    $region75: #{sea_ice_convlstm.1} parent=5 // pred_region
      %s8199 = ssub.s32 %s18, 2
      // Predicated region
      $region77: #{sea_ice_convlstm.1} parent=75 // pred_check
        %p8200 = pneg %p278
      $region78: #{sea_ice_convlstm.1} parent=75 // pred_check_branch
        %8202 = sbr.rel (%p8200) target = $region80
      $region79: #{sea_ice_convlstm.1} parent=75 // pred_region
        %p8203 = scmp.lt.s32.totalorder %s29, 1
        %s8204 = scalar_select %p8203, %s29, 1
        %s8205 = smul.addr %s8204, 32
        %s8206 = smul.addr %s8205, 8
        %s8207 = scalar_lea.vmem %s10, %s8206
      $region80: #{sea_ice_convlstm.1} parent=75 // pred_fallthru
        _
    $region76: #{sea_ice_convlstm.1} parent=5 // pred_fallthru
      _
  $region6: #{sea_ice_convlstm.1} parent=0 // loop_footer
    %s22 = sadd.s32 1, %s18
  $region7: #{sea_ice_convlstm.1} parent=0 // loop_footer_branch
    %17 = sbr.rel target = $region3
  $region8: #{sea_ice_convlstm.1} parent=0 // loop_exit
    _

</llo_original>
